<compile_context>
chip_gen: v7x
topology: tpu7x:2x2x1
jax: 0.10.0
libtpu: 0.0.40
codegen_flags: <defaults>
</compile_context>

<pallas_src>
import jax
import jax.numpy as jnp
from jax.experimental import pallas as pl
from jax.experimental.pallas import tpu as pltpu

# Shapes implied by the module: forward hardcodes reshape(-1, 50, 16)
D_MODEL = 16
MAX_SIZE = 50
N_DIM = MAX_SIZE * D_MODEL          # 800
N_TARGETS = 10
OUT_PAD = 128                       # lane-dense padded output width
BATCH = 4


def baseline_kernel(x_ref, w0_ref, b0_ref, w1_ref, b1_ref, w2_ref, b2_ref,
                    w3_ref, b3_ref, out_ref):
    bf16 = jnp.bfloat16
    x = x_ref[...]                                               # (B, 800) f32

    # layer0 (block-diagonal): one lane-dense bf16 MXU matmul, f32 accumulate
    h = jnp.dot(x.astype(bf16), w0_ref[...],
                preferred_element_type=jnp.float32) + b0_ref[...]

    # l1 / l2: bf16 operands, f32 accumulation, f32 bias + tanh
    h = jnp.tanh(jnp.dot(h.astype(bf16), w1_ref[...],
                         preferred_element_type=jnp.float32) + b1_ref[...])
    h = jnp.tanh(jnp.dot(h.astype(bf16), w2_ref[...],
                         preferred_element_type=jnp.float32) + b2_ref[...])

    # l3: small, kept fully f32; output padded to 128 lanes (unmasked stores)
    out_ref[...] = jnp.dot(h, w3_ref[...],
                           preferred_element_type=jnp.float32) + b3_ref[...]


def _full_spec(shape):
    nd = len(shape)
    return pl.BlockSpec(shape, lambda i, nd=nd: (0,) * nd)


def _prep_params(params):
    """Glue: block-diag layer0, transpose to (in,out), bf16 big weights, pad l3."""
    w0, b0, w1, b1, w2, b2, w3, b3 = params

    # block-diagonal layer0 weight: (800, 800), block s = w0[s].T (in, out)
    w0t = jnp.transpose(w0, (0, 2, 1))                           # (50, 16, 16)
    idx = jnp.arange(MAX_SIZE)
    w0_bd = jnp.zeros((MAX_SIZE, D_MODEL, MAX_SIZE, D_MODEL), jnp.float32)
    w0_bd = w0_bd.at[idx, :, idx, :].set(w0t)
    w0_bd = w0_bd.reshape(N_DIM, N_DIM).astype(jnp.bfloat16)
    b0f = b0.reshape(1, N_DIM).astype(jnp.float32)

    w1t = w1.T.astype(jnp.bfloat16)                              # (800, 800)
    w2t = w2.T.astype(jnp.bfloat16)                              # (800, 800)
    b1r = b1.reshape(1, N_DIM).astype(jnp.float32)
    b2r = b2.reshape(1, N_DIM).astype(jnp.float32)

    # pad the final layer to 128 output lanes (zero columns)
    w3p = jnp.zeros((N_DIM, OUT_PAD), jnp.float32).at[:, :N_TARGETS].set(w3.T)
    b3p = jnp.zeros((1, OUT_PAD), jnp.float32).at[:, :N_TARGETS].set(b3)

    return w0_bd, b0f, w1t, b1r, w2t, b2r, w3p, b3p


@jax.jit
def baseline_forward(x, params):
    x2 = x.reshape(-1, N_DIM).astype(jnp.float32)
    B = x2.shape[0]
    w0_bd, b0f, w1t, b1r, w2t, b2r, w3p, b3p = _prep_params(params)

    out = pl.pallas_call(
        baseline_kernel,
        out_shape=jax.ShapeDtypeStruct((B, OUT_PAD), jnp.float32),
        grid=(1,),
        in_specs=[
            _full_spec((B, N_DIM)),                 # x (f32)
            _full_spec((N_DIM, N_DIM)),             # W0 block-diag (bf16)
            _full_spec((1, N_DIM)),                 # b0
            _full_spec((N_DIM, N_DIM)),             # W1 (bf16)
            _full_spec((1, N_DIM)),                 # b1
            _full_spec((N_DIM, N_DIM)),             # W2 (bf16)
            _full_spec((1, N_DIM)),                 # b2
            _full_spec((N_DIM, OUT_PAD)),           # W3 padded (f32)
            _full_spec((1, OUT_PAD)),               # b3 padded
        ],
        out_specs=_full_spec((B, OUT_PAD)),
        compiler_params=pltpu.CompilerParams(
            dimension_semantics=("arbitrary",),
            vmem_limit_bytes=32 * 1024 * 1024),
    )(x2, w0_bd, b0f, w1t, b1r, w2t, b2r, w3p, b3p)

    return out[:, :N_TARGETS]


def baseline_ref_f32(x, params):
    """Pure-JAX f32 reference mirroring the PyTorch forward exactly."""
    w0, b0, w1, b1, w2, b2, w3, b3 = params
    xr = x.reshape(-1, MAX_SIZE, D_MODEL)
    outs = [xr[:, s, :] @ w0[s].T + b0[s] for s in range(MAX_SIZE)]
    h = jnp.concatenate(outs, axis=1)
    h = jnp.tanh(h @ w1.T + b1)
    h = jnp.tanh(h @ w2.T + b2)
    return h @ w3.T + b3


def baseline_ref_mixed(x, params):
    """Pure-JAX reference mirroring the kernel's exact mixed-precision math."""
    w0_bd, b0f, w1t, b1r, w2t, b2r, w3p, b3p = _prep_params(params)
    bf16 = jnp.bfloat16
    x2 = x.reshape(-1, N_DIM).astype(jnp.float32)
    h = jnp.dot(x2.astype(bf16), w0_bd, preferred_element_type=jnp.float32) + b0f
    h = jnp.tanh(jnp.dot(h.astype(bf16), w1t,
                         preferred_element_type=jnp.float32) + b1r)
    h = jnp.tanh(jnp.dot(h.astype(bf16), w2t,
                         preferred_element_type=jnp.float32) + b2r)
    y = jnp.dot(h, w3p, preferred_element_type=jnp.float32) + b3p
    return y[:, :N_TARGETS]


def init_params(key):
    ks = jax.random.split(key, 8)
    s_small = 0.25    # ~1/sqrt(16)
    s_big = 0.035     # ~1/sqrt(800)
    return (
        jax.random.normal(ks[0], (MAX_SIZE, D_MODEL, D_MODEL), jnp.float32) * s_small,
        jax.random.normal(ks[1], (MAX_SIZE, D_MODEL), jnp.float32) * s_small,
        jax.random.normal(ks[2], (N_DIM, N_DIM), jnp.float32) * s_big,
        jax.random.normal(ks[3], (N_DIM,), jnp.float32) * s_big,
        jax.random.normal(ks[4], (N_DIM, N_DIM), jnp.float32) * s_big,
        jax.random.normal(ks[5], (N_DIM,), jnp.float32) * s_big,
        jax.random.normal(ks[6], (N_TARGETS, N_DIM), jnp.float32) * s_big,
        jax.random.normal(ks[7], (N_TARGETS,), jnp.float32) * s_big,
    )


if __name__ == "__main__":
    key = jax.random.PRNGKey(0)
    pkey, xkey = jax.random.split(key)
    params = init_params(pkey)
    x = jax.random.normal(xkey, (BATCH, N_DIM), jnp.float32)

    out = baseline_forward(x, params)
    out = jax.block_until_ready(out)
    assert out.shape == (BATCH, N_TARGETS)

    # Tight check against the mixed-precision (bf16-weight) reference:
    # verifies the kernel math itself.
    ref_mixed = baseline_ref_mixed(x, params)
    err_mixed = float(jnp.max(jnp.abs(out - ref_mixed)))
    assert err_mixed < 2e-3, f"kernel mismatch vs mixed-precision reference: {err_mixed}"

    # Loose check against the pure-f32 PyTorch-equivalent reference:
    # verifies bf16 weight quantization stays within a benign tolerance.
    ref_f32 = baseline_ref_f32(x, params)
    err_f32 = float(jnp.max(jnp.abs(out - ref_f32)))
    assert err_f32 < 5e-2, f"mismatch vs f32 reference: {err_f32}"

    print("KERNEL_OK")
</pallas_src>

<mosaic_0001>
module attributes {stable_mosaic.version = 11 : i64} {
  func.func @baseline_kernel(%arg0: i32, %arg1: memref<4x800xf32, #tpu.memory_space<vmem>>, %arg2: memref<800x800xbf16, #tpu.memory_space<vmem>>, %arg3: memref<1x800xf32, #tpu.memory_space<vmem>>, %arg4: memref<800x800xbf16, #tpu.memory_space<vmem>>, %arg5: memref<1x800xf32, #tpu.memory_space<vmem>>, %arg6: memref<800x800xbf16, #tpu.memory_space<vmem>>, %arg7: memref<1x800xf32, #tpu.memory_space<vmem>>, %arg8: memref<800x128xf32, #tpu.memory_space<vmem>>, %arg9: memref<1x128xf32, #tpu.memory_space<vmem>>, %arg10: memref<4x128xf32, #tpu.memory_space<vmem>>) attributes {dimension_semantics = [#tpu.dimension_semantics<arbitrary>], iteration_bounds = array<i64: 1>, scalar_prefetch = 0 : i64, scratch_operands = 0 : i64, tpu.core_type = #tpu.core_type<tc>, window_params = [{pipeline_mode = #tpu.pipeline_mode<synchronous>, transform_indices = @transform_0, window_bounds = array<i64: 4, 800>}, {pipeline_mode = #tpu.pipeline_mode<synchronous>, transform_indices = @transform_1, window_bounds = array<i64: 800, 800>}, {pipeline_mode = #tpu.pipeline_mode<synchronous>, transform_indices = @transform_2, window_bounds = array<i64: 1, 800>}, {pipeline_mode = #tpu.pipeline_mode<synchronous>, transform_indices = @transform_3, window_bounds = array<i64: 800, 800>}, {pipeline_mode = #tpu.pipeline_mode<synchronous>, transform_indices = @transform_4, window_bounds = array<i64: 1, 800>}, {pipeline_mode = #tpu.pipeline_mode<synchronous>, transform_indices = @transform_5, window_bounds = array<i64: 800, 800>}, {pipeline_mode = #tpu.pipeline_mode<synchronous>, transform_indices = @transform_6, window_bounds = array<i64: 1, 800>}, {pipeline_mode = #tpu.pipeline_mode<synchronous>, transform_indices = @transform_7, window_bounds = array<i64: 800, 128>}, {pipeline_mode = #tpu.pipeline_mode<synchronous>, transform_indices = @transform_8, window_bounds = array<i64: 1, 128>}, {pipeline_mode = #tpu.pipeline_mode<synchronous>, transform_indices = @transform_9, window_bounds = array<i64: 4, 128>}]} {
    %c0 = arith.constant 0 : index
    %c0_0 = arith.constant 0 : index
    %0 = vector.load %arg1[%c0, %c0_0] : memref<4x800xf32, #tpu.memory_space<vmem>>, vector<4x800xf32>
    %1 = arith.truncf %0 : vector<4x800xf32> to vector<4x800xbf16>
    %c0_1 = arith.constant 0 : index
    %c0_2 = arith.constant 0 : index
    %2 = vector.load %arg2[%c0_1, %c0_2] : memref<800x800xbf16, #tpu.memory_space<vmem>>, vector<800x800xbf16>
    %cst = arith.constant dense<0.000000e+00> : vector<4x800xf32>
    %3 = tpu.matmul %1, %2, %cst {dimension_numbers = #tpu.dot_dimension_numbers<[1], [0], [0], [1], [0, 0, 1, 1], [], []>} : vector<4x800xbf16>, vector<800x800xbf16>, vector<4x800xf32> -> vector<4x800xf32>
    %c0_3 = arith.constant 0 : index
    %c0_4 = arith.constant 0 : index
    %4 = vector.load %arg3[%c0_3, %c0_4] : memref<1x800xf32, #tpu.memory_space<vmem>>, vector<1x800xf32>
    %5 = vector.broadcast %4 : vector<1x800xf32> to vector<4x800xf32>
    %6 = arith.addf %3, %5 : vector<4x800xf32>
    %7 = arith.truncf %6 : vector<4x800xf32> to vector<4x800xbf16>
    %c0_5 = arith.constant 0 : index
    %c0_6 = arith.constant 0 : index
    %8 = vector.load %arg4[%c0_5, %c0_6] : memref<800x800xbf16, #tpu.memory_space<vmem>>, vector<800x800xbf16>
    %cst_7 = arith.constant dense<0.000000e+00> : vector<4x800xf32>
    %9 = tpu.matmul %7, %8, %cst_7 {dimension_numbers = #tpu.dot_dimension_numbers<[1], [0], [0], [1], [0, 0, 1, 1], [], []>} : vector<4x800xbf16>, vector<800x800xbf16>, vector<4x800xf32> -> vector<4x800xf32>
    %c0_8 = arith.constant 0 : index
    %c0_9 = arith.constant 0 : index
    %10 = vector.load %arg5[%c0_8, %c0_9] : memref<1x800xf32, #tpu.memory_space<vmem>>, vector<1x800xf32>
    %11 = vector.broadcast %10 : vector<1x800xf32> to vector<4x800xf32>
    %12 = arith.addf %9, %11 : vector<4x800xf32>
    %13 = math.tanh %12 : vector<4x800xf32>
    %14 = arith.truncf %13 : vector<4x800xf32> to vector<4x800xbf16>
    %c0_10 = arith.constant 0 : index
    %c0_11 = arith.constant 0 : index
    %15 = vector.load %arg6[%c0_10, %c0_11] : memref<800x800xbf16, #tpu.memory_space<vmem>>, vector<800x800xbf16>
    %cst_12 = arith.constant dense<0.000000e+00> : vector<4x800xf32>
    %16 = tpu.matmul %14, %15, %cst_12 {dimension_numbers = #tpu.dot_dimension_numbers<[1], [0], [0], [1], [0, 0, 1, 1], [], []>} : vector<4x800xbf16>, vector<800x800xbf16>, vector<4x800xf32> -> vector<4x800xf32>
    %c0_13 = arith.constant 0 : index
    %c0_14 = arith.constant 0 : index
    %17 = vector.load %arg7[%c0_13, %c0_14] : memref<1x800xf32, #tpu.memory_space<vmem>>, vector<1x800xf32>
    %18 = vector.broadcast %17 : vector<1x800xf32> to vector<4x800xf32>
    %19 = arith.addf %16, %18 : vector<4x800xf32>
    %20 = math.tanh %19 : vector<4x800xf32>
    %c0_15 = arith.constant 0 : index
    %c0_16 = arith.constant 0 : index
    %21 = vector.load %arg8[%c0_15, %c0_16] : memref<800x128xf32, #tpu.memory_space<vmem>>, vector<800x128xf32>
    %cst_17 = arith.constant dense<0.000000e+00> : vector<4x128xf32>
    %22 = tpu.matmul %20, %21, %cst_17 {dimension_numbers = #tpu.dot_dimension_numbers<[1], [0], [0], [1], [0, 0, 1, 1], [], []>} : vector<4x800xf32>, vector<800x128xf32>, vector<4x128xf32> -> vector<4x128xf32>
    %c0_18 = arith.constant 0 : index
    %c0_19 = arith.constant 0 : index
    %23 = vector.load %arg9[%c0_18, %c0_19] : memref<1x128xf32, #tpu.memory_space<vmem>>, vector<1x128xf32>
    %24 = vector.broadcast %23 : vector<1x128xf32> to vector<4x128xf32>
    %25 = arith.addf %22, %24 : vector<4x128xf32>
    %c0_20 = arith.constant 0 : index
    %c0_21 = arith.constant 0 : index
    %26 = vector.load %arg10[%c0_20, %c0_21] : memref<4x128xf32, #tpu.memory_space<vmem>>, vector<4x128xf32>
    tpu.vector_store %arg10[%c0_20, %c0_21], %25 {strides = array<i32>} : memref<4x128xf32, #tpu.memory_space<vmem>>, vector<4x128xf32>,
    return
  }
  func.func @transform_0(%arg0: i32) -> (i32, i32) {
    %c0_i32 = arith.constant 0 : i32
    %c0_i32_0 = arith.constant 0 : i32
    %c0_i32_1 = arith.constant 0 : i32
    return %c0_i32, %c0_i32_0 : i32, i32
  }
  func.func @transform_1(%arg0: i32) -> (i32, i32) {
    %c0_i32 = arith.constant 0 : i32
    %c0_i32_0 = arith.constant 0 : i32
    %c0_i32_1 = arith.constant 0 : i32
    return %c0_i32, %c0_i32_0 : i32, i32
  }
  func.func @transform_2(%arg0: i32) -> (i32, i32) {
    %c0_i32 = arith.constant 0 : i32
    %c0_i32_0 = arith.constant 0 : i32
    %c0_i32_1 = arith.constant 0 : i32
    return %c0_i32, %c0_i32_0 : i32, i32
  }
  func.func @transform_3(%arg0: i32) -> (i32, i32) {
    %c0_i32 = arith.constant 0 : i32
    %c0_i32_0 = arith.constant 0 : i32
    %c0_i32_1 = arith.constant 0 : i32
    return %c0_i32, %c0_i32_0 : i32, i32
  }
  func.func @transform_4(%arg0: i32) -> (i32, i32) {
    %c0_i32 = arith.constant 0 : i32
    %c0_i32_0 = arith.constant 0 : i32
    %c0_i32_1 = arith.constant 0 : i32
    return %c0_i32, %c0_i32_0 : i32, i32
  }
  func.func @transform_5(%arg0: i32) -> (i32, i32) {
    %c0_i32 = arith.constant 0 : i32
    %c0_i32_0 = arith.constant 0 : i32
    %c0_i32_1 = arith.constant 0 : i32
    return %c0_i32, %c0_i32_0 : i32, i32
  }
  func.func @transform_6(%arg0: i32) -> (i32, i32) {
    %c0_i32 = arith.constant 0 : i32
    %c0_i32_0 = arith.constant 0 : i32
    %c0_i32_1 = arith.constant 0 : i32
    return %c0_i32, %c0_i32_0 : i32, i32
  }
  func.func @transform_7(%arg0: i32) -> (i32, i32) {
    %c0_i32 = arith.constant 0 : i32
    %c0_i32_0 = arith.constant 0 : i32
    %c0_i32_1 = arith.constant 0 : i32
    return %c0_i32, %c0_i32_0 : i32, i32
  }
  func.func @transform_8(%arg0: i32) -> (i32, i32) {
    %c0_i32 = arith.constant 0 : i32
    %c0_i32_0 = arith.constant 0 : i32
    %c0_i32_1 = arith.constant 0 : i32
    return %c0_i32, %c0_i32_0 : i32, i32
  }
  func.func @transform_9(%arg0: i32) -> (i32, i32) {
    %c0_i32 = arith.constant 0 : i32
    %c0_i32_0 = arith.constant 0 : i32
    %c0_i32_1 = arith.constant 0 : i32
    return %c0_i32, %c0_i32_0 : i32, i32
  }
}

</mosaic_0001>

<llo_original>
// kernel: baseline_forward.1
$region0: #{baseline_forward.1}
  #allocation0 [shape = 'u32[]', space=smem, size = 0x4, offset = 0x4, fixed_abs, tag = 'smem constant byte address 0x4 - core index']
  #allocation1 [shape = 'u32[144,128]{1,0:T(1,128)}', space=vmem, size = 0x12000, scoped, tag = 'internal scratch']
  %s0 = inlined_call_operand.vmem [shape: f32[4,800], index: 0, kind: input, shape index: {}]
  %s1 = inlined_call_operand.vmem [shape: bf16[800,800], index: 1, kind: input, shape index: {}]
  %s2 = inlined_call_operand.vmem [shape: f32[1,800], index: 2, kind: input, shape index: {}]
  %s3 = inlined_call_operand.vmem [shape: bf16[800,800], index: 3, kind: input, shape index: {}]
  %s4 = inlined_call_operand.vmem [shape: f32[1,800], index: 4, kind: input, shape index: {}]
  %s5 = inlined_call_operand.vmem [shape: bf16[800,800], index: 5, kind: input, shape index: {}]
  %s6 = inlined_call_operand.vmem [shape: f32[1,800], index: 6, kind: input, shape index: {}]
  %s7 = inlined_call_operand.vmem [shape: f32[800,128], index: 7, kind: input, shape index: {}]
  %s8 = inlined_call_operand.vmem [shape: f32[1,128], index: 8, kind: input, shape index: {}]
  %s9 = inlined_call_operand.hbm [shape: f32[4,128], index: 9, kind: output, shape index: {}]
  %s10 = sld [smem:[#allocation0]]
  $region46: #{baseline_forward.1} parent=0
    _
  %s12 = ssub.s32 1, %s10
  %s13 = scalar_select 0, %s12, %s10
  $region1: #{baseline_forward.1} parent=0
    #allocation2 [shape = 'u8[2048]{0}', space=vmem, size = 0x800, scoped, tag = 'output window, operand 0, single buffered']
    #allocation3 [shape = 's32[1]{0}', space=sflag, size = 0x4, scoped, tag = 'scoped memory for baseline_forward.1']
    %14 = vsyncpa [#allocation3], 0
    // Predicated region
    $region2: #{baseline_forward.1} parent=1 // pred_check
      _
    $region3: #{baseline_forward.1} parent=1 // pred_check_branch
      %16 = sbr.rel (0) target = $region5
    $region4: #{baseline_forward.1} parent=1 // pred_region
      _
    $region5: #{baseline_forward.1} parent=1 // pred_fallthru
      _
    // Predicated region
    $region6: #{baseline_forward.1} parent=1 // pred_check
      _
    $region7: #{baseline_forward.1} parent=1 // pred_check_branch
      %18 = sbr.rel (0) target = $region9
    $region8: #{baseline_forward.1} parent=1 // pred_region
      _
    $region9: #{baseline_forward.1} parent=1 // pred_fallthru
      _
    // Predicated region
    $region10: #{baseline_forward.1} parent=1 // pred_check
      _
    $region11: #{baseline_forward.1} parent=1 // pred_check_branch
      %20 = sbr.rel (0) target = $region13
    $region12: #{baseline_forward.1} parent=1 // pred_region
      _
    $region13: #{baseline_forward.1} parent=1 // pred_fallthru
      _
    // Predicated region
    $region14: #{baseline_forward.1} parent=1 // pred_check
      _
    $region15: #{baseline_forward.1} parent=1 // pred_check_branch
      %22 = sbr.rel (0) target = $region17
    $region16: #{baseline_forward.1} parent=1 // pred_region
      _
    $region17: #{baseline_forward.1} parent=1 // pred_fallthru
      _
    // Predicated region
    $region18: #{baseline_forward.1} parent=1 // pred_check
      _
    $region19: #{baseline_forward.1} parent=1 // pred_check_branch
      %24 = sbr.rel (0) target = $region21
    $region20: #{baseline_forward.1} parent=1 // pred_region
      _
    $region21: #{baseline_forward.1} parent=1 // pred_fallthru
      _
    // Predicated region
    $region22: #{baseline_forward.1} parent=1 // pred_check
      _
    $region23: #{baseline_forward.1} parent=1 // pred_check_branch
      %26 = sbr.rel (0) target = $region25
    $region24: #{baseline_forward.1} parent=1 // pred_region
      _
    $region25: #{baseline_forward.1} parent=1 // pred_fallthru
      _
    // Predicated region
    $region26: #{baseline_forward.1} parent=1 // pred_check
      _
    $region27: #{baseline_forward.1} parent=1 // pred_check_branch
      %28 = sbr.rel (0) target = $region29
    $region28: #{baseline_forward.1} parent=1 // pred_region
      _
    $region29: #{baseline_forward.1} parent=1 // pred_fallthru
      _
    // Predicated region
    $region30: #{baseline_forward.1} parent=1 // pred_check
      _
    $region31: #{baseline_forward.1} parent=1 // pred_check_branch
      %30 = sbr.rel (0) target = $region33
    $region32: #{baseline_forward.1} parent=1 // pred_region
      _
    $region33: #{baseline_forward.1} parent=1 // pred_fallthru
      _
    // Predicated region
    $region34: #{baseline_forward.1} parent=1 // pred_check
      _
    $region35: #{baseline_forward.1} parent=1 // pred_check_branch
      %32 = sbr.rel (0) target = $region37
    $region36: #{baseline_forward.1} parent=1 // pred_region
      _
    $region37: #{baseline_forward.1} parent=1 // pred_fallthru
      _
    %v34 = vld [vmem:[%s0] sm:$0xff]
    %v35 = vld [vmem:[%s0 + $0x8] sm:$0xff]
    %v36 = vld [vmem:[%s0 + $0x10] sm:$0xff]
    %v37 = vld [vmem:[%s0 + $0x18] sm:$0xf]
    %v41 = vcombine.high %v34, %v34
    %v42 = vcombine.high %v35, %v35
    %v43 = vcombine.high %v36, %v36
    %v47 = vpack.c.bf16 %v34, %v34
    %v48 = vpack.c.bf16 %v41, %v41
    %v49 = vpack.c.bf16 %v35, %v35
    %v50 = vpack.c.bf16 %v42, %v42
    %v51 = vpack.c.bf16 %v36, %v36
    %v52 = vpack.c.bf16 %v43, %v43
    %v53 = vpack.c.bf16 %v37, %v37
    %v54 = vld [vmem:[%s1] sm:$0xff]
    %v55 = vld [vmem:[%s1 + $0x8] sm:$0xff]
    %v56 = vld [vmem:[%s1 + $0x10] sm:$0xff]
    %v57 = vld [vmem:[%s1 + $0x18] sm:$0xf]
    %v58 = vld [vmem:[%s1 + $0x1c] sm:$0xff]
    %v59 = vld [vmem:[%s1 + $0x24] sm:$0xff]
    %v60 = vld [vmem:[%s1 + $0x2c] sm:$0xff]
    %v61 = vld [vmem:[%s1 + $0x34] sm:$0xf]
    %v62 = vld [vmem:[%s1 + $0x38] sm:$0xff]
    %v63 = vld [vmem:[%s1 + $0x40] sm:$0xff]
    %v64 = vld [vmem:[%s1 + $0x48] sm:$0xff]
    %v65 = vld [vmem:[%s1 + $0x50] sm:$0xf]
    %v66 = vld [vmem:[%s1 + $0x54] sm:$0xff]
    %v67 = vld [vmem:[%s1 + $0x5c] sm:$0xff]
    %v68 = vld [vmem:[%s1 + $0x64] sm:$0xff]
    %v69 = vld [vmem:[%s1 + $0x6c] sm:$0xf]
    %v70 = vld [vmem:[%s1 + $0x70] sm:$0xff]
    %v71 = vld [vmem:[%s1 + $0x78] sm:$0xff]
    %v72 = vld [vmem:[%s1 + $0x80] sm:$0xff]
    %v73 = vld [vmem:[%s1 + $0x88] sm:$0xf]
    %v74 = vld [vmem:[%s1 + $0x8c] sm:$0xff]
    %v75 = vld [vmem:[%s1 + $0x94] sm:$0xff]
    %v76 = vld [vmem:[%s1 + $0x9c] sm:$0xff]
    %v77 = vld [vmem:[%s1 + $0xa4] sm:$0xf]
    %v78 = vld [vmem:[%s1 + $0xa8] sm:$0xff]
    %v79 = vld [vmem:[%s1 + $0xb0] sm:$0xff]
    %v80 = vld [vmem:[%s1 + $0xb8] sm:$0xff]
    %v81 = vld [vmem:[%s1 + $0xc0] sm:$0xf]
    %v82 = vld [vmem:[%s1 + $0xc4] sm:$0xff]
    %v83 = vld [vmem:[%s1 + $0xcc] sm:$0xff]
    %v84 = vld [vmem:[%s1 + $0xd4] sm:$0xff]
    %v85 = vld [vmem:[%s1 + $0xdc] sm:$0xf]
    %v86 = vld [vmem:[%s1 + $0xe0] sm:$0xff]
    %v87 = vld [vmem:[%s1 + $0xe8] sm:$0xff]
    %v88 = vld [vmem:[%s1 + $0xf0] sm:$0xff]
    %v89 = vld [vmem:[%s1 + $0xf8] sm:$0xf]
    %v90 = vld [vmem:[%s1 + $0xfc] sm:$0xff]
    %v91 = vld [vmem:[%s1 + $0x104] sm:$0xff]
    %v92 = vld [vmem:[%s1 + $0x10c] sm:$0xff]
    %v93 = vld [vmem:[%s1 + $0x114] sm:$0xf]
    %v94 = vld [vmem:[%s1 + $0x118] sm:$0xff]
    %v95 = vld [vmem:[%s1 + $0x120] sm:$0xff]
    %v96 = vld [vmem:[%s1 + $0x128] sm:$0xff]
    %v97 = vld [vmem:[%s1 + $0x130] sm:$0xf]
    %v98 = vld [vmem:[%s1 + $0x134] sm:$0xff]
    %v99 = vld [vmem:[%s1 + $0x13c] sm:$0xff]
    %v100 = vld [vmem:[%s1 + $0x144] sm:$0xff]
    %v101 = vld [vmem:[%s1 + $0x14c] sm:$0xf]
    %v102 = vld [vmem:[%s1 + $0x150] sm:$0xff]
    %v103 = vld [vmem:[%s1 + $0x158] sm:$0xff]
    %v104 = vld [vmem:[%s1 + $0x160] sm:$0xff]
    %v105 = vld [vmem:[%s1 + $0x168] sm:$0xf]
    %v106 = vld [vmem:[%s1 + $0x16c] sm:$0xff]
    %v107 = vld [vmem:[%s1 + $0x174] sm:$0xff]
    %v108 = vld [vmem:[%s1 + $0x17c] sm:$0xff]
    %v109 = vld [vmem:[%s1 + $0x184] sm:$0xf]
    %v110 = vld [vmem:[%s1 + $0x188] sm:$0xff]
    %v111 = vld [vmem:[%s1 + $0x190] sm:$0xff]
    %v112 = vld [vmem:[%s1 + $0x198] sm:$0xff]
    %v113 = vld [vmem:[%s1 + $0x1a0] sm:$0xf]
    %v114 = vld [vmem:[%s1 + $0x1a4] sm:$0xff]
    %v115 = vld [vmem:[%s1 + $0x1ac] sm:$0xff]
    %v116 = vld [vmem:[%s1 + $0x1b4] sm:$0xff]
    %v117 = vld [vmem:[%s1 + $0x1bc] sm:$0xf]
    %v118 = vld [vmem:[%s1 + $0x1c0] sm:$0xff]
    %v119 = vld [vmem:[%s1 + $0x1c8] sm:$0xff]
    %v120 = vld [vmem:[%s1 + $0x1d0] sm:$0xff]
    %v121 = vld [vmem:[%s1 + $0x1d8] sm:$0xf]
    %v122 = vld [vmem:[%s1 + $0x1dc] sm:$0xff]
    %v123 = vld [vmem:[%s1 + $0x1e4] sm:$0xff]
    %v124 = vld [vmem:[%s1 + $0x1ec] sm:$0xff]
    %v125 = vld [vmem:[%s1 + $0x1f4] sm:$0xf]
    %v126 = vld [vmem:[%s1 + $0x1f8] sm:$0xff]
    %v127 = vld [vmem:[%s1 + $0x200] sm:$0xff]
    %v128 = vld [vmem:[%s1 + $0x208] sm:$0xff]
    %v129 = vld [vmem:[%s1 + $0x210] sm:$0xf]
    %v130 = vld [vmem:[%s1 + $0x214] sm:$0xff]
    %v131 = vld [vmem:[%s1 + $0x21c] sm:$0xff]
    %v132 = vld [vmem:[%s1 + $0x224] sm:$0xff]
    %v133 = vld [vmem:[%s1 + $0x22c] sm:$0xf]
    %v134 = vld [vmem:[%s1 + $0x230] sm:$0xff]
    %v135 = vld [vmem:[%s1 + $0x238] sm:$0xff]
    %v136 = vld [vmem:[%s1 + $0x240] sm:$0xff]
    %v137 = vld [vmem:[%s1 + $0x248] sm:$0xf]
    %v138 = vld [vmem:[%s1 + $0x24c] sm:$0xff]
    %v139 = vld [vmem:[%s1 + $0x254] sm:$0xff]
    %v140 = vld [vmem:[%s1 + $0x25c] sm:$0xff]
    %v141 = vld [vmem:[%s1 + $0x264] sm:$0xf]
    %v142 = vld [vmem:[%s1 + $0x268] sm:$0xff]
    %v143 = vld [vmem:[%s1 + $0x270] sm:$0xff]
    %v144 = vld [vmem:[%s1 + $0x278] sm:$0xff]
    %v145 = vld [vmem:[%s1 + $0x280] sm:$0xf]
    %v146 = vld [vmem:[%s1 + $0x284] sm:$0xff]
    %v147 = vld [vmem:[%s1 + $0x28c] sm:$0xff]
    %v148 = vld [vmem:[%s1 + $0x294] sm:$0xff]
    %v149 = vld [vmem:[%s1 + $0x29c] sm:$0xf]
    %v150 = vld [vmem:[%s1 + $0x2a0] sm:$0xff]
    %v151 = vld [vmem:[%s1 + $0x2a8] sm:$0xff]
    %v152 = vld [vmem:[%s1 + $0x2b0] sm:$0xff]
    %v153 = vld [vmem:[%s1 + $0x2b8] sm:$0xf]
    %v154 = vld [vmem:[%s1 + $0x2bc] sm:$0xff]
    %v155 = vld [vmem:[%s1 + $0x2c4] sm:$0xff]
    %v156 = vld [vmem:[%s1 + $0x2cc] sm:$0xff]
    %v157 = vld [vmem:[%s1 + $0x2d4] sm:$0xf]
    %v158 = vld [vmem:[%s1 + $0x2d8] sm:$0xff]
    %v159 = vld [vmem:[%s1 + $0x2e0] sm:$0xff]
    %v160 = vld [vmem:[%s1 + $0x2e8] sm:$0xff]
    %v161 = vld [vmem:[%s1 + $0x2f0] sm:$0xf]
    %v162 = vld [vmem:[%s1 + $0x2f4] sm:$0xff]
    %v163 = vld [vmem:[%s1 + $0x2fc] sm:$0xff]
    %v164 = vld [vmem:[%s1 + $0x304] sm:$0xff]
    %v165 = vld [vmem:[%s1 + $0x30c] sm:$0xf]
    %v166 = vld [vmem:[%s1 + $0x310] sm:$0xff]
    %v167 = vld [vmem:[%s1 + $0x318] sm:$0xff]
    %v168 = vld [vmem:[%s1 + $0x320] sm:$0xff]
    %v169 = vld [vmem:[%s1 + $0x328] sm:$0xf]
    %v170 = vld [vmem:[%s1 + $0x32c] sm:$0xff]
    %v171 = vld [vmem:[%s1 + $0x334] sm:$0xff]
    %v172 = vld [vmem:[%s1 + $0x33c] sm:$0xff]
    %v173 = vld [vmem:[%s1 + $0x344] sm:$0xf]
    %v174 = vld [vmem:[%s1 + $0x348] sm:$0xff]
    %v175 = vld [vmem:[%s1 + $0x350] sm:$0xff]
    %v176 = vld [vmem:[%s1 + $0x358] sm:$0xff]
    %v177 = vld [vmem:[%s1 + $0x360] sm:$0xf]
    %v178 = vld [vmem:[%s1 + $0x364] sm:$0xff]
    %v179 = vld [vmem:[%s1 + $0x36c] sm:$0xff]
    %v180 = vld [vmem:[%s1 + $0x374] sm:$0xff]
    %v181 = vld [vmem:[%s1 + $0x37c] sm:$0xf]
    %v182 = vld [vmem:[%s1 + $0x380] sm:$0xff]
    %v183 = vld [vmem:[%s1 + $0x388] sm:$0xff]
    %v184 = vld [vmem:[%s1 + $0x390] sm:$0xff]
    %v185 = vld [vmem:[%s1 + $0x398] sm:$0xf]
    %v186 = vld [vmem:[%s1 + $0x39c] sm:$0xff]
    %v187 = vld [vmem:[%s1 + $0x3a4] sm:$0xff]
    %v188 = vld [vmem:[%s1 + $0x3ac] sm:$0xff]
    %v189 = vld [vmem:[%s1 + $0x3b4] sm:$0xf]
    %v190 = vld [vmem:[%s1 + $0x3b8] sm:$0xff]
    %v191 = vld [vmem:[%s1 + $0x3c0] sm:$0xff]
    %v192 = vld [vmem:[%s1 + $0x3c8] sm:$0xff]
    %v193 = vld [vmem:[%s1 + $0x3d0] sm:$0xf]
    %v194 = vld [vmem:[%s1 + $0x3d4] sm:$0xff]
    %v195 = vld [vmem:[%s1 + $0x3dc] sm:$0xff]
    %v196 = vld [vmem:[%s1 + $0x3e4] sm:$0xff]
    %v197 = vld [vmem:[%s1 + $0x3ec] sm:$0xf]
    %v198 = vld [vmem:[%s1 + $0x3f0] sm:$0xff]
    %v199 = vld [vmem:[%s1 + $0x3f8] sm:$0xff]
    %v200 = vld [vmem:[%s1 + $0x400] sm:$0xff]
    %v201 = vld [vmem:[%s1 + $0x408] sm:$0xf]
    %v202 = vld [vmem:[%s1 + $0x40c] sm:$0xff]
    %v203 = vld [vmem:[%s1 + $0x414] sm:$0xff]
    %v204 = vld [vmem:[%s1 + $0x41c] sm:$0xff]
    %v205 = vld [vmem:[%s1 + $0x424] sm:$0xf]
    %v206 = vld [vmem:[%s1 + $0x428] sm:$0xff]
    %v207 = vld [vmem:[%s1 + $0x430] sm:$0xff]
    %v208 = vld [vmem:[%s1 + $0x438] sm:$0xff]
    %v209 = vld [vmem:[%s1 + $0x440] sm:$0xf]
    %v210 = vld [vmem:[%s1 + $0x444] sm:$0xff]
    %v211 = vld [vmem:[%s1 + $0x44c] sm:$0xff]
    %v212 = vld [vmem:[%s1 + $0x454] sm:$0xff]
    %v213 = vld [vmem:[%s1 + $0x45c] sm:$0xf]
    %v214 = vld [vmem:[%s1 + $0x460] sm:$0xff]
    %v215 = vld [vmem:[%s1 + $0x468] sm:$0xff]
    %v216 = vld [vmem:[%s1 + $0x470] sm:$0xff]
    %v217 = vld [vmem:[%s1 + $0x478] sm:$0xf]
    %v218 = vld [vmem:[%s1 + $0x47c] sm:$0xff]
    %v219 = vld [vmem:[%s1 + $0x484] sm:$0xff]
    %v220 = vld [vmem:[%s1 + $0x48c] sm:$0xff]
    %v221 = vld [vmem:[%s1 + $0x494] sm:$0xf]
    %v222 = vld [vmem:[%s1 + $0x498] sm:$0xff]
    %v223 = vld [vmem:[%s1 + $0x4a0] sm:$0xff]
    %v224 = vld [vmem:[%s1 + $0x4a8] sm:$0xff]
    %v225 = vld [vmem:[%s1 + $0x4b0] sm:$0xf]
    %v226 = vld [vmem:[%s1 + $0x4b4] sm:$0xff]
    %v227 = vld [vmem:[%s1 + $0x4bc] sm:$0xff]
    %v228 = vld [vmem:[%s1 + $0x4c4] sm:$0xff]
    %v229 = vld [vmem:[%s1 + $0x4cc] sm:$0xf]
    %v230 = vld [vmem:[%s1 + $0x4d0] sm:$0xff]
    %v231 = vld [vmem:[%s1 + $0x4d8] sm:$0xff]
    %v232 = vld [vmem:[%s1 + $0x4e0] sm:$0xff]
    %v233 = vld [vmem:[%s1 + $0x4e8] sm:$0xf]
    %v234 = vld [vmem:[%s1 + $0x4ec] sm:$0xff]
    %v235 = vld [vmem:[%s1 + $0x4f4] sm:$0xff]
    %v236 = vld [vmem:[%s1 + $0x4fc] sm:$0xff]
    %v237 = vld [vmem:[%s1 + $0x504] sm:$0xf]
    %v238 = vld [vmem:[%s1 + $0x508] sm:$0xff]
    %v239 = vld [vmem:[%s1 + $0x510] sm:$0xff]
    %v240 = vld [vmem:[%s1 + $0x518] sm:$0xff]
    %v241 = vld [vmem:[%s1 + $0x520] sm:$0xf]
    %v242 = vld [vmem:[%s1 + $0x524] sm:$0xff]
    %v243 = vld [vmem:[%s1 + $0x52c] sm:$0xff]
    %v244 = vld [vmem:[%s1 + $0x534] sm:$0xff]
    %v245 = vld [vmem:[%s1 + $0x53c] sm:$0xf]
    %v246 = vld [vmem:[%s1 + $0x540] sm:$0xff]
    %v247 = vld [vmem:[%s1 + $0x548] sm:$0xff]
    %v248 = vld [vmem:[%s1 + $0x550] sm:$0xff]
    %v249 = vld [vmem:[%s1 + $0x558] sm:$0xf]
    %v250 = vld [vmem:[%s1 + $0x55c] sm:$0xff]
    %v251 = vld [vmem:[%s1 + $0x564] sm:$0xff]
    %v252 = vld [vmem:[%s1 + $0x56c] sm:$0xff]
    %v253 = vld [vmem:[%s1 + $0x574] sm:$0xf]
    %v254 = vld [vmem:[%s1 + $0x578] sm:$0xff]
    %v255 = vld [vmem:[%s1 + $0x580] sm:$0xff]
    %v256 = vld [vmem:[%s1 + $0x588] sm:$0xff]
    %v257 = vld [vmem:[%s1 + $0x590] sm:$0xf]
    %v258 = vld [vmem:[%s1 + $0x594] sm:$0xff]
    %v259 = vld [vmem:[%s1 + $0x59c] sm:$0xff]
    %v260 = vld [vmem:[%s1 + $0x5a4] sm:$0xff]
    %v261 = vld [vmem:[%s1 + $0x5ac] sm:$0xf]
    %v262 = vld [vmem:[%s1 + $0x5b0] sm:$0xff]
    %v263 = vld [vmem:[%s1 + $0x5b8] sm:$0xff]
    %v264 = vld [vmem:[%s1 + $0x5c0] sm:$0xff]
    %v265 = vld [vmem:[%s1 + $0x5c8] sm:$0xf]
    %v266 = vld [vmem:[%s1 + $0x5cc] sm:$0xff]
    %v267 = vld [vmem:[%s1 + $0x5d4] sm:$0xff]
    %v268 = vld [vmem:[%s1 + $0x5dc] sm:$0xff]
    %v269 = vld [vmem:[%s1 + $0x5e4] sm:$0xf]
    %v270 = vld [vmem:[%s1 + $0x5e8] sm:$0xff]
    %v271 = vld [vmem:[%s1 + $0x5f0] sm:$0xff]
    %v272 = vld [vmem:[%s1 + $0x5f8] sm:$0xff]
    %v273 = vld [vmem:[%s1 + $0x600] sm:$0xf]
    %v274 = vld [vmem:[%s1 + $0x604] sm:$0xff]
    %v275 = vld [vmem:[%s1 + $0x60c] sm:$0xff]
    %v276 = vld [vmem:[%s1 + $0x614] sm:$0xff]
    %v277 = vld [vmem:[%s1 + $0x61c] sm:$0xf]
    %v278 = vld [vmem:[%s1 + $0x620] sm:$0xff]
    %v279 = vld [vmem:[%s1 + $0x628] sm:$0xff]
    %v280 = vld [vmem:[%s1 + $0x630] sm:$0xff]
    %v281 = vld [vmem:[%s1 + $0x638] sm:$0xf]
    %v282 = vld [vmem:[%s1 + $0x63c] sm:$0xff]
    %v283 = vld [vmem:[%s1 + $0x644] sm:$0xff]
    %v284 = vld [vmem:[%s1 + $0x64c] sm:$0xff]
    %v285 = vld [vmem:[%s1 + $0x654] sm:$0xf]
    %v286 = vld [vmem:[%s1 + $0x658] sm:$0xff]
    %v287 = vld [vmem:[%s1 + $0x660] sm:$0xff]
    %v288 = vld [vmem:[%s1 + $0x668] sm:$0xff]
    %v289 = vld [vmem:[%s1 + $0x670] sm:$0xf]
    %v290 = vld [vmem:[%s1 + $0x674] sm:$0xff]
    %v291 = vld [vmem:[%s1 + $0x67c] sm:$0xff]
    %v292 = vld [vmem:[%s1 + $0x684] sm:$0xff]
    %v293 = vld [vmem:[%s1 + $0x68c] sm:$0xf]
    %v294 = vld [vmem:[%s1 + $0x690] sm:$0xff]
    %v295 = vld [vmem:[%s1 + $0x698] sm:$0xff]
    %v296 = vld [vmem:[%s1 + $0x6a0] sm:$0xff]
    %v297 = vld [vmem:[%s1 + $0x6a8] sm:$0xf]
    %v298 = vld [vmem:[%s1 + $0x6ac] sm:$0xff]
    %v299 = vld [vmem:[%s1 + $0x6b4] sm:$0xff]
    %v300 = vld [vmem:[%s1 + $0x6bc] sm:$0xff]
    %v301 = vld [vmem:[%s1 + $0x6c4] sm:$0xf]
    %v302 = vld [vmem:[%s1 + $0x6c8] sm:$0xff]
    %v303 = vld [vmem:[%s1 + $0x6d0] sm:$0xff]
    %v304 = vld [vmem:[%s1 + $0x6d8] sm:$0xff]
    %v305 = vld [vmem:[%s1 + $0x6e0] sm:$0xf]
    %v306 = vld [vmem:[%s1 + $0x6e4] sm:$0xff]
    %v307 = vld [vmem:[%s1 + $0x6ec] sm:$0xff]
    %v308 = vld [vmem:[%s1 + $0x6f4] sm:$0xff]
    %v309 = vld [vmem:[%s1 + $0x6fc] sm:$0xf]
    %v310 = vld [vmem:[%s1 + $0x700] sm:$0xff]
    %v311 = vld [vmem:[%s1 + $0x708] sm:$0xff]
    %v312 = vld [vmem:[%s1 + $0x710] sm:$0xff]
    %v313 = vld [vmem:[%s1 + $0x718] sm:$0xf]
    %v314 = vld [vmem:[%s1 + $0x71c] sm:$0xff]
    %v315 = vld [vmem:[%s1 + $0x724] sm:$0xff]
    %v316 = vld [vmem:[%s1 + $0x72c] sm:$0xff]
    %v317 = vld [vmem:[%s1 + $0x734] sm:$0xf]
    %v318 = vld [vmem:[%s1 + $0x738] sm:$0xff]
    %v319 = vld [vmem:[%s1 + $0x740] sm:$0xff]
    %v320 = vld [vmem:[%s1 + $0x748] sm:$0xff]
    %v321 = vld [vmem:[%s1 + $0x750] sm:$0xf]
    %v322 = vld [vmem:[%s1 + $0x754] sm:$0xff]
    %v323 = vld [vmem:[%s1 + $0x75c] sm:$0xff]
    %v324 = vld [vmem:[%s1 + $0x764] sm:$0xff]
    %v325 = vld [vmem:[%s1 + $0x76c] sm:$0xf]
    %v326 = vld [vmem:[%s1 + $0x770] sm:$0xff]
    %v327 = vld [vmem:[%s1 + $0x778] sm:$0xff]
    %v328 = vld [vmem:[%s1 + $0x780] sm:$0xff]
    %v329 = vld [vmem:[%s1 + $0x788] sm:$0xf]
    %v330 = vld [vmem:[%s1 + $0x78c] sm:$0xff]
    %v331 = vld [vmem:[%s1 + $0x794] sm:$0xff]
    %v332 = vld [vmem:[%s1 + $0x79c] sm:$0xff]
    %v333 = vld [vmem:[%s1 + $0x7a4] sm:$0xf]
    %v334 = vld [vmem:[%s1 + $0x7a8] sm:$0xff]
    %v335 = vld [vmem:[%s1 + $0x7b0] sm:$0xff]
    %v336 = vld [vmem:[%s1 + $0x7b8] sm:$0xff]
    %v337 = vld [vmem:[%s1 + $0x7c0] sm:$0xf]
    %v338 = vld [vmem:[%s1 + $0x7c4] sm:$0xff]
    %v339 = vld [vmem:[%s1 + $0x7cc] sm:$0xff]
    %v340 = vld [vmem:[%s1 + $0x7d4] sm:$0xff]
    %v341 = vld [vmem:[%s1 + $0x7dc] sm:$0xf]
    %v342 = vld [vmem:[%s1 + $0x7e0] sm:$0xff]
    %v343 = vld [vmem:[%s1 + $0x7e8] sm:$0xff]
    %v344 = vld [vmem:[%s1 + $0x7f0] sm:$0xff]
    %v345 = vld [vmem:[%s1 + $0x7f8] sm:$0xf]
    %v346 = vld [vmem:[%s1 + $0x7fc] sm:$0xff]
    %v347 = vld [vmem:[%s1 + $0x804] sm:$0xff]
    %v348 = vld [vmem:[%s1 + $0x80c] sm:$0xff]
    %v349 = vld [vmem:[%s1 + $0x814] sm:$0xf]
    %v350 = vld [vmem:[%s1 + $0x818] sm:$0xff]
    %v351 = vld [vmem:[%s1 + $0x820] sm:$0xff]
    %v352 = vld [vmem:[%s1 + $0x828] sm:$0xff]
    %v353 = vld [vmem:[%s1 + $0x830] sm:$0xf]
    %v354 = vld [vmem:[%s1 + $0x834] sm:$0xff]
    %v355 = vld [vmem:[%s1 + $0x83c] sm:$0xff]
    %v356 = vld [vmem:[%s1 + $0x844] sm:$0xff]
    %v357 = vld [vmem:[%s1 + $0x84c] sm:$0xf]
    %v358 = vld [vmem:[%s1 + $0x850] sm:$0xff]
    %v359 = vld [vmem:[%s1 + $0x858] sm:$0xff]
    %v360 = vld [vmem:[%s1 + $0x860] sm:$0xff]
    %v361 = vld [vmem:[%s1 + $0x868] sm:$0xf]
    %v362 = vld [vmem:[%s1 + $0x86c] sm:$0xff]
    %v363 = vld [vmem:[%s1 + $0x874] sm:$0xff]
    %v364 = vld [vmem:[%s1 + $0x87c] sm:$0xff]
    %v365 = vld [vmem:[%s1 + $0x884] sm:$0xf]
    %v366 = vld [vmem:[%s1 + $0x888] sm:$0xff]
    %v367 = vld [vmem:[%s1 + $0x890] sm:$0xff]
    %v368 = vld [vmem:[%s1 + $0x898] sm:$0xff]
    %v369 = vld [vmem:[%s1 + $0x8a0] sm:$0xf]
    %v370 = vld [vmem:[%s1 + $0x8a4] sm:$0xff]
    %v371 = vld [vmem:[%s1 + $0x8ac] sm:$0xff]
    %v372 = vld [vmem:[%s1 + $0x8b4] sm:$0xff]
    %v373 = vld [vmem:[%s1 + $0x8bc] sm:$0xf]
    %v374 = vld [vmem:[%s1 + $0x8c0] sm:$0xff]
    %v375 = vld [vmem:[%s1 + $0x8c8] sm:$0xff]
    %v376 = vld [vmem:[%s1 + $0x8d0] sm:$0xff]
    %v377 = vld [vmem:[%s1 + $0x8d8] sm:$0xf]
    %v378 = vld [vmem:[%s1 + $0x8dc] sm:$0xff]
    %v379 = vld [vmem:[%s1 + $0x8e4] sm:$0xff]
    %v380 = vld [vmem:[%s1 + $0x8ec] sm:$0xff]
    %v381 = vld [vmem:[%s1 + $0x8f4] sm:$0xf]
    %v382 = vld [vmem:[%s1 + $0x8f8] sm:$0xff]
    %v383 = vld [vmem:[%s1 + $0x900] sm:$0xff]
    %v384 = vld [vmem:[%s1 + $0x908] sm:$0xff]
    %v385 = vld [vmem:[%s1 + $0x910] sm:$0xf]
    %v386 = vld [vmem:[%s1 + $0x914] sm:$0xff]
    %v387 = vld [vmem:[%s1 + $0x91c] sm:$0xff]
    %v388 = vld [vmem:[%s1 + $0x924] sm:$0xff]
    %v389 = vld [vmem:[%s1 + $0x92c] sm:$0xf]
    %v390 = vld [vmem:[%s1 + $0x930] sm:$0xff]
    %v391 = vld [vmem:[%s1 + $0x938] sm:$0xff]
    %v392 = vld [vmem:[%s1 + $0x940] sm:$0xff]
    %v393 = vld [vmem:[%s1 + $0x948] sm:$0xf]
    %v394 = vld [vmem:[%s1 + $0x94c] sm:$0xff]
    %v395 = vld [vmem:[%s1 + $0x954] sm:$0xff]
    %v396 = vld [vmem:[%s1 + $0x95c] sm:$0xff]
    %v397 = vld [vmem:[%s1 + $0x964] sm:$0xf]
    %v398 = vld [vmem:[%s1 + $0x968] sm:$0xff]
    %v399 = vld [vmem:[%s1 + $0x970] sm:$0xff]
    %v400 = vld [vmem:[%s1 + $0x978] sm:$0xff]
    %v401 = vld [vmem:[%s1 + $0x980] sm:$0xf]
    %v402 = vld [vmem:[%s1 + $0x984] sm:$0xff]
    %v403 = vld [vmem:[%s1 + $0x98c] sm:$0xff]
    %v404 = vld [vmem:[%s1 + $0x994] sm:$0xff]
    %v405 = vld [vmem:[%s1 + $0x99c] sm:$0xf]
    %v406 = vld [vmem:[%s1 + $0x9a0] sm:$0xff]
    %v407 = vld [vmem:[%s1 + $0x9a8] sm:$0xff]
    %v408 = vld [vmem:[%s1 + $0x9b0] sm:$0xff]
    %v409 = vld [vmem:[%s1 + $0x9b8] sm:$0xf]
    %v410 = vld [vmem:[%s1 + $0x9bc] sm:$0xff]
    %v411 = vld [vmem:[%s1 + $0x9c4] sm:$0xff]
    %v412 = vld [vmem:[%s1 + $0x9cc] sm:$0xff]
    %v413 = vld [vmem:[%s1 + $0x9d4] sm:$0xf]
    %v414 = vld [vmem:[%s1 + $0x9d8] sm:$0xff]
    %v415 = vld [vmem:[%s1 + $0x9e0] sm:$0xff]
    %v416 = vld [vmem:[%s1 + $0x9e8] sm:$0xff]
    %v417 = vld [vmem:[%s1 + $0x9f0] sm:$0xf]
    %v418 = vld [vmem:[%s1 + $0x9f4] sm:$0xff]
    %v419 = vld [vmem:[%s1 + $0x9fc] sm:$0xff]
    %v420 = vld [vmem:[%s1 + $0xa04] sm:$0xff]
    %v421 = vld [vmem:[%s1 + $0xa0c] sm:$0xf]
    %v422 = vld [vmem:[%s1 + $0xa10] sm:$0xff]
    %v423 = vld [vmem:[%s1 + $0xa18] sm:$0xff]
    %v424 = vld [vmem:[%s1 + $0xa20] sm:$0xff]
    %v425 = vld [vmem:[%s1 + $0xa28] sm:$0xf]
    %v426 = vld [vmem:[%s1 + $0xa2c] sm:$0xff]
    %v427 = vld [vmem:[%s1 + $0xa34] sm:$0xff]
    %v428 = vld [vmem:[%s1 + $0xa3c] sm:$0xff]
    %v429 = vld [vmem:[%s1 + $0xa44] sm:$0xf]
    %v430 = vld [vmem:[%s1 + $0xa48] sm:$0xff]
    %v431 = vld [vmem:[%s1 + $0xa50] sm:$0xff]
    %v432 = vld [vmem:[%s1 + $0xa58] sm:$0xff]
    %v433 = vld [vmem:[%s1 + $0xa60] sm:$0xf]
    %v434 = vld [vmem:[%s1 + $0xa64] sm:$0xff]
    %v435 = vld [vmem:[%s1 + $0xa6c] sm:$0xff]
    %v436 = vld [vmem:[%s1 + $0xa74] sm:$0xff]
    %v437 = vld [vmem:[%s1 + $0xa7c] sm:$0xf]
    %v438 = vld [vmem:[%s1 + $0xa80] sm:$0xff]
    %v439 = vld [vmem:[%s1 + $0xa88] sm:$0xff]
    %v440 = vld [vmem:[%s1 + $0xa90] sm:$0xff]
    %v441 = vld [vmem:[%s1 + $0xa98] sm:$0xf]
    %v442 = vld [vmem:[%s1 + $0xa9c] sm:$0xff]
    %v443 = vld [vmem:[%s1 + $0xaa4] sm:$0xff]
    %v444 = vld [vmem:[%s1 + $0xaac] sm:$0xff]
    %v445 = vld [vmem:[%s1 + $0xab4] sm:$0xf]
    %v446 = vld [vmem:[%s1 + $0xab8] sm:$0xff]
    %v447 = vld [vmem:[%s1 + $0xac0] sm:$0xff]
    %v448 = vld [vmem:[%s1 + $0xac8] sm:$0xff]
    %v449 = vld [vmem:[%s1 + $0xad0] sm:$0xf]
    %v450 = vld [vmem:[%s1 + $0xad4] sm:$0xff]
    %v451 = vld [vmem:[%s1 + $0xadc] sm:$0xff]
    %v452 = vld [vmem:[%s1 + $0xae4] sm:$0xff]
    %v453 = vld [vmem:[%s1 + $0xaec] sm:$0xf]
    %v454 = vld [vmem:[%s2] sm:$0x7f]
    %v456 = vlaneseq
    %v457 = vshrl.u32 %v456, 7
    %v458 = vsub.s32 0, %v457
    %v459 = vrot.slane %v454, %v458
    %v460 = vlaneseq
    %v461 = vshrl.u32 %v460, 7
    %v462 = vsub.s32 1, %v461
    %v463 = vrot.slane %v454, %v462
    %v464 = vlaneseq
    %v465 = vshrl.u32 %v464, 7
    %v466 = vsub.s32 2, %v465
    %v467 = vrot.slane %v454, %v466
    %v468 = vlaneseq
    %v469 = vshrl.u32 %v468, 7
    %v470 = vsub.s32 3, %v469
    %v471 = vrot.slane %v454, %v470
    %v472 = vlaneseq
    %v473 = vshrl.u32 %v472, 7
    %v474 = vsub.s32 4, %v473
    %v475 = vrot.slane %v454, %v474
    %v476 = vlaneseq
    %v477 = vshrl.u32 %v476, 7
    %v478 = vsub.s32 5, %v477
    %v479 = vrot.slane %v454, %v478
    %v480 = vlaneseq
    %v481 = vshrl.u32 %v480, 7
    %v482 = vsub.s32 6, %v481
    %v483 = vrot.slane %v454, %v482
    %v891 = vunpack.c.l.b16 %v54
    %v892 = vunpack.c.h.b16 %v54
    %v893 = vunpack.c.l.b16 %v55
    %v894 = vunpack.c.h.b16 %v55
    %v895 = vunpack.c.l.b16 %v56
    %v896 = vunpack.c.h.b16 %v56
    %v897 = vunpack.c.l.b16 %v57
    %v898 = vunpack.c.l.b16 %v58
    %v899 = vunpack.c.h.b16 %v58
    %v900 = vunpack.c.l.b16 %v59
    %v901 = vunpack.c.h.b16 %v59
    %v902 = vunpack.c.l.b16 %v60
    %v903 = vunpack.c.h.b16 %v60
    %v904 = vunpack.c.l.b16 %v61
    %v905 = vunpack.c.l.b16 %v62
    %v906 = vunpack.c.h.b16 %v62
    %v907 = vunpack.c.l.b16 %v63
    %v908 = vunpack.c.h.b16 %v63
    %v909 = vunpack.c.l.b16 %v64
    %v910 = vunpack.c.h.b16 %v64
    %v911 = vunpack.c.l.b16 %v65
    %v912 = vunpack.c.l.b16 %v66
    %v913 = vunpack.c.h.b16 %v66
    %v914 = vunpack.c.l.b16 %v67
    %v915 = vunpack.c.h.b16 %v67
    %v916 = vunpack.c.l.b16 %v68
    %v917 = vunpack.c.h.b16 %v68
    %v918 = vunpack.c.l.b16 %v69
    %v919 = vunpack.c.l.b16 %v70
    %v920 = vunpack.c.h.b16 %v70
    %v921 = vunpack.c.l.b16 %v71
    %v922 = vunpack.c.h.b16 %v71
    %v923 = vunpack.c.l.b16 %v72
    %v924 = vunpack.c.h.b16 %v72
    %v925 = vunpack.c.l.b16 %v73
    %v926 = vunpack.c.l.b16 %v74
    %v927 = vunpack.c.h.b16 %v74
    %v928 = vunpack.c.l.b16 %v75
    %v929 = vunpack.c.h.b16 %v75
    %v930 = vunpack.c.l.b16 %v76
    %v931 = vunpack.c.h.b16 %v76
    %v932 = vunpack.c.l.b16 %v77
    %v933 = vunpack.c.l.b16 %v78
    %v934 = vunpack.c.h.b16 %v78
    %v935 = vunpack.c.l.b16 %v79
    %v936 = vunpack.c.h.b16 %v79
    %v937 = vunpack.c.l.b16 %v80
    %v938 = vunpack.c.h.b16 %v80
    %v939 = vunpack.c.l.b16 %v81
    %v940 = vunpack.c.l.b16 %v82
    %v941 = vunpack.c.h.b16 %v82
    %v942 = vunpack.c.l.b16 %v83
    %v943 = vunpack.c.h.b16 %v83
    %v944 = vunpack.c.l.b16 %v84
    %v945 = vunpack.c.h.b16 %v84
    %v946 = vunpack.c.l.b16 %v85
    %v947 = vunpack.c.l.b16 %v86
    %v948 = vunpack.c.h.b16 %v86
    %v949 = vunpack.c.l.b16 %v87
    %v950 = vunpack.c.h.b16 %v87
    %v951 = vunpack.c.l.b16 %v88
    %v952 = vunpack.c.h.b16 %v88
    %v953 = vunpack.c.l.b16 %v89
    %v954 = vunpack.c.l.b16 %v90
    %v955 = vunpack.c.h.b16 %v90
    %v956 = vunpack.c.l.b16 %v91
    %v957 = vunpack.c.h.b16 %v91
    %v958 = vunpack.c.l.b16 %v92
    %v959 = vunpack.c.h.b16 %v92
    %v960 = vunpack.c.l.b16 %v93
    %v961 = vunpack.c.l.b16 %v94
    %v962 = vunpack.c.h.b16 %v94
    %v963 = vunpack.c.l.b16 %v95
    %v964 = vunpack.c.h.b16 %v95
    %v965 = vunpack.c.l.b16 %v96
    %v966 = vunpack.c.h.b16 %v96
    %v967 = vunpack.c.l.b16 %v97
    %v968 = vunpack.c.l.b16 %v98
    %v969 = vunpack.c.h.b16 %v98
    %v970 = vunpack.c.l.b16 %v99
    %v971 = vunpack.c.h.b16 %v99
    %v972 = vunpack.c.l.b16 %v100
    %v973 = vunpack.c.h.b16 %v100
    %v974 = vunpack.c.l.b16 %v101
    %v975 = vunpack.c.l.b16 %v102
    %v976 = vunpack.c.h.b16 %v102
    %v977 = vunpack.c.l.b16 %v103
    %v978 = vunpack.c.h.b16 %v103
    %v979 = vunpack.c.l.b16 %v104
    %v980 = vunpack.c.h.b16 %v104
    %v981 = vunpack.c.l.b16 %v105
    %v982 = vunpack.c.l.b16 %v106
    %v983 = vunpack.c.h.b16 %v106
    %v984 = vunpack.c.l.b16 %v107
    %v985 = vunpack.c.h.b16 %v107
    %v986 = vunpack.c.l.b16 %v108
    %v987 = vunpack.c.h.b16 %v108
    %v988 = vunpack.c.l.b16 %v109
    %v989 = vunpack.c.l.b16 %v110
    %v990 = vunpack.c.h.b16 %v110
    %v991 = vunpack.c.l.b16 %v111
    %v992 = vunpack.c.h.b16 %v111
    %v993 = vunpack.c.l.b16 %v112
    %v994 = vunpack.c.h.b16 %v112
    %v995 = vunpack.c.l.b16 %v113
    %v996 = vunpack.c.l.b16 %v114
    %v997 = vunpack.c.h.b16 %v114
    %v998 = vunpack.c.l.b16 %v115
    %v999 = vunpack.c.h.b16 %v115
    %v1000 = vunpack.c.l.b16 %v116
    %v1001 = vunpack.c.h.b16 %v116
    %v1002 = vunpack.c.l.b16 %v117
    %v1003 = vunpack.c.l.b16 %v118
    %v1004 = vunpack.c.h.b16 %v118
    %v1005 = vunpack.c.l.b16 %v119
    %v1006 = vunpack.c.h.b16 %v119
    %v1007 = vunpack.c.l.b16 %v120
    %v1008 = vunpack.c.h.b16 %v120
    %v1009 = vunpack.c.l.b16 %v121
    %v1010 = vunpack.c.l.b16 %v122
    %v1011 = vunpack.c.h.b16 %v122
    %v1012 = vunpack.c.l.b16 %v123
    %v1013 = vunpack.c.h.b16 %v123
    %v1014 = vunpack.c.l.b16 %v124
    %v1015 = vunpack.c.h.b16 %v124
    %v1016 = vunpack.c.l.b16 %v125
    %v1017 = vunpack.c.l.b16 %v126
    %v1018 = vunpack.c.h.b16 %v126
    %v1019 = vunpack.c.l.b16 %v127
    %v1020 = vunpack.c.h.b16 %v127
    %v1021 = vunpack.c.l.b16 %v128
    %v1022 = vunpack.c.h.b16 %v128
    %v1023 = vunpack.c.l.b16 %v129
    %v1024 = vunpack.c.l.b16 %v130
    %v1025 = vunpack.c.h.b16 %v130
    %v1026 = vunpack.c.l.b16 %v131
    %v1027 = vunpack.c.h.b16 %v131
    %v1028 = vunpack.c.l.b16 %v132
    %v1029 = vunpack.c.h.b16 %v132
    %v1030 = vunpack.c.l.b16 %v133
    %v1031 = vunpack.c.l.b16 %v134
    %v1032 = vunpack.c.h.b16 %v134
    %v1033 = vunpack.c.l.b16 %v135
    %v1034 = vunpack.c.h.b16 %v135
    %v1035 = vunpack.c.l.b16 %v136
    %v1036 = vunpack.c.h.b16 %v136
    %v1037 = vunpack.c.l.b16 %v137
    %v1038 = vunpack.c.l.b16 %v138
    %v1039 = vunpack.c.h.b16 %v138
    %v1040 = vunpack.c.l.b16 %v139
    %v1041 = vunpack.c.h.b16 %v139
    %v1042 = vunpack.c.l.b16 %v140
    %v1043 = vunpack.c.h.b16 %v140
    %v1044 = vunpack.c.l.b16 %v141
    %v1045 = vunpack.c.l.b16 %v142
    %v1046 = vunpack.c.h.b16 %v142
    %v1047 = vunpack.c.l.b16 %v143
    %v1048 = vunpack.c.h.b16 %v143
    %v1049 = vunpack.c.l.b16 %v144
    %v1050 = vunpack.c.h.b16 %v144
    %v1051 = vunpack.c.l.b16 %v145
    %v1052 = vunpack.c.l.b16 %v146
    %v1053 = vunpack.c.h.b16 %v146
    %v1054 = vunpack.c.l.b16 %v147
    %v1055 = vunpack.c.h.b16 %v147
    %v1056 = vunpack.c.l.b16 %v148
    %v1057 = vunpack.c.h.b16 %v148
    %v1058 = vunpack.c.l.b16 %v149
    %v1059 = vunpack.c.l.b16 %v150
    %v1060 = vunpack.c.h.b16 %v150
    %v1061 = vunpack.c.l.b16 %v151
    %v1062 = vunpack.c.h.b16 %v151
    %v1063 = vunpack.c.l.b16 %v152
    %v1064 = vunpack.c.h.b16 %v152
    %v1065 = vunpack.c.l.b16 %v153
    %v1066 = vunpack.c.l.b16 %v154
    %v1067 = vunpack.c.h.b16 %v154
    %v1068 = vunpack.c.l.b16 %v155
    %v1069 = vunpack.c.h.b16 %v155
    %v1070 = vunpack.c.l.b16 %v156
    %v1071 = vunpack.c.h.b16 %v156
    %v1072 = vunpack.c.l.b16 %v157
    %v1073 = vunpack.c.l.b16 %v158
    %v1074 = vunpack.c.h.b16 %v158
    %v1075 = vunpack.c.l.b16 %v159
    %v1076 = vunpack.c.h.b16 %v159
    %v1077 = vunpack.c.l.b16 %v160
    %v1078 = vunpack.c.h.b16 %v160
    %v1079 = vunpack.c.l.b16 %v161
    %v1080 = vunpack.c.l.b16 %v162
    %v1081 = vunpack.c.h.b16 %v162
    %v1082 = vunpack.c.l.b16 %v163
    %v1083 = vunpack.c.h.b16 %v163
    %v1084 = vunpack.c.l.b16 %v164
    %v1085 = vunpack.c.h.b16 %v164
    %v1086 = vunpack.c.l.b16 %v165
    %v1087 = vunpack.c.l.b16 %v166
    %v1088 = vunpack.c.h.b16 %v166
    %v1089 = vunpack.c.l.b16 %v167
    %v1090 = vunpack.c.h.b16 %v167
    %v1091 = vunpack.c.l.b16 %v168
    %v1092 = vunpack.c.h.b16 %v168
    %v1093 = vunpack.c.l.b16 %v169
    %v1094 = vunpack.c.l.b16 %v170
    %v1095 = vunpack.c.h.b16 %v170
    %v1096 = vunpack.c.l.b16 %v171
    %v1097 = vunpack.c.h.b16 %v171
    %v1098 = vunpack.c.l.b16 %v172
    %v1099 = vunpack.c.h.b16 %v172
    %v1100 = vunpack.c.l.b16 %v173
    %v1101 = vunpack.c.l.b16 %v174
    %v1102 = vunpack.c.h.b16 %v174
    %v1103 = vunpack.c.l.b16 %v175
    %v1104 = vunpack.c.h.b16 %v175
    %v1105 = vunpack.c.l.b16 %v176
    %v1106 = vunpack.c.h.b16 %v176
    %v1107 = vunpack.c.l.b16 %v177
    %v1108 = vunpack.c.l.b16 %v178
    %v1109 = vunpack.c.h.b16 %v178
    %v1110 = vunpack.c.l.b16 %v179
    %v1111 = vunpack.c.h.b16 %v179
    %v1112 = vunpack.c.l.b16 %v180
    %v1113 = vunpack.c.h.b16 %v180
    %v1114 = vunpack.c.l.b16 %v181
    %v1115 = vunpack.c.l.b16 %v182
    %v1116 = vunpack.c.h.b16 %v182
    %v1117 = vunpack.c.l.b16 %v183
    %v1118 = vunpack.c.h.b16 %v183
    %v1119 = vunpack.c.l.b16 %v184
    %v1120 = vunpack.c.h.b16 %v184
    %v1121 = vunpack.c.l.b16 %v185
    %v1122 = vunpack.c.l.b16 %v186
    %v1123 = vunpack.c.h.b16 %v186
    %v1124 = vunpack.c.l.b16 %v187
    %v1125 = vunpack.c.h.b16 %v187
    %v1126 = vunpack.c.l.b16 %v188
    %v1127 = vunpack.c.h.b16 %v188
    %v1128 = vunpack.c.l.b16 %v189
    %v1129 = vunpack.c.l.b16 %v190
    %v1130 = vunpack.c.h.b16 %v190
    %v1131 = vunpack.c.l.b16 %v191
    %v1132 = vunpack.c.h.b16 %v191
    %v1133 = vunpack.c.l.b16 %v192
    %v1134 = vunpack.c.h.b16 %v192
    %v1135 = vunpack.c.l.b16 %v193
    %v1136 = vunpack.c.l.b16 %v194
    %v1137 = vunpack.c.h.b16 %v194
    %v1138 = vunpack.c.l.b16 %v195
    %v1139 = vunpack.c.h.b16 %v195
    %v1140 = vunpack.c.l.b16 %v196
    %v1141 = vunpack.c.h.b16 %v196
    %v1142 = vunpack.c.l.b16 %v197
    %v1143 = vunpack.c.l.b16 %v198
    %v1144 = vunpack.c.h.b16 %v198
    %v1145 = vunpack.c.l.b16 %v199
    %v1146 = vunpack.c.h.b16 %v199
    %v1147 = vunpack.c.l.b16 %v200
    %v1148 = vunpack.c.h.b16 %v200
    %v1149 = vunpack.c.l.b16 %v201
    %v1150 = vunpack.c.l.b16 %v202
    %v1151 = vunpack.c.h.b16 %v202
    %v1152 = vunpack.c.l.b16 %v203
    %v1153 = vunpack.c.h.b16 %v203
    %v1154 = vunpack.c.l.b16 %v204
    %v1155 = vunpack.c.h.b16 %v204
    %v1156 = vunpack.c.l.b16 %v205
    %v1157 = vunpack.c.l.b16 %v206
    %v1158 = vunpack.c.h.b16 %v206
    %v1159 = vunpack.c.l.b16 %v207
    %v1160 = vunpack.c.h.b16 %v207
    %v1161 = vunpack.c.l.b16 %v208
    %v1162 = vunpack.c.h.b16 %v208
    %v1163 = vunpack.c.l.b16 %v209
    %v1164 = vunpack.c.l.b16 %v210
    %v1165 = vunpack.c.h.b16 %v210
    %v1166 = vunpack.c.l.b16 %v211
    %v1167 = vunpack.c.h.b16 %v211
    %v1168 = vunpack.c.l.b16 %v212
    %v1169 = vunpack.c.h.b16 %v212
    %v1170 = vunpack.c.l.b16 %v213
    %v1171 = vunpack.c.l.b16 %v214
    %v1172 = vunpack.c.h.b16 %v214
    %v1173 = vunpack.c.l.b16 %v215
    %v1174 = vunpack.c.h.b16 %v215
    %v1175 = vunpack.c.l.b16 %v216
    %v1176 = vunpack.c.h.b16 %v216
    %v1177 = vunpack.c.l.b16 %v217
    %v1178 = vunpack.c.l.b16 %v218
    %v1179 = vunpack.c.h.b16 %v218
    %v1180 = vunpack.c.l.b16 %v219
    %v1181 = vunpack.c.h.b16 %v219
    %v1182 = vunpack.c.l.b16 %v220
    %v1183 = vunpack.c.h.b16 %v220
    %v1184 = vunpack.c.l.b16 %v221
    %v1185 = vunpack.c.l.b16 %v222
    %v1186 = vunpack.c.h.b16 %v222
    %v1187 = vunpack.c.l.b16 %v223
    %v1188 = vunpack.c.h.b16 %v223
    %v1189 = vunpack.c.l.b16 %v224
    %v1190 = vunpack.c.h.b16 %v224
    %v1191 = vunpack.c.l.b16 %v225
    %v1192 = vunpack.c.l.b16 %v226
    %v1193 = vunpack.c.h.b16 %v226
    %v1194 = vunpack.c.l.b16 %v227
    %v1195 = vunpack.c.h.b16 %v227
    %v1196 = vunpack.c.l.b16 %v228
    %v1197 = vunpack.c.h.b16 %v228
    %v1198 = vunpack.c.l.b16 %v229
    %v1199 = vunpack.c.l.b16 %v230
    %v1200 = vunpack.c.h.b16 %v230
    %v1201 = vunpack.c.l.b16 %v231
    %v1202 = vunpack.c.h.b16 %v231
    %v1203 = vunpack.c.l.b16 %v232
    %v1204 = vunpack.c.h.b16 %v232
    %v1205 = vunpack.c.l.b16 %v233
    %v1206 = vunpack.c.l.b16 %v234
    %v1207 = vunpack.c.h.b16 %v234
    %v1208 = vunpack.c.l.b16 %v235
    %v1209 = vunpack.c.h.b16 %v235
    %v1210 = vunpack.c.l.b16 %v236
    %v1211 = vunpack.c.h.b16 %v236
    %v1212 = vunpack.c.l.b16 %v237
    %v1213 = vunpack.c.l.b16 %v238
    %v1214 = vunpack.c.h.b16 %v238
    %v1215 = vunpack.c.l.b16 %v239
    %v1216 = vunpack.c.h.b16 %v239
    %v1217 = vunpack.c.l.b16 %v240
    %v1218 = vunpack.c.h.b16 %v240
    %v1219 = vunpack.c.l.b16 %v241
    %v1220 = vunpack.c.l.b16 %v242
    %v1221 = vunpack.c.h.b16 %v242
    %v1222 = vunpack.c.l.b16 %v243
    %v1223 = vunpack.c.h.b16 %v243
    %v1224 = vunpack.c.l.b16 %v244
    %v1225 = vunpack.c.h.b16 %v244
    %v1226 = vunpack.c.l.b16 %v245
    %v1227 = vunpack.c.l.b16 %v246
    %v1228 = vunpack.c.h.b16 %v246
    %v1229 = vunpack.c.l.b16 %v247
    %v1230 = vunpack.c.h.b16 %v247
    %v1231 = vunpack.c.l.b16 %v248
    %v1232 = vunpack.c.h.b16 %v248
    %v1233 = vunpack.c.l.b16 %v249
    %v1234 = vunpack.c.l.b16 %v250
    %v1235 = vunpack.c.h.b16 %v250
    %v1236 = vunpack.c.l.b16 %v251
    %v1237 = vunpack.c.h.b16 %v251
    %v1238 = vunpack.c.l.b16 %v252
    %v1239 = vunpack.c.h.b16 %v252
    %v1240 = vunpack.c.l.b16 %v253
    %v1241 = vunpack.c.l.b16 %v254
    %v1242 = vunpack.c.h.b16 %v254
    %v1243 = vunpack.c.l.b16 %v255
    %v1244 = vunpack.c.h.b16 %v255
    %v1245 = vunpack.c.l.b16 %v256
    %v1246 = vunpack.c.h.b16 %v256
    %v1247 = vunpack.c.l.b16 %v257
    %v1248 = vunpack.c.l.b16 %v258
    %v1249 = vunpack.c.h.b16 %v258
    %v1250 = vunpack.c.l.b16 %v259
    %v1251 = vunpack.c.h.b16 %v259
    %v1252 = vunpack.c.l.b16 %v260
    %v1253 = vunpack.c.h.b16 %v260
    %v1254 = vunpack.c.l.b16 %v261
    %v1255 = vunpack.c.l.b16 %v262
    %v1256 = vunpack.c.h.b16 %v262
    %v1257 = vunpack.c.l.b16 %v263
    %v1258 = vunpack.c.h.b16 %v263
    %v1259 = vunpack.c.l.b16 %v264
    %v1260 = vunpack.c.h.b16 %v264
    %v1261 = vunpack.c.l.b16 %v265
    %v1262 = vunpack.c.l.b16 %v266
    %v1263 = vunpack.c.h.b16 %v266
    %v1264 = vunpack.c.l.b16 %v267
    %v1265 = vunpack.c.h.b16 %v267
    %v1266 = vunpack.c.l.b16 %v268
    %v1267 = vunpack.c.h.b16 %v268
    %v1268 = vunpack.c.l.b16 %v269
    %v1269 = vunpack.c.l.b16 %v270
    %v1270 = vunpack.c.h.b16 %v270
    %v1271 = vunpack.c.l.b16 %v271
    %v1272 = vunpack.c.h.b16 %v271
    %v1273 = vunpack.c.l.b16 %v272
    %v1274 = vunpack.c.h.b16 %v272
    %v1275 = vunpack.c.l.b16 %v273
    %v1276 = vunpack.c.l.b16 %v274
    %v1277 = vunpack.c.h.b16 %v274
    %v1278 = vunpack.c.l.b16 %v275
    %v1279 = vunpack.c.h.b16 %v275
    %v1280 = vunpack.c.l.b16 %v276
    %v1281 = vunpack.c.h.b16 %v276
    %v1282 = vunpack.c.l.b16 %v277
    %v1283 = vunpack.c.l.b16 %v278
    %v1284 = vunpack.c.h.b16 %v278
    %v1285 = vunpack.c.l.b16 %v279
    %v1286 = vunpack.c.h.b16 %v279
    %v1287 = vunpack.c.l.b16 %v280
    %v1288 = vunpack.c.h.b16 %v280
    %v1289 = vunpack.c.l.b16 %v281
    %v1290 = vunpack.c.l.b16 %v282
    %v1291 = vunpack.c.h.b16 %v282
    %v1292 = vunpack.c.l.b16 %v283
    %v1293 = vunpack.c.h.b16 %v283
    %v1294 = vunpack.c.l.b16 %v284
    %v1295 = vunpack.c.h.b16 %v284
    %v1296 = vunpack.c.l.b16 %v285
    %v1297 = vunpack.c.l.b16 %v286
    %v1298 = vunpack.c.h.b16 %v286
    %v1299 = vunpack.c.l.b16 %v287
    %v1300 = vunpack.c.h.b16 %v287
    %v1301 = vunpack.c.l.b16 %v288
    %v1302 = vunpack.c.h.b16 %v288
    %v1303 = vunpack.c.l.b16 %v289
    %v1304 = vunpack.c.l.b16 %v290
    %v1305 = vunpack.c.h.b16 %v290
    %v1306 = vunpack.c.l.b16 %v291
    %v1307 = vunpack.c.h.b16 %v291
    %v1308 = vunpack.c.l.b16 %v292
    %v1309 = vunpack.c.h.b16 %v292
    %v1310 = vunpack.c.l.b16 %v293
    %v1311 = vunpack.c.l.b16 %v294
    %v1312 = vunpack.c.h.b16 %v294
    %v1313 = vunpack.c.l.b16 %v295
    %v1314 = vunpack.c.h.b16 %v295
    %v1315 = vunpack.c.l.b16 %v296
    %v1316 = vunpack.c.h.b16 %v296
    %v1317 = vunpack.c.l.b16 %v297
    %v1318 = vunpack.c.l.b16 %v298
    %v1319 = vunpack.c.h.b16 %v298
    %v1320 = vunpack.c.l.b16 %v299
    %v1321 = vunpack.c.h.b16 %v299
    %v1322 = vunpack.c.l.b16 %v300
    %v1323 = vunpack.c.h.b16 %v300
    %v1324 = vunpack.c.l.b16 %v301
    %v1325 = vunpack.c.l.b16 %v302
    %v1326 = vunpack.c.h.b16 %v302
    %v1327 = vunpack.c.l.b16 %v303
    %v1328 = vunpack.c.h.b16 %v303
    %v1329 = vunpack.c.l.b16 %v304
    %v1330 = vunpack.c.h.b16 %v304
    %v1331 = vunpack.c.l.b16 %v305
    %v1332 = vunpack.c.l.b16 %v306
    %v1333 = vunpack.c.h.b16 %v306
    %v1334 = vunpack.c.l.b16 %v307
    %v1335 = vunpack.c.h.b16 %v307
    %v1336 = vunpack.c.l.b16 %v308
    %v1337 = vunpack.c.h.b16 %v308
    %v1338 = vunpack.c.l.b16 %v309
    %v1339 = vunpack.c.l.b16 %v310
    %v1340 = vunpack.c.h.b16 %v310
    %v1341 = vunpack.c.l.b16 %v311
    %v1342 = vunpack.c.h.b16 %v311
    %v1343 = vunpack.c.l.b16 %v312
    %v1344 = vunpack.c.h.b16 %v312
    %v1345 = vunpack.c.l.b16 %v313
    %v1346 = vunpack.c.l.b16 %v314
    %v1347 = vunpack.c.h.b16 %v314
    %v1348 = vunpack.c.l.b16 %v315
    %v1349 = vunpack.c.h.b16 %v315
    %v1350 = vunpack.c.l.b16 %v316
    %v1351 = vunpack.c.h.b16 %v316
    %v1352 = vunpack.c.l.b16 %v317
    %v1353 = vunpack.c.l.b16 %v318
    %v1354 = vunpack.c.h.b16 %v318
    %v1355 = vunpack.c.l.b16 %v319
    %v1356 = vunpack.c.h.b16 %v319
    %v1357 = vunpack.c.l.b16 %v320
    %v1358 = vunpack.c.h.b16 %v320
    %v1359 = vunpack.c.l.b16 %v321
    %v1360 = vunpack.c.l.b16 %v322
    %v1361 = vunpack.c.h.b16 %v322
    %v1362 = vunpack.c.l.b16 %v323
    %v1363 = vunpack.c.h.b16 %v323
    %v1364 = vunpack.c.l.b16 %v324
    %v1365 = vunpack.c.h.b16 %v324
    %v1366 = vunpack.c.l.b16 %v325
    %v1367 = vunpack.c.l.b16 %v326
    %v1368 = vunpack.c.h.b16 %v326
    %v1369 = vunpack.c.l.b16 %v327
    %v1370 = vunpack.c.h.b16 %v327
    %v1371 = vunpack.c.l.b16 %v328
    %v1372 = vunpack.c.h.b16 %v328
    %v1373 = vunpack.c.l.b16 %v329
    %v1374 = vunpack.c.l.b16 %v330
    %v1375 = vunpack.c.h.b16 %v330
    %v1376 = vunpack.c.l.b16 %v331
    %v1377 = vunpack.c.h.b16 %v331
    %v1378 = vunpack.c.l.b16 %v332
    %v1379 = vunpack.c.h.b16 %v332
    %v1380 = vunpack.c.l.b16 %v333
    %v1381 = vunpack.c.l.b16 %v334
    %v1382 = vunpack.c.h.b16 %v334
    %v1383 = vunpack.c.l.b16 %v335
    %v1384 = vunpack.c.h.b16 %v335
    %v1385 = vunpack.c.l.b16 %v336
    %v1386 = vunpack.c.h.b16 %v336
    %v1387 = vunpack.c.l.b16 %v337
    %v1388 = vunpack.c.l.b16 %v338
    %v1389 = vunpack.c.h.b16 %v338
    %v1390 = vunpack.c.l.b16 %v339
    %v1391 = vunpack.c.h.b16 %v339
    %v1392 = vunpack.c.l.b16 %v340
    %v1393 = vunpack.c.h.b16 %v340
    %v1394 = vunpack.c.l.b16 %v341
    %v1395 = vunpack.c.l.b16 %v342
    %v1396 = vunpack.c.h.b16 %v342
    %v1397 = vunpack.c.l.b16 %v343
    %v1398 = vunpack.c.h.b16 %v343
    %v1399 = vunpack.c.l.b16 %v344
    %v1400 = vunpack.c.h.b16 %v344
    %v1401 = vunpack.c.l.b16 %v345
    %v1402 = vunpack.c.l.b16 %v346
    %v1403 = vunpack.c.h.b16 %v346
    %v1404 = vunpack.c.l.b16 %v347
    %v1405 = vunpack.c.h.b16 %v347
    %v1406 = vunpack.c.l.b16 %v348
    %v1407 = vunpack.c.h.b16 %v348
    %v1408 = vunpack.c.l.b16 %v349
    %v1409 = vunpack.c.l.b16 %v350
    %v1410 = vunpack.c.h.b16 %v350
    %v1411 = vunpack.c.l.b16 %v351
    %v1412 = vunpack.c.h.b16 %v351
    %v1413 = vunpack.c.l.b16 %v352
    %v1414 = vunpack.c.h.b16 %v352
    %v1415 = vunpack.c.l.b16 %v353
    %v1416 = vunpack.c.l.b16 %v354
    %v1417 = vunpack.c.h.b16 %v354
    %v1418 = vunpack.c.l.b16 %v355
    %v1419 = vunpack.c.h.b16 %v355
    %v1420 = vunpack.c.l.b16 %v356
    %v1421 = vunpack.c.h.b16 %v356
    %v1422 = vunpack.c.l.b16 %v357
    %v1423 = vunpack.c.l.b16 %v358
    %v1424 = vunpack.c.h.b16 %v358
    %v1425 = vunpack.c.l.b16 %v359
    %v1426 = vunpack.c.h.b16 %v359
    %v1427 = vunpack.c.l.b16 %v360
    %v1428 = vunpack.c.h.b16 %v360
    %v1429 = vunpack.c.l.b16 %v361
    %v1430 = vunpack.c.l.b16 %v362
    %v1431 = vunpack.c.h.b16 %v362
    %v1432 = vunpack.c.l.b16 %v363
    %v1433 = vunpack.c.h.b16 %v363
    %v1434 = vunpack.c.l.b16 %v364
    %v1435 = vunpack.c.h.b16 %v364
    %v1436 = vunpack.c.l.b16 %v365
    %v1437 = vunpack.c.l.b16 %v366
    %v1438 = vunpack.c.h.b16 %v366
    %v1439 = vunpack.c.l.b16 %v367
    %v1440 = vunpack.c.h.b16 %v367
    %v1441 = vunpack.c.l.b16 %v368
    %v1442 = vunpack.c.h.b16 %v368
    %v1443 = vunpack.c.l.b16 %v369
    %v1444 = vunpack.c.l.b16 %v370
    %v1445 = vunpack.c.h.b16 %v370
    %v1446 = vunpack.c.l.b16 %v371
    %v1447 = vunpack.c.h.b16 %v371
    %v1448 = vunpack.c.l.b16 %v372
    %v1449 = vunpack.c.h.b16 %v372
    %v1450 = vunpack.c.l.b16 %v373
    %v1451 = vunpack.c.l.b16 %v374
    %v1452 = vunpack.c.h.b16 %v374
    %v1453 = vunpack.c.l.b16 %v375
    %v1454 = vunpack.c.h.b16 %v375
    %v1455 = vunpack.c.l.b16 %v376
    %v1456 = vunpack.c.h.b16 %v376
    %v1457 = vunpack.c.l.b16 %v377
    %v1458 = vunpack.c.l.b16 %v378
    %v1459 = vunpack.c.h.b16 %v378
    %v1460 = vunpack.c.l.b16 %v379
    %v1461 = vunpack.c.h.b16 %v379
    %v1462 = vunpack.c.l.b16 %v380
    %v1463 = vunpack.c.h.b16 %v380
    %v1464 = vunpack.c.l.b16 %v381
    %v1465 = vunpack.c.l.b16 %v382
    %v1466 = vunpack.c.h.b16 %v382
    %v1467 = vunpack.c.l.b16 %v383
    %v1468 = vunpack.c.h.b16 %v383
    %v1469 = vunpack.c.l.b16 %v384
    %v1470 = vunpack.c.h.b16 %v384
    %v1471 = vunpack.c.l.b16 %v385
    %v1472 = vunpack.c.l.b16 %v386
    %v1473 = vunpack.c.h.b16 %v386
    %v1474 = vunpack.c.l.b16 %v387
    %v1475 = vunpack.c.h.b16 %v387
    %v1476 = vunpack.c.l.b16 %v388
    %v1477 = vunpack.c.h.b16 %v388
    %v1478 = vunpack.c.l.b16 %v389
    %v1479 = vunpack.c.l.b16 %v390
    %v1480 = vunpack.c.h.b16 %v390
    %v1481 = vunpack.c.l.b16 %v391
    %v1482 = vunpack.c.h.b16 %v391
    %v1483 = vunpack.c.l.b16 %v392
    %v1484 = vunpack.c.h.b16 %v392
    %v1485 = vunpack.c.l.b16 %v393
    %v1486 = vunpack.c.l.b16 %v394
    %v1487 = vunpack.c.h.b16 %v394
    %v1488 = vunpack.c.l.b16 %v395
    %v1489 = vunpack.c.h.b16 %v395
    %v1490 = vunpack.c.l.b16 %v396
    %v1491 = vunpack.c.h.b16 %v396
    %v1492 = vunpack.c.l.b16 %v397
    %v1493 = vunpack.c.l.b16 %v398
    %v1494 = vunpack.c.h.b16 %v398
    %v1495 = vunpack.c.l.b16 %v399
    %v1496 = vunpack.c.h.b16 %v399
    %v1497 = vunpack.c.l.b16 %v400
    %v1498 = vunpack.c.h.b16 %v400
    %v1499 = vunpack.c.l.b16 %v401
    %v1500 = vunpack.c.l.b16 %v402
    %v1501 = vunpack.c.h.b16 %v402
    %v1502 = vunpack.c.l.b16 %v403
    %v1503 = vunpack.c.h.b16 %v403
    %v1504 = vunpack.c.l.b16 %v404
    %v1505 = vunpack.c.h.b16 %v404
    %v1506 = vunpack.c.l.b16 %v405
    %v1507 = vunpack.c.l.b16 %v406
    %v1508 = vunpack.c.h.b16 %v406
    %v1509 = vunpack.c.l.b16 %v407
    %v1510 = vunpack.c.h.b16 %v407
    %v1511 = vunpack.c.l.b16 %v408
    %v1512 = vunpack.c.h.b16 %v408
    %v1513 = vunpack.c.l.b16 %v409
    %v1514 = vunpack.c.l.b16 %v410
    %v1515 = vunpack.c.h.b16 %v410
    %v1516 = vunpack.c.l.b16 %v411
    %v1517 = vunpack.c.h.b16 %v411
    %v1518 = vunpack.c.l.b16 %v412
    %v1519 = vunpack.c.h.b16 %v412
    %v1520 = vunpack.c.l.b16 %v413
    %v1521 = vunpack.c.l.b16 %v414
    %v1522 = vunpack.c.h.b16 %v414
    %v1523 = vunpack.c.l.b16 %v415
    %v1524 = vunpack.c.h.b16 %v415
    %v1525 = vunpack.c.l.b16 %v416
    %v1526 = vunpack.c.h.b16 %v416
    %v1527 = vunpack.c.l.b16 %v417
    %v1528 = vunpack.c.l.b16 %v418
    %v1529 = vunpack.c.h.b16 %v418
    %v1530 = vunpack.c.l.b16 %v419
    %v1531 = vunpack.c.h.b16 %v419
    %v1532 = vunpack.c.l.b16 %v420
    %v1533 = vunpack.c.h.b16 %v420
    %v1534 = vunpack.c.l.b16 %v421
    %v1535 = vunpack.c.l.b16 %v422
    %v1536 = vunpack.c.h.b16 %v422
    %v1537 = vunpack.c.l.b16 %v423
    %v1538 = vunpack.c.h.b16 %v423
    %v1539 = vunpack.c.l.b16 %v424
    %v1540 = vunpack.c.h.b16 %v424
    %v1541 = vunpack.c.l.b16 %v425
    %v1542 = vunpack.c.l.b16 %v426
    %v1543 = vunpack.c.h.b16 %v426
    %v1544 = vunpack.c.l.b16 %v427
    %v1545 = vunpack.c.h.b16 %v427
    %v1546 = vunpack.c.l.b16 %v428
    %v1547 = vunpack.c.h.b16 %v428
    %v1548 = vunpack.c.l.b16 %v429
    %v1549 = vunpack.c.l.b16 %v430
    %v1550 = vunpack.c.h.b16 %v430
    %v1551 = vunpack.c.l.b16 %v431
    %v1552 = vunpack.c.h.b16 %v431
    %v1553 = vunpack.c.l.b16 %v432
    %v1554 = vunpack.c.h.b16 %v432
    %v1555 = vunpack.c.l.b16 %v433
    %v1556 = vunpack.c.l.b16 %v434
    %v1557 = vunpack.c.h.b16 %v434
    %v1558 = vunpack.c.l.b16 %v435
    %v1559 = vunpack.c.h.b16 %v435
    %v1560 = vunpack.c.l.b16 %v436
    %v1561 = vunpack.c.h.b16 %v436
    %v1562 = vunpack.c.l.b16 %v437
    %v1563 = vunpack.c.l.b16 %v438
    %v1564 = vunpack.c.h.b16 %v438
    %v1565 = vunpack.c.l.b16 %v439
    %v1566 = vunpack.c.h.b16 %v439
    %v1567 = vunpack.c.l.b16 %v440
    %v1568 = vunpack.c.h.b16 %v440
    %v1569 = vunpack.c.l.b16 %v441
    %v1570 = vunpack.c.l.b16 %v442
    %v1571 = vunpack.c.h.b16 %v442
    %v1572 = vunpack.c.l.b16 %v443
    %v1573 = vunpack.c.h.b16 %v443
    %v1574 = vunpack.c.l.b16 %v444
    %v1575 = vunpack.c.h.b16 %v444
    %v1576 = vunpack.c.l.b16 %v445
    %v1577 = vunpack.c.l.b16 %v446
    %v1578 = vunpack.c.h.b16 %v446
    %v1579 = vunpack.c.l.b16 %v447
    %v1580 = vunpack.c.h.b16 %v447
    %v1581 = vunpack.c.l.b16 %v448
    %v1582 = vunpack.c.h.b16 %v448
    %v1583 = vunpack.c.l.b16 %v449
    %v1584 = vunpack.c.l.b16 %v450
    %v1585 = vunpack.c.h.b16 %v450
    %v1586 = vunpack.c.l.b16 %v451
    %v1587 = vunpack.c.h.b16 %v451
    %v1588 = vunpack.c.l.b16 %v452
    %v1589 = vunpack.c.h.b16 %v452
    %v1590 = vunpack.c.l.b16 %v453
    %v1591 = vpack.c.b16 %v898, %v891
    %v1592 = vpack.c.b16 %v899, %v892
    %v1593 = vpack.c.b16 %v900, %v893
    %v1594 = vpack.c.b16 %v901, %v894
    %v1595 = vpack.c.b16 %v902, %v895
    %v1596 = vpack.c.b16 %v903, %v896
    %v1597 = vpack.c.b16 %v904, %v897
    %v1598 = vpack.c.b16 %v912, %v905
    %v1599 = vpack.c.b16 %v913, %v906
    %v1600 = vpack.c.b16 %v914, %v907
    %v1601 = vpack.c.b16 %v915, %v908
    %v1602 = vpack.c.b16 %v916, %v909
    %v1603 = vpack.c.b16 %v917, %v910
    %v1604 = vpack.c.b16 %v918, %v911
    %v1605 = vpack.c.b16 %v926, %v919
    %v1606 = vpack.c.b16 %v927, %v920
    %v1607 = vpack.c.b16 %v928, %v921
    %v1608 = vpack.c.b16 %v929, %v922
    %v1609 = vpack.c.b16 %v930, %v923
    %v1610 = vpack.c.b16 %v931, %v924
    %v1611 = vpack.c.b16 %v932, %v925
    %v1612 = vpack.c.b16 %v940, %v933
    %v1613 = vpack.c.b16 %v941, %v934
    %v1614 = vpack.c.b16 %v942, %v935
    %v1615 = vpack.c.b16 %v943, %v936
    %v1616 = vpack.c.b16 %v944, %v937
    %v1617 = vpack.c.b16 %v945, %v938
    %v1618 = vpack.c.b16 %v946, %v939
    %v1619 = vpack.c.b16 %v954, %v947
    %v1620 = vpack.c.b16 %v955, %v948
    %v1621 = vpack.c.b16 %v956, %v949
    %v1622 = vpack.c.b16 %v957, %v950
    %v1623 = vpack.c.b16 %v958, %v951
    %v1624 = vpack.c.b16 %v959, %v952
    %v1625 = vpack.c.b16 %v960, %v953
    %v1626 = vpack.c.b16 %v968, %v961
    %v1627 = vpack.c.b16 %v969, %v962
    %v1628 = vpack.c.b16 %v970, %v963
    %v1629 = vpack.c.b16 %v971, %v964
    %v1630 = vpack.c.b16 %v972, %v965
    %v1631 = vpack.c.b16 %v973, %v966
    %v1632 = vpack.c.b16 %v974, %v967
    %v1633 = vpack.c.b16 %v982, %v975
    %v1634 = vpack.c.b16 %v983, %v976
    %v1635 = vpack.c.b16 %v984, %v977
    %v1636 = vpack.c.b16 %v985, %v978
    %v1637 = vpack.c.b16 %v986, %v979
    %v1638 = vpack.c.b16 %v987, %v980
    %v1639 = vpack.c.b16 %v988, %v981
    %v1640 = vpack.c.b16 %v996, %v989
    %v1641 = vpack.c.b16 %v997, %v990
    %v1642 = vpack.c.b16 %v998, %v991
    %v1643 = vpack.c.b16 %v999, %v992
    %v1644 = vpack.c.b16 %v1000, %v993
    %v1645 = vpack.c.b16 %v1001, %v994
    %v1646 = vpack.c.b16 %v1002, %v995
    %v1647 = vpack.c.b16 %v1010, %v1003
    %v1648 = vpack.c.b16 %v1011, %v1004
    %v1649 = vpack.c.b16 %v1012, %v1005
    %v1650 = vpack.c.b16 %v1013, %v1006
    %v1651 = vpack.c.b16 %v1014, %v1007
    %v1652 = vpack.c.b16 %v1015, %v1008
    %v1653 = vpack.c.b16 %v1016, %v1009
    %v1654 = vpack.c.b16 %v1024, %v1017
    %v1655 = vpack.c.b16 %v1025, %v1018
    %v1656 = vpack.c.b16 %v1026, %v1019
    %v1657 = vpack.c.b16 %v1027, %v1020
    %v1658 = vpack.c.b16 %v1028, %v1021
    %v1659 = vpack.c.b16 %v1029, %v1022
    %v1660 = vpack.c.b16 %v1030, %v1023
    %v1661 = vpack.c.b16 %v1038, %v1031
    %v1662 = vpack.c.b16 %v1039, %v1032
    %v1663 = vpack.c.b16 %v1040, %v1033
    %v1664 = vpack.c.b16 %v1041, %v1034
    %v1665 = vpack.c.b16 %v1042, %v1035
    %v1666 = vpack.c.b16 %v1043, %v1036
    %v1667 = vpack.c.b16 %v1044, %v1037
    %v1668 = vpack.c.b16 %v1052, %v1045
    %v1669 = vpack.c.b16 %v1053, %v1046
    %v1670 = vpack.c.b16 %v1054, %v1047
    %v1671 = vpack.c.b16 %v1055, %v1048
    %v1672 = vpack.c.b16 %v1056, %v1049
    %v1673 = vpack.c.b16 %v1057, %v1050
    %v1674 = vpack.c.b16 %v1058, %v1051
    %v1675 = vpack.c.b16 %v1066, %v1059
    %v1676 = vpack.c.b16 %v1067, %v1060
    %v1677 = vpack.c.b16 %v1068, %v1061
    %v1678 = vpack.c.b16 %v1069, %v1062
    %v1679 = vpack.c.b16 %v1070, %v1063
    %v1680 = vpack.c.b16 %v1071, %v1064
    %v1681 = vpack.c.b16 %v1072, %v1065
    %v1682 = vpack.c.b16 %v1080, %v1073
    %v1683 = vpack.c.b16 %v1081, %v1074
    %v1684 = vpack.c.b16 %v1082, %v1075
    %v1685 = vpack.c.b16 %v1083, %v1076
    %v1686 = vpack.c.b16 %v1084, %v1077
    %v1687 = vpack.c.b16 %v1085, %v1078
    %v1688 = vpack.c.b16 %v1086, %v1079
    %v1689 = vpack.c.b16 %v1094, %v1087
    %v1690 = vpack.c.b16 %v1095, %v1088
    %v1691 = vpack.c.b16 %v1096, %v1089
    %v1692 = vpack.c.b16 %v1097, %v1090
    %v1693 = vpack.c.b16 %v1098, %v1091
    %v1694 = vpack.c.b16 %v1099, %v1092
    %v1695 = vpack.c.b16 %v1100, %v1093
    %v1696 = vpack.c.b16 %v1108, %v1101
    %v1697 = vpack.c.b16 %v1109, %v1102
    %v1698 = vpack.c.b16 %v1110, %v1103
    %v1699 = vpack.c.b16 %v1111, %v1104
    %v1700 = vpack.c.b16 %v1112, %v1105
    %v1701 = vpack.c.b16 %v1113, %v1106
    %v1702 = vpack.c.b16 %v1114, %v1107
    %v1703 = vpack.c.b16 %v1122, %v1115
    %v1704 = vpack.c.b16 %v1123, %v1116
    %v1705 = vpack.c.b16 %v1124, %v1117
    %v1706 = vpack.c.b16 %v1125, %v1118
    %v1707 = vpack.c.b16 %v1126, %v1119
    %v1708 = vpack.c.b16 %v1127, %v1120
    %v1709 = vpack.c.b16 %v1128, %v1121
    %v1710 = vpack.c.b16 %v1136, %v1129
    %v1711 = vpack.c.b16 %v1137, %v1130
    %v1712 = vpack.c.b16 %v1138, %v1131
    %v1713 = vpack.c.b16 %v1139, %v1132
    %v1714 = vpack.c.b16 %v1140, %v1133
    %v1715 = vpack.c.b16 %v1141, %v1134
    %v1716 = vpack.c.b16 %v1142, %v1135
    %v1717 = vpack.c.b16 %v1150, %v1143
    %v1718 = vpack.c.b16 %v1151, %v1144
    %v1719 = vpack.c.b16 %v1152, %v1145
    %v1720 = vpack.c.b16 %v1153, %v1146
    %v1721 = vpack.c.b16 %v1154, %v1147
    %v1722 = vpack.c.b16 %v1155, %v1148
    %v1723 = vpack.c.b16 %v1156, %v1149
    %v1724 = vpack.c.b16 %v1164, %v1157
    %v1725 = vpack.c.b16 %v1165, %v1158
    %v1726 = vpack.c.b16 %v1166, %v1159
    %v1727 = vpack.c.b16 %v1167, %v1160
    %v1728 = vpack.c.b16 %v1168, %v1161
    %v1729 = vpack.c.b16 %v1169, %v1162
    %v1730 = vpack.c.b16 %v1170, %v1163
    %v1731 = vpack.c.b16 %v1178, %v1171
    %v1732 = vpack.c.b16 %v1179, %v1172
    %v1733 = vpack.c.b16 %v1180, %v1173
    %v1734 = vpack.c.b16 %v1181, %v1174
    %v1735 = vpack.c.b16 %v1182, %v1175
    %v1736 = vpack.c.b16 %v1183, %v1176
    %v1737 = vpack.c.b16 %v1184, %v1177
    %v1738 = vpack.c.b16 %v1192, %v1185
    %v1739 = vpack.c.b16 %v1193, %v1186
    %v1740 = vpack.c.b16 %v1194, %v1187
    %v1741 = vpack.c.b16 %v1195, %v1188
    %v1742 = vpack.c.b16 %v1196, %v1189
    %v1743 = vpack.c.b16 %v1197, %v1190
    %v1744 = vpack.c.b16 %v1198, %v1191
    %v1745 = vpack.c.b16 %v1206, %v1199
    %v1746 = vpack.c.b16 %v1207, %v1200
    %v1747 = vpack.c.b16 %v1208, %v1201
    %v1748 = vpack.c.b16 %v1209, %v1202
    %v1749 = vpack.c.b16 %v1210, %v1203
    %v1750 = vpack.c.b16 %v1211, %v1204
    %v1751 = vpack.c.b16 %v1212, %v1205
    %v1752 = vpack.c.b16 %v1220, %v1213
    %v1753 = vpack.c.b16 %v1221, %v1214
    %v1754 = vpack.c.b16 %v1222, %v1215
    %v1755 = vpack.c.b16 %v1223, %v1216
    %v1756 = vpack.c.b16 %v1224, %v1217
    %v1757 = vpack.c.b16 %v1225, %v1218
    %v1758 = vpack.c.b16 %v1226, %v1219
    %v1759 = vpack.c.b16 %v1234, %v1227
    %v1760 = vpack.c.b16 %v1235, %v1228
    %v1761 = vpack.c.b16 %v1236, %v1229
    %v1762 = vpack.c.b16 %v1237, %v1230
    %v1763 = vpack.c.b16 %v1238, %v1231
    %v1764 = vpack.c.b16 %v1239, %v1232
    %v1765 = vpack.c.b16 %v1240, %v1233
    %v1766 = vpack.c.b16 %v1248, %v1241
    %v1767 = vpack.c.b16 %v1249, %v1242
    %v1768 = vpack.c.b16 %v1250, %v1243
    %v1769 = vpack.c.b16 %v1251, %v1244
    %v1770 = vpack.c.b16 %v1252, %v1245
    %v1771 = vpack.c.b16 %v1253, %v1246
    %v1772 = vpack.c.b16 %v1254, %v1247
    %v1773 = vpack.c.b16 %v1262, %v1255
    %v1774 = vpack.c.b16 %v1263, %v1256
    %v1775 = vpack.c.b16 %v1264, %v1257
    %v1776 = vpack.c.b16 %v1265, %v1258
    %v1777 = vpack.c.b16 %v1266, %v1259
    %v1778 = vpack.c.b16 %v1267, %v1260
    %v1779 = vpack.c.b16 %v1268, %v1261
    %v1780 = vpack.c.b16 %v1276, %v1269
    %v1781 = vpack.c.b16 %v1277, %v1270
    %v1782 = vpack.c.b16 %v1278, %v1271
    %v1783 = vpack.c.b16 %v1279, %v1272
    %v1784 = vpack.c.b16 %v1280, %v1273
    %v1785 = vpack.c.b16 %v1281, %v1274
    %v1786 = vpack.c.b16 %v1282, %v1275
    %v1787 = vpack.c.b16 %v1290, %v1283
    %v1788 = vpack.c.b16 %v1291, %v1284
    %v1789 = vpack.c.b16 %v1292, %v1285
    %v1790 = vpack.c.b16 %v1293, %v1286
    %v1791 = vpack.c.b16 %v1294, %v1287
    %v1792 = vpack.c.b16 %v1295, %v1288
    %v1793 = vpack.c.b16 %v1296, %v1289
    %v1794 = vpack.c.b16 %v1304, %v1297
    %v1795 = vpack.c.b16 %v1305, %v1298
    %v1796 = vpack.c.b16 %v1306, %v1299
    %v1797 = vpack.c.b16 %v1307, %v1300
    %v1798 = vpack.c.b16 %v1308, %v1301
    %v1799 = vpack.c.b16 %v1309, %v1302
    %v1800 = vpack.c.b16 %v1310, %v1303
    %v1801 = vpack.c.b16 %v1318, %v1311
    %v1802 = vpack.c.b16 %v1319, %v1312
    %v1803 = vpack.c.b16 %v1320, %v1313
    %v1804 = vpack.c.b16 %v1321, %v1314
    %v1805 = vpack.c.b16 %v1322, %v1315
    %v1806 = vpack.c.b16 %v1323, %v1316
    %v1807 = vpack.c.b16 %v1324, %v1317
    %v1808 = vpack.c.b16 %v1332, %v1325
    %v1809 = vpack.c.b16 %v1333, %v1326
    %v1810 = vpack.c.b16 %v1334, %v1327
    %v1811 = vpack.c.b16 %v1335, %v1328
    %v1812 = vpack.c.b16 %v1336, %v1329
    %v1813 = vpack.c.b16 %v1337, %v1330
    %v1814 = vpack.c.b16 %v1338, %v1331
    %v1815 = vpack.c.b16 %v1346, %v1339
    %v1816 = vpack.c.b16 %v1347, %v1340
    %v1817 = vpack.c.b16 %v1348, %v1341
    %v1818 = vpack.c.b16 %v1349, %v1342
    %v1819 = vpack.c.b16 %v1350, %v1343
    %v1820 = vpack.c.b16 %v1351, %v1344
    %v1821 = vpack.c.b16 %v1352, %v1345
    %v1822 = vpack.c.b16 %v1360, %v1353
    %v1823 = vpack.c.b16 %v1361, %v1354
    %v1824 = vpack.c.b16 %v1362, %v1355
    %v1825 = vpack.c.b16 %v1363, %v1356
    %v1826 = vpack.c.b16 %v1364, %v1357
    %v1827 = vpack.c.b16 %v1365, %v1358
    %v1828 = vpack.c.b16 %v1366, %v1359
    %v1829 = vpack.c.b16 %v1374, %v1367
    %v1830 = vpack.c.b16 %v1375, %v1368
    %v1831 = vpack.c.b16 %v1376, %v1369
    %v1832 = vpack.c.b16 %v1377, %v1370
    %v1833 = vpack.c.b16 %v1378, %v1371
    %v1834 = vpack.c.b16 %v1379, %v1372
    %v1835 = vpack.c.b16 %v1380, %v1373
    %v1836 = vpack.c.b16 %v1388, %v1381
    %v1837 = vpack.c.b16 %v1389, %v1382
    %v1838 = vpack.c.b16 %v1390, %v1383
    %v1839 = vpack.c.b16 %v1391, %v1384
    %v1840 = vpack.c.b16 %v1392, %v1385
    %v1841 = vpack.c.b16 %v1393, %v1386
    %v1842 = vpack.c.b16 %v1394, %v1387
    %v1843 = vpack.c.b16 %v1402, %v1395
    %v1844 = vpack.c.b16 %v1403, %v1396
    %v1845 = vpack.c.b16 %v1404, %v1397
    %v1846 = vpack.c.b16 %v1405, %v1398
    %v1847 = vpack.c.b16 %v1406, %v1399
    %v1848 = vpack.c.b16 %v1407, %v1400
    %v1849 = vpack.c.b16 %v1408, %v1401
    %v1850 = vpack.c.b16 %v1416, %v1409
    %v1851 = vpack.c.b16 %v1417, %v1410
    %v1852 = vpack.c.b16 %v1418, %v1411
    %v1853 = vpack.c.b16 %v1419, %v1412
    %v1854 = vpack.c.b16 %v1420, %v1413
    %v1855 = vpack.c.b16 %v1421, %v1414
    %v1856 = vpack.c.b16 %v1422, %v1415
    %v1857 = vpack.c.b16 %v1430, %v1423
    %v1858 = vpack.c.b16 %v1431, %v1424
    %v1859 = vpack.c.b16 %v1432, %v1425
    %v1860 = vpack.c.b16 %v1433, %v1426
    %v1861 = vpack.c.b16 %v1434, %v1427
    %v1862 = vpack.c.b16 %v1435, %v1428
    %v1863 = vpack.c.b16 %v1436, %v1429
    %v1864 = vpack.c.b16 %v1444, %v1437
    %v1865 = vpack.c.b16 %v1445, %v1438
    %v1866 = vpack.c.b16 %v1446, %v1439
    %v1867 = vpack.c.b16 %v1447, %v1440
    %v1868 = vpack.c.b16 %v1448, %v1441
    %v1869 = vpack.c.b16 %v1449, %v1442
    %v1870 = vpack.c.b16 %v1450, %v1443
    %v1871 = vpack.c.b16 %v1458, %v1451
    %v1872 = vpack.c.b16 %v1459, %v1452
    %v1873 = vpack.c.b16 %v1460, %v1453
    %v1874 = vpack.c.b16 %v1461, %v1454
    %v1875 = vpack.c.b16 %v1462, %v1455
    %v1876 = vpack.c.b16 %v1463, %v1456
    %v1877 = vpack.c.b16 %v1464, %v1457
    %v1878 = vpack.c.b16 %v1472, %v1465
    %v1879 = vpack.c.b16 %v1473, %v1466
    %v1880 = vpack.c.b16 %v1474, %v1467
    %v1881 = vpack.c.b16 %v1475, %v1468
    %v1882 = vpack.c.b16 %v1476, %v1469
    %v1883 = vpack.c.b16 %v1477, %v1470
    %v1884 = vpack.c.b16 %v1478, %v1471
    %v1885 = vpack.c.b16 %v1486, %v1479
    %v1886 = vpack.c.b16 %v1487, %v1480
    %v1887 = vpack.c.b16 %v1488, %v1481
    %v1888 = vpack.c.b16 %v1489, %v1482
    %v1889 = vpack.c.b16 %v1490, %v1483
    %v1890 = vpack.c.b16 %v1491, %v1484
    %v1891 = vpack.c.b16 %v1492, %v1485
    %v1892 = vpack.c.b16 %v1500, %v1493
    %v1893 = vpack.c.b16 %v1501, %v1494
    %v1894 = vpack.c.b16 %v1502, %v1495
    %v1895 = vpack.c.b16 %v1503, %v1496
    %v1896 = vpack.c.b16 %v1504, %v1497
    %v1897 = vpack.c.b16 %v1505, %v1498
    %v1898 = vpack.c.b16 %v1506, %v1499
    %v1899 = vpack.c.b16 %v1514, %v1507
    %v1900 = vpack.c.b16 %v1515, %v1508
    %v1901 = vpack.c.b16 %v1516, %v1509
    %v1902 = vpack.c.b16 %v1517, %v1510
    %v1903 = vpack.c.b16 %v1518, %v1511
    %v1904 = vpack.c.b16 %v1519, %v1512
    %v1905 = vpack.c.b16 %v1520, %v1513
    %v1906 = vpack.c.b16 %v1528, %v1521
    %v1907 = vpack.c.b16 %v1529, %v1522
    %v1908 = vpack.c.b16 %v1530, %v1523
    %v1909 = vpack.c.b16 %v1531, %v1524
    %v1910 = vpack.c.b16 %v1532, %v1525
    %v1911 = vpack.c.b16 %v1533, %v1526
    %v1912 = vpack.c.b16 %v1534, %v1527
    %v1913 = vpack.c.b16 %v1542, %v1535
    %v1914 = vpack.c.b16 %v1543, %v1536
    %v1915 = vpack.c.b16 %v1544, %v1537
    %v1916 = vpack.c.b16 %v1545, %v1538
    %v1917 = vpack.c.b16 %v1546, %v1539
    %v1918 = vpack.c.b16 %v1547, %v1540
    %v1919 = vpack.c.b16 %v1548, %v1541
    %v1920 = vpack.c.b16 %v1556, %v1549
    %v1921 = vpack.c.b16 %v1557, %v1550
    %v1922 = vpack.c.b16 %v1558, %v1551
    %v1923 = vpack.c.b16 %v1559, %v1552
    %v1924 = vpack.c.b16 %v1560, %v1553
    %v1925 = vpack.c.b16 %v1561, %v1554
    %v1926 = vpack.c.b16 %v1562, %v1555
    %v1927 = vpack.c.b16 %v1570, %v1563
    %v1928 = vpack.c.b16 %v1571, %v1564
    %v1929 = vpack.c.b16 %v1572, %v1565
    %v1930 = vpack.c.b16 %v1573, %v1566
    %v1931 = vpack.c.b16 %v1574, %v1567
    %v1932 = vpack.c.b16 %v1575, %v1568
    %v1933 = vpack.c.b16 %v1576, %v1569
    %v1934 = vpack.c.b16 %v1584, %v1577
    %v1935 = vpack.c.b16 %v1585, %v1578
    %v1936 = vpack.c.b16 %v1586, %v1579
    %v1937 = vpack.c.b16 %v1587, %v1580
    %v1938 = vpack.c.b16 %v1588, %v1581
    %v1939 = vpack.c.b16 %v1589, %v1582
    %v1940 = vpack.c.b16 %v1590, %v1583
    %vm2291 = vcmask 261120
    %v2293 = vsel %vm2291, %v53, 0
    %2295 = vmatprep.subr.bf16.mxu0 %v1592
    %2296 = vmatpush1.bf16.msra.mxu0 %v1591
    %2297 = vmatprep.subr.bf16.mxu0 %v1599
    %2298 = vmatpush1.bf16.msra.mxu0 %v1598
    %2299 = vmatprep.subr.bf16.mxu0 %v1606
    %2300 = vmatpush1.bf16.msra.mxu0 %v1605
    %2301 = vmatprep.subr.bf16.mxu0 %v1613
    %2302 = vmatpush1.bf16.msra.mxu0 %v1612
    %2303 = vmatprep.subr.bf16.mxu0 %v1620
    %2304 = vmatpush1.bf16.msra.mxu0 %v1619
    %2305 = vmatprep.subr.bf16.mxu0 %v1627
    %2306 = vmatpush1.bf16.msra.mxu0 %v1626
    %2307 = vmatprep.subr.bf16.mxu0 %v1634
    %2308 = vmatpush1.bf16.msra.mxu0 %v1633
    %2309 = vmatprep.subr.bf16.mxu0 %v1641
    %2310 = vmatpush1.bf16.msra.mxu0 %v1640
    %2311 = vmatprep.subr.bf16.mxu0 %v1648
    %2312 = vmatpush1.bf16.msra.mxu0 %v1647
    %2313 = vmatprep.subr.bf16.mxu0 %v1655
    %2314 = vmatpush1.bf16.msra.mxu0 %v1654
    %2315 = vmatprep.subr.bf16.mxu0 %v1662
    %2316 = vmatpush1.bf16.msra.mxu0 %v1661
    %2317 = vmatprep.subr.bf16.mxu0 %v1669
    %2318 = vmatpush1.bf16.msra.mxu0 %v1668
    %2319 = vmatprep.subr.bf16.mxu0 %v1676
    %2320 = vmatpush1.bf16.msra.mxu0 %v1675
    %2321 = vmatprep.subr.bf16.mxu0 %v1683
    %2322 = vmatpush1.bf16.msra.mxu0 %v1682
    %2323 = vmatprep.subr.bf16.mxu0 %v1690
    %2324 = vmatpush1.bf16.msra.mxu0 %v1689
    %2325 = vmatprep.subr.bf16.mxu0 %v1697
    %2326 = vmatpush1.bf16.msra.mxu0 %v1696
    %2327 = vmatprep.mubr.bf16.mxu0 %v48
    %2328 = vmatmul.mubr.bf16.gmra.mrb[0].mxu0 %v47
    %v2329 = vpop.f32.mrb[0].mxu0
    %v2330 = vadd.f32 %v459, %v2329
    %v2331 = vpop.f32.mrb[0].mxu0
    %v2332 = vadd.f32 %v463, %v2331
    %v2333 = vpop.f32.mrb[0].mxu0
    %v2334 = vpop.f32.mrb[0].mxu0
    %2335 = vdwg.mxu0
    %2336 = vmatprep.subr.bf16.mxu0 %v1704
    %2337 = vmatpush1.bf16.msra.mxu0 %v1703
    %2338 = vmatprep.subr.bf16.mxu0 %v1711
    %2339 = vmatpush1.bf16.msra.mxu0 %v1710
    %2340 = vmatprep.subr.bf16.mxu0 %v1718
    %2341 = vmatpush1.bf16.msra.mxu0 %v1717
    %2342 = vmatprep.subr.bf16.mxu0 %v1725
    %2343 = vmatpush1.bf16.msra.mxu0 %v1724
    %2344 = vmatprep.subr.bf16.mxu0 %v1732
    %2345 = vmatpush1.bf16.msra.mxu0 %v1731
    %2346 = vmatprep.subr.bf16.mxu0 %v1739
    %2347 = vmatpush1.bf16.msra.mxu0 %v1738
    %2348 = vmatprep.subr.bf16.mxu0 %v1746
    %2349 = vmatpush1.bf16.msra.mxu0 %v1745
    %2350 = vmatprep.subr.bf16.mxu0 %v1753
    %2351 = vmatpush1.bf16.msra.mxu0 %v1752
    %2352 = vmatprep.subr.bf16.mxu0 %v1760
    %2353 = vmatpush1.bf16.msra.mxu0 %v1759
    %2354 = vmatprep.subr.bf16.mxu0 %v1767
    %2355 = vmatpush1.bf16.msra.mxu0 %v1766
    %2356 = vmatprep.subr.bf16.mxu0 %v1774
    %2357 = vmatpush1.bf16.msra.mxu0 %v1773
    %2358 = vmatprep.subr.bf16.mxu0 %v1781
    %2359 = vmatpush1.bf16.msra.mxu0 %v1780
    %2360 = vmatprep.subr.bf16.mxu0 %v1788
    %2361 = vmatpush1.bf16.msra.mxu0 %v1787
    %2362 = vmatprep.subr.bf16.mxu0 %v1795
    %2363 = vmatpush1.bf16.msra.mxu0 %v1794
    %2364 = vmatprep.subr.bf16.mxu0 %v1802
    %2365 = vmatpush1.bf16.msra.mxu0 %v1801
    %2366 = vmatprep.subr.bf16.mxu0 %v1809
    %2367 = vmatpush1.bf16.msra.mxu0 %v1808
    %2368 = vmatprep.mubr.bf16.mxu0 %v50
    %2369 = vmatmul.mubr.bf16.gmra.mrb[0].mxu0 %v49
    %v2370 = vpop.f32.mrb[0].mxu0
    %v2371 = vadd.f32 %v2330, %v2370
    %v2372 = vpop.f32.mrb[0].mxu0
    %v2373 = vadd.f32 %v2332, %v2372
    %v2374 = vpop.f32.mrb[0].mxu0
    %v2375 = vpop.f32.mrb[0].mxu0
    %2376 = vdwg.mxu0
    %2377 = vmatprep.subr.bf16.mxu0 %v1816
    %2378 = vmatpush1.bf16.msra.mxu0 %v1815
    %2379 = vmatprep.subr.bf16.mxu0 %v1823
    %2380 = vmatpush1.bf16.msra.mxu0 %v1822
    %2381 = vmatprep.subr.bf16.mxu0 %v1830
    %2382 = vmatpush1.bf16.msra.mxu0 %v1829
    %2383 = vmatprep.subr.bf16.mxu0 %v1837
    %2384 = vmatpush1.bf16.msra.mxu0 %v1836
    %2385 = vmatprep.subr.bf16.mxu0 %v1844
    %2386 = vmatpush1.bf16.msra.mxu0 %v1843
    %2387 = vmatprep.subr.bf16.mxu0 %v1851
    %2388 = vmatpush1.bf16.msra.mxu0 %v1850
    %2389 = vmatprep.subr.bf16.mxu0 %v1858
    %2390 = vmatpush1.bf16.msra.mxu0 %v1857
    %2391 = vmatprep.subr.bf16.mxu0 %v1865
    %2392 = vmatpush1.bf16.msra.mxu0 %v1864
    %2393 = vmatprep.subr.bf16.mxu0 %v1872
    %2394 = vmatpush1.bf16.msra.mxu0 %v1871
    %2395 = vmatprep.subr.bf16.mxu0 %v1879
    %2396 = vmatpush1.bf16.msra.mxu0 %v1878
    %2397 = vmatprep.subr.bf16.mxu0 %v1886
    %2398 = vmatpush1.bf16.msra.mxu0 %v1885
    %2399 = vmatprep.subr.bf16.mxu0 %v1893
    %2400 = vmatpush1.bf16.msra.mxu0 %v1892
    %2401 = vmatprep.subr.bf16.mxu0 %v1900
    %2402 = vmatpush1.bf16.msra.mxu0 %v1899
    %2403 = vmatprep.subr.bf16.mxu0 %v1907
    %2404 = vmatpush1.bf16.msra.mxu0 %v1906
    %2405 = vmatprep.subr.bf16.mxu0 %v1914
    %2406 = vmatpush1.bf16.msra.mxu0 %v1913
    %2407 = vmatprep.subr.bf16.mxu0 %v1921
    %2408 = vmatpush1.bf16.msra.mxu0 %v1920
    %2409 = vmatprep.mubr.bf16.mxu0 %v52
    %2410 = vmatmul.mubr.bf16.gmra.mrb[0].mxu0 %v51
    %v2411 = vpop.f32.mrb[0].mxu0
    %v2412 = vadd.f32 %v2371, %v2411
    %v2413 = vpop.f32.mrb[0].mxu0
    %v2414 = vadd.f32 %v2373, %v2413
    %v2415 = vpop.f32.mrb[0].mxu0
    %v2416 = vpop.f32.mrb[0].mxu0
    %2417 = vdwg.mxu0
    %2418 = vmatprep.subr.bf16.mxu0 %v1928
    %2419 = vmatpush1.bf16.msra.mxu0 %v1927
    %2420 = vmatprep.subr.bf16.mxu0 %v1935
    %2421 = vmatpush1.bf16.msra.mxu0 %v1934
    %2422 = vmatprep.subr.bf16.mxu0 0
    %2423 = vmatpush1.bf16.msra.mxu0 0
    %2424 = vmatprep.subr.bf16.mxu0 0
    %2425 = vmatpush1.bf16.msra.mxu0 0
    %2426 = vmatprep.subr.bf16.mxu0 0
    %2427 = vmatpush1.bf16.msra.mxu0 0
    %2428 = vmatprep.subr.bf16.mxu0 0
    %2429 = vmatpush1.bf16.msra.mxu0 0
    %2430 = vmatprep.subr.bf16.mxu0 0
    %2431 = vmatpush1.bf16.msra.mxu0 0
    %2432 = vmatprep.subr.bf16.mxu0 0
    %2433 = vmatpush1.bf16.msra.mxu0 0
    %2434 = vmatprep.subr.bf16.mxu0 0
    %2435 = vmatpush1.bf16.msra.mxu0 0
    %2436 = vmatprep.subr.bf16.mxu0 0
    %2437 = vmatpush1.bf16.msra.mxu0 0
    %2438 = vmatprep.subr.bf16.mxu0 0
    %2439 = vmatpush1.bf16.msra.mxu0 0
    %2440 = vmatprep.subr.bf16.mxu0 0
    %2441 = vmatpush1.bf16.msra.mxu0 0
    %2442 = vmatprep.subr.bf16.mxu0 0
    %2443 = vmatpush1.bf16.msra.mxu0 0
    %2444 = vmatprep.subr.bf16.mxu0 0
    %2445 = vmatpush1.bf16.msra.mxu0 0
    %2446 = vmatprep.subr.bf16.mxu0 0
    %2447 = vmatpush1.bf16.msra.mxu0 0
    %2448 = vmatprep.subr.bf16.mxu0 0
    %2449 = vmatpush1.bf16.msra.mxu0 0
    %2450 = vmatprep.mubr.bf16.mxu0 0
    %2451 = vmatmul.mubr.bf16.gmra.mrb[0].mxu0 %v2293
    %v2452 = vpop.f32.mrb[0].mxu0
    %v2453 = vadd.f32 %v2412, %v2452
    %v2454 = vpop.f32.mrb[0].mxu0
    %v2455 = vadd.f32 %v2414, %v2454
    %v2456 = vpop.f32.mrb[0].mxu0
    %v2457 = vpop.f32.mrb[0].mxu0
    %2458 = vdwg.mxu0
    %2459 = vmatprep.subr.bf16.mxu0 %v1594
    %2460 = vmatpush1.bf16.msra.mxu0 %v1593
    %2461 = vmatprep.subr.bf16.mxu0 %v1601
    %2462 = vmatpush1.bf16.msra.mxu0 %v1600
    %2463 = vmatprep.subr.bf16.mxu0 %v1608
    %2464 = vmatpush1.bf16.msra.mxu0 %v1607
    %2465 = vmatprep.subr.bf16.mxu0 %v1615
    %2466 = vmatpush1.bf16.msra.mxu0 %v1614
    %2467 = vmatprep.subr.bf16.mxu0 %v1622
    %2468 = vmatpush1.bf16.msra.mxu0 %v1621
    %2469 = vmatprep.subr.bf16.mxu0 %v1629
    %2470 = vmatpush1.bf16.msra.mxu0 %v1628
    %2471 = vmatprep.subr.bf16.mxu0 %v1636
    %2472 = vmatpush1.bf16.msra.mxu0 %v1635
    %2473 = vmatprep.subr.bf16.mxu0 %v1643
    %2474 = vmatpush1.bf16.msra.mxu0 %v1642
    %2475 = vmatprep.subr.bf16.mxu0 %v1650
    %2476 = vmatpush1.bf16.msra.mxu0 %v1649
    %2477 = vmatprep.subr.bf16.mxu0 %v1657
    %2478 = vmatpush1.bf16.msra.mxu0 %v1656
    %2479 = vmatprep.subr.bf16.mxu0 %v1664
    %2480 = vmatpush1.bf16.msra.mxu0 %v1663
    %2481 = vmatprep.subr.bf16.mxu0 %v1671
    %2482 = vmatpush1.bf16.msra.mxu0 %v1670
    %2483 = vmatprep.subr.bf16.mxu0 %v1678
    %2484 = vmatpush1.bf16.msra.mxu0 %v1677
    %2485 = vmatprep.subr.bf16.mxu0 %v1685
    %2486 = vmatpush1.bf16.msra.mxu0 %v1684
    %2487 = vmatprep.subr.bf16.mxu0 %v1692
    %2488 = vmatpush1.bf16.msra.mxu0 %v1691
    %2489 = vmatprep.subr.bf16.mxu0 %v1699
    %2490 = vmatpush1.bf16.msra.mxu0 %v1698
    %2491 = vmatprep.mubr.bf16.mxu0 %v48
    %2492 = vmatmul.mubr.bf16.gmra.mrb[0].mxu0 %v47
    %v2493 = vpop.f32.mrb[0].mxu0
    %v2494 = vadd.f32 %v467, %v2493
    %v2495 = vpop.f32.mrb[0].mxu0
    %v2496 = vadd.f32 %v471, %v2495
    %v2497 = vpop.f32.mrb[0].mxu0
    %v2498 = vpop.f32.mrb[0].mxu0
    %2499 = vdwg.mxu0
    %2500 = vmatprep.subr.bf16.mxu0 %v1706
    %2501 = vmatpush1.bf16.msra.mxu0 %v1705
    %2502 = vmatprep.subr.bf16.mxu0 %v1713
    %2503 = vmatpush1.bf16.msra.mxu0 %v1712
    %2504 = vmatprep.subr.bf16.mxu0 %v1720
    %2505 = vmatpush1.bf16.msra.mxu0 %v1719
    %2506 = vmatprep.subr.bf16.mxu0 %v1727
    %2507 = vmatpush1.bf16.msra.mxu0 %v1726
    %2508 = vmatprep.subr.bf16.mxu0 %v1734
    %2509 = vmatpush1.bf16.msra.mxu0 %v1733
    %2510 = vmatprep.subr.bf16.mxu0 %v1741
    %2511 = vmatpush1.bf16.msra.mxu0 %v1740
    %2512 = vmatprep.subr.bf16.mxu0 %v1748
    %2513 = vmatpush1.bf16.msra.mxu0 %v1747
    %2514 = vmatprep.subr.bf16.mxu0 %v1755
    %2515 = vmatpush1.bf16.msra.mxu0 %v1754
    %2516 = vmatprep.subr.bf16.mxu0 %v1762
    %2517 = vmatpush1.bf16.msra.mxu0 %v1761
    %2518 = vmatprep.subr.bf16.mxu0 %v1769
    %2519 = vmatpush1.bf16.msra.mxu0 %v1768
    %2520 = vmatprep.subr.bf16.mxu0 %v1776
    %2521 = vmatpush1.bf16.msra.mxu0 %v1775
    %2522 = vmatprep.subr.bf16.mxu0 %v1783
    %2523 = vmatpush1.bf16.msra.mxu0 %v1782
    %2524 = vmatprep.subr.bf16.mxu0 %v1790
    %2525 = vmatpush1.bf16.msra.mxu0 %v1789
    %2526 = vmatprep.subr.bf16.mxu0 %v1797
    %2527 = vmatpush1.bf16.msra.mxu0 %v1796
    %2528 = vmatprep.subr.bf16.mxu0 %v1804
    %2529 = vmatpush1.bf16.msra.mxu0 %v1803
    %2530 = vmatprep.subr.bf16.mxu0 %v1811
    %2531 = vmatpush1.bf16.msra.mxu0 %v1810
    %2532 = vmatprep.mubr.bf16.mxu0 %v50
    %2533 = vmatmul.mubr.bf16.gmra.mrb[0].mxu0 %v49
    %v2534 = vpop.f32.mrb[0].mxu0
    %v2535 = vadd.f32 %v2494, %v2534
    %v2536 = vpop.f32.mrb[0].mxu0
    %v2537 = vadd.f32 %v2496, %v2536
    %v2538 = vpop.f32.mrb[0].mxu0
    %v2539 = vpop.f32.mrb[0].mxu0
    %2540 = vdwg.mxu0
    %2541 = vmatprep.subr.bf16.mxu0 %v1818
    %2542 = vmatpush1.bf16.msra.mxu0 %v1817
    %2543 = vmatprep.subr.bf16.mxu0 %v1825
    %2544 = vmatpush1.bf16.msra.mxu0 %v1824
    %2545 = vmatprep.subr.bf16.mxu0 %v1832
    %2546 = vmatpush1.bf16.msra.mxu0 %v1831
    %2547 = vmatprep.subr.bf16.mxu0 %v1839
    %2548 = vmatpush1.bf16.msra.mxu0 %v1838
    %2549 = vmatprep.subr.bf16.mxu0 %v1846
    %2550 = vmatpush1.bf16.msra.mxu0 %v1845
    %2551 = vmatprep.subr.bf16.mxu0 %v1853
    %2552 = vmatpush1.bf16.msra.mxu0 %v1852
    %2553 = vmatprep.subr.bf16.mxu0 %v1860
    %2554 = vmatpush1.bf16.msra.mxu0 %v1859
    %2555 = vmatprep.subr.bf16.mxu0 %v1867
    %2556 = vmatpush1.bf16.msra.mxu0 %v1866
    %2557 = vmatprep.subr.bf16.mxu0 %v1874
    %2558 = vmatpush1.bf16.msra.mxu0 %v1873
    %2559 = vmatprep.subr.bf16.mxu0 %v1881
    %2560 = vmatpush1.bf16.msra.mxu0 %v1880
    %2561 = vmatprep.subr.bf16.mxu0 %v1888
    %2562 = vmatpush1.bf16.msra.mxu0 %v1887
    %2563 = vmatprep.subr.bf16.mxu0 %v1895
    %2564 = vmatpush1.bf16.msra.mxu0 %v1894
    %2565 = vmatprep.subr.bf16.mxu0 %v1902
    %2566 = vmatpush1.bf16.msra.mxu0 %v1901
    %2567 = vmatprep.subr.bf16.mxu0 %v1909
    %2568 = vmatpush1.bf16.msra.mxu0 %v1908
    %2569 = vmatprep.subr.bf16.mxu0 %v1916
    %2570 = vmatpush1.bf16.msra.mxu0 %v1915
    %2571 = vmatprep.subr.bf16.mxu0 %v1923
    %2572 = vmatpush1.bf16.msra.mxu0 %v1922
    %2573 = vmatprep.mubr.bf16.mxu0 %v52
    %2574 = vmatmul.mubr.bf16.gmra.mrb[0].mxu0 %v51
    %v2575 = vpop.f32.mrb[0].mxu0
    %v2576 = vadd.f32 %v2535, %v2575
    %v2577 = vpop.f32.mrb[0].mxu0
    %v2578 = vadd.f32 %v2537, %v2577
    %v2579 = vpop.f32.mrb[0].mxu0
    %v2580 = vpop.f32.mrb[0].mxu0
    %2581 = vdwg.mxu0
    %2582 = vmatprep.subr.bf16.mxu0 %v1930
    %2583 = vmatpush1.bf16.msra.mxu0 %v1929
    %2584 = vmatprep.subr.bf16.mxu0 %v1937
    %2585 = vmatpush1.bf16.msra.mxu0 %v1936
    %2586 = vmatprep.subr.bf16.mxu0 0
    %2587 = vmatpush1.bf16.msra.mxu0 0
    %2588 = vmatprep.subr.bf16.mxu0 0
    %2589 = vmatpush1.bf16.msra.mxu0 0
    %2590 = vmatprep.subr.bf16.mxu0 0
    %2591 = vmatpush1.bf16.msra.mxu0 0
    %2592 = vmatprep.subr.bf16.mxu0 0
    %2593 = vmatpush1.bf16.msra.mxu0 0
    %2594 = vmatprep.subr.bf16.mxu0 0
    %2595 = vmatpush1.bf16.msra.mxu0 0
    %2596 = vmatprep.subr.bf16.mxu0 0
    %2597 = vmatpush1.bf16.msra.mxu0 0
    %2598 = vmatprep.subr.bf16.mxu0 0
    %2599 = vmatpush1.bf16.msra.mxu0 0
    %2600 = vmatprep.subr.bf16.mxu0 0
    %2601 = vmatpush1.bf16.msra.mxu0 0
    %2602 = vmatprep.subr.bf16.mxu0 0
    %2603 = vmatpush1.bf16.msra.mxu0 0
    %2604 = vmatprep.subr.bf16.mxu0 0
    %2605 = vmatpush1.bf16.msra.mxu0 0
    %2606 = vmatprep.subr.bf16.mxu0 0
    %2607 = vmatpush1.bf16.msra.mxu0 0
    %2608 = vmatprep.subr.bf16.mxu0 0
    %2609 = vmatpush1.bf16.msra.mxu0 0
    %2610 = vmatprep.subr.bf16.mxu0 0
    %2611 = vmatpush1.bf16.msra.mxu0 0
    %2612 = vmatprep.subr.bf16.mxu0 0
    %2613 = vmatpush1.bf16.msra.mxu0 0
    %2614 = vmatprep.mubr.bf16.mxu0 0
    %2615 = vmatmul.mubr.bf16.gmra.mrb[0].mxu0 %v2293
    %v2616 = vpop.f32.mrb[0].mxu0
    %v2617 = vadd.f32 %v2576, %v2616
    %v2618 = vpop.f32.mrb[0].mxu0
    %v2619 = vadd.f32 %v2578, %v2618
    %v2620 = vpop.f32.mrb[0].mxu0
    %v2621 = vpop.f32.mrb[0].mxu0
    %2622 = vdwg.mxu0
    %2623 = vmatprep.subr.bf16.mxu0 %v1596
    %2624 = vmatpush1.bf16.msra.mxu0 %v1595
    %2625 = vmatprep.subr.bf16.mxu0 %v1603
    %2626 = vmatpush1.bf16.msra.mxu0 %v1602
    %2627 = vmatprep.subr.bf16.mxu0 %v1610
    %2628 = vmatpush1.bf16.msra.mxu0 %v1609
    %2629 = vmatprep.subr.bf16.mxu0 %v1617
    %2630 = vmatpush1.bf16.msra.mxu0 %v1616
    %2631 = vmatprep.subr.bf16.mxu0 %v1624
    %2632 = vmatpush1.bf16.msra.mxu0 %v1623
    %2633 = vmatprep.subr.bf16.mxu0 %v1631
    %2634 = vmatpush1.bf16.msra.mxu0 %v1630
    %2635 = vmatprep.subr.bf16.mxu0 %v1638
    %2636 = vmatpush1.bf16.msra.mxu0 %v1637
    %2637 = vmatprep.subr.bf16.mxu0 %v1645
    %2638 = vmatpush1.bf16.msra.mxu0 %v1644
    %2639 = vmatprep.subr.bf16.mxu0 %v1652
    %2640 = vmatpush1.bf16.msra.mxu0 %v1651
    %2641 = vmatprep.subr.bf16.mxu0 %v1659
    %2642 = vmatpush1.bf16.msra.mxu0 %v1658
    %2643 = vmatprep.subr.bf16.mxu0 %v1666
    %2644 = vmatpush1.bf16.msra.mxu0 %v1665
    %2645 = vmatprep.subr.bf16.mxu0 %v1673
    %2646 = vmatpush1.bf16.msra.mxu0 %v1672
    %2647 = vmatprep.subr.bf16.mxu0 %v1680
    %2648 = vmatpush1.bf16.msra.mxu0 %v1679
    %2649 = vmatprep.subr.bf16.mxu0 %v1687
    %2650 = vmatpush1.bf16.msra.mxu0 %v1686
    %2651 = vmatprep.subr.bf16.mxu0 %v1694
    %2652 = vmatpush1.bf16.msra.mxu0 %v1693
    %2653 = vmatprep.subr.bf16.mxu0 %v1701
    %2654 = vmatpush1.bf16.msra.mxu0 %v1700
    %2655 = vmatprep.mubr.bf16.mxu0 %v48
    %2656 = vmatmul.mubr.bf16.gmra.mrb[0].mxu0 %v47
    %v2657 = vpop.f32.mrb[0].mxu0
    %v2658 = vadd.f32 %v475, %v2657
    %v2659 = vpop.f32.mrb[0].mxu0
    %v2660 = vadd.f32 %v479, %v2659
    %v2661 = vpop.f32.mrb[0].mxu0
    %v2662 = vpop.f32.mrb[0].mxu0
    %2663 = vdwg.mxu0
    %2664 = vmatprep.subr.bf16.mxu0 %v1708
    %2665 = vmatpush1.bf16.msra.mxu0 %v1707
    %2666 = vmatprep.subr.bf16.mxu0 %v1715
    %2667 = vmatpush1.bf16.msra.mxu0 %v1714
    %2668 = vmatprep.subr.bf16.mxu0 %v1722
    %2669 = vmatpush1.bf16.msra.mxu0 %v1721
    %2670 = vmatprep.subr.bf16.mxu0 %v1729
    %2671 = vmatpush1.bf16.msra.mxu0 %v1728
    %2672 = vmatprep.subr.bf16.mxu0 %v1736
    %2673 = vmatpush1.bf16.msra.mxu0 %v1735
    %2674 = vmatprep.subr.bf16.mxu0 %v1743
    %2675 = vmatpush1.bf16.msra.mxu0 %v1742
    %2676 = vmatprep.subr.bf16.mxu0 %v1750
    %2677 = vmatpush1.bf16.msra.mxu0 %v1749
    %2678 = vmatprep.subr.bf16.mxu0 %v1757
    %2679 = vmatpush1.bf16.msra.mxu0 %v1756
    %2680 = vmatprep.subr.bf16.mxu0 %v1764
    %2681 = vmatpush1.bf16.msra.mxu0 %v1763
    %2682 = vmatprep.subr.bf16.mxu0 %v1771
    %2683 = vmatpush1.bf16.msra.mxu0 %v1770
    %2684 = vmatprep.subr.bf16.mxu0 %v1778
    %2685 = vmatpush1.bf16.msra.mxu0 %v1777
    %2686 = vmatprep.subr.bf16.mxu0 %v1785
    %2687 = vmatpush1.bf16.msra.mxu0 %v1784
    %2688 = vmatprep.subr.bf16.mxu0 %v1792
    %2689 = vmatpush1.bf16.msra.mxu0 %v1791
    %2690 = vmatprep.subr.bf16.mxu0 %v1799
    %2691 = vmatpush1.bf16.msra.mxu0 %v1798
    %2692 = vmatprep.subr.bf16.mxu0 %v1806
    %2693 = vmatpush1.bf16.msra.mxu0 %v1805
    %2694 = vmatprep.subr.bf16.mxu0 %v1813
    %2695 = vmatpush1.bf16.msra.mxu0 %v1812
    %2696 = vmatprep.mubr.bf16.mxu0 %v50
    %2697 = vmatmul.mubr.bf16.gmra.mrb[0].mxu0 %v49
    %v2698 = vpop.f32.mrb[0].mxu0
    %v2699 = vadd.f32 %v2658, %v2698
    %v2700 = vpop.f32.mrb[0].mxu0
    %v2701 = vadd.f32 %v2660, %v2700
    %v2702 = vpop.f32.mrb[0].mxu0
    %v2703 = vpop.f32.mrb[0].mxu0
    %2704 = vdwg.mxu0
    %2705 = vmatprep.subr.bf16.mxu0 %v1820
    %2706 = vmatpush1.bf16.msra.mxu0 %v1819
    %2707 = vmatprep.subr.bf16.mxu0 %v1827
    %2708 = vmatpush1.bf16.msra.mxu0 %v1826
    %2709 = vmatprep.subr.bf16.mxu0 %v1834
    %2710 = vmatpush1.bf16.msra.mxu0 %v1833
    %2711 = vmatprep.subr.bf16.mxu0 %v1841
    %2712 = vmatpush1.bf16.msra.mxu0 %v1840
    %2713 = vmatprep.subr.bf16.mxu0 %v1848
    %2714 = vmatpush1.bf16.msra.mxu0 %v1847
    %2715 = vmatprep.subr.bf16.mxu0 %v1855
    %2716 = vmatpush1.bf16.msra.mxu0 %v1854
    %2717 = vmatprep.subr.bf16.mxu0 %v1862
    %2718 = vmatpush1.bf16.msra.mxu0 %v1861
    %2719 = vmatprep.subr.bf16.mxu0 %v1869
    %2720 = vmatpush1.bf16.msra.mxu0 %v1868
    %2721 = vmatprep.subr.bf16.mxu0 %v1876
    %2722 = vmatpush1.bf16.msra.mxu0 %v1875
    %2723 = vmatprep.subr.bf16.mxu0 %v1883
    %2724 = vmatpush1.bf16.msra.mxu0 %v1882
    %2725 = vmatprep.subr.bf16.mxu0 %v1890
    %2726 = vmatpush1.bf16.msra.mxu0 %v1889
    %2727 = vmatprep.subr.bf16.mxu0 %v1897
    %2728 = vmatpush1.bf16.msra.mxu0 %v1896
    %2729 = vmatprep.subr.bf16.mxu0 %v1904
    %2730 = vmatpush1.bf16.msra.mxu0 %v1903
    %2731 = vmatprep.subr.bf16.mxu0 %v1911
    %2732 = vmatpush1.bf16.msra.mxu0 %v1910
    %2733 = vmatprep.subr.bf16.mxu0 %v1918
    %2734 = vmatpush1.bf16.msra.mxu0 %v1917
    %2735 = vmatprep.subr.bf16.mxu0 %v1925
    %2736 = vmatpush1.bf16.msra.mxu0 %v1924
    %2737 = vmatprep.mubr.bf16.mxu0 %v52
    %2738 = vmatmul.mubr.bf16.gmra.mrb[0].mxu0 %v51
    %v2739 = vpop.f32.mrb[0].mxu0
    %v2740 = vadd.f32 %v2699, %v2739
    %v2741 = vpop.f32.mrb[0].mxu0
    %v2742 = vadd.f32 %v2701, %v2741
    %v2743 = vpop.f32.mrb[0].mxu0
    %v2744 = vpop.f32.mrb[0].mxu0
    %2745 = vdwg.mxu0
    %2746 = vmatprep.subr.bf16.mxu0 %v1932
    %2747 = vmatpush1.bf16.msra.mxu0 %v1931
    %2748 = vmatprep.subr.bf16.mxu0 %v1939
    %2749 = vmatpush1.bf16.msra.mxu0 %v1938
    %2750 = vmatprep.subr.bf16.mxu0 0
    %2751 = vmatpush1.bf16.msra.mxu0 0
    %2752 = vmatprep.subr.bf16.mxu0 0
    %2753 = vmatpush1.bf16.msra.mxu0 0
    %2754 = vmatprep.subr.bf16.mxu0 0
    %2755 = vmatpush1.bf16.msra.mxu0 0
    %2756 = vmatprep.subr.bf16.mxu0 0
    %2757 = vmatpush1.bf16.msra.mxu0 0
    %2758 = vmatprep.subr.bf16.mxu0 0
    %2759 = vmatpush1.bf16.msra.mxu0 0
    %2760 = vmatprep.subr.bf16.mxu0 0
    %2761 = vmatpush1.bf16.msra.mxu0 0
    %2762 = vmatprep.subr.bf16.mxu0 0
    %2763 = vmatpush1.bf16.msra.mxu0 0
    %2764 = vmatprep.subr.bf16.mxu0 0
    %2765 = vmatpush1.bf16.msra.mxu0 0
    %2766 = vmatprep.subr.bf16.mxu0 0
    %2767 = vmatpush1.bf16.msra.mxu0 0
    %2768 = vmatprep.subr.bf16.mxu0 0
    %2769 = vmatpush1.bf16.msra.mxu0 0
    %2770 = vmatprep.subr.bf16.mxu0 0
    %2771 = vmatpush1.bf16.msra.mxu0 0
    %2772 = vmatprep.subr.bf16.mxu0 0
    %2773 = vmatpush1.bf16.msra.mxu0 0
    %2774 = vmatprep.subr.bf16.mxu0 0
    %2775 = vmatpush1.bf16.msra.mxu0 0
    %2776 = vmatprep.subr.bf16.mxu0 0
    %2777 = vmatpush1.bf16.msra.mxu0 0
    %2778 = vmatprep.mubr.bf16.mxu0 0
    %2779 = vmatmul.mubr.bf16.gmra.mrb[0].mxu0 %v2293
    %v2780 = vpop.f32.mrb[0].mxu0
    %v2781 = vadd.f32 %v2740, %v2780
    %v2782 = vpop.f32.mrb[0].mxu0
    %v2783 = vadd.f32 %v2742, %v2782
    %v2784 = vpop.f32.mrb[0].mxu0
    %v2785 = vpop.f32.mrb[0].mxu0
    %2786 = vdwg.mxu0
    %2787 = vmatprep.subr.bf16.mxu0 0
    %2788 = vmatpush1.bf16.msra.mxu0 %v1597
    %2789 = vmatprep.subr.bf16.mxu0 0
    %2790 = vmatpush1.bf16.msra.mxu0 %v1604
    %2791 = vmatprep.subr.bf16.mxu0 0
    %2792 = vmatpush1.bf16.msra.mxu0 %v1611
    %2793 = vmatprep.subr.bf16.mxu0 0
    %2794 = vmatpush1.bf16.msra.mxu0 %v1618
    %2795 = vmatprep.subr.bf16.mxu0 0
    %2796 = vmatpush1.bf16.msra.mxu0 %v1625
    %2797 = vmatprep.subr.bf16.mxu0 0
    %2798 = vmatpush1.bf16.msra.mxu0 %v1632
    %2799 = vmatprep.subr.bf16.mxu0 0
    %2800 = vmatpush1.bf16.msra.mxu0 %v1639
    %2801 = vmatprep.subr.bf16.mxu0 0
    %2802 = vmatpush1.bf16.msra.mxu0 %v1646
    %2803 = vmatprep.subr.bf16.mxu0 0
    %2804 = vmatpush1.bf16.msra.mxu0 %v1653
    %2805 = vmatprep.subr.bf16.mxu0 0
    %2806 = vmatpush1.bf16.msra.mxu0 %v1660
    %2807 = vmatprep.subr.bf16.mxu0 0
    %2808 = vmatpush1.bf16.msra.mxu0 %v1667
    %2809 = vmatprep.subr.bf16.mxu0 0
    %2810 = vmatpush1.bf16.msra.mxu0 %v1674
    %2811 = vmatprep.subr.bf16.mxu0 0
    %2812 = vmatpush1.bf16.msra.mxu0 %v1681
    %2813 = vmatprep.subr.bf16.mxu0 0
    %2814 = vmatpush1.bf16.msra.mxu0 %v1688
    %2815 = vmatprep.subr.bf16.mxu0 0
    %2816 = vmatpush1.bf16.msra.mxu0 %v1695
    %2817 = vmatprep.subr.bf16.mxu0 0
    %2818 = vmatpush1.bf16.msra.mxu0 %v1702
    %2819 = vmatprep.mubr.bf16.mxu0 %v48
    %2820 = vmatmul.mubr.bf16.gmra.mrb[0].mxu0 %v47
    %v2821 = vpop.f32.mrb[0].mxu0
    %v2822 = vadd.f32 %v483, %v2821
    %v2823 = vpop.f32.mrb[0].mxu0
    %v2824 = vpop.f32.mrb[0].mxu0
    %v2825 = vpop.f32.mrb[0].mxu0
    %2826 = vdwg.mxu0
    %2827 = vmatprep.subr.bf16.mxu0 0
    %2828 = vmatpush1.bf16.msra.mxu0 %v1709
    %2829 = vmatprep.subr.bf16.mxu0 0
    %2830 = vmatpush1.bf16.msra.mxu0 %v1716
    %2831 = vmatprep.subr.bf16.mxu0 0
    %2832 = vmatpush1.bf16.msra.mxu0 %v1723
    %2833 = vmatprep.subr.bf16.mxu0 0
    %2834 = vmatpush1.bf16.msra.mxu0 %v1730
    %2835 = vmatprep.subr.bf16.mxu0 0
    %2836 = vmatpush1.bf16.msra.mxu0 %v1737
    %2837 = vmatprep.subr.bf16.mxu0 0
    %2838 = vmatpush1.bf16.msra.mxu0 %v1744
    %2839 = vmatprep.subr.bf16.mxu0 0
    %2840 = vmatpush1.bf16.msra.mxu0 %v1751
    %2841 = vmatprep.subr.bf16.mxu0 0
    %2842 = vmatpush1.bf16.msra.mxu0 %v1758
    %2843 = vmatprep.subr.bf16.mxu0 0
    %2844 = vmatpush1.bf16.msra.mxu0 %v1765
    %2845 = vmatprep.subr.bf16.mxu0 0
    %2846 = vmatpush1.bf16.msra.mxu0 %v1772
    %2847 = vmatprep.subr.bf16.mxu0 0
    %2848 = vmatpush1.bf16.msra.mxu0 %v1779
    %2849 = vmatprep.subr.bf16.mxu0 0
    %2850 = vmatpush1.bf16.msra.mxu0 %v1786
    %2851 = vmatprep.subr.bf16.mxu0 0
    %2852 = vmatpush1.bf16.msra.mxu0 %v1793
    %2853 = vmatprep.subr.bf16.mxu0 0
    %2854 = vmatpush1.bf16.msra.mxu0 %v1800
    %2855 = vmatprep.subr.bf16.mxu0 0
    %2856 = vmatpush1.bf16.msra.mxu0 %v1807
    %2857 = vmatprep.subr.bf16.mxu0 0
    %2858 = vmatpush1.bf16.msra.mxu0 %v1814
    %2859 = vmatprep.mubr.bf16.mxu0 %v50
    %2860 = vmatmul.mubr.bf16.gmra.mrb[0].mxu0 %v49
    %v2861 = vpop.f32.mrb[0].mxu0
    %v2862 = vadd.f32 %v2822, %v2861
    %v2863 = vpop.f32.mrb[0].mxu0
    %v2864 = vpop.f32.mrb[0].mxu0
    %v2865 = vpop.f32.mrb[0].mxu0
    %2866 = vdwg.mxu0
    %2867 = vmatprep.subr.bf16.mxu0 0
    %2868 = vmatpush1.bf16.msra.mxu0 %v1821
    %2869 = vmatprep.subr.bf16.mxu0 0
    %2870 = vmatpush1.bf16.msra.mxu0 %v1828
    %2871 = vmatprep.subr.bf16.mxu0 0
    %2872 = vmatpush1.bf16.msra.mxu0 %v1835
    %2873 = vmatprep.subr.bf16.mxu0 0
    %2874 = vmatpush1.bf16.msra.mxu0 %v1842
    %2875 = vmatprep.subr.bf16.mxu0 0
    %2876 = vmatpush1.bf16.msra.mxu0 %v1849
    %2877 = vmatprep.subr.bf16.mxu0 0
    %2878 = vmatpush1.bf16.msra.mxu0 %v1856
    %2879 = vmatprep.subr.bf16.mxu0 0
    %2880 = vmatpush1.bf16.msra.mxu0 %v1863
    %2881 = vmatprep.subr.bf16.mxu0 0
    %2882 = vmatpush1.bf16.msra.mxu0 %v1870
    %2883 = vmatprep.subr.bf16.mxu0 0
    %2884 = vmatpush1.bf16.msra.mxu0 %v1877
    %2885 = vmatprep.subr.bf16.mxu0 0
    %2886 = vmatpush1.bf16.msra.mxu0 %v1884
    %2887 = vmatprep.subr.bf16.mxu0 0
    %2888 = vmatpush1.bf16.msra.mxu0 %v1891
    %2889 = vmatprep.subr.bf16.mxu0 0
    %2890 = vmatpush1.bf16.msra.mxu0 %v1898
    %2891 = vmatprep.subr.bf16.mxu0 0
    %2892 = vmatpush1.bf16.msra.mxu0 %v1905
    %2893 = vmatprep.subr.bf16.mxu0 0
    %2894 = vmatpush1.bf16.msra.mxu0 %v1912
    %2895 = vmatprep.subr.bf16.mxu0 0
    %2896 = vmatpush1.bf16.msra.mxu0 %v1919
    %2897 = vmatprep.subr.bf16.mxu0 0
    %2898 = vmatpush1.bf16.msra.mxu0 %v1926
    %2899 = vmatprep.mubr.bf16.mxu0 %v52
    %2900 = vmatmul.mubr.bf16.gmra.mrb[0].mxu0 %v51
    %v2901 = vpop.f32.mrb[0].mxu0
    %v2902 = vadd.f32 %v2862, %v2901
    %v2903 = vpop.f32.mrb[0].mxu0
    %v2904 = vpop.f32.mrb[0].mxu0
    %v2905 = vpop.f32.mrb[0].mxu0
    %2906 = vdwg.mxu0
    %2907 = vmatprep.subr.bf16.mxu0 0
    %2908 = vmatpush1.bf16.msra.mxu0 %v1933
    %2909 = vmatprep.subr.bf16.mxu0 0
    %2910 = vmatpush1.bf16.msra.mxu0 %v1940
    %2911 = vmatprep.subr.bf16.mxu0 0
    %2912 = vmatpush1.bf16.msra.mxu0 0
    %2913 = vmatprep.subr.bf16.mxu0 0
    %2914 = vmatpush1.bf16.msra.mxu0 0
    %2915 = vmatprep.subr.bf16.mxu0 0
    %2916 = vmatpush1.bf16.msra.mxu0 0
    %2917 = vmatprep.subr.bf16.mxu0 0
    %2918 = vmatpush1.bf16.msra.mxu0 0
    %2919 = vmatprep.subr.bf16.mxu0 0
    %2920 = vmatpush1.bf16.msra.mxu0 0
    %2921 = vmatprep.subr.bf16.mxu0 0
    %2922 = vmatpush1.bf16.msra.mxu0 0
    %2923 = vmatprep.subr.bf16.mxu0 0
    %2924 = vmatpush1.bf16.msra.mxu0 0
    %2925 = vmatprep.subr.bf16.mxu0 0
    %2926 = vmatpush1.bf16.msra.mxu0 0
    %2927 = vmatprep.subr.bf16.mxu0 0
    %2928 = vmatpush1.bf16.msra.mxu0 0
    %2929 = vmatprep.subr.bf16.mxu0 0
    %2930 = vmatpush1.bf16.msra.mxu0 0
    %2931 = vmatprep.subr.bf16.mxu0 0
    %2932 = vmatpush1.bf16.msra.mxu0 0
    %2933 = vmatprep.subr.bf16.mxu0 0
    %2934 = vmatpush1.bf16.msra.mxu0 0
    %2935 = vmatprep.subr.bf16.mxu0 0
    %2936 = vmatpush1.bf16.msra.mxu0 0
    %2937 = vmatprep.subr.bf16.mxu0 0
    %2938 = vmatpush1.bf16.msra.mxu0 0
    %2939 = vmatprep.mubr.bf16.mxu0 0
    %2940 = vmatmul.mubr.bf16.gmra.mrb[0].mxu0 %v2293
    %v2941 = vpop.f32.mrb[0].mxu0
    %v2942 = vadd.f32 %v2902, %v2941
    %v2943 = vpop.f32.mrb[0].mxu0
    %v2944 = vpop.f32.mrb[0].mxu0
    %v2945 = vpop.f32.mrb[0].mxu0
    %2946 = vdwg.mxu0
    %v2947 = vpack.c.bf16 %v2453, %v2453
    %v2948 = vpack.c.bf16 %v2455, %v2455
    %v2949 = vpack.c.bf16 %v2617, %v2617
    %v2950 = vpack.c.bf16 %v2619, %v2619
    %v2951 = vpack.c.bf16 %v2781, %v2781
    %v2952 = vpack.c.bf16 %v2783, %v2783
    %v2953 = vpack.c.bf16 %v2942, %v2942
    %v2954 = vld [vmem:[%s3] sm:$0xff]
    %v2955 = vld [vmem:[%s3 + $0x8] sm:$0xff]
    %v2956 = vld [vmem:[%s3 + $0x10] sm:$0xff]
    %v2957 = vld [vmem:[%s3 + $0x18] sm:$0xf]
    %v2958 = vld [vmem:[%s3 + $0x1c] sm:$0xff]
    %v2959 = vld [vmem:[%s3 + $0x24] sm:$0xff]
    %v2960 = vld [vmem:[%s3 + $0x2c] sm:$0xff]
    %v2961 = vld [vmem:[%s3 + $0x34] sm:$0xf]
    %v2962 = vld [vmem:[%s3 + $0x38] sm:$0xff]
    %v2963 = vld [vmem:[%s3 + $0x40] sm:$0xff]
    %v2964 = vld [vmem:[%s3 + $0x48] sm:$0xff]
    %v2965 = vld [vmem:[%s3 + $0x50] sm:$0xf]
    %v2966 = vld [vmem:[%s3 + $0x54] sm:$0xff]
    %v2967 = vld [vmem:[%s3 + $0x5c] sm:$0xff]
    %v2968 = vld [vmem:[%s3 + $0x64] sm:$0xff]
    %v2969 = vld [vmem:[%s3 + $0x6c] sm:$0xf]
    %v2970 = vld [vmem:[%s3 + $0x70] sm:$0xff]
    %v2971 = vld [vmem:[%s3 + $0x78] sm:$0xff]
    %v2972 = vld [vmem:[%s3 + $0x80] sm:$0xff]
    %v2973 = vld [vmem:[%s3 + $0x88] sm:$0xf]
    %v2974 = vld [vmem:[%s3 + $0x8c] sm:$0xff]
    %v2975 = vld [vmem:[%s3 + $0x94] sm:$0xff]
    %v2976 = vld [vmem:[%s3 + $0x9c] sm:$0xff]
    %v2977 = vld [vmem:[%s3 + $0xa4] sm:$0xf]
    %v2978 = vld [vmem:[%s3 + $0xa8] sm:$0xff]
    %v2979 = vld [vmem:[%s3 + $0xb0] sm:$0xff]
    %v2980 = vld [vmem:[%s3 + $0xb8] sm:$0xff]
    %v2981 = vld [vmem:[%s3 + $0xc0] sm:$0xf]
    %v2982 = vld [vmem:[%s3 + $0xc4] sm:$0xff]
    %v2983 = vld [vmem:[%s3 + $0xcc] sm:$0xff]
    %v2984 = vld [vmem:[%s3 + $0xd4] sm:$0xff]
    %v2985 = vld [vmem:[%s3 + $0xdc] sm:$0xf]
    %v2986 = vld [vmem:[%s3 + $0xe0] sm:$0xff]
    %v2987 = vld [vmem:[%s3 + $0xe8] sm:$0xff]
    %v2988 = vld [vmem:[%s3 + $0xf0] sm:$0xff]
    %v2989 = vld [vmem:[%s3 + $0xf8] sm:$0xf]
    %v2990 = vld [vmem:[%s3 + $0xfc] sm:$0xff]
    %v2991 = vld [vmem:[%s3 + $0x104] sm:$0xff]
    %v2992 = vld [vmem:[%s3 + $0x10c] sm:$0xff]
    %v2993 = vld [vmem:[%s3 + $0x114] sm:$0xf]
    %v2994 = vld [vmem:[%s3 + $0x118] sm:$0xff]
    %v2995 = vld [vmem:[%s3 + $0x120] sm:$0xff]
    %v2996 = vld [vmem:[%s3 + $0x128] sm:$0xff]
    %v2997 = vld [vmem:[%s3 + $0x130] sm:$0xf]
    %v2998 = vld [vmem:[%s3 + $0x134] sm:$0xff]
    %v2999 = vld [vmem:[%s3 + $0x13c] sm:$0xff]
    %v3000 = vld [vmem:[%s3 + $0x144] sm:$0xff]
    %v3001 = vld [vmem:[%s3 + $0x14c] sm:$0xf]
    %v3002 = vld [vmem:[%s3 + $0x150] sm:$0xff]
    %v3003 = vld [vmem:[%s3 + $0x158] sm:$0xff]
    %v3004 = vld [vmem:[%s3 + $0x160] sm:$0xff]
    %v3005 = vld [vmem:[%s3 + $0x168] sm:$0xf]
    %v3006 = vld [vmem:[%s3 + $0x16c] sm:$0xff]
    %v3007 = vld [vmem:[%s3 + $0x174] sm:$0xff]
    %v3008 = vld [vmem:[%s3 + $0x17c] sm:$0xff]
    %v3009 = vld [vmem:[%s3 + $0x184] sm:$0xf]
    %v3010 = vld [vmem:[%s3 + $0x188] sm:$0xff]
    %v3011 = vld [vmem:[%s3 + $0x190] sm:$0xff]
    %v3012 = vld [vmem:[%s3 + $0x198] sm:$0xff]
    %v3013 = vld [vmem:[%s3 + $0x1a0] sm:$0xf]
    %v3014 = vld [vmem:[%s3 + $0x1a4] sm:$0xff]
    %v3015 = vld [vmem:[%s3 + $0x1ac] sm:$0xff]
    %v3016 = vld [vmem:[%s3 + $0x1b4] sm:$0xff]
    %v3017 = vld [vmem:[%s3 + $0x1bc] sm:$0xf]
    %v3018 = vld [vmem:[%s3 + $0x1c0] sm:$0xff]
    %v3019 = vld [vmem:[%s3 + $0x1c8] sm:$0xff]
    %v3020 = vld [vmem:[%s3 + $0x1d0] sm:$0xff]
    %v3021 = vld [vmem:[%s3 + $0x1d8] sm:$0xf]
    %v3022 = vld [vmem:[%s3 + $0x1dc] sm:$0xff]
    %v3023 = vld [vmem:[%s3 + $0x1e4] sm:$0xff]
    %v3024 = vld [vmem:[%s3 + $0x1ec] sm:$0xff]
    %v3025 = vld [vmem:[%s3 + $0x1f4] sm:$0xf]
    %v3026 = vld [vmem:[%s3 + $0x1f8] sm:$0xff]
    %v3027 = vld [vmem:[%s3 + $0x200] sm:$0xff]
    %v3028 = vld [vmem:[%s3 + $0x208] sm:$0xff]
    %v3029 = vld [vmem:[%s3 + $0x210] sm:$0xf]
    %v3030 = vld [vmem:[%s3 + $0x214] sm:$0xff]
    %v3031 = vld [vmem:[%s3 + $0x21c] sm:$0xff]
    %v3032 = vld [vmem:[%s3 + $0x224] sm:$0xff]
    %v3033 = vld [vmem:[%s3 + $0x22c] sm:$0xf]
    %v3034 = vld [vmem:[%s3 + $0x230] sm:$0xff]
    %v3035 = vld [vmem:[%s3 + $0x238] sm:$0xff]
    %v3036 = vld [vmem:[%s3 + $0x240] sm:$0xff]
    %v3037 = vld [vmem:[%s3 + $0x248] sm:$0xf]
    %v3038 = vld [vmem:[%s3 + $0x24c] sm:$0xff]
    %v3039 = vld [vmem:[%s3 + $0x254] sm:$0xff]
    %v3040 = vld [vmem:[%s3 + $0x25c] sm:$0xff]
    %v3041 = vld [vmem:[%s3 + $0x264] sm:$0xf]
    %v3042 = vld [vmem:[%s3 + $0x268] sm:$0xff]
    %v3043 = vld [vmem:[%s3 + $0x270] sm:$0xff]
    %v3044 = vld [vmem:[%s3 + $0x278] sm:$0xff]
    %v3045 = vld [vmem:[%s3 + $0x280] sm:$0xf]
    %v3046 = vld [vmem:[%s3 + $0x284] sm:$0xff]
    %v3047 = vld [vmem:[%s3 + $0x28c] sm:$0xff]
    %v3048 = vld [vmem:[%s3 + $0x294] sm:$0xff]
    %v3049 = vld [vmem:[%s3 + $0x29c] sm:$0xf]
    %v3050 = vld [vmem:[%s3 + $0x2a0] sm:$0xff]
    %v3051 = vld [vmem:[%s3 + $0x2a8] sm:$0xff]
    %v3052 = vld [vmem:[%s3 + $0x2b0] sm:$0xff]
    %v3053 = vld [vmem:[%s3 + $0x2b8] sm:$0xf]
    %v3054 = vld [vmem:[%s3 + $0x2bc] sm:$0xff]
    %v3055 = vld [vmem:[%s3 + $0x2c4] sm:$0xff]
    %v3056 = vld [vmem:[%s3 + $0x2cc] sm:$0xff]
    %v3057 = vld [vmem:[%s3 + $0x2d4] sm:$0xf]
    %v3058 = vld [vmem:[%s3 + $0x2d8] sm:$0xff]
    %v3059 = vld [vmem:[%s3 + $0x2e0] sm:$0xff]
    %v3060 = vld [vmem:[%s3 + $0x2e8] sm:$0xff]
    %v3061 = vld [vmem:[%s3 + $0x2f0] sm:$0xf]
    %v3062 = vld [vmem:[%s3 + $0x2f4] sm:$0xff]
    %v3063 = vld [vmem:[%s3 + $0x2fc] sm:$0xff]
    %v3064 = vld [vmem:[%s3 + $0x304] sm:$0xff]
    %v3065 = vld [vmem:[%s3 + $0x30c] sm:$0xf]
    %v3066 = vld [vmem:[%s3 + $0x310] sm:$0xff]
    %v3067 = vld [vmem:[%s3 + $0x318] sm:$0xff]
    %v3068 = vld [vmem:[%s3 + $0x320] sm:$0xff]
    %v3069 = vld [vmem:[%s3 + $0x328] sm:$0xf]
    %v3070 = vld [vmem:[%s3 + $0x32c] sm:$0xff]
    %v3071 = vld [vmem:[%s3 + $0x334] sm:$0xff]
    %v3072 = vld [vmem:[%s3 + $0x33c] sm:$0xff]
    %v3073 = vld [vmem:[%s3 + $0x344] sm:$0xf]
    %v3074 = vld [vmem:[%s3 + $0x348] sm:$0xff]
    %v3075 = vld [vmem:[%s3 + $0x350] sm:$0xff]
    %v3076 = vld [vmem:[%s3 + $0x358] sm:$0xff]
    %v3077 = vld [vmem:[%s3 + $0x360] sm:$0xf]
    %v3078 = vld [vmem:[%s3 + $0x364] sm:$0xff]
    %v3079 = vld [vmem:[%s3 + $0x36c] sm:$0xff]
    %v3080 = vld [vmem:[%s3 + $0x374] sm:$0xff]
    %v3081 = vld [vmem:[%s3 + $0x37c] sm:$0xf]
    %v3082 = vld [vmem:[%s3 + $0x380] sm:$0xff]
    %v3083 = vld [vmem:[%s3 + $0x388] sm:$0xff]
    %v3084 = vld [vmem:[%s3 + $0x390] sm:$0xff]
    %v3085 = vld [vmem:[%s3 + $0x398] sm:$0xf]
    %v3086 = vld [vmem:[%s3 + $0x39c] sm:$0xff]
    %v3087 = vld [vmem:[%s3 + $0x3a4] sm:$0xff]
    %v3088 = vld [vmem:[%s3 + $0x3ac] sm:$0xff]
    %v3089 = vld [vmem:[%s3 + $0x3b4] sm:$0xf]
    %v3090 = vld [vmem:[%s3 + $0x3b8] sm:$0xff]
    %v3091 = vld [vmem:[%s3 + $0x3c0] sm:$0xff]
    %v3092 = vld [vmem:[%s3 + $0x3c8] sm:$0xff]
    %v3093 = vld [vmem:[%s3 + $0x3d0] sm:$0xf]
    %v3094 = vld [vmem:[%s3 + $0x3d4] sm:$0xff]
    %v3095 = vld [vmem:[%s3 + $0x3dc] sm:$0xff]
    %v3096 = vld [vmem:[%s3 + $0x3e4] sm:$0xff]
    %v3097 = vld [vmem:[%s3 + $0x3ec] sm:$0xf]
    %v3098 = vld [vmem:[%s3 + $0x3f0] sm:$0xff]
    %v3099 = vld [vmem:[%s3 + $0x3f8] sm:$0xff]
    %v3100 = vld [vmem:[%s3 + $0x400] sm:$0xff]
    %v3101 = vld [vmem:[%s3 + $0x408] sm:$0xf]
    %v3102 = vld [vmem:[%s3 + $0x40c] sm:$0xff]
    %v3103 = vld [vmem:[%s3 + $0x414] sm:$0xff]
    %v3104 = vld [vmem:[%s3 + $0x41c] sm:$0xff]
    %v3105 = vld [vmem:[%s3 + $0x424] sm:$0xf]
    %v3106 = vld [vmem:[%s3 + $0x428] sm:$0xff]
    %v3107 = vld [vmem:[%s3 + $0x430] sm:$0xff]
    %v3108 = vld [vmem:[%s3 + $0x438] sm:$0xff]
    %v3109 = vld [vmem:[%s3 + $0x440] sm:$0xf]
    %v3110 = vld [vmem:[%s3 + $0x444] sm:$0xff]
    %v3111 = vld [vmem:[%s3 + $0x44c] sm:$0xff]
    %v3112 = vld [vmem:[%s3 + $0x454] sm:$0xff]
    %v3113 = vld [vmem:[%s3 + $0x45c] sm:$0xf]
    %v3114 = vld [vmem:[%s3 + $0x460] sm:$0xff]
    %v3115 = vld [vmem:[%s3 + $0x468] sm:$0xff]
    %v3116 = vld [vmem:[%s3 + $0x470] sm:$0xff]
    %v3117 = vld [vmem:[%s3 + $0x478] sm:$0xf]
    %v3118 = vld [vmem:[%s3 + $0x47c] sm:$0xff]
    %v3119 = vld [vmem:[%s3 + $0x484] sm:$0xff]
    %v3120 = vld [vmem:[%s3 + $0x48c] sm:$0xff]
    %v3121 = vld [vmem:[%s3 + $0x494] sm:$0xf]
    %v3122 = vld [vmem:[%s3 + $0x498] sm:$0xff]
    %v3123 = vld [vmem:[%s3 + $0x4a0] sm:$0xff]
    %v3124 = vld [vmem:[%s3 + $0x4a8] sm:$0xff]
    %v3125 = vld [vmem:[%s3 + $0x4b0] sm:$0xf]
    %v3126 = vld [vmem:[%s3 + $0x4b4] sm:$0xff]
    %v3127 = vld [vmem:[%s3 + $0x4bc] sm:$0xff]
    %v3128 = vld [vmem:[%s3 + $0x4c4] sm:$0xff]
    %v3129 = vld [vmem:[%s3 + $0x4cc] sm:$0xf]
    %v3130 = vld [vmem:[%s3 + $0x4d0] sm:$0xff]
    %v3131 = vld [vmem:[%s3 + $0x4d8] sm:$0xff]
    %v3132 = vld [vmem:[%s3 + $0x4e0] sm:$0xff]
    %v3133 = vld [vmem:[%s3 + $0x4e8] sm:$0xf]
    %v3134 = vld [vmem:[%s3 + $0x4ec] sm:$0xff]
    %v3135 = vld [vmem:[%s3 + $0x4f4] sm:$0xff]
    %v3136 = vld [vmem:[%s3 + $0x4fc] sm:$0xff]
    %v3137 = vld [vmem:[%s3 + $0x504] sm:$0xf]
    %v3138 = vld [vmem:[%s3 + $0x508] sm:$0xff]
    %v3139 = vld [vmem:[%s3 + $0x510] sm:$0xff]
    %v3140 = vld [vmem:[%s3 + $0x518] sm:$0xff]
    %v3141 = vld [vmem:[%s3 + $0x520] sm:$0xf]
    %v3142 = vld [vmem:[%s3 + $0x524] sm:$0xff]
    %v3143 = vld [vmem:[%s3 + $0x52c] sm:$0xff]
    %v3144 = vld [vmem:[%s3 + $0x534] sm:$0xff]
    %v3145 = vld [vmem:[%s3 + $0x53c] sm:$0xf]
    %v3146 = vld [vmem:[%s3 + $0x540] sm:$0xff]
    %v3147 = vld [vmem:[%s3 + $0x548] sm:$0xff]
    %v3148 = vld [vmem:[%s3 + $0x550] sm:$0xff]
    %v3149 = vld [vmem:[%s3 + $0x558] sm:$0xf]
    %v3150 = vld [vmem:[%s3 + $0x55c] sm:$0xff]
    %v3151 = vld [vmem:[%s3 + $0x564] sm:$0xff]
    %v3152 = vld [vmem:[%s3 + $0x56c] sm:$0xff]
    %v3153 = vld [vmem:[%s3 + $0x574] sm:$0xf]
    %v3154 = vld [vmem:[%s3 + $0x578] sm:$0xff]
    %v3155 = vld [vmem:[%s3 + $0x580] sm:$0xff]
    %v3156 = vld [vmem:[%s3 + $0x588] sm:$0xff]
    %v3157 = vld [vmem:[%s3 + $0x590] sm:$0xf]
    %v3158 = vld [vmem:[%s3 + $0x594] sm:$0xff]
    %v3159 = vld [vmem:[%s3 + $0x59c] sm:$0xff]
    %v3160 = vld [vmem:[%s3 + $0x5a4] sm:$0xff]
    %v3161 = vld [vmem:[%s3 + $0x5ac] sm:$0xf]
    %v3162 = vld [vmem:[%s3 + $0x5b0] sm:$0xff]
    %v3163 = vld [vmem:[%s3 + $0x5b8] sm:$0xff]
    %v3164 = vld [vmem:[%s3 + $0x5c0] sm:$0xff]
    %v3165 = vld [vmem:[%s3 + $0x5c8] sm:$0xf]
    %v3166 = vld [vmem:[%s3 + $0x5cc] sm:$0xff]
    %v3167 = vld [vmem:[%s3 + $0x5d4] sm:$0xff]
    %v3168 = vld [vmem:[%s3 + $0x5dc] sm:$0xff]
    %v3169 = vld [vmem:[%s3 + $0x5e4] sm:$0xf]
    %v3170 = vld [vmem:[%s3 + $0x5e8] sm:$0xff]
    %v3171 = vld [vmem:[%s3 + $0x5f0] sm:$0xff]
    %v3172 = vld [vmem:[%s3 + $0x5f8] sm:$0xff]
    %v3173 = vld [vmem:[%s3 + $0x600] sm:$0xf]
    %v3174 = vld [vmem:[%s3 + $0x604] sm:$0xff]
    %v3175 = vld [vmem:[%s3 + $0x60c] sm:$0xff]
    %v3176 = vld [vmem:[%s3 + $0x614] sm:$0xff]
    %v3177 = vld [vmem:[%s3 + $0x61c] sm:$0xf]
    %v3178 = vld [vmem:[%s3 + $0x620] sm:$0xff]
    %v3179 = vld [vmem:[%s3 + $0x628] sm:$0xff]
    %v3180 = vld [vmem:[%s3 + $0x630] sm:$0xff]
    %v3181 = vld [vmem:[%s3 + $0x638] sm:$0xf]
    %v3182 = vld [vmem:[%s3 + $0x63c] sm:$0xff]
    %v3183 = vld [vmem:[%s3 + $0x644] sm:$0xff]
    %v3184 = vld [vmem:[%s3 + $0x64c] sm:$0xff]
    %v3185 = vld [vmem:[%s3 + $0x654] sm:$0xf]
    %v3186 = vld [vmem:[%s3 + $0x658] sm:$0xff]
    %v3187 = vld [vmem:[%s3 + $0x660] sm:$0xff]
    %v3188 = vld [vmem:[%s3 + $0x668] sm:$0xff]
    %v3189 = vld [vmem:[%s3 + $0x670] sm:$0xf]
    %v3190 = vld [vmem:[%s3 + $0x674] sm:$0xff]
    %v3191 = vld [vmem:[%s3 + $0x67c] sm:$0xff]
    %v3192 = vld [vmem:[%s3 + $0x684] sm:$0xff]
    %v3193 = vld [vmem:[%s3 + $0x68c] sm:$0xf]
    %v3194 = vld [vmem:[%s3 + $0x690] sm:$0xff]
    %v3195 = vld [vmem:[%s3 + $0x698] sm:$0xff]
    %v3196 = vld [vmem:[%s3 + $0x6a0] sm:$0xff]
    %v3197 = vld [vmem:[%s3 + $0x6a8] sm:$0xf]
    %v3198 = vld [vmem:[%s3 + $0x6ac] sm:$0xff]
    %v3199 = vld [vmem:[%s3 + $0x6b4] sm:$0xff]
    %v3200 = vld [vmem:[%s3 + $0x6bc] sm:$0xff]
    %v3201 = vld [vmem:[%s3 + $0x6c4] sm:$0xf]
    %v3202 = vld [vmem:[%s3 + $0x6c8] sm:$0xff]
    %v3203 = vld [vmem:[%s3 + $0x6d0] sm:$0xff]
    %v3204 = vld [vmem:[%s3 + $0x6d8] sm:$0xff]
    %v3205 = vld [vmem:[%s3 + $0x6e0] sm:$0xf]
    %v3206 = vld [vmem:[%s3 + $0x6e4] sm:$0xff]
    %v3207 = vld [vmem:[%s3 + $0x6ec] sm:$0xff]
    %v3208 = vld [vmem:[%s3 + $0x6f4] sm:$0xff]
    %v3209 = vld [vmem:[%s3 + $0x6fc] sm:$0xf]
    %v3210 = vld [vmem:[%s3 + $0x700] sm:$0xff]
    %v3211 = vld [vmem:[%s3 + $0x708] sm:$0xff]
    %v3212 = vld [vmem:[%s3 + $0x710] sm:$0xff]
    %v3213 = vld [vmem:[%s3 + $0x718] sm:$0xf]
    %v3214 = vld [vmem:[%s3 + $0x71c] sm:$0xff]
    %v3215 = vld [vmem:[%s3 + $0x724] sm:$0xff]
    %v3216 = vld [vmem:[%s3 + $0x72c] sm:$0xff]
    %v3217 = vld [vmem:[%s3 + $0x734] sm:$0xf]
    %v3218 = vld [vmem:[%s3 + $0x738] sm:$0xff]
    %v3219 = vld [vmem:[%s3 + $0x740] sm:$0xff]
    %v3220 = vld [vmem:[%s3 + $0x748] sm:$0xff]
    %v3221 = vld [vmem:[%s3 + $0x750] sm:$0xf]
    %v3222 = vld [vmem:[%s3 + $0x754] sm:$0xff]
    %v3223 = vld [vmem:[%s3 + $0x75c] sm:$0xff]
    %v3224 = vld [vmem:[%s3 + $0x764] sm:$0xff]
    %v3225 = vld [vmem:[%s3 + $0x76c] sm:$0xf]
    %v3226 = vld [vmem:[%s3 + $0x770] sm:$0xff]
    %v3227 = vld [vmem:[%s3 + $0x778] sm:$0xff]
    %v3228 = vld [vmem:[%s3 + $0x780] sm:$0xff]
    %v3229 = vld [vmem:[%s3 + $0x788] sm:$0xf]
    %v3230 = vld [vmem:[%s3 + $0x78c] sm:$0xff]
    %v3231 = vld [vmem:[%s3 + $0x794] sm:$0xff]
    %v3232 = vld [vmem:[%s3 + $0x79c] sm:$0xff]
    %v3233 = vld [vmem:[%s3 + $0x7a4] sm:$0xf]
    %v3234 = vld [vmem:[%s3 + $0x7a8] sm:$0xff]
    %v3235 = vld [vmem:[%s3 + $0x7b0] sm:$0xff]
    %v3236 = vld [vmem:[%s3 + $0x7b8] sm:$0xff]
    %v3237 = vld [vmem:[%s3 + $0x7c0] sm:$0xf]
    %v3238 = vld [vmem:[%s3 + $0x7c4] sm:$0xff]
    %v3239 = vld [vmem:[%s3 + $0x7cc] sm:$0xff]
    %v3240 = vld [vmem:[%s3 + $0x7d4] sm:$0xff]
    %v3241 = vld [vmem:[%s3 + $0x7dc] sm:$0xf]
    %v3242 = vld [vmem:[%s3 + $0x7e0] sm:$0xff]
    %v3243 = vld [vmem:[%s3 + $0x7e8] sm:$0xff]
    %v3244 = vld [vmem:[%s3 + $0x7f0] sm:$0xff]
    %v3245 = vld [vmem:[%s3 + $0x7f8] sm:$0xf]
    %v3246 = vld [vmem:[%s3 + $0x7fc] sm:$0xff]
    %v3247 = vld [vmem:[%s3 + $0x804] sm:$0xff]
    %v3248 = vld [vmem:[%s3 + $0x80c] sm:$0xff]
    %v3249 = vld [vmem:[%s3 + $0x814] sm:$0xf]
    %v3250 = vld [vmem:[%s3 + $0x818] sm:$0xff]
    %v3251 = vld [vmem:[%s3 + $0x820] sm:$0xff]
    %v3252 = vld [vmem:[%s3 + $0x828] sm:$0xff]
    %v3253 = vld [vmem:[%s3 + $0x830] sm:$0xf]
    %v3254 = vld [vmem:[%s3 + $0x834] sm:$0xff]
    %v3255 = vld [vmem:[%s3 + $0x83c] sm:$0xff]
    %v3256 = vld [vmem:[%s3 + $0x844] sm:$0xff]
    %v3257 = vld [vmem:[%s3 + $0x84c] sm:$0xf]
    %v3258 = vld [vmem:[%s3 + $0x850] sm:$0xff]
    %v3259 = vld [vmem:[%s3 + $0x858] sm:$0xff]
    %v3260 = vld [vmem:[%s3 + $0x860] sm:$0xff]
    %v3261 = vld [vmem:[%s3 + $0x868] sm:$0xf]
    %v3262 = vld [vmem:[%s3 + $0x86c] sm:$0xff]
    %v3263 = vld [vmem:[%s3 + $0x874] sm:$0xff]
    %v3264 = vld [vmem:[%s3 + $0x87c] sm:$0xff]
    %v3265 = vld [vmem:[%s3 + $0x884] sm:$0xf]
    %v3266 = vld [vmem:[%s3 + $0x888] sm:$0xff]
    %v3267 = vld [vmem:[%s3 + $0x890] sm:$0xff]
    %v3268 = vld [vmem:[%s3 + $0x898] sm:$0xff]
    %v3269 = vld [vmem:[%s3 + $0x8a0] sm:$0xf]
    %v3270 = vld [vmem:[%s3 + $0x8a4] sm:$0xff]
    %v3271 = vld [vmem:[%s3 + $0x8ac] sm:$0xff]
    %v3272 = vld [vmem:[%s3 + $0x8b4] sm:$0xff]
    %v3273 = vld [vmem:[%s3 + $0x8bc] sm:$0xf]
    %v3274 = vld [vmem:[%s3 + $0x8c0] sm:$0xff]
    %v3275 = vld [vmem:[%s3 + $0x8c8] sm:$0xff]
    %v3276 = vld [vmem:[%s3 + $0x8d0] sm:$0xff]
    %v3277 = vld [vmem:[%s3 + $0x8d8] sm:$0xf]
    %v3278 = vld [vmem:[%s3 + $0x8dc] sm:$0xff]
    %v3279 = vld [vmem:[%s3 + $0x8e4] sm:$0xff]
    %v3280 = vld [vmem:[%s3 + $0x8ec] sm:$0xff]
    %v3281 = vld [vmem:[%s3 + $0x8f4] sm:$0xf]
    %v3282 = vld [vmem:[%s3 + $0x8f8] sm:$0xff]
    %v3283 = vld [vmem:[%s3 + $0x900] sm:$0xff]
    %v3284 = vld [vmem:[%s3 + $0x908] sm:$0xff]
    %v3285 = vld [vmem:[%s3 + $0x910] sm:$0xf]
    %v3286 = vld [vmem:[%s3 + $0x914] sm:$0xff]
    %v3287 = vld [vmem:[%s3 + $0x91c] sm:$0xff]
    %v3288 = vld [vmem:[%s3 + $0x924] sm:$0xff]
    %v3289 = vld [vmem:[%s3 + $0x92c] sm:$0xf]
    %v3290 = vld [vmem:[%s3 + $0x930] sm:$0xff]
    %v3291 = vld [vmem:[%s3 + $0x938] sm:$0xff]
    %v3292 = vld [vmem:[%s3 + $0x940] sm:$0xff]
    %v3293 = vld [vmem:[%s3 + $0x948] sm:$0xf]
    %v3294 = vld [vmem:[%s3 + $0x94c] sm:$0xff]
    %v3295 = vld [vmem:[%s3 + $0x954] sm:$0xff]
    %v3296 = vld [vmem:[%s3 + $0x95c] sm:$0xff]
    %v3297 = vld [vmem:[%s3 + $0x964] sm:$0xf]
    %v3298 = vld [vmem:[%s3 + $0x968] sm:$0xff]
    %v3299 = vld [vmem:[%s3 + $0x970] sm:$0xff]
    %v3300 = vld [vmem:[%s3 + $0x978] sm:$0xff]
    %v3301 = vld [vmem:[%s3 + $0x980] sm:$0xf]
    %v3302 = vld [vmem:[%s3 + $0x984] sm:$0xff]
    %v3303 = vld [vmem:[%s3 + $0x98c] sm:$0xff]
    %v3304 = vld [vmem:[%s3 + $0x994] sm:$0xff]
    %v3305 = vld [vmem:[%s3 + $0x99c] sm:$0xf]
    %v3306 = vld [vmem:[%s3 + $0x9a0] sm:$0xff]
    %v3307 = vld [vmem:[%s3 + $0x9a8] sm:$0xff]
    %v3308 = vld [vmem:[%s3 + $0x9b0] sm:$0xff]
    %v3309 = vld [vmem:[%s3 + $0x9b8] sm:$0xf]
    %v3310 = vld [vmem:[%s3 + $0x9bc] sm:$0xff]
    %v3311 = vld [vmem:[%s3 + $0x9c4] sm:$0xff]
    %v3312 = vld [vmem:[%s3 + $0x9cc] sm:$0xff]
    %v3313 = vld [vmem:[%s3 + $0x9d4] sm:$0xf]
    %v3314 = vld [vmem:[%s3 + $0x9d8] sm:$0xff]
    %v3315 = vld [vmem:[%s3 + $0x9e0] sm:$0xff]
    %v3316 = vld [vmem:[%s3 + $0x9e8] sm:$0xff]
    %v3317 = vld [vmem:[%s3 + $0x9f0] sm:$0xf]
    %v3318 = vld [vmem:[%s3 + $0x9f4] sm:$0xff]
    %v3319 = vld [vmem:[%s3 + $0x9fc] sm:$0xff]
    %v3320 = vld [vmem:[%s3 + $0xa04] sm:$0xff]
    %v3321 = vld [vmem:[%s3 + $0xa0c] sm:$0xf]
    %v3322 = vld [vmem:[%s3 + $0xa10] sm:$0xff]
    %v3323 = vld [vmem:[%s3 + $0xa18] sm:$0xff]
    %v3324 = vld [vmem:[%s3 + $0xa20] sm:$0xff]
    %v3325 = vld [vmem:[%s3 + $0xa28] sm:$0xf]
    %v3326 = vld [vmem:[%s3 + $0xa2c] sm:$0xff]
    %v3327 = vld [vmem:[%s3 + $0xa34] sm:$0xff]
    %v3328 = vld [vmem:[%s3 + $0xa3c] sm:$0xff]
    %v3329 = vld [vmem:[%s3 + $0xa44] sm:$0xf]
    %v3330 = vld [vmem:[%s3 + $0xa48] sm:$0xff]
    %v3331 = vld [vmem:[%s3 + $0xa50] sm:$0xff]
    %v3332 = vld [vmem:[%s3 + $0xa58] sm:$0xff]
    %v3333 = vld [vmem:[%s3 + $0xa60] sm:$0xf]
    %v3334 = vld [vmem:[%s3 + $0xa64] sm:$0xff]
    %v3335 = vld [vmem:[%s3 + $0xa6c] sm:$0xff]
    %v3336 = vld [vmem:[%s3 + $0xa74] sm:$0xff]
    %v3337 = vld [vmem:[%s3 + $0xa7c] sm:$0xf]
    %v3338 = vld [vmem:[%s3 + $0xa80] sm:$0xff]
    %v3339 = vld [vmem:[%s3 + $0xa88] sm:$0xff]
    %v3340 = vld [vmem:[%s3 + $0xa90] sm:$0xff]
    %v3341 = vld [vmem:[%s3 + $0xa98] sm:$0xf]
    %v3342 = vld [vmem:[%s3 + $0xa9c] sm:$0xff]
    %v3343 = vld [vmem:[%s3 + $0xaa4] sm:$0xff]
    %v3344 = vld [vmem:[%s3 + $0xaac] sm:$0xff]
    %v3345 = vld [vmem:[%s3 + $0xab4] sm:$0xf]
    %v3346 = vld [vmem:[%s3 + $0xab8] sm:$0xff]
    %v3347 = vld [vmem:[%s3 + $0xac0] sm:$0xff]
    %v3348 = vld [vmem:[%s3 + $0xac8] sm:$0xff]
    %v3349 = vld [vmem:[%s3 + $0xad0] sm:$0xf]
    %v3350 = vld [vmem:[%s3 + $0xad4] sm:$0xff]
    %v3351 = vld [vmem:[%s3 + $0xadc] sm:$0xff]
    %v3352 = vld [vmem:[%s3 + $0xae4] sm:$0xff]
    %v3353 = vld [vmem:[%s3 + $0xaec] sm:$0xf]
    %v3354 = vld [vmem:[%s4] sm:$0x7f]
    %v3356 = vlaneseq
    %v3357 = vshrl.u32 %v3356, 7
    %v3358 = vsub.s32 0, %v3357
    %v3359 = vrot.slane %v3354, %v3358
    %v3360 = vlaneseq
    %v3361 = vshrl.u32 %v3360, 7
    %v3362 = vsub.s32 1, %v3361
    %v3363 = vrot.slane %v3354, %v3362
    %v3364 = vlaneseq
    %v3365 = vshrl.u32 %v3364, 7
    %v3366 = vsub.s32 2, %v3365
    %v3367 = vrot.slane %v3354, %v3366
    %v3368 = vlaneseq
    %v3369 = vshrl.u32 %v3368, 7
    %v3370 = vsub.s32 3, %v3369
    %v3371 = vrot.slane %v3354, %v3370
    %v3372 = vlaneseq
    %v3373 = vshrl.u32 %v3372, 7
    %v3374 = vsub.s32 4, %v3373
    %v3375 = vrot.slane %v3354, %v3374
    %v3376 = vlaneseq
    %v3377 = vshrl.u32 %v3376, 7
    %v3378 = vsub.s32 5, %v3377
    %v3379 = vrot.slane %v3354, %v3378
    %v3380 = vlaneseq
    %v3381 = vshrl.u32 %v3380, 7
    %v3382 = vsub.s32 6, %v3381
    %v3383 = vrot.slane %v3354, %v3382
    %v3791 = vunpack.c.l.b16 %v2954
    %v3792 = vunpack.c.h.b16 %v2954
    %v3793 = vunpack.c.l.b16 %v2955
    %v3794 = vunpack.c.h.b16 %v2955
    %v3795 = vunpack.c.l.b16 %v2956
    %v3796 = vunpack.c.h.b16 %v2956
    %v3797 = vunpack.c.l.b16 %v2957
    %v3798 = vunpack.c.l.b16 %v2958
    %v3799 = vunpack.c.h.b16 %v2958
    %v3800 = vunpack.c.l.b16 %v2959
    %v3801 = vunpack.c.h.b16 %v2959
    %v3802 = vunpack.c.l.b16 %v2960
    %v3803 = vunpack.c.h.b16 %v2960
    %v3804 = vunpack.c.l.b16 %v2961
    %v3805 = vunpack.c.l.b16 %v2962
    %v3806 = vunpack.c.h.b16 %v2962
    %v3807 = vunpack.c.l.b16 %v2963
    %v3808 = vunpack.c.h.b16 %v2963
    %v3809 = vunpack.c.l.b16 %v2964
    %v3810 = vunpack.c.h.b16 %v2964
    %v3811 = vunpack.c.l.b16 %v2965
    %v3812 = vunpack.c.l.b16 %v2966
    %v3813 = vunpack.c.h.b16 %v2966
    %v3814 = vunpack.c.l.b16 %v2967
    %v3815 = vunpack.c.h.b16 %v2967
    %v3816 = vunpack.c.l.b16 %v2968
    %v3817 = vunpack.c.h.b16 %v2968
    %v3818 = vunpack.c.l.b16 %v2969
    %v3819 = vunpack.c.l.b16 %v2970
    %v3820 = vunpack.c.h.b16 %v2970
    %v3821 = vunpack.c.l.b16 %v2971
    %v3822 = vunpack.c.h.b16 %v2971
    %v3823 = vunpack.c.l.b16 %v2972
    %v3824 = vunpack.c.h.b16 %v2972
    %v3825 = vunpack.c.l.b16 %v2973
    %v3826 = vunpack.c.l.b16 %v2974
    %v3827 = vunpack.c.h.b16 %v2974
    %v3828 = vunpack.c.l.b16 %v2975
    %v3829 = vunpack.c.h.b16 %v2975
    %v3830 = vunpack.c.l.b16 %v2976
    %v3831 = vunpack.c.h.b16 %v2976
    %v3832 = vunpack.c.l.b16 %v2977
    %v3833 = vunpack.c.l.b16 %v2978
    %v3834 = vunpack.c.h.b16 %v2978
    %v3835 = vunpack.c.l.b16 %v2979
    %v3836 = vunpack.c.h.b16 %v2979
    %v3837 = vunpack.c.l.b16 %v2980
    %v3838 = vunpack.c.h.b16 %v2980
    %v3839 = vunpack.c.l.b16 %v2981
    %v3840 = vunpack.c.l.b16 %v2982
    %v3841 = vunpack.c.h.b16 %v2982
    %v3842 = vunpack.c.l.b16 %v2983
    %v3843 = vunpack.c.h.b16 %v2983
    %v3844 = vunpack.c.l.b16 %v2984
    %v3845 = vunpack.c.h.b16 %v2984
    %v3846 = vunpack.c.l.b16 %v2985
    %v3847 = vunpack.c.l.b16 %v2986
    %v3848 = vunpack.c.h.b16 %v2986
    %v3849 = vunpack.c.l.b16 %v2987
    %v3850 = vunpack.c.h.b16 %v2987
    %v3851 = vunpack.c.l.b16 %v2988
    %v3852 = vunpack.c.h.b16 %v2988
    %v3853 = vunpack.c.l.b16 %v2989
    %v3854 = vunpack.c.l.b16 %v2990
    %v3855 = vunpack.c.h.b16 %v2990
    %v3856 = vunpack.c.l.b16 %v2991
    %v3857 = vunpack.c.h.b16 %v2991
    %v3858 = vunpack.c.l.b16 %v2992
    %v3859 = vunpack.c.h.b16 %v2992
    %v3860 = vunpack.c.l.b16 %v2993
    %v3861 = vunpack.c.l.b16 %v2994
    %v3862 = vunpack.c.h.b16 %v2994
    %v3863 = vunpack.c.l.b16 %v2995
    %v3864 = vunpack.c.h.b16 %v2995
    %v3865 = vunpack.c.l.b16 %v2996
    %v3866 = vunpack.c.h.b16 %v2996
    %v3867 = vunpack.c.l.b16 %v2997
    %v3868 = vunpack.c.l.b16 %v2998
    %v3869 = vunpack.c.h.b16 %v2998
    %v3870 = vunpack.c.l.b16 %v2999
    %v3871 = vunpack.c.h.b16 %v2999
    %v3872 = vunpack.c.l.b16 %v3000
    %v3873 = vunpack.c.h.b16 %v3000
    %v3874 = vunpack.c.l.b16 %v3001
    %v3875 = vunpack.c.l.b16 %v3002
    %v3876 = vunpack.c.h.b16 %v3002
    %v3877 = vunpack.c.l.b16 %v3003
    %v3878 = vunpack.c.h.b16 %v3003
    %v3879 = vunpack.c.l.b16 %v3004
    %v3880 = vunpack.c.h.b16 %v3004
    %v3881 = vunpack.c.l.b16 %v3005
    %v3882 = vunpack.c.l.b16 %v3006
    %v3883 = vunpack.c.h.b16 %v3006
    %v3884 = vunpack.c.l.b16 %v3007
    %v3885 = vunpack.c.h.b16 %v3007
    %v3886 = vunpack.c.l.b16 %v3008
    %v3887 = vunpack.c.h.b16 %v3008
    %v3888 = vunpack.c.l.b16 %v3009
    %v3889 = vunpack.c.l.b16 %v3010
    %v3890 = vunpack.c.h.b16 %v3010
    %v3891 = vunpack.c.l.b16 %v3011
    %v3892 = vunpack.c.h.b16 %v3011
    %v3893 = vunpack.c.l.b16 %v3012
    %v3894 = vunpack.c.h.b16 %v3012
    %v3895 = vunpack.c.l.b16 %v3013
    %v3896 = vunpack.c.l.b16 %v3014
    %v3897 = vunpack.c.h.b16 %v3014
    %v3898 = vunpack.c.l.b16 %v3015
    %v3899 = vunpack.c.h.b16 %v3015
    %v3900 = vunpack.c.l.b16 %v3016
    %v3901 = vunpack.c.h.b16 %v3016
    %v3902 = vunpack.c.l.b16 %v3017
    %v3903 = vunpack.c.l.b16 %v3018
    %v3904 = vunpack.c.h.b16 %v3018
    %v3905 = vunpack.c.l.b16 %v3019
    %v3906 = vunpack.c.h.b16 %v3019
    %v3907 = vunpack.c.l.b16 %v3020
    %v3908 = vunpack.c.h.b16 %v3020
    %v3909 = vunpack.c.l.b16 %v3021
    %v3910 = vunpack.c.l.b16 %v3022
    %v3911 = vunpack.c.h.b16 %v3022
    %v3912 = vunpack.c.l.b16 %v3023
    %v3913 = vunpack.c.h.b16 %v3023
    %v3914 = vunpack.c.l.b16 %v3024
    %v3915 = vunpack.c.h.b16 %v3024
    %v3916 = vunpack.c.l.b16 %v3025
    %v3917 = vunpack.c.l.b16 %v3026
    %v3918 = vunpack.c.h.b16 %v3026
    %v3919 = vunpack.c.l.b16 %v3027
    %v3920 = vunpack.c.h.b16 %v3027
    %v3921 = vunpack.c.l.b16 %v3028
    %v3922 = vunpack.c.h.b16 %v3028
    %v3923 = vunpack.c.l.b16 %v3029
    %v3924 = vunpack.c.l.b16 %v3030
    %v3925 = vunpack.c.h.b16 %v3030
    %v3926 = vunpack.c.l.b16 %v3031
    %v3927 = vunpack.c.h.b16 %v3031
    %v3928 = vunpack.c.l.b16 %v3032
    %v3929 = vunpack.c.h.b16 %v3032
    %v3930 = vunpack.c.l.b16 %v3033
    %v3931 = vunpack.c.l.b16 %v3034
    %v3932 = vunpack.c.h.b16 %v3034
    %v3933 = vunpack.c.l.b16 %v3035
    %v3934 = vunpack.c.h.b16 %v3035
    %v3935 = vunpack.c.l.b16 %v3036
    %v3936 = vunpack.c.h.b16 %v3036
    %v3937 = vunpack.c.l.b16 %v3037
    %v3938 = vunpack.c.l.b16 %v3038
    %v3939 = vunpack.c.h.b16 %v3038
    %v3940 = vunpack.c.l.b16 %v3039
    %v3941 = vunpack.c.h.b16 %v3039
    %v3942 = vunpack.c.l.b16 %v3040
    %v3943 = vunpack.c.h.b16 %v3040
    %v3944 = vunpack.c.l.b16 %v3041
    %v3945 = vunpack.c.l.b16 %v3042
    %v3946 = vunpack.c.h.b16 %v3042
    %v3947 = vunpack.c.l.b16 %v3043
    %v3948 = vunpack.c.h.b16 %v3043
    %v3949 = vunpack.c.l.b16 %v3044
    %v3950 = vunpack.c.h.b16 %v3044
    %v3951 = vunpack.c.l.b16 %v3045
    %v3952 = vunpack.c.l.b16 %v3046
    %v3953 = vunpack.c.h.b16 %v3046
    %v3954 = vunpack.c.l.b16 %v3047
    %v3955 = vunpack.c.h.b16 %v3047
    %v3956 = vunpack.c.l.b16 %v3048
    %v3957 = vunpack.c.h.b16 %v3048
    %v3958 = vunpack.c.l.b16 %v3049
    %v3959 = vunpack.c.l.b16 %v3050
    %v3960 = vunpack.c.h.b16 %v3050
    %v3961 = vunpack.c.l.b16 %v3051
    %v3962 = vunpack.c.h.b16 %v3051
    %v3963 = vunpack.c.l.b16 %v3052
    %v3964 = vunpack.c.h.b16 %v3052
    %v3965 = vunpack.c.l.b16 %v3053
    %v3966 = vunpack.c.l.b16 %v3054
    %v3967 = vunpack.c.h.b16 %v3054
    %v3968 = vunpack.c.l.b16 %v3055
    %v3969 = vunpack.c.h.b16 %v3055
    %v3970 = vunpack.c.l.b16 %v3056
    %v3971 = vunpack.c.h.b16 %v3056
    %v3972 = vunpack.c.l.b16 %v3057
    %v3973 = vunpack.c.l.b16 %v3058
    %v3974 = vunpack.c.h.b16 %v3058
    %v3975 = vunpack.c.l.b16 %v3059
    %v3976 = vunpack.c.h.b16 %v3059
    %v3977 = vunpack.c.l.b16 %v3060
    %v3978 = vunpack.c.h.b16 %v3060
    %v3979 = vunpack.c.l.b16 %v3061
    %v3980 = vunpack.c.l.b16 %v3062
    %v3981 = vunpack.c.h.b16 %v3062
    %v3982 = vunpack.c.l.b16 %v3063
    %v3983 = vunpack.c.h.b16 %v3063
    %v3984 = vunpack.c.l.b16 %v3064
    %v3985 = vunpack.c.h.b16 %v3064
    %v3986 = vunpack.c.l.b16 %v3065
    %v3987 = vunpack.c.l.b16 %v3066
    %v3988 = vunpack.c.h.b16 %v3066
    %v3989 = vunpack.c.l.b16 %v3067
    %v3990 = vunpack.c.h.b16 %v3067
    %v3991 = vunpack.c.l.b16 %v3068
    %v3992 = vunpack.c.h.b16 %v3068
    %v3993 = vunpack.c.l.b16 %v3069
    %v3994 = vunpack.c.l.b16 %v3070
    %v3995 = vunpack.c.h.b16 %v3070
    %v3996 = vunpack.c.l.b16 %v3071
    %v3997 = vunpack.c.h.b16 %v3071
    %v3998 = vunpack.c.l.b16 %v3072
    %v3999 = vunpack.c.h.b16 %v3072
    %v4000 = vunpack.c.l.b16 %v3073
    %v4001 = vunpack.c.l.b16 %v3074
    %v4002 = vunpack.c.h.b16 %v3074
    %v4003 = vunpack.c.l.b16 %v3075
    %v4004 = vunpack.c.h.b16 %v3075
    %v4005 = vunpack.c.l.b16 %v3076
    %v4006 = vunpack.c.h.b16 %v3076
    %v4007 = vunpack.c.l.b16 %v3077
    %v4008 = vunpack.c.l.b16 %v3078
    %v4009 = vunpack.c.h.b16 %v3078
    %v4010 = vunpack.c.l.b16 %v3079
    %v4011 = vunpack.c.h.b16 %v3079
    %v4012 = vunpack.c.l.b16 %v3080
    %v4013 = vunpack.c.h.b16 %v3080
    %v4014 = vunpack.c.l.b16 %v3081
    %v4015 = vunpack.c.l.b16 %v3082
    %v4016 = vunpack.c.h.b16 %v3082
    %v4017 = vunpack.c.l.b16 %v3083
    %v4018 = vunpack.c.h.b16 %v3083
    %v4019 = vunpack.c.l.b16 %v3084
    %v4020 = vunpack.c.h.b16 %v3084
    %v4021 = vunpack.c.l.b16 %v3085
    %v4022 = vunpack.c.l.b16 %v3086
    %v4023 = vunpack.c.h.b16 %v3086
    %v4024 = vunpack.c.l.b16 %v3087
    %v4025 = vunpack.c.h.b16 %v3087
    %v4026 = vunpack.c.l.b16 %v3088
    %v4027 = vunpack.c.h.b16 %v3088
    %v4028 = vunpack.c.l.b16 %v3089
    %v4029 = vunpack.c.l.b16 %v3090
    %v4030 = vunpack.c.h.b16 %v3090
    %v4031 = vunpack.c.l.b16 %v3091
    %v4032 = vunpack.c.h.b16 %v3091
    %v4033 = vunpack.c.l.b16 %v3092
    %v4034 = vunpack.c.h.b16 %v3092
    %v4035 = vunpack.c.l.b16 %v3093
    %v4036 = vunpack.c.l.b16 %v3094
    %v4037 = vunpack.c.h.b16 %v3094
    %v4038 = vunpack.c.l.b16 %v3095
    %v4039 = vunpack.c.h.b16 %v3095
    %v4040 = vunpack.c.l.b16 %v3096
    %v4041 = vunpack.c.h.b16 %v3096
    %v4042 = vunpack.c.l.b16 %v3097
    %v4043 = vunpack.c.l.b16 %v3098
    %v4044 = vunpack.c.h.b16 %v3098
    %v4045 = vunpack.c.l.b16 %v3099
    %v4046 = vunpack.c.h.b16 %v3099
    %v4047 = vunpack.c.l.b16 %v3100
    %v4048 = vunpack.c.h.b16 %v3100
    %v4049 = vunpack.c.l.b16 %v3101
    %v4050 = vunpack.c.l.b16 %v3102
    %v4051 = vunpack.c.h.b16 %v3102
    %v4052 = vunpack.c.l.b16 %v3103
    %v4053 = vunpack.c.h.b16 %v3103
    %v4054 = vunpack.c.l.b16 %v3104
    %v4055 = vunpack.c.h.b16 %v3104
    %v4056 = vunpack.c.l.b16 %v3105
    %v4057 = vunpack.c.l.b16 %v3106
    %v4058 = vunpack.c.h.b16 %v3106
    %v4059 = vunpack.c.l.b16 %v3107
    %v4060 = vunpack.c.h.b16 %v3107
    %v4061 = vunpack.c.l.b16 %v3108
    %v4062 = vunpack.c.h.b16 %v3108
    %v4063 = vunpack.c.l.b16 %v3109
    %v4064 = vunpack.c.l.b16 %v3110
    %v4065 = vunpack.c.h.b16 %v3110
    %v4066 = vunpack.c.l.b16 %v3111
    %v4067 = vunpack.c.h.b16 %v3111
    %v4068 = vunpack.c.l.b16 %v3112
    %v4069 = vunpack.c.h.b16 %v3112
    %v4070 = vunpack.c.l.b16 %v3113
    %v4071 = vunpack.c.l.b16 %v3114
    %v4072 = vunpack.c.h.b16 %v3114
    %v4073 = vunpack.c.l.b16 %v3115
    %v4074 = vunpack.c.h.b16 %v3115
    %v4075 = vunpack.c.l.b16 %v3116
    %v4076 = vunpack.c.h.b16 %v3116
    %v4077 = vunpack.c.l.b16 %v3117
    %v4078 = vunpack.c.l.b16 %v3118
    %v4079 = vunpack.c.h.b16 %v3118
    %v4080 = vunpack.c.l.b16 %v3119
    %v4081 = vunpack.c.h.b16 %v3119
    %v4082 = vunpack.c.l.b16 %v3120
    %v4083 = vunpack.c.h.b16 %v3120
    %v4084 = vunpack.c.l.b16 %v3121
    %v4085 = vunpack.c.l.b16 %v3122
    %v4086 = vunpack.c.h.b16 %v3122
    %v4087 = vunpack.c.l.b16 %v3123
    %v4088 = vunpack.c.h.b16 %v3123
    %v4089 = vunpack.c.l.b16 %v3124
    %v4090 = vunpack.c.h.b16 %v3124
    %v4091 = vunpack.c.l.b16 %v3125
    %v4092 = vunpack.c.l.b16 %v3126
    %v4093 = vunpack.c.h.b16 %v3126
    %v4094 = vunpack.c.l.b16 %v3127
    %v4095 = vunpack.c.h.b16 %v3127
    %v4096 = vunpack.c.l.b16 %v3128
    %v4097 = vunpack.c.h.b16 %v3128
    %v4098 = vunpack.c.l.b16 %v3129
    %v4099 = vunpack.c.l.b16 %v3130
    %v4100 = vunpack.c.h.b16 %v3130
    %v4101 = vunpack.c.l.b16 %v3131
    %v4102 = vunpack.c.h.b16 %v3131
    %v4103 = vunpack.c.l.b16 %v3132
    %v4104 = vunpack.c.h.b16 %v3132
    %v4105 = vunpack.c.l.b16 %v3133
    %v4106 = vunpack.c.l.b16 %v3134
    %v4107 = vunpack.c.h.b16 %v3134
    %v4108 = vunpack.c.l.b16 %v3135
    %v4109 = vunpack.c.h.b16 %v3135
    %v4110 = vunpack.c.l.b16 %v3136
    %v4111 = vunpack.c.h.b16 %v3136
    %v4112 = vunpack.c.l.b16 %v3137
    %v4113 = vunpack.c.l.b16 %v3138
    %v4114 = vunpack.c.h.b16 %v3138
    %v4115 = vunpack.c.l.b16 %v3139
    %v4116 = vunpack.c.h.b16 %v3139
    %v4117 = vunpack.c.l.b16 %v3140
    %v4118 = vunpack.c.h.b16 %v3140
    %v4119 = vunpack.c.l.b16 %v3141
    %v4120 = vunpack.c.l.b16 %v3142
    %v4121 = vunpack.c.h.b16 %v3142
    %v4122 = vunpack.c.l.b16 %v3143
    %v4123 = vunpack.c.h.b16 %v3143
    %v4124 = vunpack.c.l.b16 %v3144
    %v4125 = vunpack.c.h.b16 %v3144
    %v4126 = vunpack.c.l.b16 %v3145
    %v4127 = vunpack.c.l.b16 %v3146
    %v4128 = vunpack.c.h.b16 %v3146
    %v4129 = vunpack.c.l.b16 %v3147
    %v4130 = vunpack.c.h.b16 %v3147
    %v4131 = vunpack.c.l.b16 %v3148
    %v4132 = vunpack.c.h.b16 %v3148
    %v4133 = vunpack.c.l.b16 %v3149
    %v4134 = vunpack.c.l.b16 %v3150
    %v4135 = vunpack.c.h.b16 %v3150
    %v4136 = vunpack.c.l.b16 %v3151
    %v4137 = vunpack.c.h.b16 %v3151
    %v4138 = vunpack.c.l.b16 %v3152
    %v4139 = vunpack.c.h.b16 %v3152
    %v4140 = vunpack.c.l.b16 %v3153
    %v4141 = vunpack.c.l.b16 %v3154
    %v4142 = vunpack.c.h.b16 %v3154
    %v4143 = vunpack.c.l.b16 %v3155
    %v4144 = vunpack.c.h.b16 %v3155
    %v4145 = vunpack.c.l.b16 %v3156
    %v4146 = vunpack.c.h.b16 %v3156
    %v4147 = vunpack.c.l.b16 %v3157
    %v4148 = vunpack.c.l.b16 %v3158
    %v4149 = vunpack.c.h.b16 %v3158
    %v4150 = vunpack.c.l.b16 %v3159
    %v4151 = vunpack.c.h.b16 %v3159
    %v4152 = vunpack.c.l.b16 %v3160
    %v4153 = vunpack.c.h.b16 %v3160
    %v4154 = vunpack.c.l.b16 %v3161
    %v4155 = vunpack.c.l.b16 %v3162
    %v4156 = vunpack.c.h.b16 %v3162
    %v4157 = vunpack.c.l.b16 %v3163
    %v4158 = vunpack.c.h.b16 %v3163
    %v4159 = vunpack.c.l.b16 %v3164
    %v4160 = vunpack.c.h.b16 %v3164
    %v4161 = vunpack.c.l.b16 %v3165
    %v4162 = vunpack.c.l.b16 %v3166
    %v4163 = vunpack.c.h.b16 %v3166
    %v4164 = vunpack.c.l.b16 %v3167
    %v4165 = vunpack.c.h.b16 %v3167
    %v4166 = vunpack.c.l.b16 %v3168
    %v4167 = vunpack.c.h.b16 %v3168
    %v4168 = vunpack.c.l.b16 %v3169
    %v4169 = vunpack.c.l.b16 %v3170
    %v4170 = vunpack.c.h.b16 %v3170
    %v4171 = vunpack.c.l.b16 %v3171
    %v4172 = vunpack.c.h.b16 %v3171
    %v4173 = vunpack.c.l.b16 %v3172
    %v4174 = vunpack.c.h.b16 %v3172
    %v4175 = vunpack.c.l.b16 %v3173
    %v4176 = vunpack.c.l.b16 %v3174
    %v4177 = vunpack.c.h.b16 %v3174
    %v4178 = vunpack.c.l.b16 %v3175
    %v4179 = vunpack.c.h.b16 %v3175
    %v4180 = vunpack.c.l.b16 %v3176
    %v4181 = vunpack.c.h.b16 %v3176
    %v4182 = vunpack.c.l.b16 %v3177
    %v4183 = vunpack.c.l.b16 %v3178
    %v4184 = vunpack.c.h.b16 %v3178
    %v4185 = vunpack.c.l.b16 %v3179
    %v4186 = vunpack.c.h.b16 %v3179
    %v4187 = vunpack.c.l.b16 %v3180
    %v4188 = vunpack.c.h.b16 %v3180
    %v4189 = vunpack.c.l.b16 %v3181
    %v4190 = vunpack.c.l.b16 %v3182
    %v4191 = vunpack.c.h.b16 %v3182
    %v4192 = vunpack.c.l.b16 %v3183
    %v4193 = vunpack.c.h.b16 %v3183
    %v4194 = vunpack.c.l.b16 %v3184
    %v4195 = vunpack.c.h.b16 %v3184
    %v4196 = vunpack.c.l.b16 %v3185
    %v4197 = vunpack.c.l.b16 %v3186
    %v4198 = vunpack.c.h.b16 %v3186
    %v4199 = vunpack.c.l.b16 %v3187
    %v4200 = vunpack.c.h.b16 %v3187
    %v4201 = vunpack.c.l.b16 %v3188
    %v4202 = vunpack.c.h.b16 %v3188
    %v4203 = vunpack.c.l.b16 %v3189
    %v4204 = vunpack.c.l.b16 %v3190
    %v4205 = vunpack.c.h.b16 %v3190
    %v4206 = vunpack.c.l.b16 %v3191
    %v4207 = vunpack.c.h.b16 %v3191
    %v4208 = vunpack.c.l.b16 %v3192
    %v4209 = vunpack.c.h.b16 %v3192
    %v4210 = vunpack.c.l.b16 %v3193
    %v4211 = vunpack.c.l.b16 %v3194
    %v4212 = vunpack.c.h.b16 %v3194
    %v4213 = vunpack.c.l.b16 %v3195
    %v4214 = vunpack.c.h.b16 %v3195
    %v4215 = vunpack.c.l.b16 %v3196
    %v4216 = vunpack.c.h.b16 %v3196
    %v4217 = vunpack.c.l.b16 %v3197
    %v4218 = vunpack.c.l.b16 %v3198
    %v4219 = vunpack.c.h.b16 %v3198
    %v4220 = vunpack.c.l.b16 %v3199
    %v4221 = vunpack.c.h.b16 %v3199
    %v4222 = vunpack.c.l.b16 %v3200
    %v4223 = vunpack.c.h.b16 %v3200
    %v4224 = vunpack.c.l.b16 %v3201
    %v4225 = vunpack.c.l.b16 %v3202
    %v4226 = vunpack.c.h.b16 %v3202
    %v4227 = vunpack.c.l.b16 %v3203
    %v4228 = vunpack.c.h.b16 %v3203
    %v4229 = vunpack.c.l.b16 %v3204
    %v4230 = vunpack.c.h.b16 %v3204
    %v4231 = vunpack.c.l.b16 %v3205
    %v4232 = vunpack.c.l.b16 %v3206
    %v4233 = vunpack.c.h.b16 %v3206
    %v4234 = vunpack.c.l.b16 %v3207
    %v4235 = vunpack.c.h.b16 %v3207
    %v4236 = vunpack.c.l.b16 %v3208
    %v4237 = vunpack.c.h.b16 %v3208
    %v4238 = vunpack.c.l.b16 %v3209
    %v4239 = vunpack.c.l.b16 %v3210
    %v4240 = vunpack.c.h.b16 %v3210
    %v4241 = vunpack.c.l.b16 %v3211
    %v4242 = vunpack.c.h.b16 %v3211
    %v4243 = vunpack.c.l.b16 %v3212
    %v4244 = vunpack.c.h.b16 %v3212
    %v4245 = vunpack.c.l.b16 %v3213
    %v4246 = vunpack.c.l.b16 %v3214
    %v4247 = vunpack.c.h.b16 %v3214
    %v4248 = vunpack.c.l.b16 %v3215
    %v4249 = vunpack.c.h.b16 %v3215
    %v4250 = vunpack.c.l.b16 %v3216
    %v4251 = vunpack.c.h.b16 %v3216
    %v4252 = vunpack.c.l.b16 %v3217
    %v4253 = vunpack.c.l.b16 %v3218
    %v4254 = vunpack.c.h.b16 %v3218
    %v4255 = vunpack.c.l.b16 %v3219
    %v4256 = vunpack.c.h.b16 %v3219
    %v4257 = vunpack.c.l.b16 %v3220
    %v4258 = vunpack.c.h.b16 %v3220
    %v4259 = vunpack.c.l.b16 %v3221
    %v4260 = vunpack.c.l.b16 %v3222
    %v4261 = vunpack.c.h.b16 %v3222
    %v4262 = vunpack.c.l.b16 %v3223
    %v4263 = vunpack.c.h.b16 %v3223
    %v4264 = vunpack.c.l.b16 %v3224
    %v4265 = vunpack.c.h.b16 %v3224
    %v4266 = vunpack.c.l.b16 %v3225
    %v4267 = vunpack.c.l.b16 %v3226
    %v4268 = vunpack.c.h.b16 %v3226
    %v4269 = vunpack.c.l.b16 %v3227
    %v4270 = vunpack.c.h.b16 %v3227
    %v4271 = vunpack.c.l.b16 %v3228
    %v4272 = vunpack.c.h.b16 %v3228
    %v4273 = vunpack.c.l.b16 %v3229
    %v4274 = vunpack.c.l.b16 %v3230
    %v4275 = vunpack.c.h.b16 %v3230
    %v4276 = vunpack.c.l.b16 %v3231
    %v4277 = vunpack.c.h.b16 %v3231
    %v4278 = vunpack.c.l.b16 %v3232
    %v4279 = vunpack.c.h.b16 %v3232
    %v4280 = vunpack.c.l.b16 %v3233
    %v4281 = vunpack.c.l.b16 %v3234
    %v4282 = vunpack.c.h.b16 %v3234
    %v4283 = vunpack.c.l.b16 %v3235
    %v4284 = vunpack.c.h.b16 %v3235
    %v4285 = vunpack.c.l.b16 %v3236
    %v4286 = vunpack.c.h.b16 %v3236
    %v4287 = vunpack.c.l.b16 %v3237
    %v4288 = vunpack.c.l.b16 %v3238
    %v4289 = vunpack.c.h.b16 %v3238
    %v4290 = vunpack.c.l.b16 %v3239
    %v4291 = vunpack.c.h.b16 %v3239
    %v4292 = vunpack.c.l.b16 %v3240
    %v4293 = vunpack.c.h.b16 %v3240
    %v4294 = vunpack.c.l.b16 %v3241
    %v4295 = vunpack.c.l.b16 %v3242
    %v4296 = vunpack.c.h.b16 %v3242
    %v4297 = vunpack.c.l.b16 %v3243
    %v4298 = vunpack.c.h.b16 %v3243
    %v4299 = vunpack.c.l.b16 %v3244
    %v4300 = vunpack.c.h.b16 %v3244
    %v4301 = vunpack.c.l.b16 %v3245
    %v4302 = vunpack.c.l.b16 %v3246
    %v4303 = vunpack.c.h.b16 %v3246
    %v4304 = vunpack.c.l.b16 %v3247
    %v4305 = vunpack.c.h.b16 %v3247
    %v4306 = vunpack.c.l.b16 %v3248
    %v4307 = vunpack.c.h.b16 %v3248
    %v4308 = vunpack.c.l.b16 %v3249
    %v4309 = vunpack.c.l.b16 %v3250
    %v4310 = vunpack.c.h.b16 %v3250
    %v4311 = vunpack.c.l.b16 %v3251
    %v4312 = vunpack.c.h.b16 %v3251
    %v4313 = vunpack.c.l.b16 %v3252
    %v4314 = vunpack.c.h.b16 %v3252
    %v4315 = vunpack.c.l.b16 %v3253
    %v4316 = vunpack.c.l.b16 %v3254
    %v4317 = vunpack.c.h.b16 %v3254
    %v4318 = vunpack.c.l.b16 %v3255
    %v4319 = vunpack.c.h.b16 %v3255
    %v4320 = vunpack.c.l.b16 %v3256
    %v4321 = vunpack.c.h.b16 %v3256
    %v4322 = vunpack.c.l.b16 %v3257
    %v4323 = vunpack.c.l.b16 %v3258
    %v4324 = vunpack.c.h.b16 %v3258
    %v4325 = vunpack.c.l.b16 %v3259
    %v4326 = vunpack.c.h.b16 %v3259
    %v4327 = vunpack.c.l.b16 %v3260
    %v4328 = vunpack.c.h.b16 %v3260
    %v4329 = vunpack.c.l.b16 %v3261
    %v4330 = vunpack.c.l.b16 %v3262
    %v4331 = vunpack.c.h.b16 %v3262
    %v4332 = vunpack.c.l.b16 %v3263
    %v4333 = vunpack.c.h.b16 %v3263
    %v4334 = vunpack.c.l.b16 %v3264
    %v4335 = vunpack.c.h.b16 %v3264
    %v4336 = vunpack.c.l.b16 %v3265
    %v4337 = vunpack.c.l.b16 %v3266
    %v4338 = vunpack.c.h.b16 %v3266
    %v4339 = vunpack.c.l.b16 %v3267
    %v4340 = vunpack.c.h.b16 %v3267
    %v4341 = vunpack.c.l.b16 %v3268
    %v4342 = vunpack.c.h.b16 %v3268
    %v4343 = vunpack.c.l.b16 %v3269
    %v4344 = vunpack.c.l.b16 %v3270
    %v4345 = vunpack.c.h.b16 %v3270
    %v4346 = vunpack.c.l.b16 %v3271
    %v4347 = vunpack.c.h.b16 %v3271
    %v4348 = vunpack.c.l.b16 %v3272
    %v4349 = vunpack.c.h.b16 %v3272
    %v4350 = vunpack.c.l.b16 %v3273
    %v4351 = vunpack.c.l.b16 %v3274
    %v4352 = vunpack.c.h.b16 %v3274
    %v4353 = vunpack.c.l.b16 %v3275
    %v4354 = vunpack.c.h.b16 %v3275
    %v4355 = vunpack.c.l.b16 %v3276
    %v4356 = vunpack.c.h.b16 %v3276
    %v4357 = vunpack.c.l.b16 %v3277
    %v4358 = vunpack.c.l.b16 %v3278
    %v4359 = vunpack.c.h.b16 %v3278
    %v4360 = vunpack.c.l.b16 %v3279
    %v4361 = vunpack.c.h.b16 %v3279
    %v4362 = vunpack.c.l.b16 %v3280
    %v4363 = vunpack.c.h.b16 %v3280
    %v4364 = vunpack.c.l.b16 %v3281
    %v4365 = vunpack.c.l.b16 %v3282
    %v4366 = vunpack.c.h.b16 %v3282
    %v4367 = vunpack.c.l.b16 %v3283
    %v4368 = vunpack.c.h.b16 %v3283
    %v4369 = vunpack.c.l.b16 %v3284
    %v4370 = vunpack.c.h.b16 %v3284
    %v4371 = vunpack.c.l.b16 %v3285
    %v4372 = vunpack.c.l.b16 %v3286
    %v4373 = vunpack.c.h.b16 %v3286
    %v4374 = vunpack.c.l.b16 %v3287
    %v4375 = vunpack.c.h.b16 %v3287
    %v4376 = vunpack.c.l.b16 %v3288
    %v4377 = vunpack.c.h.b16 %v3288
    %v4378 = vunpack.c.l.b16 %v3289
    %v4379 = vunpack.c.l.b16 %v3290
    %v4380 = vunpack.c.h.b16 %v3290
    %v4381 = vunpack.c.l.b16 %v3291
    %v4382 = vunpack.c.h.b16 %v3291
    %v4383 = vunpack.c.l.b16 %v3292
    %v4384 = vunpack.c.h.b16 %v3292
    %v4385 = vunpack.c.l.b16 %v3293
    %v4386 = vunpack.c.l.b16 %v3294
    %v4387 = vunpack.c.h.b16 %v3294
    %v4388 = vunpack.c.l.b16 %v3295
    %v4389 = vunpack.c.h.b16 %v3295
    %v4390 = vunpack.c.l.b16 %v3296
    %v4391 = vunpack.c.h.b16 %v3296
    %v4392 = vunpack.c.l.b16 %v3297
    %v4393 = vunpack.c.l.b16 %v3298
    %v4394 = vunpack.c.h.b16 %v3298
    %v4395 = vunpack.c.l.b16 %v3299
    %v4396 = vunpack.c.h.b16 %v3299
    %v4397 = vunpack.c.l.b16 %v3300
    %v4398 = vunpack.c.h.b16 %v3300
    %v4399 = vunpack.c.l.b16 %v3301
    %v4400 = vunpack.c.l.b16 %v3302
    %v4401 = vunpack.c.h.b16 %v3302
    %v4402 = vunpack.c.l.b16 %v3303
    %v4403 = vunpack.c.h.b16 %v3303
    %v4404 = vunpack.c.l.b16 %v3304
    %v4405 = vunpack.c.h.b16 %v3304
    %v4406 = vunpack.c.l.b16 %v3305
    %v4407 = vunpack.c.l.b16 %v3306
    %v4408 = vunpack.c.h.b16 %v3306
    %v4409 = vunpack.c.l.b16 %v3307
    %v4410 = vunpack.c.h.b16 %v3307
    %v4411 = vunpack.c.l.b16 %v3308
    %v4412 = vunpack.c.h.b16 %v3308
    %v4413 = vunpack.c.l.b16 %v3309
    %v4414 = vunpack.c.l.b16 %v3310
    %v4415 = vunpack.c.h.b16 %v3310
    %v4416 = vunpack.c.l.b16 %v3311
    %v4417 = vunpack.c.h.b16 %v3311
    %v4418 = vunpack.c.l.b16 %v3312
    %v4419 = vunpack.c.h.b16 %v3312
    %v4420 = vunpack.c.l.b16 %v3313
    %v4421 = vunpack.c.l.b16 %v3314
    %v4422 = vunpack.c.h.b16 %v3314
    %v4423 = vunpack.c.l.b16 %v3315
    %v4424 = vunpack.c.h.b16 %v3315
    %v4425 = vunpack.c.l.b16 %v3316
    %v4426 = vunpack.c.h.b16 %v3316
    %v4427 = vunpack.c.l.b16 %v3317
    %v4428 = vunpack.c.l.b16 %v3318
    %v4429 = vunpack.c.h.b16 %v3318
    %v4430 = vunpack.c.l.b16 %v3319
    %v4431 = vunpack.c.h.b16 %v3319
    %v4432 = vunpack.c.l.b16 %v3320
    %v4433 = vunpack.c.h.b16 %v3320
    %v4434 = vunpack.c.l.b16 %v3321
    %v4435 = vunpack.c.l.b16 %v3322
    %v4436 = vunpack.c.h.b16 %v3322
    %v4437 = vunpack.c.l.b16 %v3323
    %v4438 = vunpack.c.h.b16 %v3323
    %v4439 = vunpack.c.l.b16 %v3324
    %v4440 = vunpack.c.h.b16 %v3324
    %v4441 = vunpack.c.l.b16 %v3325
    %v4442 = vunpack.c.l.b16 %v3326
    %v4443 = vunpack.c.h.b16 %v3326
    %v4444 = vunpack.c.l.b16 %v3327
    %v4445 = vunpack.c.h.b16 %v3327
    %v4446 = vunpack.c.l.b16 %v3328
    %v4447 = vunpack.c.h.b16 %v3328
    %v4448 = vunpack.c.l.b16 %v3329
    %v4449 = vunpack.c.l.b16 %v3330
    %v4450 = vunpack.c.h.b16 %v3330
    %v4451 = vunpack.c.l.b16 %v3331
    %v4452 = vunpack.c.h.b16 %v3331
    %v4453 = vunpack.c.l.b16 %v3332
    %v4454 = vunpack.c.h.b16 %v3332
    %v4455 = vunpack.c.l.b16 %v3333
    %v4456 = vunpack.c.l.b16 %v3334
    %v4457 = vunpack.c.h.b16 %v3334
    %v4458 = vunpack.c.l.b16 %v3335
    %v4459 = vunpack.c.h.b16 %v3335
    %v4460 = vunpack.c.l.b16 %v3336
    %v4461 = vunpack.c.h.b16 %v3336
    %v4462 = vunpack.c.l.b16 %v3337
    %v4463 = vunpack.c.l.b16 %v3338
    %v4464 = vunpack.c.h.b16 %v3338
    %v4465 = vunpack.c.l.b16 %v3339
    %v4466 = vunpack.c.h.b16 %v3339
    %v4467 = vunpack.c.l.b16 %v3340
    %v4468 = vunpack.c.h.b16 %v3340
    %v4469 = vunpack.c.l.b16 %v3341
    %v4470 = vunpack.c.l.b16 %v3342
    %v4471 = vunpack.c.h.b16 %v3342
    %v4472 = vunpack.c.l.b16 %v3343
    %v4473 = vunpack.c.h.b16 %v3343
    %v4474 = vunpack.c.l.b16 %v3344
    %v4475 = vunpack.c.h.b16 %v3344
    %v4476 = vunpack.c.l.b16 %v3345
    %v4477 = vunpack.c.l.b16 %v3346
    %v4478 = vunpack.c.h.b16 %v3346
    %v4479 = vunpack.c.l.b16 %v3347
    %v4480 = vunpack.c.h.b16 %v3347
    %v4481 = vunpack.c.l.b16 %v3348
    %v4482 = vunpack.c.h.b16 %v3348
    %v4483 = vunpack.c.l.b16 %v3349
    %v4484 = vunpack.c.l.b16 %v3350
    %v4485 = vunpack.c.h.b16 %v3350
    %v4486 = vunpack.c.l.b16 %v3351
    %v4487 = vunpack.c.h.b16 %v3351
    %v4488 = vunpack.c.l.b16 %v3352
    %v4489 = vunpack.c.h.b16 %v3352
    %v4490 = vunpack.c.l.b16 %v3353
    %v4491 = vpack.c.b16 %v3798, %v3791
    %v4492 = vpack.c.b16 %v3799, %v3792
    %v4493 = vpack.c.b16 %v3800, %v3793
    %v4494 = vpack.c.b16 %v3801, %v3794
    %v4495 = vpack.c.b16 %v3802, %v3795
    %v4496 = vpack.c.b16 %v3803, %v3796
    %v4497 = vpack.c.b16 %v3804, %v3797
    %v4498 = vpack.c.b16 %v3812, %v3805
    %v4499 = vpack.c.b16 %v3813, %v3806
    %v4500 = vpack.c.b16 %v3814, %v3807
    %v4501 = vpack.c.b16 %v3815, %v3808
    %v4502 = vpack.c.b16 %v3816, %v3809
    %v4503 = vpack.c.b16 %v3817, %v3810
    %v4504 = vpack.c.b16 %v3818, %v3811
    %v4505 = vpack.c.b16 %v3826, %v3819
    %v4506 = vpack.c.b16 %v3827, %v3820
    %v4507 = vpack.c.b16 %v3828, %v3821
    %v4508 = vpack.c.b16 %v3829, %v3822
    %v4509 = vpack.c.b16 %v3830, %v3823
    %v4510 = vpack.c.b16 %v3831, %v3824
    %v4511 = vpack.c.b16 %v3832, %v3825
    %v4512 = vpack.c.b16 %v3840, %v3833
    %v4513 = vpack.c.b16 %v3841, %v3834
    %v4514 = vpack.c.b16 %v3842, %v3835
    %v4515 = vpack.c.b16 %v3843, %v3836
    %v4516 = vpack.c.b16 %v3844, %v3837
    %v4517 = vpack.c.b16 %v3845, %v3838
    %v4518 = vpack.c.b16 %v3846, %v3839
    %v4519 = vpack.c.b16 %v3854, %v3847
    %v4520 = vpack.c.b16 %v3855, %v3848
    %v4521 = vpack.c.b16 %v3856, %v3849
    %v4522 = vpack.c.b16 %v3857, %v3850
    %v4523 = vpack.c.b16 %v3858, %v3851
    %v4524 = vpack.c.b16 %v3859, %v3852
    %v4525 = vpack.c.b16 %v3860, %v3853
    %v4526 = vpack.c.b16 %v3868, %v3861
    %v4527 = vpack.c.b16 %v3869, %v3862
    %v4528 = vpack.c.b16 %v3870, %v3863
    %v4529 = vpack.c.b16 %v3871, %v3864
    %v4530 = vpack.c.b16 %v3872, %v3865
    %v4531 = vpack.c.b16 %v3873, %v3866
    %v4532 = vpack.c.b16 %v3874, %v3867
    %v4533 = vpack.c.b16 %v3882, %v3875
    %v4534 = vpack.c.b16 %v3883, %v3876
    %v4535 = vpack.c.b16 %v3884, %v3877
    %v4536 = vpack.c.b16 %v3885, %v3878
    %v4537 = vpack.c.b16 %v3886, %v3879
    %v4538 = vpack.c.b16 %v3887, %v3880
    %v4539 = vpack.c.b16 %v3888, %v3881
    %v4540 = vpack.c.b16 %v3896, %v3889
    %v4541 = vpack.c.b16 %v3897, %v3890
    %v4542 = vpack.c.b16 %v3898, %v3891
    %v4543 = vpack.c.b16 %v3899, %v3892
    %v4544 = vpack.c.b16 %v3900, %v3893
    %v4545 = vpack.c.b16 %v3901, %v3894
    %v4546 = vpack.c.b16 %v3902, %v3895
    %v4547 = vpack.c.b16 %v3910, %v3903
    %v4548 = vpack.c.b16 %v3911, %v3904
    %v4549 = vpack.c.b16 %v3912, %v3905
    %v4550 = vpack.c.b16 %v3913, %v3906
    %v4551 = vpack.c.b16 %v3914, %v3907
    %v4552 = vpack.c.b16 %v3915, %v3908
    %v4553 = vpack.c.b16 %v3916, %v3909
    %v4554 = vpack.c.b16 %v3924, %v3917
    %v4555 = vpack.c.b16 %v3925, %v3918
    %v4556 = vpack.c.b16 %v3926, %v3919
    %v4557 = vpack.c.b16 %v3927, %v3920
    %v4558 = vpack.c.b16 %v3928, %v3921
    %v4559 = vpack.c.b16 %v3929, %v3922
    %v4560 = vpack.c.b16 %v3930, %v3923
    %v4561 = vpack.c.b16 %v3938, %v3931
    %v4562 = vpack.c.b16 %v3939, %v3932
    %v4563 = vpack.c.b16 %v3940, %v3933
    %v4564 = vpack.c.b16 %v3941, %v3934
    %v4565 = vpack.c.b16 %v3942, %v3935
    %v4566 = vpack.c.b16 %v3943, %v3936
    %v4567 = vpack.c.b16 %v3944, %v3937
    %v4568 = vpack.c.b16 %v3952, %v3945
    %v4569 = vpack.c.b16 %v3953, %v3946
    %v4570 = vpack.c.b16 %v3954, %v3947
    %v4571 = vpack.c.b16 %v3955, %v3948
    %v4572 = vpack.c.b16 %v3956, %v3949
    %v4573 = vpack.c.b16 %v3957, %v3950
    %v4574 = vpack.c.b16 %v3958, %v3951
    %v4575 = vpack.c.b16 %v3966, %v3959
    %v4576 = vpack.c.b16 %v3967, %v3960
    %v4577 = vpack.c.b16 %v3968, %v3961
    %v4578 = vpack.c.b16 %v3969, %v3962
    %v4579 = vpack.c.b16 %v3970, %v3963
    %v4580 = vpack.c.b16 %v3971, %v3964
    %v4581 = vpack.c.b16 %v3972, %v3965
    %v4582 = vpack.c.b16 %v3980, %v3973
    %v4583 = vpack.c.b16 %v3981, %v3974
    %v4584 = vpack.c.b16 %v3982, %v3975
    %v4585 = vpack.c.b16 %v3983, %v3976
    %v4586 = vpack.c.b16 %v3984, %v3977
    %v4587 = vpack.c.b16 %v3985, %v3978
    %v4588 = vpack.c.b16 %v3986, %v3979
    %v4589 = vpack.c.b16 %v3994, %v3987
    %v4590 = vpack.c.b16 %v3995, %v3988
    %v4591 = vpack.c.b16 %v3996, %v3989
    %v4592 = vpack.c.b16 %v3997, %v3990
    %v4593 = vpack.c.b16 %v3998, %v3991
    %v4594 = vpack.c.b16 %v3999, %v3992
    %v4595 = vpack.c.b16 %v4000, %v3993
    %v4596 = vpack.c.b16 %v4008, %v4001
    %v4597 = vpack.c.b16 %v4009, %v4002
    %v4598 = vpack.c.b16 %v4010, %v4003
    %v4599 = vpack.c.b16 %v4011, %v4004
    %v4600 = vpack.c.b16 %v4012, %v4005
    %v4601 = vpack.c.b16 %v4013, %v4006
    %v4602 = vpack.c.b16 %v4014, %v4007
    %v4603 = vpack.c.b16 %v4022, %v4015
    %v4604 = vpack.c.b16 %v4023, %v4016
    %v4605 = vpack.c.b16 %v4024, %v4017
    %v4606 = vpack.c.b16 %v4025, %v4018
    %v4607 = vpack.c.b16 %v4026, %v4019
    %v4608 = vpack.c.b16 %v4027, %v4020
    %v4609 = vpack.c.b16 %v4028, %v4021
    %v4610 = vpack.c.b16 %v4036, %v4029
    %v4611 = vpack.c.b16 %v4037, %v4030
    %v4612 = vpack.c.b16 %v4038, %v4031
    %v4613 = vpack.c.b16 %v4039, %v4032
    %v4614 = vpack.c.b16 %v4040, %v4033
    %v4615 = vpack.c.b16 %v4041, %v4034
    %v4616 = vpack.c.b16 %v4042, %v4035
    %v4617 = vpack.c.b16 %v4050, %v4043
    %v4618 = vpack.c.b16 %v4051, %v4044
    %v4619 = vpack.c.b16 %v4052, %v4045
    %v4620 = vpack.c.b16 %v4053, %v4046
    %v4621 = vpack.c.b16 %v4054, %v4047
    %v4622 = vpack.c.b16 %v4055, %v4048
    %v4623 = vpack.c.b16 %v4056, %v4049
    %v4624 = vpack.c.b16 %v4064, %v4057
    %v4625 = vpack.c.b16 %v4065, %v4058
    %v4626 = vpack.c.b16 %v4066, %v4059
    %v4627 = vpack.c.b16 %v4067, %v4060
    %v4628 = vpack.c.b16 %v4068, %v4061
    %v4629 = vpack.c.b16 %v4069, %v4062
    %v4630 = vpack.c.b16 %v4070, %v4063
    %v4631 = vpack.c.b16 %v4078, %v4071
    %v4632 = vpack.c.b16 %v4079, %v4072
    %v4633 = vpack.c.b16 %v4080, %v4073
    %v4634 = vpack.c.b16 %v4081, %v4074
    %v4635 = vpack.c.b16 %v4082, %v4075
    %v4636 = vpack.c.b16 %v4083, %v4076
    %v4637 = vpack.c.b16 %v4084, %v4077
    %v4638 = vpack.c.b16 %v4092, %v4085
    %v4639 = vpack.c.b16 %v4093, %v4086
    %v4640 = vpack.c.b16 %v4094, %v4087
    %v4641 = vpack.c.b16 %v4095, %v4088
    %v4642 = vpack.c.b16 %v4096, %v4089
    %v4643 = vpack.c.b16 %v4097, %v4090
    %v4644 = vpack.c.b16 %v4098, %v4091
    %v4645 = vpack.c.b16 %v4106, %v4099
    %v4646 = vpack.c.b16 %v4107, %v4100
    %v4647 = vpack.c.b16 %v4108, %v4101
    %v4648 = vpack.c.b16 %v4109, %v4102
    %v4649 = vpack.c.b16 %v4110, %v4103
    %v4650 = vpack.c.b16 %v4111, %v4104
    %v4651 = vpack.c.b16 %v4112, %v4105
    %v4652 = vpack.c.b16 %v4120, %v4113
    %v4653 = vpack.c.b16 %v4121, %v4114
    %v4654 = vpack.c.b16 %v4122, %v4115
    %v4655 = vpack.c.b16 %v4123, %v4116
    %v4656 = vpack.c.b16 %v4124, %v4117
    %v4657 = vpack.c.b16 %v4125, %v4118
    %v4658 = vpack.c.b16 %v4126, %v4119
    %v4659 = vpack.c.b16 %v4134, %v4127
    %v4660 = vpack.c.b16 %v4135, %v4128
    %v4661 = vpack.c.b16 %v4136, %v4129
    %v4662 = vpack.c.b16 %v4137, %v4130
    %v4663 = vpack.c.b16 %v4138, %v4131
    %v4664 = vpack.c.b16 %v4139, %v4132
    %v4665 = vpack.c.b16 %v4140, %v4133
    %v4666 = vpack.c.b16 %v4148, %v4141
    %v4667 = vpack.c.b16 %v4149, %v4142
    %v4668 = vpack.c.b16 %v4150, %v4143
    %v4669 = vpack.c.b16 %v4151, %v4144
    %v4670 = vpack.c.b16 %v4152, %v4145
    %v4671 = vpack.c.b16 %v4153, %v4146
    %v4672 = vpack.c.b16 %v4154, %v4147
    %v4673 = vpack.c.b16 %v4162, %v4155
    %v4674 = vpack.c.b16 %v4163, %v4156
    %v4675 = vpack.c.b16 %v4164, %v4157
    %v4676 = vpack.c.b16 %v4165, %v4158
    %v4677 = vpack.c.b16 %v4166, %v4159
    %v4678 = vpack.c.b16 %v4167, %v4160
    %v4679 = vpack.c.b16 %v4168, %v4161
    %v4680 = vpack.c.b16 %v4176, %v4169
    %v4681 = vpack.c.b16 %v4177, %v4170
    %v4682 = vpack.c.b16 %v4178, %v4171
    %v4683 = vpack.c.b16 %v4179, %v4172
    %v4684 = vpack.c.b16 %v4180, %v4173
    %v4685 = vpack.c.b16 %v4181, %v4174
    %v4686 = vpack.c.b16 %v4182, %v4175
    %v4687 = vpack.c.b16 %v4190, %v4183
    %v4688 = vpack.c.b16 %v4191, %v4184
    %v4689 = vpack.c.b16 %v4192, %v4185
    %v4690 = vpack.c.b16 %v4193, %v4186
    %v4691 = vpack.c.b16 %v4194, %v4187
    %v4692 = vpack.c.b16 %v4195, %v4188
    %v4693 = vpack.c.b16 %v4196, %v4189
    %v4694 = vpack.c.b16 %v4204, %v4197
    %v4695 = vpack.c.b16 %v4205, %v4198
    %v4696 = vpack.c.b16 %v4206, %v4199
    %v4697 = vpack.c.b16 %v4207, %v4200
    %v4698 = vpack.c.b16 %v4208, %v4201
    %v4699 = vpack.c.b16 %v4209, %v4202
    %v4700 = vpack.c.b16 %v4210, %v4203
    %v4701 = vpack.c.b16 %v4218, %v4211
    %v4702 = vpack.c.b16 %v4219, %v4212
    %v4703 = vpack.c.b16 %v4220, %v4213
    %v4704 = vpack.c.b16 %v4221, %v4214
    %v4705 = vpack.c.b16 %v4222, %v4215
    %v4706 = vpack.c.b16 %v4223, %v4216
    %v4707 = vpack.c.b16 %v4224, %v4217
    %v4708 = vpack.c.b16 %v4232, %v4225
    %v4709 = vpack.c.b16 %v4233, %v4226
    %v4710 = vpack.c.b16 %v4234, %v4227
    %v4711 = vpack.c.b16 %v4235, %v4228
    %v4712 = vpack.c.b16 %v4236, %v4229
    %v4713 = vpack.c.b16 %v4237, %v4230
    %v4714 = vpack.c.b16 %v4238, %v4231
    %v4715 = vpack.c.b16 %v4246, %v4239
    %v4716 = vpack.c.b16 %v4247, %v4240
    %v4717 = vpack.c.b16 %v4248, %v4241
    %v4718 = vpack.c.b16 %v4249, %v4242
    %v4719 = vpack.c.b16 %v4250, %v4243
    %v4720 = vpack.c.b16 %v4251, %v4244
    %v4721 = vpack.c.b16 %v4252, %v4245
    %v4722 = vpack.c.b16 %v4260, %v4253
    %v4723 = vpack.c.b16 %v4261, %v4254
    %v4724 = vpack.c.b16 %v4262, %v4255
    %v4725 = vpack.c.b16 %v4263, %v4256
    %v4726 = vpack.c.b16 %v4264, %v4257
    %v4727 = vpack.c.b16 %v4265, %v4258
    %v4728 = vpack.c.b16 %v4266, %v4259
    %v4729 = vpack.c.b16 %v4274, %v4267
    %v4730 = vpack.c.b16 %v4275, %v4268
    %v4731 = vpack.c.b16 %v4276, %v4269
    %v4732 = vpack.c.b16 %v4277, %v4270
    %v4733 = vpack.c.b16 %v4278, %v4271
    %v4734 = vpack.c.b16 %v4279, %v4272
    %v4735 = vpack.c.b16 %v4280, %v4273
    %v4736 = vpack.c.b16 %v4288, %v4281
    %v4737 = vpack.c.b16 %v4289, %v4282
    %v4738 = vpack.c.b16 %v4290, %v4283
    %v4739 = vpack.c.b16 %v4291, %v4284
    %v4740 = vpack.c.b16 %v4292, %v4285
    %v4741 = vpack.c.b16 %v4293, %v4286
    %v4742 = vpack.c.b16 %v4294, %v4287
    %v4743 = vpack.c.b16 %v4302, %v4295
    %v4744 = vpack.c.b16 %v4303, %v4296
    %v4745 = vpack.c.b16 %v4304, %v4297
    %v4746 = vpack.c.b16 %v4305, %v4298
    %v4747 = vpack.c.b16 %v4306, %v4299
    %v4748 = vpack.c.b16 %v4307, %v4300
    %v4749 = vpack.c.b16 %v4308, %v4301
    %v4750 = vpack.c.b16 %v4316, %v4309
    %v4751 = vpack.c.b16 %v4317, %v4310
    %v4752 = vpack.c.b16 %v4318, %v4311
    %v4753 = vpack.c.b16 %v4319, %v4312
    %v4754 = vpack.c.b16 %v4320, %v4313
    %v4755 = vpack.c.b16 %v4321, %v4314
    %v4756 = vpack.c.b16 %v4322, %v4315
    %v4757 = vpack.c.b16 %v4330, %v4323
    %v4758 = vpack.c.b16 %v4331, %v4324
    %v4759 = vpack.c.b16 %v4332, %v4325
    %v4760 = vpack.c.b16 %v4333, %v4326
    %v4761 = vpack.c.b16 %v4334, %v4327
    %v4762 = vpack.c.b16 %v4335, %v4328
    %v4763 = vpack.c.b16 %v4336, %v4329
    %v4764 = vpack.c.b16 %v4344, %v4337
    %v4765 = vpack.c.b16 %v4345, %v4338
    %v4766 = vpack.c.b16 %v4346, %v4339
    %v4767 = vpack.c.b16 %v4347, %v4340
    %v4768 = vpack.c.b16 %v4348, %v4341
    %v4769 = vpack.c.b16 %v4349, %v4342
    %v4770 = vpack.c.b16 %v4350, %v4343
    %v4771 = vpack.c.b16 %v4358, %v4351
    %v4772 = vpack.c.b16 %v4359, %v4352
    %v4773 = vpack.c.b16 %v4360, %v4353
    %v4774 = vpack.c.b16 %v4361, %v4354
    %v4775 = vpack.c.b16 %v4362, %v4355
    %v4776 = vpack.c.b16 %v4363, %v4356
    %v4777 = vpack.c.b16 %v4364, %v4357
    %v4778 = vpack.c.b16 %v4372, %v4365
    %v4779 = vpack.c.b16 %v4373, %v4366
    %v4780 = vpack.c.b16 %v4374, %v4367
    %v4781 = vpack.c.b16 %v4375, %v4368
    %v4782 = vpack.c.b16 %v4376, %v4369
    %v4783 = vpack.c.b16 %v4377, %v4370
    %v4784 = vpack.c.b16 %v4378, %v4371
    %v4785 = vpack.c.b16 %v4386, %v4379
    %v4786 = vpack.c.b16 %v4387, %v4380
    %v4787 = vpack.c.b16 %v4388, %v4381
    %v4788 = vpack.c.b16 %v4389, %v4382
    %v4789 = vpack.c.b16 %v4390, %v4383
    %v4790 = vpack.c.b16 %v4391, %v4384
    %v4791 = vpack.c.b16 %v4392, %v4385
    %v4792 = vpack.c.b16 %v4400, %v4393
    %v4793 = vpack.c.b16 %v4401, %v4394
    %v4794 = vpack.c.b16 %v4402, %v4395
    %v4795 = vpack.c.b16 %v4403, %v4396
    %v4796 = vpack.c.b16 %v4404, %v4397
    %v4797 = vpack.c.b16 %v4405, %v4398
    %v4798 = vpack.c.b16 %v4406, %v4399
    %v4799 = vpack.c.b16 %v4414, %v4407
    %v4800 = vpack.c.b16 %v4415, %v4408
    %v4801 = vpack.c.b16 %v4416, %v4409
    %v4802 = vpack.c.b16 %v4417, %v4410
    %v4803 = vpack.c.b16 %v4418, %v4411
    %v4804 = vpack.c.b16 %v4419, %v4412
    %v4805 = vpack.c.b16 %v4420, %v4413
    %v4806 = vpack.c.b16 %v4428, %v4421
    %v4807 = vpack.c.b16 %v4429, %v4422
    %v4808 = vpack.c.b16 %v4430, %v4423
    %v4809 = vpack.c.b16 %v4431, %v4424
    %v4810 = vpack.c.b16 %v4432, %v4425
    %v4811 = vpack.c.b16 %v4433, %v4426
    %v4812 = vpack.c.b16 %v4434, %v4427
    %v4813 = vpack.c.b16 %v4442, %v4435
    %v4814 = vpack.c.b16 %v4443, %v4436
    %v4815 = vpack.c.b16 %v4444, %v4437
    %v4816 = vpack.c.b16 %v4445, %v4438
    %v4817 = vpack.c.b16 %v4446, %v4439
    %v4818 = vpack.c.b16 %v4447, %v4440
    %v4819 = vpack.c.b16 %v4448, %v4441
    %v4820 = vpack.c.b16 %v4456, %v4449
    %v4821 = vpack.c.b16 %v4457, %v4450
    %v4822 = vpack.c.b16 %v4458, %v4451
    %v4823 = vpack.c.b16 %v4459, %v4452
    %v4824 = vpack.c.b16 %v4460, %v4453
    %v4825 = vpack.c.b16 %v4461, %v4454
    %v4826 = vpack.c.b16 %v4462, %v4455
    %v4827 = vpack.c.b16 %v4470, %v4463
    %v4828 = vpack.c.b16 %v4471, %v4464
    %v4829 = vpack.c.b16 %v4472, %v4465
    %v4830 = vpack.c.b16 %v4473, %v4466
    %v4831 = vpack.c.b16 %v4474, %v4467
    %v4832 = vpack.c.b16 %v4475, %v4468
    %v4833 = vpack.c.b16 %v4476, %v4469
    %v4834 = vpack.c.b16 %v4484, %v4477
    %v4835 = vpack.c.b16 %v4485, %v4478
    %v4836 = vpack.c.b16 %v4486, %v4479
    %v4837 = vpack.c.b16 %v4487, %v4480
    %v4838 = vpack.c.b16 %v4488, %v4481
    %v4839 = vpack.c.b16 %v4489, %v4482
    %v4840 = vpack.c.b16 %v4490, %v4483
    %v5192 = vsel %vm2291, %v2953, 0
    %5194 = vmatprep.subr.bf16.mxu0 %v4492
    %5195 = vmatpush1.bf16.msra.mxu0 %v4491
    %5196 = vmatprep.subr.bf16.mxu0 %v4499
    %5197 = vmatpush1.bf16.msra.mxu0 %v4498
    %5198 = vmatprep.subr.bf16.mxu0 %v4506
    %5199 = vmatpush1.bf16.msra.mxu0 %v4505
    %5200 = vmatprep.subr.bf16.mxu0 %v4513
    %5201 = vmatpush1.bf16.msra.mxu0 %v4512
    %5202 = vmatprep.subr.bf16.mxu0 %v4520
    %5203 = vmatpush1.bf16.msra.mxu0 %v4519
    %5204 = vmatprep.subr.bf16.mxu0 %v4527
    %5205 = vmatpush1.bf16.msra.mxu0 %v4526
    %5206 = vmatprep.subr.bf16.mxu0 %v4534
    %5207 = vmatpush1.bf16.msra.mxu0 %v4533
    %5208 = vmatprep.subr.bf16.mxu0 %v4541
    %5209 = vmatpush1.bf16.msra.mxu0 %v4540
    %5210 = vmatprep.subr.bf16.mxu0 %v4548
    %5211 = vmatpush1.bf16.msra.mxu0 %v4547
    %5212 = vmatprep.subr.bf16.mxu0 %v4555
    %5213 = vmatpush1.bf16.msra.mxu0 %v4554
    %5214 = vmatprep.subr.bf16.mxu0 %v4562
    %5215 = vmatpush1.bf16.msra.mxu0 %v4561
    %5216 = vmatprep.subr.bf16.mxu0 %v4569
    %5217 = vmatpush1.bf16.msra.mxu0 %v4568
    %5218 = vmatprep.subr.bf16.mxu0 %v4576
    %5219 = vmatpush1.bf16.msra.mxu0 %v4575
    %5220 = vmatprep.subr.bf16.mxu0 %v4583
    %5221 = vmatpush1.bf16.msra.mxu0 %v4582
    %5222 = vmatprep.subr.bf16.mxu0 %v4590
    %5223 = vmatpush1.bf16.msra.mxu0 %v4589
    %5224 = vmatprep.subr.bf16.mxu0 %v4597
    %5225 = vmatpush1.bf16.msra.mxu0 %v4596
    %5226 = vmatprep.mubr.bf16.mxu0 %v2948
    %5227 = vmatmul.mubr.bf16.gmra.mrb[0].mxu0 %v2947
    %v5228 = vpop.f32.mrb[0].mxu0
    %v5229 = vadd.f32 %v3359, %v5228
    %v5230 = vpop.f32.mrb[0].mxu0
    %v5231 = vadd.f32 %v3363, %v5230
    %v5232 = vpop.f32.mrb[0].mxu0
    %v5233 = vpop.f32.mrb[0].mxu0
    %5234 = vdwg.mxu0
    %5235 = vmatprep.subr.bf16.mxu0 %v4604
    %5236 = vmatpush1.bf16.msra.mxu0 %v4603
    %5237 = vmatprep.subr.bf16.mxu0 %v4611
    %5238 = vmatpush1.bf16.msra.mxu0 %v4610
    %5239 = vmatprep.subr.bf16.mxu0 %v4618
    %5240 = vmatpush1.bf16.msra.mxu0 %v4617
    %5241 = vmatprep.subr.bf16.mxu0 %v4625
    %5242 = vmatpush1.bf16.msra.mxu0 %v4624
    %5243 = vmatprep.subr.bf16.mxu0 %v4632
    %5244 = vmatpush1.bf16.msra.mxu0 %v4631
    %5245 = vmatprep.subr.bf16.mxu0 %v4639
    %5246 = vmatpush1.bf16.msra.mxu0 %v4638
    %5247 = vmatprep.subr.bf16.mxu0 %v4646
    %5248 = vmatpush1.bf16.msra.mxu0 %v4645
    %5249 = vmatprep.subr.bf16.mxu0 %v4653
    %5250 = vmatpush1.bf16.msra.mxu0 %v4652
    %5251 = vmatprep.subr.bf16.mxu0 %v4660
    %5252 = vmatpush1.bf16.msra.mxu0 %v4659
    %5253 = vmatprep.subr.bf16.mxu0 %v4667
    %5254 = vmatpush1.bf16.msra.mxu0 %v4666
    %5255 = vmatprep.subr.bf16.mxu0 %v4674
    %5256 = vmatpush1.bf16.msra.mxu0 %v4673
    %5257 = vmatprep.subr.bf16.mxu0 %v4681
    %5258 = vmatpush1.bf16.msra.mxu0 %v4680
    %5259 = vmatprep.subr.bf16.mxu0 %v4688
    %5260 = vmatpush1.bf16.msra.mxu0 %v4687
    %5261 = vmatprep.subr.bf16.mxu0 %v4695
    %5262 = vmatpush1.bf16.msra.mxu0 %v4694
    %5263 = vmatprep.subr.bf16.mxu0 %v4702
    %5264 = vmatpush1.bf16.msra.mxu0 %v4701
    %5265 = vmatprep.subr.bf16.mxu0 %v4709
    %5266 = vmatpush1.bf16.msra.mxu0 %v4708
    %5267 = vmatprep.mubr.bf16.mxu0 %v2950
    %5268 = vmatmul.mubr.bf16.gmra.mrb[0].mxu0 %v2949
    %v5269 = vpop.f32.mrb[0].mxu0
    %v5270 = vadd.f32 %v5229, %v5269
    %v5271 = vpop.f32.mrb[0].mxu0
    %v5272 = vadd.f32 %v5231, %v5271
    %v5273 = vpop.f32.mrb[0].mxu0
    %v5274 = vpop.f32.mrb[0].mxu0
    %5275 = vdwg.mxu0
    %5276 = vmatprep.subr.bf16.mxu0 %v4716
    %5277 = vmatpush1.bf16.msra.mxu0 %v4715
    %5278 = vmatprep.subr.bf16.mxu0 %v4723
    %5279 = vmatpush1.bf16.msra.mxu0 %v4722
    %5280 = vmatprep.subr.bf16.mxu0 %v4730
    %5281 = vmatpush1.bf16.msra.mxu0 %v4729
    %5282 = vmatprep.subr.bf16.mxu0 %v4737
    %5283 = vmatpush1.bf16.msra.mxu0 %v4736
    %5284 = vmatprep.subr.bf16.mxu0 %v4744
    %5285 = vmatpush1.bf16.msra.mxu0 %v4743
    %5286 = vmatprep.subr.bf16.mxu0 %v4751
    %5287 = vmatpush1.bf16.msra.mxu0 %v4750
    %5288 = vmatprep.subr.bf16.mxu0 %v4758
    %5289 = vmatpush1.bf16.msra.mxu0 %v4757
    %5290 = vmatprep.subr.bf16.mxu0 %v4765
    %5291 = vmatpush1.bf16.msra.mxu0 %v4764
    %5292 = vmatprep.subr.bf16.mxu0 %v4772
    %5293 = vmatpush1.bf16.msra.mxu0 %v4771
    %5294 = vmatprep.subr.bf16.mxu0 %v4779
    %5295 = vmatpush1.bf16.msra.mxu0 %v4778
    %5296 = vmatprep.subr.bf16.mxu0 %v4786
    %5297 = vmatpush1.bf16.msra.mxu0 %v4785
    %5298 = vmatprep.subr.bf16.mxu0 %v4793
    %5299 = vmatpush1.bf16.msra.mxu0 %v4792
    %5300 = vmatprep.subr.bf16.mxu0 %v4800
    %5301 = vmatpush1.bf16.msra.mxu0 %v4799
    %5302 = vmatprep.subr.bf16.mxu0 %v4807
    %5303 = vmatpush1.bf16.msra.mxu0 %v4806
    %5304 = vmatprep.subr.bf16.mxu0 %v4814
    %5305 = vmatpush1.bf16.msra.mxu0 %v4813
    %5306 = vmatprep.subr.bf16.mxu0 %v4821
    %5307 = vmatpush1.bf16.msra.mxu0 %v4820
    %5308 = vmatprep.mubr.bf16.mxu0 %v2952
    %5309 = vmatmul.mubr.bf16.gmra.mrb[0].mxu0 %v2951
    %v5310 = vpop.f32.mrb[0].mxu0
    %v5311 = vadd.f32 %v5270, %v5310
    %v5312 = vpop.f32.mrb[0].mxu0
    %v5313 = vadd.f32 %v5272, %v5312
    %v5314 = vpop.f32.mrb[0].mxu0
    %v5315 = vpop.f32.mrb[0].mxu0
    %5316 = vdwg.mxu0
    %5317 = vmatprep.subr.bf16.mxu0 %v4828
    %5318 = vmatpush1.bf16.msra.mxu0 %v4827
    %5319 = vmatprep.subr.bf16.mxu0 %v4835
    %5320 = vmatpush1.bf16.msra.mxu0 %v4834
    %5321 = vmatprep.subr.bf16.mxu0 0
    %5322 = vmatpush1.bf16.msra.mxu0 0
    %5323 = vmatprep.subr.bf16.mxu0 0
    %5324 = vmatpush1.bf16.msra.mxu0 0
    %5325 = vmatprep.subr.bf16.mxu0 0
    %5326 = vmatpush1.bf16.msra.mxu0 0
    %5327 = vmatprep.subr.bf16.mxu0 0
    %5328 = vmatpush1.bf16.msra.mxu0 0
    %5329 = vmatprep.subr.bf16.mxu0 0
    %5330 = vmatpush1.bf16.msra.mxu0 0
    %5331 = vmatprep.subr.bf16.mxu0 0
    %5332 = vmatpush1.bf16.msra.mxu0 0
    %5333 = vmatprep.subr.bf16.mxu0 0
    %5334 = vmatpush1.bf16.msra.mxu0 0
    %5335 = vmatprep.subr.bf16.mxu0 0
    %5336 = vmatpush1.bf16.msra.mxu0 0
    %5337 = vmatprep.subr.bf16.mxu0 0
    %5338 = vmatpush1.bf16.msra.mxu0 0
    %5339 = vmatprep.subr.bf16.mxu0 0
    %5340 = vmatpush1.bf16.msra.mxu0 0
    %5341 = vmatprep.subr.bf16.mxu0 0
    %5342 = vmatpush1.bf16.msra.mxu0 0
    %5343 = vmatprep.subr.bf16.mxu0 0
    %5344 = vmatpush1.bf16.msra.mxu0 0
    %5345 = vmatprep.subr.bf16.mxu0 0
    %5346 = vmatpush1.bf16.msra.mxu0 0
    %5347 = vmatprep.subr.bf16.mxu0 0
    %5348 = vmatpush1.bf16.msra.mxu0 0
    %5349 = vmatprep.mubr.bf16.mxu0 0
    %5350 = vmatmul.mubr.bf16.gmra.mrb[0].mxu0 %v5192
    %v5351 = vpop.f32.mrb[0].mxu0
    %v5352 = vadd.f32 %v5311, %v5351
    %v5353 = vpop.f32.mrb[0].mxu0
    %v5354 = vadd.f32 %v5313, %v5353
    %v5355 = vpop.f32.mrb[0].mxu0
    %v5356 = vpop.f32.mrb[0].mxu0
    %5357 = vdwg.mxu0
    %5358 = vmatprep.subr.bf16.mxu0 %v4494
    %5359 = vmatpush1.bf16.msra.mxu0 %v4493
    %5360 = vmatprep.subr.bf16.mxu0 %v4501
    %5361 = vmatpush1.bf16.msra.mxu0 %v4500
    %5362 = vmatprep.subr.bf16.mxu0 %v4508
    %5363 = vmatpush1.bf16.msra.mxu0 %v4507
    %5364 = vmatprep.subr.bf16.mxu0 %v4515
    %5365 = vmatpush1.bf16.msra.mxu0 %v4514
    %5366 = vmatprep.subr.bf16.mxu0 %v4522
    %5367 = vmatpush1.bf16.msra.mxu0 %v4521
    %5368 = vmatprep.subr.bf16.mxu0 %v4529
    %5369 = vmatpush1.bf16.msra.mxu0 %v4528
    %5370 = vmatprep.subr.bf16.mxu0 %v4536
    %5371 = vmatpush1.bf16.msra.mxu0 %v4535
    %5372 = vmatprep.subr.bf16.mxu0 %v4543
    %5373 = vmatpush1.bf16.msra.mxu0 %v4542
    %5374 = vmatprep.subr.bf16.mxu0 %v4550
    %5375 = vmatpush1.bf16.msra.mxu0 %v4549
    %5376 = vmatprep.subr.bf16.mxu0 %v4557
    %5377 = vmatpush1.bf16.msra.mxu0 %v4556
    %5378 = vmatprep.subr.bf16.mxu0 %v4564
    %5379 = vmatpush1.bf16.msra.mxu0 %v4563
    %5380 = vmatprep.subr.bf16.mxu0 %v4571
    %5381 = vmatpush1.bf16.msra.mxu0 %v4570
    %5382 = vmatprep.subr.bf16.mxu0 %v4578
    %5383 = vmatpush1.bf16.msra.mxu0 %v4577
    %5384 = vmatprep.subr.bf16.mxu0 %v4585
    %5385 = vmatpush1.bf16.msra.mxu0 %v4584
    %5386 = vmatprep.subr.bf16.mxu0 %v4592
    %5387 = vmatpush1.bf16.msra.mxu0 %v4591
    %5388 = vmatprep.subr.bf16.mxu0 %v4599
    %5389 = vmatpush1.bf16.msra.mxu0 %v4598
    %5390 = vmatprep.mubr.bf16.mxu0 %v2948
    %5391 = vmatmul.mubr.bf16.gmra.mrb[0].mxu0 %v2947
    %v5392 = vpop.f32.mrb[0].mxu0
    %v5393 = vadd.f32 %v3367, %v5392
    %v5394 = vpop.f32.mrb[0].mxu0
    %v5395 = vadd.f32 %v3371, %v5394
    %v5396 = vpop.f32.mrb[0].mxu0
    %v5397 = vpop.f32.mrb[0].mxu0
    %5398 = vdwg.mxu0
    %5399 = vmatprep.subr.bf16.mxu0 %v4606
    %5400 = vmatpush1.bf16.msra.mxu0 %v4605
    %5401 = vmatprep.subr.bf16.mxu0 %v4613
    %5402 = vmatpush1.bf16.msra.mxu0 %v4612
    %5403 = vmatprep.subr.bf16.mxu0 %v4620
    %5404 = vmatpush1.bf16.msra.mxu0 %v4619
    %5405 = vmatprep.subr.bf16.mxu0 %v4627
    %5406 = vmatpush1.bf16.msra.mxu0 %v4626
    %5407 = vmatprep.subr.bf16.mxu0 %v4634
    %5408 = vmatpush1.bf16.msra.mxu0 %v4633
    %5409 = vmatprep.subr.bf16.mxu0 %v4641
    %5410 = vmatpush1.bf16.msra.mxu0 %v4640
    %5411 = vmatprep.subr.bf16.mxu0 %v4648
    %5412 = vmatpush1.bf16.msra.mxu0 %v4647
    %5413 = vmatprep.subr.bf16.mxu0 %v4655
    %5414 = vmatpush1.bf16.msra.mxu0 %v4654
    %5415 = vmatprep.subr.bf16.mxu0 %v4662
    %5416 = vmatpush1.bf16.msra.mxu0 %v4661
    %5417 = vmatprep.subr.bf16.mxu0 %v4669
    %5418 = vmatpush1.bf16.msra.mxu0 %v4668
    %5419 = vmatprep.subr.bf16.mxu0 %v4676
    %5420 = vmatpush1.bf16.msra.mxu0 %v4675
    %5421 = vmatprep.subr.bf16.mxu0 %v4683
    %5422 = vmatpush1.bf16.msra.mxu0 %v4682
    %5423 = vmatprep.subr.bf16.mxu0 %v4690
    %5424 = vmatpush1.bf16.msra.mxu0 %v4689
    %5425 = vmatprep.subr.bf16.mxu0 %v4697
    %5426 = vmatpush1.bf16.msra.mxu0 %v4696
    %5427 = vmatprep.subr.bf16.mxu0 %v4704
    %5428 = vmatpush1.bf16.msra.mxu0 %v4703
    %5429 = vmatprep.subr.bf16.mxu0 %v4711
    %5430 = vmatpush1.bf16.msra.mxu0 %v4710
    %5431 = vmatprep.mubr.bf16.mxu0 %v2950
    %5432 = vmatmul.mubr.bf16.gmra.mrb[0].mxu0 %v2949
    %v5433 = vpop.f32.mrb[0].mxu0
    %v5434 = vadd.f32 %v5393, %v5433
    %v5435 = vpop.f32.mrb[0].mxu0
    %v5436 = vadd.f32 %v5395, %v5435
    %v5437 = vpop.f32.mrb[0].mxu0
    %v5438 = vpop.f32.mrb[0].mxu0
    %5439 = vdwg.mxu0
    %5440 = vmatprep.subr.bf16.mxu0 %v4718
    %5441 = vmatpush1.bf16.msra.mxu0 %v4717
    %5442 = vmatprep.subr.bf16.mxu0 %v4725
    %5443 = vmatpush1.bf16.msra.mxu0 %v4724
    %5444 = vmatprep.subr.bf16.mxu0 %v4732
    %5445 = vmatpush1.bf16.msra.mxu0 %v4731
    %5446 = vmatprep.subr.bf16.mxu0 %v4739
    %5447 = vmatpush1.bf16.msra.mxu0 %v4738
    %5448 = vmatprep.subr.bf16.mxu0 %v4746
    %5449 = vmatpush1.bf16.msra.mxu0 %v4745
    %5450 = vmatprep.subr.bf16.mxu0 %v4753
    %5451 = vmatpush1.bf16.msra.mxu0 %v4752
    %5452 = vmatprep.subr.bf16.mxu0 %v4760
    %5453 = vmatpush1.bf16.msra.mxu0 %v4759
    %5454 = vmatprep.subr.bf16.mxu0 %v4767
    %5455 = vmatpush1.bf16.msra.mxu0 %v4766
    %5456 = vmatprep.subr.bf16.mxu0 %v4774
    %5457 = vmatpush1.bf16.msra.mxu0 %v4773
    %5458 = vmatprep.subr.bf16.mxu0 %v4781
    %5459 = vmatpush1.bf16.msra.mxu0 %v4780
    %5460 = vmatprep.subr.bf16.mxu0 %v4788
    %5461 = vmatpush1.bf16.msra.mxu0 %v4787
    %5462 = vmatprep.subr.bf16.mxu0 %v4795
    %5463 = vmatpush1.bf16.msra.mxu0 %v4794
    %5464 = vmatprep.subr.bf16.mxu0 %v4802
    %5465 = vmatpush1.bf16.msra.mxu0 %v4801
    %5466 = vmatprep.subr.bf16.mxu0 %v4809
    %5467 = vmatpush1.bf16.msra.mxu0 %v4808
    %5468 = vmatprep.subr.bf16.mxu0 %v4816
    %5469 = vmatpush1.bf16.msra.mxu0 %v4815
    %5470 = vmatprep.subr.bf16.mxu0 %v4823
    %5471 = vmatpush1.bf16.msra.mxu0 %v4822
    %5472 = vmatprep.mubr.bf16.mxu0 %v2952
    %5473 = vmatmul.mubr.bf16.gmra.mrb[0].mxu0 %v2951
    %v5474 = vpop.f32.mrb[0].mxu0
    %v5475 = vadd.f32 %v5434, %v5474
    %v5476 = vpop.f32.mrb[0].mxu0
    %v5477 = vadd.f32 %v5436, %v5476
    %v5478 = vpop.f32.mrb[0].mxu0
    %v5479 = vpop.f32.mrb[0].mxu0
    %5480 = vdwg.mxu0
    %5481 = vmatprep.subr.bf16.mxu0 %v4830
    %5482 = vmatpush1.bf16.msra.mxu0 %v4829
    %5483 = vmatprep.subr.bf16.mxu0 %v4837
    %5484 = vmatpush1.bf16.msra.mxu0 %v4836
    %5485 = vmatprep.subr.bf16.mxu0 0
    %5486 = vmatpush1.bf16.msra.mxu0 0
    %5487 = vmatprep.subr.bf16.mxu0 0
    %5488 = vmatpush1.bf16.msra.mxu0 0
    %5489 = vmatprep.subr.bf16.mxu0 0
    %5490 = vmatpush1.bf16.msra.mxu0 0
    %5491 = vmatprep.subr.bf16.mxu0 0
    %5492 = vmatpush1.bf16.msra.mxu0 0
    %5493 = vmatprep.subr.bf16.mxu0 0
    %5494 = vmatpush1.bf16.msra.mxu0 0
    %5495 = vmatprep.subr.bf16.mxu0 0
    %5496 = vmatpush1.bf16.msra.mxu0 0
    %5497 = vmatprep.subr.bf16.mxu0 0
    %5498 = vmatpush1.bf16.msra.mxu0 0
    %5499 = vmatprep.subr.bf16.mxu0 0
    %5500 = vmatpush1.bf16.msra.mxu0 0
    %5501 = vmatprep.subr.bf16.mxu0 0
    %5502 = vmatpush1.bf16.msra.mxu0 0
    %5503 = vmatprep.subr.bf16.mxu0 0
    %5504 = vmatpush1.bf16.msra.mxu0 0
    %5505 = vmatprep.subr.bf16.mxu0 0
    %5506 = vmatpush1.bf16.msra.mxu0 0
    %5507 = vmatprep.subr.bf16.mxu0 0
    %5508 = vmatpush1.bf16.msra.mxu0 0
    %5509 = vmatprep.subr.bf16.mxu0 0
    %5510 = vmatpush1.bf16.msra.mxu0 0
    %5511 = vmatprep.subr.bf16.mxu0 0
    %5512 = vmatpush1.bf16.msra.mxu0 0
    %5513 = vmatprep.mubr.bf16.mxu0 0
    %5514 = vmatmul.mubr.bf16.gmra.mrb[0].mxu0 %v5192
    %v5515 = vpop.f32.mrb[0].mxu0
    %v5516 = vadd.f32 %v5475, %v5515
    %v5517 = vpop.f32.mrb[0].mxu0
    %v5518 = vadd.f32 %v5477, %v5517
    %v5519 = vpop.f32.mrb[0].mxu0
    %v5520 = vpop.f32.mrb[0].mxu0
    %5521 = vdwg.mxu0
    %5522 = vmatprep.subr.bf16.mxu0 %v4496
    %5523 = vmatpush1.bf16.msra.mxu0 %v4495
    %5524 = vmatprep.subr.bf16.mxu0 %v4503
    %5525 = vmatpush1.bf16.msra.mxu0 %v4502
    %5526 = vmatprep.subr.bf16.mxu0 %v4510
    %5527 = vmatpush1.bf16.msra.mxu0 %v4509
    %5528 = vmatprep.subr.bf16.mxu0 %v4517
    %5529 = vmatpush1.bf16.msra.mxu0 %v4516
    %5530 = vmatprep.subr.bf16.mxu0 %v4524
    %5531 = vmatpush1.bf16.msra.mxu0 %v4523
    %5532 = vmatprep.subr.bf16.mxu0 %v4531
    %5533 = vmatpush1.bf16.msra.mxu0 %v4530
    %5534 = vmatprep.subr.bf16.mxu0 %v4538
    %5535 = vmatpush1.bf16.msra.mxu0 %v4537
    %5536 = vmatprep.subr.bf16.mxu0 %v4545
    %5537 = vmatpush1.bf16.msra.mxu0 %v4544
    %5538 = vmatprep.subr.bf16.mxu0 %v4552
    %5539 = vmatpush1.bf16.msra.mxu0 %v4551
    %5540 = vmatprep.subr.bf16.mxu0 %v4559
    %5541 = vmatpush1.bf16.msra.mxu0 %v4558
    %5542 = vmatprep.subr.bf16.mxu0 %v4566
    %5543 = vmatpush1.bf16.msra.mxu0 %v4565
    %5544 = vmatprep.subr.bf16.mxu0 %v4573
    %5545 = vmatpush1.bf16.msra.mxu0 %v4572
    %5546 = vmatprep.subr.bf16.mxu0 %v4580
    %5547 = vmatpush1.bf16.msra.mxu0 %v4579
    %5548 = vmatprep.subr.bf16.mxu0 %v4587
    %5549 = vmatpush1.bf16.msra.mxu0 %v4586
    %5550 = vmatprep.subr.bf16.mxu0 %v4594
    %5551 = vmatpush1.bf16.msra.mxu0 %v4593
    %5552 = vmatprep.subr.bf16.mxu0 %v4601
    %5553 = vmatpush1.bf16.msra.mxu0 %v4600
    %5554 = vmatprep.mubr.bf16.mxu0 %v2948
    %5555 = vmatmul.mubr.bf16.gmra.mrb[0].mxu0 %v2947
    %v5556 = vpop.f32.mrb[0].mxu0
    %v5557 = vadd.f32 %v3375, %v5556
    %v5558 = vpop.f32.mrb[0].mxu0
    %v5559 = vadd.f32 %v3379, %v5558
    %v5560 = vpop.f32.mrb[0].mxu0
    %v5561 = vpop.f32.mrb[0].mxu0
    %5562 = vdwg.mxu0
    %5563 = vmatprep.subr.bf16.mxu0 %v4608
    %5564 = vmatpush1.bf16.msra.mxu0 %v4607
    %5565 = vmatprep.subr.bf16.mxu0 %v4615
    %5566 = vmatpush1.bf16.msra.mxu0 %v4614
    %5567 = vmatprep.subr.bf16.mxu0 %v4622
    %5568 = vmatpush1.bf16.msra.mxu0 %v4621
    %5569 = vmatprep.subr.bf16.mxu0 %v4629
    %5570 = vmatpush1.bf16.msra.mxu0 %v4628
    %5571 = vmatprep.subr.bf16.mxu0 %v4636
    %5572 = vmatpush1.bf16.msra.mxu0 %v4635
    %5573 = vmatprep.subr.bf16.mxu0 %v4643
    %5574 = vmatpush1.bf16.msra.mxu0 %v4642
    %5575 = vmatprep.subr.bf16.mxu0 %v4650
    %5576 = vmatpush1.bf16.msra.mxu0 %v4649
    %5577 = vmatprep.subr.bf16.mxu0 %v4657
    %5578 = vmatpush1.bf16.msra.mxu0 %v4656
    %5579 = vmatprep.subr.bf16.mxu0 %v4664
    %5580 = vmatpush1.bf16.msra.mxu0 %v4663
    %5581 = vmatprep.subr.bf16.mxu0 %v4671
    %5582 = vmatpush1.bf16.msra.mxu0 %v4670
    %5583 = vmatprep.subr.bf16.mxu0 %v4678
    %5584 = vmatpush1.bf16.msra.mxu0 %v4677
    %5585 = vmatprep.subr.bf16.mxu0 %v4685
    %5586 = vmatpush1.bf16.msra.mxu0 %v4684
    %5587 = vmatprep.subr.bf16.mxu0 %v4692
    %5588 = vmatpush1.bf16.msra.mxu0 %v4691
    %5589 = vmatprep.subr.bf16.mxu0 %v4699
    %5590 = vmatpush1.bf16.msra.mxu0 %v4698
    %5591 = vmatprep.subr.bf16.mxu0 %v4706
    %5592 = vmatpush1.bf16.msra.mxu0 %v4705
    %5593 = vmatprep.subr.bf16.mxu0 %v4713
    %5594 = vmatpush1.bf16.msra.mxu0 %v4712
    %5595 = vmatprep.mubr.bf16.mxu0 %v2950
    %5596 = vmatmul.mubr.bf16.gmra.mrb[0].mxu0 %v2949
    %v5597 = vpop.f32.mrb[0].mxu0
    %v5598 = vadd.f32 %v5557, %v5597
    %v5599 = vpop.f32.mrb[0].mxu0
    %v5600 = vadd.f32 %v5559, %v5599
    %v5601 = vpop.f32.mrb[0].mxu0
    %v5602 = vpop.f32.mrb[0].mxu0
    %5603 = vdwg.mxu0
    %5604 = vmatprep.subr.bf16.mxu0 %v4720
    %5605 = vmatpush1.bf16.msra.mxu0 %v4719
    %5606 = vmatprep.subr.bf16.mxu0 %v4727
    %5607 = vmatpush1.bf16.msra.mxu0 %v4726
    %5608 = vmatprep.subr.bf16.mxu0 %v4734
    %5609 = vmatpush1.bf16.msra.mxu0 %v4733
    %5610 = vmatprep.subr.bf16.mxu0 %v4741
    %5611 = vmatpush1.bf16.msra.mxu0 %v4740
    %5612 = vmatprep.subr.bf16.mxu0 %v4748
    %5613 = vmatpush1.bf16.msra.mxu0 %v4747
    %5614 = vmatprep.subr.bf16.mxu0 %v4755
    %5615 = vmatpush1.bf16.msra.mxu0 %v4754
    %5616 = vmatprep.subr.bf16.mxu0 %v4762
    %5617 = vmatpush1.bf16.msra.mxu0 %v4761
    %5618 = vmatprep.subr.bf16.mxu0 %v4769
    %5619 = vmatpush1.bf16.msra.mxu0 %v4768
    %5620 = vmatprep.subr.bf16.mxu0 %v4776
    %5621 = vmatpush1.bf16.msra.mxu0 %v4775
    %5622 = vmatprep.subr.bf16.mxu0 %v4783
    %5623 = vmatpush1.bf16.msra.mxu0 %v4782
    %5624 = vmatprep.subr.bf16.mxu0 %v4790
    %5625 = vmatpush1.bf16.msra.mxu0 %v4789
    %5626 = vmatprep.subr.bf16.mxu0 %v4797
    %5627 = vmatpush1.bf16.msra.mxu0 %v4796
    %5628 = vmatprep.subr.bf16.mxu0 %v4804
    %5629 = vmatpush1.bf16.msra.mxu0 %v4803
    %5630 = vmatprep.subr.bf16.mxu0 %v4811
    %5631 = vmatpush1.bf16.msra.mxu0 %v4810
    %5632 = vmatprep.subr.bf16.mxu0 %v4818
    %5633 = vmatpush1.bf16.msra.mxu0 %v4817
    %5634 = vmatprep.subr.bf16.mxu0 %v4825
    %5635 = vmatpush1.bf16.msra.mxu0 %v4824
    %5636 = vmatprep.mubr.bf16.mxu0 %v2952
    %5637 = vmatmul.mubr.bf16.gmra.mrb[0].mxu0 %v2951
    %v5638 = vpop.f32.mrb[0].mxu0
    %v5639 = vadd.f32 %v5598, %v5638
    %v5640 = vpop.f32.mrb[0].mxu0
    %v5641 = vadd.f32 %v5600, %v5640
    %v5642 = vpop.f32.mrb[0].mxu0
    %v5643 = vpop.f32.mrb[0].mxu0
    %5644 = vdwg.mxu0
    %5645 = vmatprep.subr.bf16.mxu0 %v4832
    %5646 = vmatpush1.bf16.msra.mxu0 %v4831
    %5647 = vmatprep.subr.bf16.mxu0 %v4839
    %5648 = vmatpush1.bf16.msra.mxu0 %v4838
    %5649 = vmatprep.subr.bf16.mxu0 0
    %5650 = vmatpush1.bf16.msra.mxu0 0
    %5651 = vmatprep.subr.bf16.mxu0 0
    %5652 = vmatpush1.bf16.msra.mxu0 0
    %5653 = vmatprep.subr.bf16.mxu0 0
    %5654 = vmatpush1.bf16.msra.mxu0 0
    %5655 = vmatprep.subr.bf16.mxu0 0
    %5656 = vmatpush1.bf16.msra.mxu0 0
    %5657 = vmatprep.subr.bf16.mxu0 0
    %5658 = vmatpush1.bf16.msra.mxu0 0
    %5659 = vmatprep.subr.bf16.mxu0 0
    %5660 = vmatpush1.bf16.msra.mxu0 0
    %5661 = vmatprep.subr.bf16.mxu0 0
    %5662 = vmatpush1.bf16.msra.mxu0 0
    %5663 = vmatprep.subr.bf16.mxu0 0
    %5664 = vmatpush1.bf16.msra.mxu0 0
    %5665 = vmatprep.subr.bf16.mxu0 0
    %5666 = vmatpush1.bf16.msra.mxu0 0
    %5667 = vmatprep.subr.bf16.mxu0 0
    %5668 = vmatpush1.bf16.msra.mxu0 0
    %5669 = vmatprep.subr.bf16.mxu0 0
    %5670 = vmatpush1.bf16.msra.mxu0 0
    %5671 = vmatprep.subr.bf16.mxu0 0
    %5672 = vmatpush1.bf16.msra.mxu0 0
    %5673 = vmatprep.subr.bf16.mxu0 0
    %5674 = vmatpush1.bf16.msra.mxu0 0
    %5675 = vmatprep.subr.bf16.mxu0 0
    %5676 = vmatpush1.bf16.msra.mxu0 0
    %5677 = vmatprep.mubr.bf16.mxu0 0
    %5678 = vmatmul.mubr.bf16.gmra.mrb[0].mxu0 %v5192
    %v5679 = vpop.f32.mrb[0].mxu0
    %v5680 = vadd.f32 %v5639, %v5679
    %v5681 = vpop.f32.mrb[0].mxu0
    %v5682 = vadd.f32 %v5641, %v5681
    %v5683 = vpop.f32.mrb[0].mxu0
    %v5684 = vpop.f32.mrb[0].mxu0
    %5685 = vdwg.mxu0
    %5686 = vmatprep.subr.bf16.mxu0 0
    %5687 = vmatpush1.bf16.msra.mxu0 %v4497
    %5688 = vmatprep.subr.bf16.mxu0 0
    %5689 = vmatpush1.bf16.msra.mxu0 %v4504
    %5690 = vmatprep.subr.bf16.mxu0 0
    %5691 = vmatpush1.bf16.msra.mxu0 %v4511
    %5692 = vmatprep.subr.bf16.mxu0 0
    %5693 = vmatpush1.bf16.msra.mxu0 %v4518
    %5694 = vmatprep.subr.bf16.mxu0 0
    %5695 = vmatpush1.bf16.msra.mxu0 %v4525
    %5696 = vmatprep.subr.bf16.mxu0 0
    %5697 = vmatpush1.bf16.msra.mxu0 %v4532
    %5698 = vmatprep.subr.bf16.mxu0 0
    %5699 = vmatpush1.bf16.msra.mxu0 %v4539
    %5700 = vmatprep.subr.bf16.mxu0 0
    %5701 = vmatpush1.bf16.msra.mxu0 %v4546
    %5702 = vmatprep.subr.bf16.mxu0 0
    %5703 = vmatpush1.bf16.msra.mxu0 %v4553
    %5704 = vmatprep.subr.bf16.mxu0 0
    %5705 = vmatpush1.bf16.msra.mxu0 %v4560
    %5706 = vmatprep.subr.bf16.mxu0 0
    %5707 = vmatpush1.bf16.msra.mxu0 %v4567
    %5708 = vmatprep.subr.bf16.mxu0 0
    %5709 = vmatpush1.bf16.msra.mxu0 %v4574
    %5710 = vmatprep.subr.bf16.mxu0 0
    %5711 = vmatpush1.bf16.msra.mxu0 %v4581
    %5712 = vmatprep.subr.bf16.mxu0 0
    %5713 = vmatpush1.bf16.msra.mxu0 %v4588
    %5714 = vmatprep.subr.bf16.mxu0 0
    %5715 = vmatpush1.bf16.msra.mxu0 %v4595
    %5716 = vmatprep.subr.bf16.mxu0 0
    %5717 = vmatpush1.bf16.msra.mxu0 %v4602
    %5718 = vmatprep.mubr.bf16.mxu0 %v2948
    %5719 = vmatmul.mubr.bf16.gmra.mrb[0].mxu0 %v2947
    %v5720 = vpop.f32.mrb[0].mxu0
    %v5721 = vadd.f32 %v3383, %v5720
    %v5722 = vpop.f32.mrb[0].mxu0
    %v5723 = vpop.f32.mrb[0].mxu0
    %v5724 = vpop.f32.mrb[0].mxu0
    %5725 = vdwg.mxu0
    %5726 = vmatprep.subr.bf16.mxu0 0
    %5727 = vmatpush1.bf16.msra.mxu0 %v4609
    %5728 = vmatprep.subr.bf16.mxu0 0
    %5729 = vmatpush1.bf16.msra.mxu0 %v4616
    %5730 = vmatprep.subr.bf16.mxu0 0
    %5731 = vmatpush1.bf16.msra.mxu0 %v4623
    %5732 = vmatprep.subr.bf16.mxu0 0
    %5733 = vmatpush1.bf16.msra.mxu0 %v4630
    %5734 = vmatprep.subr.bf16.mxu0 0
    %5735 = vmatpush1.bf16.msra.mxu0 %v4637
    %5736 = vmatprep.subr.bf16.mxu0 0
    %5737 = vmatpush1.bf16.msra.mxu0 %v4644
    %5738 = vmatprep.subr.bf16.mxu0 0
    %5739 = vmatpush1.bf16.msra.mxu0 %v4651
    %5740 = vmatprep.subr.bf16.mxu0 0
    %5741 = vmatpush1.bf16.msra.mxu0 %v4658
    %5742 = vmatprep.subr.bf16.mxu0 0
    %5743 = vmatpush1.bf16.msra.mxu0 %v4665
    %5744 = vmatprep.subr.bf16.mxu0 0
    %5745 = vmatpush1.bf16.msra.mxu0 %v4672
    %5746 = vmatprep.subr.bf16.mxu0 0
    %5747 = vmatpush1.bf16.msra.mxu0 %v4679
    %5748 = vmatprep.subr.bf16.mxu0 0
    %5749 = vmatpush1.bf16.msra.mxu0 %v4686
    %5750 = vmatprep.subr.bf16.mxu0 0
    %5751 = vmatpush1.bf16.msra.mxu0 %v4693
    %5752 = vmatprep.subr.bf16.mxu0 0
    %5753 = vmatpush1.bf16.msra.mxu0 %v4700
    %5754 = vmatprep.subr.bf16.mxu0 0
    %5755 = vmatpush1.bf16.msra.mxu0 %v4707
    %5756 = vmatprep.subr.bf16.mxu0 0
    %5757 = vmatpush1.bf16.msra.mxu0 %v4714
    %5758 = vmatprep.mubr.bf16.mxu0 %v2950
    %5759 = vmatmul.mubr.bf16.gmra.mrb[0].mxu0 %v2949
    %v5760 = vpop.f32.mrb[0].mxu0
    %v5761 = vadd.f32 %v5721, %v5760
    %v5762 = vpop.f32.mrb[0].mxu0
    %v5763 = vpop.f32.mrb[0].mxu0
    %v5764 = vpop.f32.mrb[0].mxu0
    %5765 = vdwg.mxu0
    %5766 = vmatprep.subr.bf16.mxu0 0
    %5767 = vmatpush1.bf16.msra.mxu0 %v4721
    %5768 = vmatprep.subr.bf16.mxu0 0
    %5769 = vmatpush1.bf16.msra.mxu0 %v4728
    %5770 = vmatprep.subr.bf16.mxu0 0
    %5771 = vmatpush1.bf16.msra.mxu0 %v4735
    %5772 = vmatprep.subr.bf16.mxu0 0
    %5773 = vmatpush1.bf16.msra.mxu0 %v4742
    %5774 = vmatprep.subr.bf16.mxu0 0
    %5775 = vmatpush1.bf16.msra.mxu0 %v4749
    %5776 = vmatprep.subr.bf16.mxu0 0
    %5777 = vmatpush1.bf16.msra.mxu0 %v4756
    %5778 = vmatprep.subr.bf16.mxu0 0
    %5779 = vmatpush1.bf16.msra.mxu0 %v4763
    %5780 = vmatprep.subr.bf16.mxu0 0
    %5781 = vmatpush1.bf16.msra.mxu0 %v4770
    %5782 = vmatprep.subr.bf16.mxu0 0
    %5783 = vmatpush1.bf16.msra.mxu0 %v4777
    %5784 = vmatprep.subr.bf16.mxu0 0
    %5785 = vmatpush1.bf16.msra.mxu0 %v4784
    %5786 = vmatprep.subr.bf16.mxu0 0
    %5787 = vmatpush1.bf16.msra.mxu0 %v4791
    %5788 = vmatprep.subr.bf16.mxu0 0
    %5789 = vmatpush1.bf16.msra.mxu0 %v4798
    %5790 = vmatprep.subr.bf16.mxu0 0
    %5791 = vmatpush1.bf16.msra.mxu0 %v4805
    %5792 = vmatprep.subr.bf16.mxu0 0
    %5793 = vmatpush1.bf16.msra.mxu0 %v4812
    %5794 = vmatprep.subr.bf16.mxu0 0
    %5795 = vmatpush1.bf16.msra.mxu0 %v4819
    %5796 = vmatprep.subr.bf16.mxu0 0
    %5797 = vmatpush1.bf16.msra.mxu0 %v4826
    %5798 = vmatprep.mubr.bf16.mxu0 %v2952
    %5799 = vmatmul.mubr.bf16.gmra.mrb[0].mxu0 %v2951
    %v5800 = vpop.f32.mrb[0].mxu0
    %v5801 = vadd.f32 %v5761, %v5800
    %v5802 = vpop.f32.mrb[0].mxu0
    %v5803 = vpop.f32.mrb[0].mxu0
    %v5804 = vpop.f32.mrb[0].mxu0
    %5805 = vdwg.mxu0
    %5806 = vmatprep.subr.bf16.mxu0 0
    %5807 = vmatpush1.bf16.msra.mxu0 %v4833
    %5808 = vmatprep.subr.bf16.mxu0 0
    %5809 = vmatpush1.bf16.msra.mxu0 %v4840
    %5810 = vmatprep.subr.bf16.mxu0 0
    %5811 = vmatpush1.bf16.msra.mxu0 0
    %5812 = vmatprep.subr.bf16.mxu0 0
    %5813 = vmatpush1.bf16.msra.mxu0 0
    %5814 = vmatprep.subr.bf16.mxu0 0
    %5815 = vmatpush1.bf16.msra.mxu0 0
    %5816 = vmatprep.subr.bf16.mxu0 0
    %5817 = vmatpush1.bf16.msra.mxu0 0
    %5818 = vmatprep.subr.bf16.mxu0 0
    %5819 = vmatpush1.bf16.msra.mxu0 0
    %5820 = vmatprep.subr.bf16.mxu0 0
    %5821 = vmatpush1.bf16.msra.mxu0 0
    %5822 = vmatprep.subr.bf16.mxu0 0
    %5823 = vmatpush1.bf16.msra.mxu0 0
    %5824 = vmatprep.subr.bf16.mxu0 0
    %5825 = vmatpush1.bf16.msra.mxu0 0
    %5826 = vmatprep.subr.bf16.mxu0 0
    %5827 = vmatpush1.bf16.msra.mxu0 0
    %5828 = vmatprep.subr.bf16.mxu0 0
    %5829 = vmatpush1.bf16.msra.mxu0 0
    %5830 = vmatprep.subr.bf16.mxu0 0
    %5831 = vmatpush1.bf16.msra.mxu0 0
    %5832 = vmatprep.subr.bf16.mxu0 0
    %5833 = vmatpush1.bf16.msra.mxu0 0
    %5834 = vmatprep.subr.bf16.mxu0 0
    %5835 = vmatpush1.bf16.msra.mxu0 0
    %5836 = vmatprep.subr.bf16.mxu0 0
    %5837 = vmatpush1.bf16.msra.mxu0 0
    %5838 = vmatprep.mubr.bf16.mxu0 0
    %5839 = vmatmul.mubr.bf16.gmra.mrb[0].mxu0 %v5192
    %v5840 = vpop.f32.mrb[0].mxu0
    %v5841 = vadd.f32 %v5801, %v5840
    %v5842 = vpop.f32.mrb[0].mxu0
    %v5843 = vpop.f32.mrb[0].mxu0
    %v5844 = vpop.f32.mrb[0].mxu0
    %5845 = vdwg.mxu0
    %v5846 = vtanh.pop %v5352
    %v5847 = vtanh.pop %v5354
    %v5848 = vtanh.pop %v5516
    %v5849 = vtanh.pop %v5518
    %v5850 = vtanh.pop %v5680
    %v5851 = vtanh.pop %v5682
    %v5852 = vtanh.pop %v5841
    %v5853 = vpack.c.bf16 %v5846, %v5846
    %v5854 = vpack.c.bf16 %v5847, %v5847
    %v5855 = vpack.c.bf16 %v5848, %v5848
    %v5856 = vpack.c.bf16 %v5849, %v5849
    %v5857 = vpack.c.bf16 %v5850, %v5850
    %v5858 = vpack.c.bf16 %v5851, %v5851
    %v5859 = vpack.c.bf16 %v5852, %v5852
    %v5860 = vld [vmem:[%s5] sm:$0xff]
    %v5861 = vld [vmem:[%s5 + $0x8] sm:$0xff]
    %v5862 = vld [vmem:[%s5 + $0x10] sm:$0xff]
    %v5863 = vld [vmem:[%s5 + $0x18] sm:$0xf]
    %v5864 = vld [vmem:[%s5 + $0x1c] sm:$0xff]
    %v5865 = vld [vmem:[%s5 + $0x24] sm:$0xff]
    %v5866 = vld [vmem:[%s5 + $0x2c] sm:$0xff]
    %v5867 = vld [vmem:[%s5 + $0x34] sm:$0xf]
    %v5868 = vld [vmem:[%s5 + $0x38] sm:$0xff]
    %v5869 = vld [vmem:[%s5 + $0x40] sm:$0xff]
    %v5870 = vld [vmem:[%s5 + $0x48] sm:$0xff]
    %v5871 = vld [vmem:[%s5 + $0x50] sm:$0xf]
    %v5872 = vld [vmem:[%s5 + $0x54] sm:$0xff]
    %v5873 = vld [vmem:[%s5 + $0x5c] sm:$0xff]
    %v5874 = vld [vmem:[%s5 + $0x64] sm:$0xff]
    %v5875 = vld [vmem:[%s5 + $0x6c] sm:$0xf]
    %v5876 = vld [vmem:[%s5 + $0x70] sm:$0xff]
    %v5877 = vld [vmem:[%s5 + $0x78] sm:$0xff]
    %v5878 = vld [vmem:[%s5 + $0x80] sm:$0xff]
    %v5879 = vld [vmem:[%s5 + $0x88] sm:$0xf]
    %v5880 = vld [vmem:[%s5 + $0x8c] sm:$0xff]
    %v5881 = vld [vmem:[%s5 + $0x94] sm:$0xff]
    %v5882 = vld [vmem:[%s5 + $0x9c] sm:$0xff]
    %v5883 = vld [vmem:[%s5 + $0xa4] sm:$0xf]
    %v5884 = vld [vmem:[%s5 + $0xa8] sm:$0xff]
    %v5885 = vld [vmem:[%s5 + $0xb0] sm:$0xff]
    %v5886 = vld [vmem:[%s5 + $0xb8] sm:$0xff]
    %v5887 = vld [vmem:[%s5 + $0xc0] sm:$0xf]
    %v5888 = vld [vmem:[%s5 + $0xc4] sm:$0xff]
    %v5889 = vld [vmem:[%s5 + $0xcc] sm:$0xff]
    %v5890 = vld [vmem:[%s5 + $0xd4] sm:$0xff]
    %v5891 = vld [vmem:[%s5 + $0xdc] sm:$0xf]
    %v5892 = vld [vmem:[%s5 + $0xe0] sm:$0xff]
    %v5893 = vld [vmem:[%s5 + $0xe8] sm:$0xff]
    %v5894 = vld [vmem:[%s5 + $0xf0] sm:$0xff]
    %v5895 = vld [vmem:[%s5 + $0xf8] sm:$0xf]
    %v5896 = vld [vmem:[%s5 + $0xfc] sm:$0xff]
    %v5897 = vld [vmem:[%s5 + $0x104] sm:$0xff]
    %v5898 = vld [vmem:[%s5 + $0x10c] sm:$0xff]
    %v5899 = vld [vmem:[%s5 + $0x114] sm:$0xf]
    %v5900 = vld [vmem:[%s5 + $0x118] sm:$0xff]
    %v5901 = vld [vmem:[%s5 + $0x120] sm:$0xff]
    %v5902 = vld [vmem:[%s5 + $0x128] sm:$0xff]
    %v5903 = vld [vmem:[%s5 + $0x130] sm:$0xf]
    %v5904 = vld [vmem:[%s5 + $0x134] sm:$0xff]
    %v5905 = vld [vmem:[%s5 + $0x13c] sm:$0xff]
    %v5906 = vld [vmem:[%s5 + $0x144] sm:$0xff]
    %v5907 = vld [vmem:[%s5 + $0x14c] sm:$0xf]
    %v5908 = vld [vmem:[%s5 + $0x150] sm:$0xff]
    %v5909 = vld [vmem:[%s5 + $0x158] sm:$0xff]
    %v5910 = vld [vmem:[%s5 + $0x160] sm:$0xff]
    %v5911 = vld [vmem:[%s5 + $0x168] sm:$0xf]
    %v5912 = vld [vmem:[%s5 + $0x16c] sm:$0xff]
    %v5913 = vld [vmem:[%s5 + $0x174] sm:$0xff]
    %v5914 = vld [vmem:[%s5 + $0x17c] sm:$0xff]
    %v5915 = vld [vmem:[%s5 + $0x184] sm:$0xf]
    %v5916 = vld [vmem:[%s5 + $0x188] sm:$0xff]
    %v5917 = vld [vmem:[%s5 + $0x190] sm:$0xff]
    %v5918 = vld [vmem:[%s5 + $0x198] sm:$0xff]
    %v5919 = vld [vmem:[%s5 + $0x1a0] sm:$0xf]
    %v5920 = vld [vmem:[%s5 + $0x1a4] sm:$0xff]
    %v5921 = vld [vmem:[%s5 + $0x1ac] sm:$0xff]
    %v5922 = vld [vmem:[%s5 + $0x1b4] sm:$0xff]
    %v5923 = vld [vmem:[%s5 + $0x1bc] sm:$0xf]
    %v5924 = vld [vmem:[%s5 + $0x1c0] sm:$0xff]
    %v5925 = vld [vmem:[%s5 + $0x1c8] sm:$0xff]
    %v5926 = vld [vmem:[%s5 + $0x1d0] sm:$0xff]
    %v5927 = vld [vmem:[%s5 + $0x1d8] sm:$0xf]
    %v5928 = vld [vmem:[%s5 + $0x1dc] sm:$0xff]
    %v5929 = vld [vmem:[%s5 + $0x1e4] sm:$0xff]
    %v5930 = vld [vmem:[%s5 + $0x1ec] sm:$0xff]
    %v5931 = vld [vmem:[%s5 + $0x1f4] sm:$0xf]
    %v5932 = vld [vmem:[%s5 + $0x1f8] sm:$0xff]
    %v5933 = vld [vmem:[%s5 + $0x200] sm:$0xff]
    %v5934 = vld [vmem:[%s5 + $0x208] sm:$0xff]
    %v5935 = vld [vmem:[%s5 + $0x210] sm:$0xf]
    %v5936 = vld [vmem:[%s5 + $0x214] sm:$0xff]
    %v5937 = vld [vmem:[%s5 + $0x21c] sm:$0xff]
    %v5938 = vld [vmem:[%s5 + $0x224] sm:$0xff]
    %v5939 = vld [vmem:[%s5 + $0x22c] sm:$0xf]
    %v5940 = vld [vmem:[%s5 + $0x230] sm:$0xff]
    %v5941 = vld [vmem:[%s5 + $0x238] sm:$0xff]
    %v5942 = vld [vmem:[%s5 + $0x240] sm:$0xff]
    %v5943 = vld [vmem:[%s5 + $0x248] sm:$0xf]
    %v5944 = vld [vmem:[%s5 + $0x24c] sm:$0xff]
    %v5945 = vld [vmem:[%s5 + $0x254] sm:$0xff]
    %v5946 = vld [vmem:[%s5 + $0x25c] sm:$0xff]
    %v5947 = vld [vmem:[%s5 + $0x264] sm:$0xf]
    %v5948 = vld [vmem:[%s5 + $0x268] sm:$0xff]
    %v5949 = vld [vmem:[%s5 + $0x270] sm:$0xff]
    %v5950 = vld [vmem:[%s5 + $0x278] sm:$0xff]
    %v5951 = vld [vmem:[%s5 + $0x280] sm:$0xf]
    %v5952 = vld [vmem:[%s5 + $0x284] sm:$0xff]
    %v5953 = vld [vmem:[%s5 + $0x28c] sm:$0xff]
    %v5954 = vld [vmem:[%s5 + $0x294] sm:$0xff]
    %v5955 = vld [vmem:[%s5 + $0x29c] sm:$0xf]
    %v5956 = vld [vmem:[%s5 + $0x2a0] sm:$0xff]
    %v5957 = vld [vmem:[%s5 + $0x2a8] sm:$0xff]
    %v5958 = vld [vmem:[%s5 + $0x2b0] sm:$0xff]
    %v5959 = vld [vmem:[%s5 + $0x2b8] sm:$0xf]
    %v5960 = vld [vmem:[%s5 + $0x2bc] sm:$0xff]
    %v5961 = vld [vmem:[%s5 + $0x2c4] sm:$0xff]
    %v5962 = vld [vmem:[%s5 + $0x2cc] sm:$0xff]
    %v5963 = vld [vmem:[%s5 + $0x2d4] sm:$0xf]
    %v5964 = vld [vmem:[%s5 + $0x2d8] sm:$0xff]
    %v5965 = vld [vmem:[%s5 + $0x2e0] sm:$0xff]
    %v5966 = vld [vmem:[%s5 + $0x2e8] sm:$0xff]
    %v5967 = vld [vmem:[%s5 + $0x2f0] sm:$0xf]
    %v5968 = vld [vmem:[%s5 + $0x2f4] sm:$0xff]
    %v5969 = vld [vmem:[%s5 + $0x2fc] sm:$0xff]
    %v5970 = vld [vmem:[%s5 + $0x304] sm:$0xff]
    %v5971 = vld [vmem:[%s5 + $0x30c] sm:$0xf]
    %v5972 = vld [vmem:[%s5 + $0x310] sm:$0xff]
    %v5973 = vld [vmem:[%s5 + $0x318] sm:$0xff]
    %v5974 = vld [vmem:[%s5 + $0x320] sm:$0xff]
    %v5975 = vld [vmem:[%s5 + $0x328] sm:$0xf]
    %v5976 = vld [vmem:[%s5 + $0x32c] sm:$0xff]
    %v5977 = vld [vmem:[%s5 + $0x334] sm:$0xff]
    %v5978 = vld [vmem:[%s5 + $0x33c] sm:$0xff]
    %v5979 = vld [vmem:[%s5 + $0x344] sm:$0xf]
    %v5980 = vld [vmem:[%s5 + $0x348] sm:$0xff]
    %v5981 = vld [vmem:[%s5 + $0x350] sm:$0xff]
    %v5982 = vld [vmem:[%s5 + $0x358] sm:$0xff]
    %v5983 = vld [vmem:[%s5 + $0x360] sm:$0xf]
    %v5984 = vld [vmem:[%s5 + $0x364] sm:$0xff]
    %v5985 = vld [vmem:[%s5 + $0x36c] sm:$0xff]
    %v5986 = vld [vmem:[%s5 + $0x374] sm:$0xff]
    %v5987 = vld [vmem:[%s5 + $0x37c] sm:$0xf]
    %v5988 = vld [vmem:[%s5 + $0x380] sm:$0xff]
    %v5989 = vld [vmem:[%s5 + $0x388] sm:$0xff]
    %v5990 = vld [vmem:[%s5 + $0x390] sm:$0xff]
    %v5991 = vld [vmem:[%s5 + $0x398] sm:$0xf]
    %v5992 = vld [vmem:[%s5 + $0x39c] sm:$0xff]
    %v5993 = vld [vmem:[%s5 + $0x3a4] sm:$0xff]
    %v5994 = vld [vmem:[%s5 + $0x3ac] sm:$0xff]
    %v5995 = vld [vmem:[%s5 + $0x3b4] sm:$0xf]
    %v5996 = vld [vmem:[%s5 + $0x3b8] sm:$0xff]
    %v5997 = vld [vmem:[%s5 + $0x3c0] sm:$0xff]
    %v5998 = vld [vmem:[%s5 + $0x3c8] sm:$0xff]
    %v5999 = vld [vmem:[%s5 + $0x3d0] sm:$0xf]
    %v6000 = vld [vmem:[%s5 + $0x3d4] sm:$0xff]
    %v6001 = vld [vmem:[%s5 + $0x3dc] sm:$0xff]
    %v6002 = vld [vmem:[%s5 + $0x3e4] sm:$0xff]
    %v6003 = vld [vmem:[%s5 + $0x3ec] sm:$0xf]
    %v6004 = vld [vmem:[%s5 + $0x3f0] sm:$0xff]
    %v6005 = vld [vmem:[%s5 + $0x3f8] sm:$0xff]
    %v6006 = vld [vmem:[%s5 + $0x400] sm:$0xff]
    %v6007 = vld [vmem:[%s5 + $0x408] sm:$0xf]
    %v6008 = vld [vmem:[%s5 + $0x40c] sm:$0xff]
    %v6009 = vld [vmem:[%s5 + $0x414] sm:$0xff]
    %v6010 = vld [vmem:[%s5 + $0x41c] sm:$0xff]
    %v6011 = vld [vmem:[%s5 + $0x424] sm:$0xf]
    %v6012 = vld [vmem:[%s5 + $0x428] sm:$0xff]
    %v6013 = vld [vmem:[%s5 + $0x430] sm:$0xff]
    %v6014 = vld [vmem:[%s5 + $0x438] sm:$0xff]
    %v6015 = vld [vmem:[%s5 + $0x440] sm:$0xf]
    %v6016 = vld [vmem:[%s5 + $0x444] sm:$0xff]
    %v6017 = vld [vmem:[%s5 + $0x44c] sm:$0xff]
    %v6018 = vld [vmem:[%s5 + $0x454] sm:$0xff]
    %v6019 = vld [vmem:[%s5 + $0x45c] sm:$0xf]
    %v6020 = vld [vmem:[%s5 + $0x460] sm:$0xff]
    %v6021 = vld [vmem:[%s5 + $0x468] sm:$0xff]
    %v6022 = vld [vmem:[%s5 + $0x470] sm:$0xff]
    %v6023 = vld [vmem:[%s5 + $0x478] sm:$0xf]
    %v6024 = vld [vmem:[%s5 + $0x47c] sm:$0xff]
    %v6025 = vld [vmem:[%s5 + $0x484] sm:$0xff]
    %v6026 = vld [vmem:[%s5 + $0x48c] sm:$0xff]
    %v6027 = vld [vmem:[%s5 + $0x494] sm:$0xf]
    %v6028 = vld [vmem:[%s5 + $0x498] sm:$0xff]
    %v6029 = vld [vmem:[%s5 + $0x4a0] sm:$0xff]
    %v6030 = vld [vmem:[%s5 + $0x4a8] sm:$0xff]
    %v6031 = vld [vmem:[%s5 + $0x4b0] sm:$0xf]
    %v6032 = vld [vmem:[%s5 + $0x4b4] sm:$0xff]
    %v6033 = vld [vmem:[%s5 + $0x4bc] sm:$0xff]
    %v6034 = vld [vmem:[%s5 + $0x4c4] sm:$0xff]
    %v6035 = vld [vmem:[%s5 + $0x4cc] sm:$0xf]
    %v6036 = vld [vmem:[%s5 + $0x4d0] sm:$0xff]
    %v6037 = vld [vmem:[%s5 + $0x4d8] sm:$0xff]
    %v6038 = vld [vmem:[%s5 + $0x4e0] sm:$0xff]
    %v6039 = vld [vmem:[%s5 + $0x4e8] sm:$0xf]
    %v6040 = vld [vmem:[%s5 + $0x4ec] sm:$0xff]
    %v6041 = vld [vmem:[%s5 + $0x4f4] sm:$0xff]
    %v6042 = vld [vmem:[%s5 + $0x4fc] sm:$0xff]
    %v6043 = vld [vmem:[%s5 + $0x504] sm:$0xf]
    %v6044 = vld [vmem:[%s5 + $0x508] sm:$0xff]
    %v6045 = vld [vmem:[%s5 + $0x510] sm:$0xff]
    %v6046 = vld [vmem:[%s5 + $0x518] sm:$0xff]
    %v6047 = vld [vmem:[%s5 + $0x520] sm:$0xf]
    %v6048 = vld [vmem:[%s5 + $0x524] sm:$0xff]
    %v6049 = vld [vmem:[%s5 + $0x52c] sm:$0xff]
    %v6050 = vld [vmem:[%s5 + $0x534] sm:$0xff]
    %v6051 = vld [vmem:[%s5 + $0x53c] sm:$0xf]
    %v6052 = vld [vmem:[%s5 + $0x540] sm:$0xff]
    %v6053 = vld [vmem:[%s5 + $0x548] sm:$0xff]
    %v6054 = vld [vmem:[%s5 + $0x550] sm:$0xff]
    %v6055 = vld [vmem:[%s5 + $0x558] sm:$0xf]
    %v6056 = vld [vmem:[%s5 + $0x55c] sm:$0xff]
    %v6057 = vld [vmem:[%s5 + $0x564] sm:$0xff]
    %v6058 = vld [vmem:[%s5 + $0x56c] sm:$0xff]
    %v6059 = vld [vmem:[%s5 + $0x574] sm:$0xf]
    %v6060 = vld [vmem:[%s5 + $0x578] sm:$0xff]
    %v6061 = vld [vmem:[%s5 + $0x580] sm:$0xff]
    %v6062 = vld [vmem:[%s5 + $0x588] sm:$0xff]
    %v6063 = vld [vmem:[%s5 + $0x590] sm:$0xf]
    %v6064 = vld [vmem:[%s5 + $0x594] sm:$0xff]
    %v6065 = vld [vmem:[%s5 + $0x59c] sm:$0xff]
    %v6066 = vld [vmem:[%s5 + $0x5a4] sm:$0xff]
    %v6067 = vld [vmem:[%s5 + $0x5ac] sm:$0xf]
    %v6068 = vld [vmem:[%s5 + $0x5b0] sm:$0xff]
    %v6069 = vld [vmem:[%s5 + $0x5b8] sm:$0xff]
    %v6070 = vld [vmem:[%s5 + $0x5c0] sm:$0xff]
    %v6071 = vld [vmem:[%s5 + $0x5c8] sm:$0xf]
    %v6072 = vld [vmem:[%s5 + $0x5cc] sm:$0xff]
    %v6073 = vld [vmem:[%s5 + $0x5d4] sm:$0xff]
    %v6074 = vld [vmem:[%s5 + $0x5dc] sm:$0xff]
    %v6075 = vld [vmem:[%s5 + $0x5e4] sm:$0xf]
    %v6076 = vld [vmem:[%s5 + $0x5e8] sm:$0xff]
    %v6077 = vld [vmem:[%s5 + $0x5f0] sm:$0xff]
    %v6078 = vld [vmem:[%s5 + $0x5f8] sm:$0xff]
    %v6079 = vld [vmem:[%s5 + $0x600] sm:$0xf]
    %v6080 = vld [vmem:[%s5 + $0x604] sm:$0xff]
    %v6081 = vld [vmem:[%s5 + $0x60c] sm:$0xff]
    %v6082 = vld [vmem:[%s5 + $0x614] sm:$0xff]
    %v6083 = vld [vmem:[%s5 + $0x61c] sm:$0xf]
    %v6084 = vld [vmem:[%s5 + $0x620] sm:$0xff]
    %v6085 = vld [vmem:[%s5 + $0x628] sm:$0xff]
    %v6086 = vld [vmem:[%s5 + $0x630] sm:$0xff]
    %v6087 = vld [vmem:[%s5 + $0x638] sm:$0xf]
    %v6088 = vld [vmem:[%s5 + $0x63c] sm:$0xff]
    %v6089 = vld [vmem:[%s5 + $0x644] sm:$0xff]
    %v6090 = vld [vmem:[%s5 + $0x64c] sm:$0xff]
    %v6091 = vld [vmem:[%s5 + $0x654] sm:$0xf]
    %v6092 = vld [vmem:[%s5 + $0x658] sm:$0xff]
    %v6093 = vld [vmem:[%s5 + $0x660] sm:$0xff]
    %v6094 = vld [vmem:[%s5 + $0x668] sm:$0xff]
    %v6095 = vld [vmem:[%s5 + $0x670] sm:$0xf]
    %v6096 = vld [vmem:[%s5 + $0x674] sm:$0xff]
    %v6097 = vld [vmem:[%s5 + $0x67c] sm:$0xff]
    %v6098 = vld [vmem:[%s5 + $0x684] sm:$0xff]
    %v6099 = vld [vmem:[%s5 + $0x68c] sm:$0xf]
    %v6100 = vld [vmem:[%s5 + $0x690] sm:$0xff]
    %v6101 = vld [vmem:[%s5 + $0x698] sm:$0xff]
    %v6102 = vld [vmem:[%s5 + $0x6a0] sm:$0xff]
    %v6103 = vld [vmem:[%s5 + $0x6a8] sm:$0xf]
    %v6104 = vld [vmem:[%s5 + $0x6ac] sm:$0xff]
    %v6105 = vld [vmem:[%s5 + $0x6b4] sm:$0xff]
    %v6106 = vld [vmem:[%s5 + $0x6bc] sm:$0xff]
    %v6107 = vld [vmem:[%s5 + $0x6c4] sm:$0xf]
    %v6108 = vld [vmem:[%s5 + $0x6c8] sm:$0xff]
    %v6109 = vld [vmem:[%s5 + $0x6d0] sm:$0xff]
    %v6110 = vld [vmem:[%s5 + $0x6d8] sm:$0xff]
    %v6111 = vld [vmem:[%s5 + $0x6e0] sm:$0xf]
    %v6112 = vld [vmem:[%s5 + $0x6e4] sm:$0xff]
    %v6113 = vld [vmem:[%s5 + $0x6ec] sm:$0xff]
    %v6114 = vld [vmem:[%s5 + $0x6f4] sm:$0xff]
    %v6115 = vld [vmem:[%s5 + $0x6fc] sm:$0xf]
    %v6116 = vld [vmem:[%s5 + $0x700] sm:$0xff]
    %v6117 = vld [vmem:[%s5 + $0x708] sm:$0xff]
    %v6118 = vld [vmem:[%s5 + $0x710] sm:$0xff]
    %v6119 = vld [vmem:[%s5 + $0x718] sm:$0xf]
    %v6120 = vld [vmem:[%s5 + $0x71c] sm:$0xff]
    %v6121 = vld [vmem:[%s5 + $0x724] sm:$0xff]
    %v6122 = vld [vmem:[%s5 + $0x72c] sm:$0xff]
    %v6123 = vld [vmem:[%s5 + $0x734] sm:$0xf]
    %v6124 = vld [vmem:[%s5 + $0x738] sm:$0xff]
    %v6125 = vld [vmem:[%s5 + $0x740] sm:$0xff]
    %v6126 = vld [vmem:[%s5 + $0x748] sm:$0xff]
    %v6127 = vld [vmem:[%s5 + $0x750] sm:$0xf]
    %v6128 = vld [vmem:[%s5 + $0x754] sm:$0xff]
    %v6129 = vld [vmem:[%s5 + $0x75c] sm:$0xff]
    %v6130 = vld [vmem:[%s5 + $0x764] sm:$0xff]
    %v6131 = vld [vmem:[%s5 + $0x76c] sm:$0xf]
    %v6132 = vld [vmem:[%s5 + $0x770] sm:$0xff]
    %v6133 = vld [vmem:[%s5 + $0x778] sm:$0xff]
    %v6134 = vld [vmem:[%s5 + $0x780] sm:$0xff]
    %v6135 = vld [vmem:[%s5 + $0x788] sm:$0xf]
    %v6136 = vld [vmem:[%s5 + $0x78c] sm:$0xff]
    %v6137 = vld [vmem:[%s5 + $0x794] sm:$0xff]
    %v6138 = vld [vmem:[%s5 + $0x79c] sm:$0xff]
    %v6139 = vld [vmem:[%s5 + $0x7a4] sm:$0xf]
    %v6140 = vld [vmem:[%s5 + $0x7a8] sm:$0xff]
    %v6141 = vld [vmem:[%s5 + $0x7b0] sm:$0xff]
    %v6142 = vld [vmem:[%s5 + $0x7b8] sm:$0xff]
    %v6143 = vld [vmem:[%s5 + $0x7c0] sm:$0xf]
    %v6144 = vld [vmem:[%s5 + $0x7c4] sm:$0xff]
    %v6145 = vld [vmem:[%s5 + $0x7cc] sm:$0xff]
    %v6146 = vld [vmem:[%s5 + $0x7d4] sm:$0xff]
    %v6147 = vld [vmem:[%s5 + $0x7dc] sm:$0xf]
    %v6148 = vld [vmem:[%s5 + $0x7e0] sm:$0xff]
    %v6149 = vld [vmem:[%s5 + $0x7e8] sm:$0xff]
    %v6150 = vld [vmem:[%s5 + $0x7f0] sm:$0xff]
    %v6151 = vld [vmem:[%s5 + $0x7f8] sm:$0xf]
    %v6152 = vld [vmem:[%s5 + $0x7fc] sm:$0xff]
    %v6153 = vld [vmem:[%s5 + $0x804] sm:$0xff]
    %v6154 = vld [vmem:[%s5 + $0x80c] sm:$0xff]
    %v6155 = vld [vmem:[%s5 + $0x814] sm:$0xf]
    %v6156 = vld [vmem:[%s5 + $0x818] sm:$0xff]
    %v6157 = vld [vmem:[%s5 + $0x820] sm:$0xff]
    %v6158 = vld [vmem:[%s5 + $0x828] sm:$0xff]
    %v6159 = vld [vmem:[%s5 + $0x830] sm:$0xf]
    %v6160 = vld [vmem:[%s5 + $0x834] sm:$0xff]
    %v6161 = vld [vmem:[%s5 + $0x83c] sm:$0xff]
    %v6162 = vld [vmem:[%s5 + $0x844] sm:$0xff]
    %v6163 = vld [vmem:[%s5 + $0x84c] sm:$0xf]
    %v6164 = vld [vmem:[%s5 + $0x850] sm:$0xff]
    %v6165 = vld [vmem:[%s5 + $0x858] sm:$0xff]
    %v6166 = vld [vmem:[%s5 + $0x860] sm:$0xff]
    %v6167 = vld [vmem:[%s5 + $0x868] sm:$0xf]
    %v6168 = vld [vmem:[%s5 + $0x86c] sm:$0xff]
    %v6169 = vld [vmem:[%s5 + $0x874] sm:$0xff]
    %v6170 = vld [vmem:[%s5 + $0x87c] sm:$0xff]
    %v6171 = vld [vmem:[%s5 + $0x884] sm:$0xf]
    %v6172 = vld [vmem:[%s5 + $0x888] sm:$0xff]
    %v6173 = vld [vmem:[%s5 + $0x890] sm:$0xff]
    %v6174 = vld [vmem:[%s5 + $0x898] sm:$0xff]
    %v6175 = vld [vmem:[%s5 + $0x8a0] sm:$0xf]
    %v6176 = vld [vmem:[%s5 + $0x8a4] sm:$0xff]
    %v6177 = vld [vmem:[%s5 + $0x8ac] sm:$0xff]
    %v6178 = vld [vmem:[%s5 + $0x8b4] sm:$0xff]
    %v6179 = vld [vmem:[%s5 + $0x8bc] sm:$0xf]
    %v6180 = vld [vmem:[%s5 + $0x8c0] sm:$0xff]
    %v6181 = vld [vmem:[%s5 + $0x8c8] sm:$0xff]
    %v6182 = vld [vmem:[%s5 + $0x8d0] sm:$0xff]
    %v6183 = vld [vmem:[%s5 + $0x8d8] sm:$0xf]
    %v6184 = vld [vmem:[%s5 + $0x8dc] sm:$0xff]
    %v6185 = vld [vmem:[%s5 + $0x8e4] sm:$0xff]
    %v6186 = vld [vmem:[%s5 + $0x8ec] sm:$0xff]
    %v6187 = vld [vmem:[%s5 + $0x8f4] sm:$0xf]
    %v6188 = vld [vmem:[%s5 + $0x8f8] sm:$0xff]
    %v6189 = vld [vmem:[%s5 + $0x900] sm:$0xff]
    %v6190 = vld [vmem:[%s5 + $0x908] sm:$0xff]
    %v6191 = vld [vmem:[%s5 + $0x910] sm:$0xf]
    %v6192 = vld [vmem:[%s5 + $0x914] sm:$0xff]
    %v6193 = vld [vmem:[%s5 + $0x91c] sm:$0xff]
    %v6194 = vld [vmem:[%s5 + $0x924] sm:$0xff]
    %v6195 = vld [vmem:[%s5 + $0x92c] sm:$0xf]
    %v6196 = vld [vmem:[%s5 + $0x930] sm:$0xff]
    %v6197 = vld [vmem:[%s5 + $0x938] sm:$0xff]
    %v6198 = vld [vmem:[%s5 + $0x940] sm:$0xff]
    %v6199 = vld [vmem:[%s5 + $0x948] sm:$0xf]
    %v6200 = vld [vmem:[%s5 + $0x94c] sm:$0xff]
    %v6201 = vld [vmem:[%s5 + $0x954] sm:$0xff]
    %v6202 = vld [vmem:[%s5 + $0x95c] sm:$0xff]
    %v6203 = vld [vmem:[%s5 + $0x964] sm:$0xf]
    %v6204 = vld [vmem:[%s5 + $0x968] sm:$0xff]
    %v6205 = vld [vmem:[%s5 + $0x970] sm:$0xff]
    %v6206 = vld [vmem:[%s5 + $0x978] sm:$0xff]
    %v6207 = vld [vmem:[%s5 + $0x980] sm:$0xf]
    %v6208 = vld [vmem:[%s5 + $0x984] sm:$0xff]
    %v6209 = vld [vmem:[%s5 + $0x98c] sm:$0xff]
    %v6210 = vld [vmem:[%s5 + $0x994] sm:$0xff]
    %v6211 = vld [vmem:[%s5 + $0x99c] sm:$0xf]
    %v6212 = vld [vmem:[%s5 + $0x9a0] sm:$0xff]
    %v6213 = vld [vmem:[%s5 + $0x9a8] sm:$0xff]
    %v6214 = vld [vmem:[%s5 + $0x9b0] sm:$0xff]
    %v6215 = vld [vmem:[%s5 + $0x9b8] sm:$0xf]
    %v6216 = vld [vmem:[%s5 + $0x9bc] sm:$0xff]
    %v6217 = vld [vmem:[%s5 + $0x9c4] sm:$0xff]
    %v6218 = vld [vmem:[%s5 + $0x9cc] sm:$0xff]
    %v6219 = vld [vmem:[%s5 + $0x9d4] sm:$0xf]
    %v6220 = vld [vmem:[%s5 + $0x9d8] sm:$0xff]
    %v6221 = vld [vmem:[%s5 + $0x9e0] sm:$0xff]
    %v6222 = vld [vmem:[%s5 + $0x9e8] sm:$0xff]
    %v6223 = vld [vmem:[%s5 + $0x9f0] sm:$0xf]
    %v6224 = vld [vmem:[%s5 + $0x9f4] sm:$0xff]
    %v6225 = vld [vmem:[%s5 + $0x9fc] sm:$0xff]
    %v6226 = vld [vmem:[%s5 + $0xa04] sm:$0xff]
    %v6227 = vld [vmem:[%s5 + $0xa0c] sm:$0xf]
    %v6228 = vld [vmem:[%s5 + $0xa10] sm:$0xff]
    %v6229 = vld [vmem:[%s5 + $0xa18] sm:$0xff]
    %v6230 = vld [vmem:[%s5 + $0xa20] sm:$0xff]
    %v6231 = vld [vmem:[%s5 + $0xa28] sm:$0xf]
    %v6232 = vld [vmem:[%s5 + $0xa2c] sm:$0xff]
    %v6233 = vld [vmem:[%s5 + $0xa34] sm:$0xff]
    %v6234 = vld [vmem:[%s5 + $0xa3c] sm:$0xff]
    %v6235 = vld [vmem:[%s5 + $0xa44] sm:$0xf]
    %v6236 = vld [vmem:[%s5 + $0xa48] sm:$0xff]
    %v6237 = vld [vmem:[%s5 + $0xa50] sm:$0xff]
    %v6238 = vld [vmem:[%s5 + $0xa58] sm:$0xff]
    %v6239 = vld [vmem:[%s5 + $0xa60] sm:$0xf]
    %v6240 = vld [vmem:[%s5 + $0xa64] sm:$0xff]
    %v6241 = vld [vmem:[%s5 + $0xa6c] sm:$0xff]
    %v6242 = vld [vmem:[%s5 + $0xa74] sm:$0xff]
    %v6243 = vld [vmem:[%s5 + $0xa7c] sm:$0xf]
    %v6244 = vld [vmem:[%s5 + $0xa80] sm:$0xff]
    %v6245 = vld [vmem:[%s5 + $0xa88] sm:$0xff]
    %v6246 = vld [vmem:[%s5 + $0xa90] sm:$0xff]
    %v6247 = vld [vmem:[%s5 + $0xa98] sm:$0xf]
    %v6248 = vld [vmem:[%s5 + $0xa9c] sm:$0xff]
    %v6249 = vld [vmem:[%s5 + $0xaa4] sm:$0xff]
    %v6250 = vld [vmem:[%s5 + $0xaac] sm:$0xff]
    %v6251 = vld [vmem:[%s5 + $0xab4] sm:$0xf]
    %v6252 = vld [vmem:[%s5 + $0xab8] sm:$0xff]
    %v6253 = vld [vmem:[%s5 + $0xac0] sm:$0xff]
    %v6254 = vld [vmem:[%s5 + $0xac8] sm:$0xff]
    %v6255 = vld [vmem:[%s5 + $0xad0] sm:$0xf]
    %v6256 = vld [vmem:[%s5 + $0xad4] sm:$0xff]
    %v6257 = vld [vmem:[%s5 + $0xadc] sm:$0xff]
    %v6258 = vld [vmem:[%s5 + $0xae4] sm:$0xff]
    %v6259 = vld [vmem:[%s5 + $0xaec] sm:$0xf]
    %v6260 = vld [vmem:[%s6] sm:$0x7f]
    %v6262 = vlaneseq
    %v6263 = vshrl.u32 %v6262, 7
    %v6264 = vsub.s32 0, %v6263
    %v6265 = vrot.slane %v6260, %v6264
    %v6266 = vlaneseq
    %v6267 = vshrl.u32 %v6266, 7
    %v6268 = vsub.s32 1, %v6267
    %v6269 = vrot.slane %v6260, %v6268
    %v6270 = vlaneseq
    %v6271 = vshrl.u32 %v6270, 7
    %v6272 = vsub.s32 2, %v6271
    %v6273 = vrot.slane %v6260, %v6272
    %v6274 = vlaneseq
    %v6275 = vshrl.u32 %v6274, 7
    %v6276 = vsub.s32 3, %v6275
    %v6277 = vrot.slane %v6260, %v6276
    %v6278 = vlaneseq
    %v6279 = vshrl.u32 %v6278, 7
    %v6280 = vsub.s32 4, %v6279
    %v6281 = vrot.slane %v6260, %v6280
    %v6282 = vlaneseq
    %v6283 = vshrl.u32 %v6282, 7
    %v6284 = vsub.s32 5, %v6283
    %v6285 = vrot.slane %v6260, %v6284
    %v6286 = vlaneseq
    %v6287 = vshrl.u32 %v6286, 7
    %v6288 = vsub.s32 6, %v6287
    %v6289 = vrot.slane %v6260, %v6288
    %v6697 = vunpack.c.l.b16 %v5860
    %v6698 = vunpack.c.h.b16 %v5860
    %v6699 = vunpack.c.l.b16 %v5861
    %v6700 = vunpack.c.h.b16 %v5861
    %v6701 = vunpack.c.l.b16 %v5862
    %v6702 = vunpack.c.h.b16 %v5862
    %v6703 = vunpack.c.l.b16 %v5863
    %v6704 = vunpack.c.l.b16 %v5864
    %v6705 = vunpack.c.h.b16 %v5864
    %v6706 = vunpack.c.l.b16 %v5865
    %v6707 = vunpack.c.h.b16 %v5865
    %v6708 = vunpack.c.l.b16 %v5866
    %v6709 = vunpack.c.h.b16 %v5866
    %v6710 = vunpack.c.l.b16 %v5867
    %v6711 = vunpack.c.l.b16 %v5868
    %v6712 = vunpack.c.h.b16 %v5868
    %v6713 = vunpack.c.l.b16 %v5869
    %v6714 = vunpack.c.h.b16 %v5869
    %v6715 = vunpack.c.l.b16 %v5870
    %v6716 = vunpack.c.h.b16 %v5870
    %v6717 = vunpack.c.l.b16 %v5871
    %v6718 = vunpack.c.l.b16 %v5872
    %v6719 = vunpack.c.h.b16 %v5872
    %v6720 = vunpack.c.l.b16 %v5873
    %v6721 = vunpack.c.h.b16 %v5873
    %v6722 = vunpack.c.l.b16 %v5874
    %v6723 = vunpack.c.h.b16 %v5874
    %v6724 = vunpack.c.l.b16 %v5875
    %v6725 = vunpack.c.l.b16 %v5876
    %v6726 = vunpack.c.h.b16 %v5876
    %v6727 = vunpack.c.l.b16 %v5877
    %v6728 = vunpack.c.h.b16 %v5877
    %v6729 = vunpack.c.l.b16 %v5878
    %v6730 = vunpack.c.h.b16 %v5878
    %v6731 = vunpack.c.l.b16 %v5879
    %v6732 = vunpack.c.l.b16 %v5880
    %v6733 = vunpack.c.h.b16 %v5880
    %v6734 = vunpack.c.l.b16 %v5881
    %v6735 = vunpack.c.h.b16 %v5881
    %v6736 = vunpack.c.l.b16 %v5882
    %v6737 = vunpack.c.h.b16 %v5882
    %v6738 = vunpack.c.l.b16 %v5883
    %v6739 = vunpack.c.l.b16 %v5884
    %v6740 = vunpack.c.h.b16 %v5884
    %v6741 = vunpack.c.l.b16 %v5885
    %v6742 = vunpack.c.h.b16 %v5885
    %v6743 = vunpack.c.l.b16 %v5886
    %v6744 = vunpack.c.h.b16 %v5886
    %v6745 = vunpack.c.l.b16 %v5887
    %v6746 = vunpack.c.l.b16 %v5888
    %v6747 = vunpack.c.h.b16 %v5888
    %v6748 = vunpack.c.l.b16 %v5889
    %v6749 = vunpack.c.h.b16 %v5889
    %v6750 = vunpack.c.l.b16 %v5890
    %v6751 = vunpack.c.h.b16 %v5890
    %v6752 = vunpack.c.l.b16 %v5891
    %v6753 = vunpack.c.l.b16 %v5892
    %v6754 = vunpack.c.h.b16 %v5892
    %v6755 = vunpack.c.l.b16 %v5893
    %v6756 = vunpack.c.h.b16 %v5893
    %v6757 = vunpack.c.l.b16 %v5894
    %v6758 = vunpack.c.h.b16 %v5894
    %v6759 = vunpack.c.l.b16 %v5895
    %v6760 = vunpack.c.l.b16 %v5896
    %v6761 = vunpack.c.h.b16 %v5896
    %v6762 = vunpack.c.l.b16 %v5897
    %v6763 = vunpack.c.h.b16 %v5897
    %v6764 = vunpack.c.l.b16 %v5898
    %v6765 = vunpack.c.h.b16 %v5898
    %v6766 = vunpack.c.l.b16 %v5899
    %v6767 = vunpack.c.l.b16 %v5900
    %v6768 = vunpack.c.h.b16 %v5900
    %v6769 = vunpack.c.l.b16 %v5901
    %v6770 = vunpack.c.h.b16 %v5901
    %v6771 = vunpack.c.l.b16 %v5902
    %v6772 = vunpack.c.h.b16 %v5902
    %v6773 = vunpack.c.l.b16 %v5903
    %v6774 = vunpack.c.l.b16 %v5904
    %v6775 = vunpack.c.h.b16 %v5904
    %v6776 = vunpack.c.l.b16 %v5905
    %v6777 = vunpack.c.h.b16 %v5905
    %v6778 = vunpack.c.l.b16 %v5906
    %v6779 = vunpack.c.h.b16 %v5906
    %v6780 = vunpack.c.l.b16 %v5907
    %v6781 = vunpack.c.l.b16 %v5908
    %v6782 = vunpack.c.h.b16 %v5908
    %v6783 = vunpack.c.l.b16 %v5909
    %v6784 = vunpack.c.h.b16 %v5909
    %v6785 = vunpack.c.l.b16 %v5910
    %v6786 = vunpack.c.h.b16 %v5910
    %v6787 = vunpack.c.l.b16 %v5911
    %v6788 = vunpack.c.l.b16 %v5912
    %v6789 = vunpack.c.h.b16 %v5912
    %v6790 = vunpack.c.l.b16 %v5913
    %v6791 = vunpack.c.h.b16 %v5913
    %v6792 = vunpack.c.l.b16 %v5914
    %v6793 = vunpack.c.h.b16 %v5914
    %v6794 = vunpack.c.l.b16 %v5915
    %v6795 = vunpack.c.l.b16 %v5916
    %v6796 = vunpack.c.h.b16 %v5916
    %v6797 = vunpack.c.l.b16 %v5917
    %v6798 = vunpack.c.h.b16 %v5917
    %v6799 = vunpack.c.l.b16 %v5918
    %v6800 = vunpack.c.h.b16 %v5918
    %v6801 = vunpack.c.l.b16 %v5919
    %v6802 = vunpack.c.l.b16 %v5920
    %v6803 = vunpack.c.h.b16 %v5920
    %v6804 = vunpack.c.l.b16 %v5921
    %v6805 = vunpack.c.h.b16 %v5921
    %v6806 = vunpack.c.l.b16 %v5922
    %v6807 = vunpack.c.h.b16 %v5922
    %v6808 = vunpack.c.l.b16 %v5923
    %v6809 = vunpack.c.l.b16 %v5924
    %v6810 = vunpack.c.h.b16 %v5924
    %v6811 = vunpack.c.l.b16 %v5925
    %v6812 = vunpack.c.h.b16 %v5925
    %v6813 = vunpack.c.l.b16 %v5926
    %v6814 = vunpack.c.h.b16 %v5926
    %v6815 = vunpack.c.l.b16 %v5927
    %v6816 = vunpack.c.l.b16 %v5928
    %v6817 = vunpack.c.h.b16 %v5928
    %v6818 = vunpack.c.l.b16 %v5929
    %v6819 = vunpack.c.h.b16 %v5929
    %v6820 = vunpack.c.l.b16 %v5930
    %v6821 = vunpack.c.h.b16 %v5930
    %v6822 = vunpack.c.l.b16 %v5931
    %v6823 = vunpack.c.l.b16 %v5932
    %v6824 = vunpack.c.h.b16 %v5932
    %v6825 = vunpack.c.l.b16 %v5933
    %v6826 = vunpack.c.h.b16 %v5933
    %v6827 = vunpack.c.l.b16 %v5934
    %v6828 = vunpack.c.h.b16 %v5934
    %v6829 = vunpack.c.l.b16 %v5935
    %v6830 = vunpack.c.l.b16 %v5936
    %v6831 = vunpack.c.h.b16 %v5936
    %v6832 = vunpack.c.l.b16 %v5937
    %v6833 = vunpack.c.h.b16 %v5937
    %v6834 = vunpack.c.l.b16 %v5938
    %v6835 = vunpack.c.h.b16 %v5938
    %v6836 = vunpack.c.l.b16 %v5939
    %v6837 = vunpack.c.l.b16 %v5940
    %v6838 = vunpack.c.h.b16 %v5940
    %v6839 = vunpack.c.l.b16 %v5941
    %v6840 = vunpack.c.h.b16 %v5941
    %v6841 = vunpack.c.l.b16 %v5942
    %v6842 = vunpack.c.h.b16 %v5942
    %v6843 = vunpack.c.l.b16 %v5943
    %v6844 = vunpack.c.l.b16 %v5944
    %v6845 = vunpack.c.h.b16 %v5944
    %v6846 = vunpack.c.l.b16 %v5945
    %v6847 = vunpack.c.h.b16 %v5945
    %v6848 = vunpack.c.l.b16 %v5946
    %v6849 = vunpack.c.h.b16 %v5946
    %v6850 = vunpack.c.l.b16 %v5947
    %v6851 = vunpack.c.l.b16 %v5948
    %v6852 = vunpack.c.h.b16 %v5948
    %v6853 = vunpack.c.l.b16 %v5949
    %v6854 = vunpack.c.h.b16 %v5949
    %v6855 = vunpack.c.l.b16 %v5950
    %v6856 = vunpack.c.h.b16 %v5950
    %v6857 = vunpack.c.l.b16 %v5951
    %v6858 = vunpack.c.l.b16 %v5952
    %v6859 = vunpack.c.h.b16 %v5952
    %v6860 = vunpack.c.l.b16 %v5953
    %v6861 = vunpack.c.h.b16 %v5953
    %v6862 = vunpack.c.l.b16 %v5954
    %v6863 = vunpack.c.h.b16 %v5954
    %v6864 = vunpack.c.l.b16 %v5955
    %v6865 = vunpack.c.l.b16 %v5956
    %v6866 = vunpack.c.h.b16 %v5956
    %v6867 = vunpack.c.l.b16 %v5957
    %v6868 = vunpack.c.h.b16 %v5957
    %v6869 = vunpack.c.l.b16 %v5958
    %v6870 = vunpack.c.h.b16 %v5958
    %v6871 = vunpack.c.l.b16 %v5959
    %v6872 = vunpack.c.l.b16 %v5960
    %v6873 = vunpack.c.h.b16 %v5960
    %v6874 = vunpack.c.l.b16 %v5961
    %v6875 = vunpack.c.h.b16 %v5961
    %v6876 = vunpack.c.l.b16 %v5962
    %v6877 = vunpack.c.h.b16 %v5962
    %v6878 = vunpack.c.l.b16 %v5963
    %v6879 = vunpack.c.l.b16 %v5964
    %v6880 = vunpack.c.h.b16 %v5964
    %v6881 = vunpack.c.l.b16 %v5965
    %v6882 = vunpack.c.h.b16 %v5965
    %v6883 = vunpack.c.l.b16 %v5966
    %v6884 = vunpack.c.h.b16 %v5966
    %v6885 = vunpack.c.l.b16 %v5967
    %v6886 = vunpack.c.l.b16 %v5968
    %v6887 = vunpack.c.h.b16 %v5968
    %v6888 = vunpack.c.l.b16 %v5969
    %v6889 = vunpack.c.h.b16 %v5969
    %v6890 = vunpack.c.l.b16 %v5970
    %v6891 = vunpack.c.h.b16 %v5970
    %v6892 = vunpack.c.l.b16 %v5971
    %v6893 = vunpack.c.l.b16 %v5972
    %v6894 = vunpack.c.h.b16 %v5972
    %v6895 = vunpack.c.l.b16 %v5973
    %v6896 = vunpack.c.h.b16 %v5973
    %v6897 = vunpack.c.l.b16 %v5974
    %v6898 = vunpack.c.h.b16 %v5974
    %v6899 = vunpack.c.l.b16 %v5975
    %v6900 = vunpack.c.l.b16 %v5976
    %v6901 = vunpack.c.h.b16 %v5976
    %v6902 = vunpack.c.l.b16 %v5977
    %v6903 = vunpack.c.h.b16 %v5977
    %v6904 = vunpack.c.l.b16 %v5978
    %v6905 = vunpack.c.h.b16 %v5978
    %v6906 = vunpack.c.l.b16 %v5979
    %v6907 = vunpack.c.l.b16 %v5980
    %v6908 = vunpack.c.h.b16 %v5980
    %v6909 = vunpack.c.l.b16 %v5981
    %v6910 = vunpack.c.h.b16 %v5981
    %v6911 = vunpack.c.l.b16 %v5982
    %v6912 = vunpack.c.h.b16 %v5982
    %v6913 = vunpack.c.l.b16 %v5983
    %v6914 = vunpack.c.l.b16 %v5984
    %v6915 = vunpack.c.h.b16 %v5984
    %v6916 = vunpack.c.l.b16 %v5985
    %v6917 = vunpack.c.h.b16 %v5985
    %v6918 = vunpack.c.l.b16 %v5986
    %v6919 = vunpack.c.h.b16 %v5986
    %v6920 = vunpack.c.l.b16 %v5987
    %v6921 = vunpack.c.l.b16 %v5988
    %v6922 = vunpack.c.h.b16 %v5988
    %v6923 = vunpack.c.l.b16 %v5989
    %v6924 = vunpack.c.h.b16 %v5989
    %v6925 = vunpack.c.l.b16 %v5990
    %v6926 = vunpack.c.h.b16 %v5990
    %v6927 = vunpack.c.l.b16 %v5991
    %v6928 = vunpack.c.l.b16 %v5992
    %v6929 = vunpack.c.h.b16 %v5992
    %v6930 = vunpack.c.l.b16 %v5993
    %v6931 = vunpack.c.h.b16 %v5993
    %v6932 = vunpack.c.l.b16 %v5994
    %v6933 = vunpack.c.h.b16 %v5994
    %v6934 = vunpack.c.l.b16 %v5995
    %v6935 = vunpack.c.l.b16 %v5996
    %v6936 = vunpack.c.h.b16 %v5996
    %v6937 = vunpack.c.l.b16 %v5997
    %v6938 = vunpack.c.h.b16 %v5997
    %v6939 = vunpack.c.l.b16 %v5998
    %v6940 = vunpack.c.h.b16 %v5998
    %v6941 = vunpack.c.l.b16 %v5999
    %v6942 = vunpack.c.l.b16 %v6000
    %v6943 = vunpack.c.h.b16 %v6000
    %v6944 = vunpack.c.l.b16 %v6001
    %v6945 = vunpack.c.h.b16 %v6001
    %v6946 = vunpack.c.l.b16 %v6002
    %v6947 = vunpack.c.h.b16 %v6002
    %v6948 = vunpack.c.l.b16 %v6003
    %v6949 = vunpack.c.l.b16 %v6004
    %v6950 = vunpack.c.h.b16 %v6004
    %v6951 = vunpack.c.l.b16 %v6005
    %v6952 = vunpack.c.h.b16 %v6005
    %v6953 = vunpack.c.l.b16 %v6006
    %v6954 = vunpack.c.h.b16 %v6006
    %v6955 = vunpack.c.l.b16 %v6007
    %v6956 = vunpack.c.l.b16 %v6008
    %v6957 = vunpack.c.h.b16 %v6008
    %v6958 = vunpack.c.l.b16 %v6009
    %v6959 = vunpack.c.h.b16 %v6009
    %v6960 = vunpack.c.l.b16 %v6010
    %v6961 = vunpack.c.h.b16 %v6010
    %v6962 = vunpack.c.l.b16 %v6011
    %v6963 = vunpack.c.l.b16 %v6012
    %v6964 = vunpack.c.h.b16 %v6012
    %v6965 = vunpack.c.l.b16 %v6013
    %v6966 = vunpack.c.h.b16 %v6013
    %v6967 = vunpack.c.l.b16 %v6014
    %v6968 = vunpack.c.h.b16 %v6014
    %v6969 = vunpack.c.l.b16 %v6015
    %v6970 = vunpack.c.l.b16 %v6016
    %v6971 = vunpack.c.h.b16 %v6016
    %v6972 = vunpack.c.l.b16 %v6017
    %v6973 = vunpack.c.h.b16 %v6017
    %v6974 = vunpack.c.l.b16 %v6018
    %v6975 = vunpack.c.h.b16 %v6018
    %v6976 = vunpack.c.l.b16 %v6019
    %v6977 = vunpack.c.l.b16 %v6020
    %v6978 = vunpack.c.h.b16 %v6020
    %v6979 = vunpack.c.l.b16 %v6021
    %v6980 = vunpack.c.h.b16 %v6021
    %v6981 = vunpack.c.l.b16 %v6022
    %v6982 = vunpack.c.h.b16 %v6022
    %v6983 = vunpack.c.l.b16 %v6023
    %v6984 = vunpack.c.l.b16 %v6024
    %v6985 = vunpack.c.h.b16 %v6024
    %v6986 = vunpack.c.l.b16 %v6025
    %v6987 = vunpack.c.h.b16 %v6025
    %v6988 = vunpack.c.l.b16 %v6026
    %v6989 = vunpack.c.h.b16 %v6026
    %v6990 = vunpack.c.l.b16 %v6027
    %v6991 = vunpack.c.l.b16 %v6028
    %v6992 = vunpack.c.h.b16 %v6028
    %v6993 = vunpack.c.l.b16 %v6029
    %v6994 = vunpack.c.h.b16 %v6029
    %v6995 = vunpack.c.l.b16 %v6030
    %v6996 = vunpack.c.h.b16 %v6030
    %v6997 = vunpack.c.l.b16 %v6031
    %v6998 = vunpack.c.l.b16 %v6032
    %v6999 = vunpack.c.h.b16 %v6032
    %v7000 = vunpack.c.l.b16 %v6033
    %v7001 = vunpack.c.h.b16 %v6033
    %v7002 = vunpack.c.l.b16 %v6034
    %v7003 = vunpack.c.h.b16 %v6034
    %v7004 = vunpack.c.l.b16 %v6035
    %v7005 = vunpack.c.l.b16 %v6036
    %v7006 = vunpack.c.h.b16 %v6036
    %v7007 = vunpack.c.l.b16 %v6037
    %v7008 = vunpack.c.h.b16 %v6037
    %v7009 = vunpack.c.l.b16 %v6038
    %v7010 = vunpack.c.h.b16 %v6038
    %v7011 = vunpack.c.l.b16 %v6039
    %v7012 = vunpack.c.l.b16 %v6040
    %v7013 = vunpack.c.h.b16 %v6040
    %v7014 = vunpack.c.l.b16 %v6041
    %v7015 = vunpack.c.h.b16 %v6041
    %v7016 = vunpack.c.l.b16 %v6042
    %v7017 = vunpack.c.h.b16 %v6042
    %v7018 = vunpack.c.l.b16 %v6043
    %v7019 = vunpack.c.l.b16 %v6044
    %v7020 = vunpack.c.h.b16 %v6044
    %v7021 = vunpack.c.l.b16 %v6045
    %v7022 = vunpack.c.h.b16 %v6045
    %v7023 = vunpack.c.l.b16 %v6046
    %v7024 = vunpack.c.h.b16 %v6046
    %v7025 = vunpack.c.l.b16 %v6047
    %v7026 = vunpack.c.l.b16 %v6048
    %v7027 = vunpack.c.h.b16 %v6048
    %v7028 = vunpack.c.l.b16 %v6049
    %v7029 = vunpack.c.h.b16 %v6049
    %v7030 = vunpack.c.l.b16 %v6050
    %v7031 = vunpack.c.h.b16 %v6050
    %v7032 = vunpack.c.l.b16 %v6051
    %v7033 = vunpack.c.l.b16 %v6052
    %v7034 = vunpack.c.h.b16 %v6052
    %v7035 = vunpack.c.l.b16 %v6053
    %v7036 = vunpack.c.h.b16 %v6053
    %v7037 = vunpack.c.l.b16 %v6054
    %v7038 = vunpack.c.h.b16 %v6054
    %v7039 = vunpack.c.l.b16 %v6055
    %v7040 = vunpack.c.l.b16 %v6056
    %v7041 = vunpack.c.h.b16 %v6056
    %v7042 = vunpack.c.l.b16 %v6057
    %v7043 = vunpack.c.h.b16 %v6057
    %v7044 = vunpack.c.l.b16 %v6058
    %v7045 = vunpack.c.h.b16 %v6058
    %v7046 = vunpack.c.l.b16 %v6059
    %v7047 = vunpack.c.l.b16 %v6060
    %v7048 = vunpack.c.h.b16 %v6060
    %v7049 = vunpack.c.l.b16 %v6061
    %v7050 = vunpack.c.h.b16 %v6061
    %v7051 = vunpack.c.l.b16 %v6062
    %v7052 = vunpack.c.h.b16 %v6062
    %v7053 = vunpack.c.l.b16 %v6063
    %v7054 = vunpack.c.l.b16 %v6064
    %v7055 = vunpack.c.h.b16 %v6064
    %v7056 = vunpack.c.l.b16 %v6065
    %v7057 = vunpack.c.h.b16 %v6065
    %v7058 = vunpack.c.l.b16 %v6066
    %v7059 = vunpack.c.h.b16 %v6066
    %v7060 = vunpack.c.l.b16 %v6067
    %v7061 = vunpack.c.l.b16 %v6068
    %v7062 = vunpack.c.h.b16 %v6068
    %v7063 = vunpack.c.l.b16 %v6069
    %v7064 = vunpack.c.h.b16 %v6069
    %v7065 = vunpack.c.l.b16 %v6070
    %v7066 = vunpack.c.h.b16 %v6070
    %v7067 = vunpack.c.l.b16 %v6071
    %v7068 = vunpack.c.l.b16 %v6072
    %v7069 = vunpack.c.h.b16 %v6072
    %v7070 = vunpack.c.l.b16 %v6073
    %v7071 = vunpack.c.h.b16 %v6073
    %v7072 = vunpack.c.l.b16 %v6074
    %v7073 = vunpack.c.h.b16 %v6074
    %v7074 = vunpack.c.l.b16 %v6075
    %v7075 = vunpack.c.l.b16 %v6076
    %v7076 = vunpack.c.h.b16 %v6076
    %v7077 = vunpack.c.l.b16 %v6077
    %v7078 = vunpack.c.h.b16 %v6077
    %v7079 = vunpack.c.l.b16 %v6078
    %v7080 = vunpack.c.h.b16 %v6078
    %v7081 = vunpack.c.l.b16 %v6079
    %v7082 = vunpack.c.l.b16 %v6080
    %v7083 = vunpack.c.h.b16 %v6080
    %v7084 = vunpack.c.l.b16 %v6081
    %v7085 = vunpack.c.h.b16 %v6081
    %v7086 = vunpack.c.l.b16 %v6082
    %v7087 = vunpack.c.h.b16 %v6082
    %v7088 = vunpack.c.l.b16 %v6083
    %v7089 = vunpack.c.l.b16 %v6084
    %v7090 = vunpack.c.h.b16 %v6084
    %v7091 = vunpack.c.l.b16 %v6085
    %v7092 = vunpack.c.h.b16 %v6085
    %v7093 = vunpack.c.l.b16 %v6086
    %v7094 = vunpack.c.h.b16 %v6086
    %v7095 = vunpack.c.l.b16 %v6087
    %v7096 = vunpack.c.l.b16 %v6088
    %v7097 = vunpack.c.h.b16 %v6088
    %v7098 = vunpack.c.l.b16 %v6089
    %v7099 = vunpack.c.h.b16 %v6089
    %v7100 = vunpack.c.l.b16 %v6090
    %v7101 = vunpack.c.h.b16 %v6090
    %v7102 = vunpack.c.l.b16 %v6091
    %v7103 = vunpack.c.l.b16 %v6092
    %v7104 = vunpack.c.h.b16 %v6092
    %v7105 = vunpack.c.l.b16 %v6093
    %v7106 = vunpack.c.h.b16 %v6093
    %v7107 = vunpack.c.l.b16 %v6094
    %v7108 = vunpack.c.h.b16 %v6094
    %v7109 = vunpack.c.l.b16 %v6095
    %v7110 = vunpack.c.l.b16 %v6096
    %v7111 = vunpack.c.h.b16 %v6096
    %v7112 = vunpack.c.l.b16 %v6097
    %v7113 = vunpack.c.h.b16 %v6097
    %v7114 = vunpack.c.l.b16 %v6098
    %v7115 = vunpack.c.h.b16 %v6098
    %v7116 = vunpack.c.l.b16 %v6099
    %v7117 = vunpack.c.l.b16 %v6100
    %v7118 = vunpack.c.h.b16 %v6100
    %v7119 = vunpack.c.l.b16 %v6101
    %v7120 = vunpack.c.h.b16 %v6101
    %v7121 = vunpack.c.l.b16 %v6102
    %v7122 = vunpack.c.h.b16 %v6102
    %v7123 = vunpack.c.l.b16 %v6103
    %v7124 = vunpack.c.l.b16 %v6104
    %v7125 = vunpack.c.h.b16 %v6104
    %v7126 = vunpack.c.l.b16 %v6105
    %v7127 = vunpack.c.h.b16 %v6105
    %v7128 = vunpack.c.l.b16 %v6106
    %v7129 = vunpack.c.h.b16 %v6106
    %v7130 = vunpack.c.l.b16 %v6107
    %v7131 = vunpack.c.l.b16 %v6108
    %v7132 = vunpack.c.h.b16 %v6108
    %v7133 = vunpack.c.l.b16 %v6109
    %v7134 = vunpack.c.h.b16 %v6109
    %v7135 = vunpack.c.l.b16 %v6110
    %v7136 = vunpack.c.h.b16 %v6110
    %v7137 = vunpack.c.l.b16 %v6111
    %v7138 = vunpack.c.l.b16 %v6112
    %v7139 = vunpack.c.h.b16 %v6112
    %v7140 = vunpack.c.l.b16 %v6113
    %v7141 = vunpack.c.h.b16 %v6113
    %v7142 = vunpack.c.l.b16 %v6114
    %v7143 = vunpack.c.h.b16 %v6114
    %v7144 = vunpack.c.l.b16 %v6115
    %v7145 = vunpack.c.l.b16 %v6116
    %v7146 = vunpack.c.h.b16 %v6116
    %v7147 = vunpack.c.l.b16 %v6117
    %v7148 = vunpack.c.h.b16 %v6117
    %v7149 = vunpack.c.l.b16 %v6118
    %v7150 = vunpack.c.h.b16 %v6118
    %v7151 = vunpack.c.l.b16 %v6119
    %v7152 = vunpack.c.l.b16 %v6120
    %v7153 = vunpack.c.h.b16 %v6120
    %v7154 = vunpack.c.l.b16 %v6121
    %v7155 = vunpack.c.h.b16 %v6121
    %v7156 = vunpack.c.l.b16 %v6122
    %v7157 = vunpack.c.h.b16 %v6122
    %v7158 = vunpack.c.l.b16 %v6123
    %v7159 = vunpack.c.l.b16 %v6124
    %v7160 = vunpack.c.h.b16 %v6124
    %v7161 = vunpack.c.l.b16 %v6125
    %v7162 = vunpack.c.h.b16 %v6125
    %v7163 = vunpack.c.l.b16 %v6126
    %v7164 = vunpack.c.h.b16 %v6126
    %v7165 = vunpack.c.l.b16 %v6127
    %v7166 = vunpack.c.l.b16 %v6128
    %v7167 = vunpack.c.h.b16 %v6128
    %v7168 = vunpack.c.l.b16 %v6129
    %v7169 = vunpack.c.h.b16 %v6129
    %v7170 = vunpack.c.l.b16 %v6130
    %v7171 = vunpack.c.h.b16 %v6130
    %v7172 = vunpack.c.l.b16 %v6131
    %v7173 = vunpack.c.l.b16 %v6132
    %v7174 = vunpack.c.h.b16 %v6132
    %v7175 = vunpack.c.l.b16 %v6133
    %v7176 = vunpack.c.h.b16 %v6133
    %v7177 = vunpack.c.l.b16 %v6134
    %v7178 = vunpack.c.h.b16 %v6134
    %v7179 = vunpack.c.l.b16 %v6135
    %v7180 = vunpack.c.l.b16 %v6136
    %v7181 = vunpack.c.h.b16 %v6136
    %v7182 = vunpack.c.l.b16 %v6137
    %v7183 = vunpack.c.h.b16 %v6137
    %v7184 = vunpack.c.l.b16 %v6138
    %v7185 = vunpack.c.h.b16 %v6138
    %v7186 = vunpack.c.l.b16 %v6139
    %v7187 = vunpack.c.l.b16 %v6140
    %v7188 = vunpack.c.h.b16 %v6140
    %v7189 = vunpack.c.l.b16 %v6141
    %v7190 = vunpack.c.h.b16 %v6141
    %v7191 = vunpack.c.l.b16 %v6142
    %v7192 = vunpack.c.h.b16 %v6142
    %v7193 = vunpack.c.l.b16 %v6143
    %v7194 = vunpack.c.l.b16 %v6144
    %v7195 = vunpack.c.h.b16 %v6144
    %v7196 = vunpack.c.l.b16 %v6145
    %v7197 = vunpack.c.h.b16 %v6145
    %v7198 = vunpack.c.l.b16 %v6146
    %v7199 = vunpack.c.h.b16 %v6146
    %v7200 = vunpack.c.l.b16 %v6147
    %v7201 = vunpack.c.l.b16 %v6148
    %v7202 = vunpack.c.h.b16 %v6148
    %v7203 = vunpack.c.l.b16 %v6149
    %v7204 = vunpack.c.h.b16 %v6149
    %v7205 = vunpack.c.l.b16 %v6150
    %v7206 = vunpack.c.h.b16 %v6150
    %v7207 = vunpack.c.l.b16 %v6151
    %v7208 = vunpack.c.l.b16 %v6152
    %v7209 = vunpack.c.h.b16 %v6152
    %v7210 = vunpack.c.l.b16 %v6153
    %v7211 = vunpack.c.h.b16 %v6153
    %v7212 = vunpack.c.l.b16 %v6154
    %v7213 = vunpack.c.h.b16 %v6154
    %v7214 = vunpack.c.l.b16 %v6155
    %v7215 = vunpack.c.l.b16 %v6156
    %v7216 = vunpack.c.h.b16 %v6156
    %v7217 = vunpack.c.l.b16 %v6157
    %v7218 = vunpack.c.h.b16 %v6157
    %v7219 = vunpack.c.l.b16 %v6158
    %v7220 = vunpack.c.h.b16 %v6158
    %v7221 = vunpack.c.l.b16 %v6159
    %v7222 = vunpack.c.l.b16 %v6160
    %v7223 = vunpack.c.h.b16 %v6160
    %v7224 = vunpack.c.l.b16 %v6161
    %v7225 = vunpack.c.h.b16 %v6161
    %v7226 = vunpack.c.l.b16 %v6162
    %v7227 = vunpack.c.h.b16 %v6162
    %v7228 = vunpack.c.l.b16 %v6163
    %v7229 = vunpack.c.l.b16 %v6164
    %v7230 = vunpack.c.h.b16 %v6164
    %v7231 = vunpack.c.l.b16 %v6165
    %v7232 = vunpack.c.h.b16 %v6165
    %v7233 = vunpack.c.l.b16 %v6166
    %v7234 = vunpack.c.h.b16 %v6166
    %v7235 = vunpack.c.l.b16 %v6167
    %v7236 = vunpack.c.l.b16 %v6168
    %v7237 = vunpack.c.h.b16 %v6168
    %v7238 = vunpack.c.l.b16 %v6169
    %v7239 = vunpack.c.h.b16 %v6169
    %v7240 = vunpack.c.l.b16 %v6170
    %v7241 = vunpack.c.h.b16 %v6170
    %v7242 = vunpack.c.l.b16 %v6171
    %v7243 = vunpack.c.l.b16 %v6172
    %v7244 = vunpack.c.h.b16 %v6172
    %v7245 = vunpack.c.l.b16 %v6173
    %v7246 = vunpack.c.h.b16 %v6173
    %v7247 = vunpack.c.l.b16 %v6174
    %v7248 = vunpack.c.h.b16 %v6174
    %v7249 = vunpack.c.l.b16 %v6175
    %v7250 = vunpack.c.l.b16 %v6176
    %v7251 = vunpack.c.h.b16 %v6176
    %v7252 = vunpack.c.l.b16 %v6177
    %v7253 = vunpack.c.h.b16 %v6177
    %v7254 = vunpack.c.l.b16 %v6178
    %v7255 = vunpack.c.h.b16 %v6178
    %v7256 = vunpack.c.l.b16 %v6179
    %v7257 = vunpack.c.l.b16 %v6180
    %v7258 = vunpack.c.h.b16 %v6180
    %v7259 = vunpack.c.l.b16 %v6181
    %v7260 = vunpack.c.h.b16 %v6181
    %v7261 = vunpack.c.l.b16 %v6182
    %v7262 = vunpack.c.h.b16 %v6182
    %v7263 = vunpack.c.l.b16 %v6183
    %v7264 = vunpack.c.l.b16 %v6184
    %v7265 = vunpack.c.h.b16 %v6184
    %v7266 = vunpack.c.l.b16 %v6185
    %v7267 = vunpack.c.h.b16 %v6185
    %v7268 = vunpack.c.l.b16 %v6186
    %v7269 = vunpack.c.h.b16 %v6186
    %v7270 = vunpack.c.l.b16 %v6187
    %v7271 = vunpack.c.l.b16 %v6188
    %v7272 = vunpack.c.h.b16 %v6188
    %v7273 = vunpack.c.l.b16 %v6189
    %v7274 = vunpack.c.h.b16 %v6189
    %v7275 = vunpack.c.l.b16 %v6190
    %v7276 = vunpack.c.h.b16 %v6190
    %v7277 = vunpack.c.l.b16 %v6191
    %v7278 = vunpack.c.l.b16 %v6192
    %v7279 = vunpack.c.h.b16 %v6192
    %v7280 = vunpack.c.l.b16 %v6193
    %v7281 = vunpack.c.h.b16 %v6193
    %v7282 = vunpack.c.l.b16 %v6194
    %v7283 = vunpack.c.h.b16 %v6194
    %v7284 = vunpack.c.l.b16 %v6195
    %v7285 = vunpack.c.l.b16 %v6196
    %v7286 = vunpack.c.h.b16 %v6196
    %v7287 = vunpack.c.l.b16 %v6197
    %v7288 = vunpack.c.h.b16 %v6197
    %v7289 = vunpack.c.l.b16 %v6198
    %v7290 = vunpack.c.h.b16 %v6198
    %v7291 = vunpack.c.l.b16 %v6199
    %v7292 = vunpack.c.l.b16 %v6200
    %v7293 = vunpack.c.h.b16 %v6200
    %v7294 = vunpack.c.l.b16 %v6201
    %v7295 = vunpack.c.h.b16 %v6201
    %v7296 = vunpack.c.l.b16 %v6202
    %v7297 = vunpack.c.h.b16 %v6202
    %v7298 = vunpack.c.l.b16 %v6203
    %v7299 = vunpack.c.l.b16 %v6204
    %v7300 = vunpack.c.h.b16 %v6204
    %v7301 = vunpack.c.l.b16 %v6205
    %v7302 = vunpack.c.h.b16 %v6205
    %v7303 = vunpack.c.l.b16 %v6206
    %v7304 = vunpack.c.h.b16 %v6206
    %v7305 = vunpack.c.l.b16 %v6207
    %v7306 = vunpack.c.l.b16 %v6208
    %v7307 = vunpack.c.h.b16 %v6208
    %v7308 = vunpack.c.l.b16 %v6209
    %v7309 = vunpack.c.h.b16 %v6209
    %v7310 = vunpack.c.l.b16 %v6210
    %v7311 = vunpack.c.h.b16 %v6210
    %v7312 = vunpack.c.l.b16 %v6211
    %v7313 = vunpack.c.l.b16 %v6212
    %v7314 = vunpack.c.h.b16 %v6212
    %v7315 = vunpack.c.l.b16 %v6213
    %v7316 = vunpack.c.h.b16 %v6213
    %v7317 = vunpack.c.l.b16 %v6214
    %v7318 = vunpack.c.h.b16 %v6214
    %v7319 = vunpack.c.l.b16 %v6215
    %v7320 = vunpack.c.l.b16 %v6216
    %v7321 = vunpack.c.h.b16 %v6216
    %v7322 = vunpack.c.l.b16 %v6217
    %v7323 = vunpack.c.h.b16 %v6217
    %v7324 = vunpack.c.l.b16 %v6218
    %v7325 = vunpack.c.h.b16 %v6218
    %v7326 = vunpack.c.l.b16 %v6219
    %v7327 = vunpack.c.l.b16 %v6220
    %v7328 = vunpack.c.h.b16 %v6220
    %v7329 = vunpack.c.l.b16 %v6221
    %v7330 = vunpack.c.h.b16 %v6221
    %v7331 = vunpack.c.l.b16 %v6222
    %v7332 = vunpack.c.h.b16 %v6222
    %v7333 = vunpack.c.l.b16 %v6223
    %v7334 = vunpack.c.l.b16 %v6224
    %v7335 = vunpack.c.h.b16 %v6224
    %v7336 = vunpack.c.l.b16 %v6225
    %v7337 = vunpack.c.h.b16 %v6225
    %v7338 = vunpack.c.l.b16 %v6226
    %v7339 = vunpack.c.h.b16 %v6226
    %v7340 = vunpack.c.l.b16 %v6227
    %v7341 = vunpack.c.l.b16 %v6228
    %v7342 = vunpack.c.h.b16 %v6228
    %v7343 = vunpack.c.l.b16 %v6229
    %v7344 = vunpack.c.h.b16 %v6229
    %v7345 = vunpack.c.l.b16 %v6230
    %v7346 = vunpack.c.h.b16 %v6230
    %v7347 = vunpack.c.l.b16 %v6231
    %v7348 = vunpack.c.l.b16 %v6232
    %v7349 = vunpack.c.h.b16 %v6232
    %v7350 = vunpack.c.l.b16 %v6233
    %v7351 = vunpack.c.h.b16 %v6233
    %v7352 = vunpack.c.l.b16 %v6234
    %v7353 = vunpack.c.h.b16 %v6234
    %v7354 = vunpack.c.l.b16 %v6235
    %v7355 = vunpack.c.l.b16 %v6236
    %v7356 = vunpack.c.h.b16 %v6236
    %v7357 = vunpack.c.l.b16 %v6237
    %v7358 = vunpack.c.h.b16 %v6237
    %v7359 = vunpack.c.l.b16 %v6238
    %v7360 = vunpack.c.h.b16 %v6238
    %v7361 = vunpack.c.l.b16 %v6239
    %v7362 = vunpack.c.l.b16 %v6240
    %v7363 = vunpack.c.h.b16 %v6240
    %v7364 = vunpack.c.l.b16 %v6241
    %v7365 = vunpack.c.h.b16 %v6241
    %v7366 = vunpack.c.l.b16 %v6242
    %v7367 = vunpack.c.h.b16 %v6242
    %v7368 = vunpack.c.l.b16 %v6243
    %v7369 = vunpack.c.l.b16 %v6244
    %v7370 = vunpack.c.h.b16 %v6244
    %v7371 = vunpack.c.l.b16 %v6245
    %v7372 = vunpack.c.h.b16 %v6245
    %v7373 = vunpack.c.l.b16 %v6246
    %v7374 = vunpack.c.h.b16 %v6246
    %v7375 = vunpack.c.l.b16 %v6247
    %v7376 = vunpack.c.l.b16 %v6248
    %v7377 = vunpack.c.h.b16 %v6248
    %v7378 = vunpack.c.l.b16 %v6249
    %v7379 = vunpack.c.h.b16 %v6249
    %v7380 = vunpack.c.l.b16 %v6250
    %v7381 = vunpack.c.h.b16 %v6250
    %v7382 = vunpack.c.l.b16 %v6251
    %v7383 = vunpack.c.l.b16 %v6252
    %v7384 = vunpack.c.h.b16 %v6252
    %v7385 = vunpack.c.l.b16 %v6253
    %v7386 = vunpack.c.h.b16 %v6253
    %v7387 = vunpack.c.l.b16 %v6254
    %v7388 = vunpack.c.h.b16 %v6254
    %v7389 = vunpack.c.l.b16 %v6255
    %v7390 = vunpack.c.l.b16 %v6256
    %v7391 = vunpack.c.h.b16 %v6256
    %v7392 = vunpack.c.l.b16 %v6257
    %v7393 = vunpack.c.h.b16 %v6257
    %v7394 = vunpack.c.l.b16 %v6258
    %v7395 = vunpack.c.h.b16 %v6258
    %v7396 = vunpack.c.l.b16 %v6259
    %v7397 = vpack.c.b16 %v6704, %v6697
    %v7398 = vpack.c.b16 %v6705, %v6698
    %v7399 = vpack.c.b16 %v6706, %v6699
    %v7400 = vpack.c.b16 %v6707, %v6700
    %v7401 = vpack.c.b16 %v6708, %v6701
    %v7402 = vpack.c.b16 %v6709, %v6702
    %v7403 = vpack.c.b16 %v6710, %v6703
    %v7404 = vpack.c.b16 %v6718, %v6711
    %v7405 = vpack.c.b16 %v6719, %v6712
    %v7406 = vpack.c.b16 %v6720, %v6713
    %v7407 = vpack.c.b16 %v6721, %v6714
    %v7408 = vpack.c.b16 %v6722, %v6715
    %v7409 = vpack.c.b16 %v6723, %v6716
    %v7410 = vpack.c.b16 %v6724, %v6717
    %v7411 = vpack.c.b16 %v6732, %v6725
    %v7412 = vpack.c.b16 %v6733, %v6726
    %v7413 = vpack.c.b16 %v6734, %v6727
    %v7414 = vpack.c.b16 %v6735, %v6728
    %v7415 = vpack.c.b16 %v6736, %v6729
    %v7416 = vpack.c.b16 %v6737, %v6730
    %v7417 = vpack.c.b16 %v6738, %v6731
    %v7418 = vpack.c.b16 %v6746, %v6739
    %v7419 = vpack.c.b16 %v6747, %v6740
    %v7420 = vpack.c.b16 %v6748, %v6741
    %v7421 = vpack.c.b16 %v6749, %v6742
    %v7422 = vpack.c.b16 %v6750, %v6743
    %v7423 = vpack.c.b16 %v6751, %v6744
    %v7424 = vpack.c.b16 %v6752, %v6745
    %v7425 = vpack.c.b16 %v6760, %v6753
    %v7426 = vpack.c.b16 %v6761, %v6754
    %v7427 = vpack.c.b16 %v6762, %v6755
    %v7428 = vpack.c.b16 %v6763, %v6756
    %v7429 = vpack.c.b16 %v6764, %v6757
    %v7430 = vpack.c.b16 %v6765, %v6758
    %v7431 = vpack.c.b16 %v6766, %v6759
    %v7432 = vpack.c.b16 %v6774, %v6767
    %v7433 = vpack.c.b16 %v6775, %v6768
    %v7434 = vpack.c.b16 %v6776, %v6769
    %v7435 = vpack.c.b16 %v6777, %v6770
    %v7436 = vpack.c.b16 %v6778, %v6771
    %v7437 = vpack.c.b16 %v6779, %v6772
    %v7438 = vpack.c.b16 %v6780, %v6773
    %v7439 = vpack.c.b16 %v6788, %v6781
    %v7440 = vpack.c.b16 %v6789, %v6782
    %v7441 = vpack.c.b16 %v6790, %v6783
    %v7442 = vpack.c.b16 %v6791, %v6784
    %v7443 = vpack.c.b16 %v6792, %v6785
    %v7444 = vpack.c.b16 %v6793, %v6786
    %v7445 = vpack.c.b16 %v6794, %v6787
    %v7446 = vpack.c.b16 %v6802, %v6795
    %v7447 = vpack.c.b16 %v6803, %v6796
    %v7448 = vpack.c.b16 %v6804, %v6797
    %v7449 = vpack.c.b16 %v6805, %v6798
    %v7450 = vpack.c.b16 %v6806, %v6799
    %v7451 = vpack.c.b16 %v6807, %v6800
    %v7452 = vpack.c.b16 %v6808, %v6801
    %v7453 = vpack.c.b16 %v6816, %v6809
    %v7454 = vpack.c.b16 %v6817, %v6810
    %v7455 = vpack.c.b16 %v6818, %v6811
    %v7456 = vpack.c.b16 %v6819, %v6812
    %v7457 = vpack.c.b16 %v6820, %v6813
    %v7458 = vpack.c.b16 %v6821, %v6814
    %v7459 = vpack.c.b16 %v6822, %v6815
    %v7460 = vpack.c.b16 %v6830, %v6823
    %v7461 = vpack.c.b16 %v6831, %v6824
    %v7462 = vpack.c.b16 %v6832, %v6825
    %v7463 = vpack.c.b16 %v6833, %v6826
    %v7464 = vpack.c.b16 %v6834, %v6827
    %v7465 = vpack.c.b16 %v6835, %v6828
    %v7466 = vpack.c.b16 %v6836, %v6829
    %v7467 = vpack.c.b16 %v6844, %v6837
    %v7468 = vpack.c.b16 %v6845, %v6838
    %v7469 = vpack.c.b16 %v6846, %v6839
    %v7470 = vpack.c.b16 %v6847, %v6840
    %v7471 = vpack.c.b16 %v6848, %v6841
    %v7472 = vpack.c.b16 %v6849, %v6842
    %v7473 = vpack.c.b16 %v6850, %v6843
    %v7474 = vpack.c.b16 %v6858, %v6851
    %v7475 = vpack.c.b16 %v6859, %v6852
    %v7476 = vpack.c.b16 %v6860, %v6853
    %v7477 = vpack.c.b16 %v6861, %v6854
    %v7478 = vpack.c.b16 %v6862, %v6855
    %v7479 = vpack.c.b16 %v6863, %v6856
    %v7480 = vpack.c.b16 %v6864, %v6857
    %v7481 = vpack.c.b16 %v6872, %v6865
    %v7482 = vpack.c.b16 %v6873, %v6866
    %v7483 = vpack.c.b16 %v6874, %v6867
    %v7484 = vpack.c.b16 %v6875, %v6868
    %v7485 = vpack.c.b16 %v6876, %v6869
    %v7486 = vpack.c.b16 %v6877, %v6870
    %v7487 = vpack.c.b16 %v6878, %v6871
    %v7488 = vpack.c.b16 %v6886, %v6879
    %v7489 = vpack.c.b16 %v6887, %v6880
    %v7490 = vpack.c.b16 %v6888, %v6881
    %v7491 = vpack.c.b16 %v6889, %v6882
    %v7492 = vpack.c.b16 %v6890, %v6883
    %v7493 = vpack.c.b16 %v6891, %v6884
    %v7494 = vpack.c.b16 %v6892, %v6885
    %v7495 = vpack.c.b16 %v6900, %v6893
    %v7496 = vpack.c.b16 %v6901, %v6894
    %v7497 = vpack.c.b16 %v6902, %v6895
    %v7498 = vpack.c.b16 %v6903, %v6896
    %v7499 = vpack.c.b16 %v6904, %v6897
    %v7500 = vpack.c.b16 %v6905, %v6898
    %v7501 = vpack.c.b16 %v6906, %v6899
    %v7502 = vpack.c.b16 %v6914, %v6907
    %v7503 = vpack.c.b16 %v6915, %v6908
    %v7504 = vpack.c.b16 %v6916, %v6909
    %v7505 = vpack.c.b16 %v6917, %v6910
    %v7506 = vpack.c.b16 %v6918, %v6911
    %v7507 = vpack.c.b16 %v6919, %v6912
    %v7508 = vpack.c.b16 %v6920, %v6913
    %v7509 = vpack.c.b16 %v6928, %v6921
    %v7510 = vpack.c.b16 %v6929, %v6922
    %v7511 = vpack.c.b16 %v6930, %v6923
    %v7512 = vpack.c.b16 %v6931, %v6924
    %v7513 = vpack.c.b16 %v6932, %v6925
    %v7514 = vpack.c.b16 %v6933, %v6926
    %v7515 = vpack.c.b16 %v6934, %v6927
    %v7516 = vpack.c.b16 %v6942, %v6935
    %v7517 = vpack.c.b16 %v6943, %v6936
    %v7518 = vpack.c.b16 %v6944, %v6937
    %v7519 = vpack.c.b16 %v6945, %v6938
    %v7520 = vpack.c.b16 %v6946, %v6939
    %v7521 = vpack.c.b16 %v6947, %v6940
    %v7522 = vpack.c.b16 %v6948, %v6941
    %v7523 = vpack.c.b16 %v6956, %v6949
    %v7524 = vpack.c.b16 %v6957, %v6950
    %v7525 = vpack.c.b16 %v6958, %v6951
    %v7526 = vpack.c.b16 %v6959, %v6952
    %v7527 = vpack.c.b16 %v6960, %v6953
    %v7528 = vpack.c.b16 %v6961, %v6954
    %v7529 = vpack.c.b16 %v6962, %v6955
    %v7530 = vpack.c.b16 %v6970, %v6963
    %v7531 = vpack.c.b16 %v6971, %v6964
    %v7532 = vpack.c.b16 %v6972, %v6965
    %v7533 = vpack.c.b16 %v6973, %v6966
    %v7534 = vpack.c.b16 %v6974, %v6967
    %v7535 = vpack.c.b16 %v6975, %v6968
    %v7536 = vpack.c.b16 %v6976, %v6969
    %v7537 = vpack.c.b16 %v6984, %v6977
    %v7538 = vpack.c.b16 %v6985, %v6978
    %v7539 = vpack.c.b16 %v6986, %v6979
    %v7540 = vpack.c.b16 %v6987, %v6980
    %v7541 = vpack.c.b16 %v6988, %v6981
    %v7542 = vpack.c.b16 %v6989, %v6982
    %v7543 = vpack.c.b16 %v6990, %v6983
    %v7544 = vpack.c.b16 %v6998, %v6991
    %v7545 = vpack.c.b16 %v6999, %v6992
    %v7546 = vpack.c.b16 %v7000, %v6993
    %v7547 = vpack.c.b16 %v7001, %v6994
    %v7548 = vpack.c.b16 %v7002, %v6995
    %v7549 = vpack.c.b16 %v7003, %v6996
    %v7550 = vpack.c.b16 %v7004, %v6997
    %v7551 = vpack.c.b16 %v7012, %v7005
    %v7552 = vpack.c.b16 %v7013, %v7006
    %v7553 = vpack.c.b16 %v7014, %v7007
    %v7554 = vpack.c.b16 %v7015, %v7008
    %v7555 = vpack.c.b16 %v7016, %v7009
    %v7556 = vpack.c.b16 %v7017, %v7010
    %v7557 = vpack.c.b16 %v7018, %v7011
    %v7558 = vpack.c.b16 %v7026, %v7019
    %v7559 = vpack.c.b16 %v7027, %v7020
    %v7560 = vpack.c.b16 %v7028, %v7021
    %v7561 = vpack.c.b16 %v7029, %v7022
    %v7562 = vpack.c.b16 %v7030, %v7023
    %v7563 = vpack.c.b16 %v7031, %v7024
    %v7564 = vpack.c.b16 %v7032, %v7025
    %v7565 = vpack.c.b16 %v7040, %v7033
    %v7566 = vpack.c.b16 %v7041, %v7034
    %v7567 = vpack.c.b16 %v7042, %v7035
    %v7568 = vpack.c.b16 %v7043, %v7036
    %v7569 = vpack.c.b16 %v7044, %v7037
    %v7570 = vpack.c.b16 %v7045, %v7038
    %v7571 = vpack.c.b16 %v7046, %v7039
    %v7572 = vpack.c.b16 %v7054, %v7047
    %v7573 = vpack.c.b16 %v7055, %v7048
    %v7574 = vpack.c.b16 %v7056, %v7049
    %v7575 = vpack.c.b16 %v7057, %v7050
    %v7576 = vpack.c.b16 %v7058, %v7051
    %v7577 = vpack.c.b16 %v7059, %v7052
    %v7578 = vpack.c.b16 %v7060, %v7053
    %v7579 = vpack.c.b16 %v7068, %v7061
    %v7580 = vpack.c.b16 %v7069, %v7062
    %v7581 = vpack.c.b16 %v7070, %v7063
    %v7582 = vpack.c.b16 %v7071, %v7064
    %v7583 = vpack.c.b16 %v7072, %v7065
    %v7584 = vpack.c.b16 %v7073, %v7066
    %v7585 = vpack.c.b16 %v7074, %v7067
    %v7586 = vpack.c.b16 %v7082, %v7075
    %v7587 = vpack.c.b16 %v7083, %v7076
    %v7588 = vpack.c.b16 %v7084, %v7077
    %v7589 = vpack.c.b16 %v7085, %v7078
    %v7590 = vpack.c.b16 %v7086, %v7079
    %v7591 = vpack.c.b16 %v7087, %v7080
    %v7592 = vpack.c.b16 %v7088, %v7081
    %v7593 = vpack.c.b16 %v7096, %v7089
    %v7594 = vpack.c.b16 %v7097, %v7090
    %v7595 = vpack.c.b16 %v7098, %v7091
    %v7596 = vpack.c.b16 %v7099, %v7092
    %v7597 = vpack.c.b16 %v7100, %v7093
    %v7598 = vpack.c.b16 %v7101, %v7094
    %v7599 = vpack.c.b16 %v7102, %v7095
    %v7600 = vpack.c.b16 %v7110, %v7103
    %v7601 = vpack.c.b16 %v7111, %v7104
    %v7602 = vpack.c.b16 %v7112, %v7105
    %v7603 = vpack.c.b16 %v7113, %v7106
    %v7604 = vpack.c.b16 %v7114, %v7107
    %v7605 = vpack.c.b16 %v7115, %v7108
    %v7606 = vpack.c.b16 %v7116, %v7109
    %v7607 = vpack.c.b16 %v7124, %v7117
    %v7608 = vpack.c.b16 %v7125, %v7118
    %v7609 = vpack.c.b16 %v7126, %v7119
    %v7610 = vpack.c.b16 %v7127, %v7120
    %v7611 = vpack.c.b16 %v7128, %v7121
    %v7612 = vpack.c.b16 %v7129, %v7122
    %v7613 = vpack.c.b16 %v7130, %v7123
    %v7614 = vpack.c.b16 %v7138, %v7131
    %v7615 = vpack.c.b16 %v7139, %v7132
    %v7616 = vpack.c.b16 %v7140, %v7133
    %v7617 = vpack.c.b16 %v7141, %v7134
    %v7618 = vpack.c.b16 %v7142, %v7135
    %v7619 = vpack.c.b16 %v7143, %v7136
    %v7620 = vpack.c.b16 %v7144, %v7137
    %v7621 = vpack.c.b16 %v7152, %v7145
    %v7622 = vpack.c.b16 %v7153, %v7146
    %v7623 = vpack.c.b16 %v7154, %v7147
    %v7624 = vpack.c.b16 %v7155, %v7148
    %v7625 = vpack.c.b16 %v7156, %v7149
    %v7626 = vpack.c.b16 %v7157, %v7150
    %v7627 = vpack.c.b16 %v7158, %v7151
    %v7628 = vpack.c.b16 %v7166, %v7159
    %v7629 = vpack.c.b16 %v7167, %v7160
    %v7630 = vpack.c.b16 %v7168, %v7161
    %v7631 = vpack.c.b16 %v7169, %v7162
    %v7632 = vpack.c.b16 %v7170, %v7163
    %v7633 = vpack.c.b16 %v7171, %v7164
    %v7634 = vpack.c.b16 %v7172, %v7165
    %v7635 = vpack.c.b16 %v7180, %v7173
    %v7636 = vpack.c.b16 %v7181, %v7174
    %v7637 = vpack.c.b16 %v7182, %v7175
    %v7638 = vpack.c.b16 %v7183, %v7176
    %v7639 = vpack.c.b16 %v7184, %v7177
    %v7640 = vpack.c.b16 %v7185, %v7178
    %v7641 = vpack.c.b16 %v7186, %v7179
    %v7642 = vpack.c.b16 %v7194, %v7187
    %v7643 = vpack.c.b16 %v7195, %v7188
    %v7644 = vpack.c.b16 %v7196, %v7189
    %v7645 = vpack.c.b16 %v7197, %v7190
    %v7646 = vpack.c.b16 %v7198, %v7191
    %v7647 = vpack.c.b16 %v7199, %v7192
    %v7648 = vpack.c.b16 %v7200, %v7193
    %v7649 = vpack.c.b16 %v7208, %v7201
    %v7650 = vpack.c.b16 %v7209, %v7202
    %v7651 = vpack.c.b16 %v7210, %v7203
    %v7652 = vpack.c.b16 %v7211, %v7204
    %v7653 = vpack.c.b16 %v7212, %v7205
    %v7654 = vpack.c.b16 %v7213, %v7206
    %v7655 = vpack.c.b16 %v7214, %v7207
    %v7656 = vpack.c.b16 %v7222, %v7215
    %v7657 = vpack.c.b16 %v7223, %v7216
    %v7658 = vpack.c.b16 %v7224, %v7217
    %v7659 = vpack.c.b16 %v7225, %v7218
    %v7660 = vpack.c.b16 %v7226, %v7219
    %v7661 = vpack.c.b16 %v7227, %v7220
    %v7662 = vpack.c.b16 %v7228, %v7221
    %v7663 = vpack.c.b16 %v7236, %v7229
    %v7664 = vpack.c.b16 %v7237, %v7230
    %v7665 = vpack.c.b16 %v7238, %v7231
    %v7666 = vpack.c.b16 %v7239, %v7232
    %v7667 = vpack.c.b16 %v7240, %v7233
    %v7668 = vpack.c.b16 %v7241, %v7234
    %v7669 = vpack.c.b16 %v7242, %v7235
    %v7670 = vpack.c.b16 %v7250, %v7243
    %v7671 = vpack.c.b16 %v7251, %v7244
    %v7672 = vpack.c.b16 %v7252, %v7245
    %v7673 = vpack.c.b16 %v7253, %v7246
    %v7674 = vpack.c.b16 %v7254, %v7247
    %v7675 = vpack.c.b16 %v7255, %v7248
    %v7676 = vpack.c.b16 %v7256, %v7249
    %v7677 = vpack.c.b16 %v7264, %v7257
    %v7678 = vpack.c.b16 %v7265, %v7258
    %v7679 = vpack.c.b16 %v7266, %v7259
    %v7680 = vpack.c.b16 %v7267, %v7260
    %v7681 = vpack.c.b16 %v7268, %v7261
    %v7682 = vpack.c.b16 %v7269, %v7262
    %v7683 = vpack.c.b16 %v7270, %v7263
    %v7684 = vpack.c.b16 %v7278, %v7271
    %v7685 = vpack.c.b16 %v7279, %v7272
    %v7686 = vpack.c.b16 %v7280, %v7273
    %v7687 = vpack.c.b16 %v7281, %v7274
    %v7688 = vpack.c.b16 %v7282, %v7275
    %v7689 = vpack.c.b16 %v7283, %v7276
    %v7690 = vpack.c.b16 %v7284, %v7277
    %v7691 = vpack.c.b16 %v7292, %v7285
    %v7692 = vpack.c.b16 %v7293, %v7286
    %v7693 = vpack.c.b16 %v7294, %v7287
    %v7694 = vpack.c.b16 %v7295, %v7288
    %v7695 = vpack.c.b16 %v7296, %v7289
    %v7696 = vpack.c.b16 %v7297, %v7290
    %v7697 = vpack.c.b16 %v7298, %v7291
    %v7698 = vpack.c.b16 %v7306, %v7299
    %v7699 = vpack.c.b16 %v7307, %v7300
    %v7700 = vpack.c.b16 %v7308, %v7301
    %v7701 = vpack.c.b16 %v7309, %v7302
    %v7702 = vpack.c.b16 %v7310, %v7303
    %v7703 = vpack.c.b16 %v7311, %v7304
    %v7704 = vpack.c.b16 %v7312, %v7305
    %v7705 = vpack.c.b16 %v7320, %v7313
    %v7706 = vpack.c.b16 %v7321, %v7314
    %v7707 = vpack.c.b16 %v7322, %v7315
    %v7708 = vpack.c.b16 %v7323, %v7316
    %v7709 = vpack.c.b16 %v7324, %v7317
    %v7710 = vpack.c.b16 %v7325, %v7318
    %v7711 = vpack.c.b16 %v7326, %v7319
    %v7712 = vpack.c.b16 %v7334, %v7327
    %v7713 = vpack.c.b16 %v7335, %v7328
    %v7714 = vpack.c.b16 %v7336, %v7329
    %v7715 = vpack.c.b16 %v7337, %v7330
    %v7716 = vpack.c.b16 %v7338, %v7331
    %v7717 = vpack.c.b16 %v7339, %v7332
    %v7718 = vpack.c.b16 %v7340, %v7333
    %v7719 = vpack.c.b16 %v7348, %v7341
    %v7720 = vpack.c.b16 %v7349, %v7342
    %v7721 = vpack.c.b16 %v7350, %v7343
    %v7722 = vpack.c.b16 %v7351, %v7344
    %v7723 = vpack.c.b16 %v7352, %v7345
    %v7724 = vpack.c.b16 %v7353, %v7346
    %v7725 = vpack.c.b16 %v7354, %v7347
    %v7726 = vpack.c.b16 %v7362, %v7355
    %v7727 = vpack.c.b16 %v7363, %v7356
    %v7728 = vpack.c.b16 %v7364, %v7357
    %v7729 = vpack.c.b16 %v7365, %v7358
    %v7730 = vpack.c.b16 %v7366, %v7359
    %v7731 = vpack.c.b16 %v7367, %v7360
    %v7732 = vpack.c.b16 %v7368, %v7361
    %v7733 = vpack.c.b16 %v7376, %v7369
    %v7734 = vpack.c.b16 %v7377, %v7370
    %v7735 = vpack.c.b16 %v7378, %v7371
    %v7736 = vpack.c.b16 %v7379, %v7372
    %v7737 = vpack.c.b16 %v7380, %v7373
    %v7738 = vpack.c.b16 %v7381, %v7374
    %v7739 = vpack.c.b16 %v7382, %v7375
    %v7740 = vpack.c.b16 %v7390, %v7383
    %v7741 = vpack.c.b16 %v7391, %v7384
    %v7742 = vpack.c.b16 %v7392, %v7385
    %v7743 = vpack.c.b16 %v7393, %v7386
    %v7744 = vpack.c.b16 %v7394, %v7387
    %v7745 = vpack.c.b16 %v7395, %v7388
    %v7746 = vpack.c.b16 %v7396, %v7389
    %v8098 = vsel %vm2291, %v5859, 0
    %8100 = vmatprep.subr.bf16.mxu0 %v7398
    %8101 = vmatpush1.bf16.msra.mxu0 %v7397
    %8102 = vmatprep.subr.bf16.mxu0 %v7405
    %8103 = vmatpush1.bf16.msra.mxu0 %v7404
    %8104 = vmatprep.subr.bf16.mxu0 %v7412
    %8105 = vmatpush1.bf16.msra.mxu0 %v7411
    %8106 = vmatprep.subr.bf16.mxu0 %v7419
    %8107 = vmatpush1.bf16.msra.mxu0 %v7418
    %8108 = vmatprep.subr.bf16.mxu0 %v7426
    %8109 = vmatpush1.bf16.msra.mxu0 %v7425
    %8110 = vmatprep.subr.bf16.mxu0 %v7433
    %8111 = vmatpush1.bf16.msra.mxu0 %v7432
    %8112 = vmatprep.subr.bf16.mxu0 %v7440
    %8113 = vmatpush1.bf16.msra.mxu0 %v7439
    %8114 = vmatprep.subr.bf16.mxu0 %v7447
    %8115 = vmatpush1.bf16.msra.mxu0 %v7446
    %8116 = vmatprep.subr.bf16.mxu0 %v7454
    %8117 = vmatpush1.bf16.msra.mxu0 %v7453
    %8118 = vmatprep.subr.bf16.mxu0 %v7461
    %8119 = vmatpush1.bf16.msra.mxu0 %v7460
    %8120 = vmatprep.subr.bf16.mxu0 %v7468
    %8121 = vmatpush1.bf16.msra.mxu0 %v7467
    %8122 = vmatprep.subr.bf16.mxu0 %v7475
    %8123 = vmatpush1.bf16.msra.mxu0 %v7474
    %8124 = vmatprep.subr.bf16.mxu0 %v7482
    %8125 = vmatpush1.bf16.msra.mxu0 %v7481
    %8126 = vmatprep.subr.bf16.mxu0 %v7489
    %8127 = vmatpush1.bf16.msra.mxu0 %v7488
    %8128 = vmatprep.subr.bf16.mxu0 %v7496
    %8129 = vmatpush1.bf16.msra.mxu0 %v7495
    %8130 = vmatprep.subr.bf16.mxu0 %v7503
    %8131 = vmatpush1.bf16.msra.mxu0 %v7502
    %8132 = vmatprep.mubr.bf16.mxu0 %v5854
    %8133 = vmatmul.mubr.bf16.gmra.mrb[0].mxu0 %v5853
    %v8134 = vpop.f32.mrb[0].mxu0
    %v8135 = vadd.f32 %v6265, %v8134
    %v8136 = vpop.f32.mrb[0].mxu0
    %v8137 = vadd.f32 %v6269, %v8136
    %v8138 = vpop.f32.mrb[0].mxu0
    %v8139 = vpop.f32.mrb[0].mxu0
    %8140 = vdwg.mxu0
    %8141 = vmatprep.subr.bf16.mxu0 %v7510
    %8142 = vmatpush1.bf16.msra.mxu0 %v7509
    %8143 = vmatprep.subr.bf16.mxu0 %v7517
    %8144 = vmatpush1.bf16.msra.mxu0 %v7516
    %8145 = vmatprep.subr.bf16.mxu0 %v7524
    %8146 = vmatpush1.bf16.msra.mxu0 %v7523
    %8147 = vmatprep.subr.bf16.mxu0 %v7531
    %8148 = vmatpush1.bf16.msra.mxu0 %v7530
    %8149 = vmatprep.subr.bf16.mxu0 %v7538
    %8150 = vmatpush1.bf16.msra.mxu0 %v7537
    %8151 = vmatprep.subr.bf16.mxu0 %v7545
    %8152 = vmatpush1.bf16.msra.mxu0 %v7544
    %8153 = vmatprep.subr.bf16.mxu0 %v7552
    %8154 = vmatpush1.bf16.msra.mxu0 %v7551
    %8155 = vmatprep.subr.bf16.mxu0 %v7559
    %8156 = vmatpush1.bf16.msra.mxu0 %v7558
    %8157 = vmatprep.subr.bf16.mxu0 %v7566
    %8158 = vmatpush1.bf16.msra.mxu0 %v7565
    %8159 = vmatprep.subr.bf16.mxu0 %v7573
    %8160 = vmatpush1.bf16.msra.mxu0 %v7572
    %8161 = vmatprep.subr.bf16.mxu0 %v7580
    %8162 = vmatpush1.bf16.msra.mxu0 %v7579
    %8163 = vmatprep.subr.bf16.mxu0 %v7587
    %8164 = vmatpush1.bf16.msra.mxu0 %v7586
    %8165 = vmatprep.subr.bf16.mxu0 %v7594
    %8166 = vmatpush1.bf16.msra.mxu0 %v7593
    %8167 = vmatprep.subr.bf16.mxu0 %v7601
    %8168 = vmatpush1.bf16.msra.mxu0 %v7600
    %8169 = vmatprep.subr.bf16.mxu0 %v7608
    %8170 = vmatpush1.bf16.msra.mxu0 %v7607
    %8171 = vmatprep.subr.bf16.mxu0 %v7615
    %8172 = vmatpush1.bf16.msra.mxu0 %v7614
    %8173 = vmatprep.mubr.bf16.mxu0 %v5856
    %8174 = vmatmul.mubr.bf16.gmra.mrb[0].mxu0 %v5855
    %v8175 = vpop.f32.mrb[0].mxu0
    %v8176 = vadd.f32 %v8135, %v8175
    %v8177 = vpop.f32.mrb[0].mxu0
    %v8178 = vadd.f32 %v8137, %v8177
    %v8179 = vpop.f32.mrb[0].mxu0
    %v8180 = vpop.f32.mrb[0].mxu0
    %8181 = vdwg.mxu0
    %8182 = vmatprep.subr.bf16.mxu0 %v7622
    %8183 = vmatpush1.bf16.msra.mxu0 %v7621
    %8184 = vmatprep.subr.bf16.mxu0 %v7629
    %8185 = vmatpush1.bf16.msra.mxu0 %v7628
    %8186 = vmatprep.subr.bf16.mxu0 %v7636
    %8187 = vmatpush1.bf16.msra.mxu0 %v7635
    %8188 = vmatprep.subr.bf16.mxu0 %v7643
    %8189 = vmatpush1.bf16.msra.mxu0 %v7642
    %8190 = vmatprep.subr.bf16.mxu0 %v7650
    %8191 = vmatpush1.bf16.msra.mxu0 %v7649
    %8192 = vmatprep.subr.bf16.mxu0 %v7657
    %8193 = vmatpush1.bf16.msra.mxu0 %v7656
    %8194 = vmatprep.subr.bf16.mxu0 %v7664
    %8195 = vmatpush1.bf16.msra.mxu0 %v7663
    %8196 = vmatprep.subr.bf16.mxu0 %v7671
    %8197 = vmatpush1.bf16.msra.mxu0 %v7670
    %8198 = vmatprep.subr.bf16.mxu0 %v7678
    %8199 = vmatpush1.bf16.msra.mxu0 %v7677
    %8200 = vmatprep.subr.bf16.mxu0 %v7685
    %8201 = vmatpush1.bf16.msra.mxu0 %v7684
    %8202 = vmatprep.subr.bf16.mxu0 %v7692
    %8203 = vmatpush1.bf16.msra.mxu0 %v7691
    %8204 = vmatprep.subr.bf16.mxu0 %v7699
    %8205 = vmatpush1.bf16.msra.mxu0 %v7698
    %8206 = vmatprep.subr.bf16.mxu0 %v7706
    %8207 = vmatpush1.bf16.msra.mxu0 %v7705
    %8208 = vmatprep.subr.bf16.mxu0 %v7713
    %8209 = vmatpush1.bf16.msra.mxu0 %v7712
    %8210 = vmatprep.subr.bf16.mxu0 %v7720
    %8211 = vmatpush1.bf16.msra.mxu0 %v7719
    %8212 = vmatprep.subr.bf16.mxu0 %v7727
    %8213 = vmatpush1.bf16.msra.mxu0 %v7726
    %8214 = vmatprep.mubr.bf16.mxu0 %v5858
    %8215 = vmatmul.mubr.bf16.gmra.mrb[0].mxu0 %v5857
    %v8216 = vpop.f32.mrb[0].mxu0
    %v8217 = vadd.f32 %v8176, %v8216
    %v8218 = vpop.f32.mrb[0].mxu0
    %v8219 = vadd.f32 %v8178, %v8218
    %v8220 = vpop.f32.mrb[0].mxu0
    %v8221 = vpop.f32.mrb[0].mxu0
    %8222 = vdwg.mxu0
    %8223 = vmatprep.subr.bf16.mxu0 %v7734
    %8224 = vmatpush1.bf16.msra.mxu0 %v7733
    %8225 = vmatprep.subr.bf16.mxu0 %v7741
    %8226 = vmatpush1.bf16.msra.mxu0 %v7740
    %8227 = vmatprep.subr.bf16.mxu0 0
    %8228 = vmatpush1.bf16.msra.mxu0 0
    %8229 = vmatprep.subr.bf16.mxu0 0
    %8230 = vmatpush1.bf16.msra.mxu0 0
    %8231 = vmatprep.subr.bf16.mxu0 0
    %8232 = vmatpush1.bf16.msra.mxu0 0
    %8233 = vmatprep.subr.bf16.mxu0 0
    %8234 = vmatpush1.bf16.msra.mxu0 0
    %8235 = vmatprep.subr.bf16.mxu0 0
    %8236 = vmatpush1.bf16.msra.mxu0 0
    %8237 = vmatprep.subr.bf16.mxu0 0
    %8238 = vmatpush1.bf16.msra.mxu0 0
    %8239 = vmatprep.subr.bf16.mxu0 0
    %8240 = vmatpush1.bf16.msra.mxu0 0
    %8241 = vmatprep.subr.bf16.mxu0 0
    %8242 = vmatpush1.bf16.msra.mxu0 0
    %8243 = vmatprep.subr.bf16.mxu0 0
    %8244 = vmatpush1.bf16.msra.mxu0 0
    %8245 = vmatprep.subr.bf16.mxu0 0
    %8246 = vmatpush1.bf16.msra.mxu0 0
    %8247 = vmatprep.subr.bf16.mxu0 0
    %8248 = vmatpush1.bf16.msra.mxu0 0
    %8249 = vmatprep.subr.bf16.mxu0 0
    %8250 = vmatpush1.bf16.msra.mxu0 0
    %8251 = vmatprep.subr.bf16.mxu0 0
    %8252 = vmatpush1.bf16.msra.mxu0 0
    %8253 = vmatprep.subr.bf16.mxu0 0
    %8254 = vmatpush1.bf16.msra.mxu0 0
    %8255 = vmatprep.mubr.bf16.mxu0 0
    %8256 = vmatmul.mubr.bf16.gmra.mrb[0].mxu0 %v8098
    %v8257 = vpop.f32.mrb[0].mxu0
    %v8258 = vadd.f32 %v8217, %v8257
    %v8259 = vpop.f32.mrb[0].mxu0
    %v8260 = vadd.f32 %v8219, %v8259
    %v8261 = vpop.f32.mrb[0].mxu0
    %v8262 = vpop.f32.mrb[0].mxu0
    %8263 = vdwg.mxu0
    %8264 = vmatprep.subr.bf16.mxu0 %v7400
    %8265 = vmatpush1.bf16.msra.mxu0 %v7399
    %8266 = vmatprep.subr.bf16.mxu0 %v7407
    %8267 = vmatpush1.bf16.msra.mxu0 %v7406
    %8268 = vmatprep.subr.bf16.mxu0 %v7414
    %8269 = vmatpush1.bf16.msra.mxu0 %v7413
    %8270 = vmatprep.subr.bf16.mxu0 %v7421
    %8271 = vmatpush1.bf16.msra.mxu0 %v7420
    %8272 = vmatprep.subr.bf16.mxu0 %v7428
    %8273 = vmatpush1.bf16.msra.mxu0 %v7427
    %8274 = vmatprep.subr.bf16.mxu0 %v7435
    %8275 = vmatpush1.bf16.msra.mxu0 %v7434
    %8276 = vmatprep.subr.bf16.mxu0 %v7442
    %8277 = vmatpush1.bf16.msra.mxu0 %v7441
    %8278 = vmatprep.subr.bf16.mxu0 %v7449
    %8279 = vmatpush1.bf16.msra.mxu0 %v7448
    %8280 = vmatprep.subr.bf16.mxu0 %v7456
    %8281 = vmatpush1.bf16.msra.mxu0 %v7455
    %8282 = vmatprep.subr.bf16.mxu0 %v7463
    %8283 = vmatpush1.bf16.msra.mxu0 %v7462
    %8284 = vmatprep.subr.bf16.mxu0 %v7470
    %8285 = vmatpush1.bf16.msra.mxu0 %v7469
    %8286 = vmatprep.subr.bf16.mxu0 %v7477
    %8287 = vmatpush1.bf16.msra.mxu0 %v7476
    %8288 = vmatprep.subr.bf16.mxu0 %v7484
    %8289 = vmatpush1.bf16.msra.mxu0 %v7483
    %8290 = vmatprep.subr.bf16.mxu0 %v7491
    %8291 = vmatpush1.bf16.msra.mxu0 %v7490
    %8292 = vmatprep.subr.bf16.mxu0 %v7498
    %8293 = vmatpush1.bf16.msra.mxu0 %v7497
    %8294 = vmatprep.subr.bf16.mxu0 %v7505
    %8295 = vmatpush1.bf16.msra.mxu0 %v7504
    %8296 = vmatprep.mubr.bf16.mxu0 %v5854
    %8297 = vmatmul.mubr.bf16.gmra.mrb[0].mxu0 %v5853
    %v8298 = vpop.f32.mrb[0].mxu0
    %v8299 = vadd.f32 %v6273, %v8298
    %v8300 = vpop.f32.mrb[0].mxu0
    %v8301 = vadd.f32 %v6277, %v8300
    %v8302 = vpop.f32.mrb[0].mxu0
    %v8303 = vpop.f32.mrb[0].mxu0
    %8304 = vdwg.mxu0
    %8305 = vmatprep.subr.bf16.mxu0 %v7512
    %8306 = vmatpush1.bf16.msra.mxu0 %v7511
    %8307 = vmatprep.subr.bf16.mxu0 %v7519
    %8308 = vmatpush1.bf16.msra.mxu0 %v7518
    %8309 = vmatprep.subr.bf16.mxu0 %v7526
    %8310 = vmatpush1.bf16.msra.mxu0 %v7525
    %8311 = vmatprep.subr.bf16.mxu0 %v7533
    %8312 = vmatpush1.bf16.msra.mxu0 %v7532
    %8313 = vmatprep.subr.bf16.mxu0 %v7540
    %8314 = vmatpush1.bf16.msra.mxu0 %v7539
    %8315 = vmatprep.subr.bf16.mxu0 %v7547
    %8316 = vmatpush1.bf16.msra.mxu0 %v7546
    %8317 = vmatprep.subr.bf16.mxu0 %v7554
    %8318 = vmatpush1.bf16.msra.mxu0 %v7553
    %8319 = vmatprep.subr.bf16.mxu0 %v7561
    %8320 = vmatpush1.bf16.msra.mxu0 %v7560
    %8321 = vmatprep.subr.bf16.mxu0 %v7568
    %8322 = vmatpush1.bf16.msra.mxu0 %v7567
    %8323 = vmatprep.subr.bf16.mxu0 %v7575
    %8324 = vmatpush1.bf16.msra.mxu0 %v7574
    %8325 = vmatprep.subr.bf16.mxu0 %v7582
    %8326 = vmatpush1.bf16.msra.mxu0 %v7581
    %8327 = vmatprep.subr.bf16.mxu0 %v7589
    %8328 = vmatpush1.bf16.msra.mxu0 %v7588
    %8329 = vmatprep.subr.bf16.mxu0 %v7596
    %8330 = vmatpush1.bf16.msra.mxu0 %v7595
    %8331 = vmatprep.subr.bf16.mxu0 %v7603
    %8332 = vmatpush1.bf16.msra.mxu0 %v7602
    %8333 = vmatprep.subr.bf16.mxu0 %v7610
    %8334 = vmatpush1.bf16.msra.mxu0 %v7609
    %8335 = vmatprep.subr.bf16.mxu0 %v7617
    %8336 = vmatpush1.bf16.msra.mxu0 %v7616
    %8337 = vmatprep.mubr.bf16.mxu0 %v5856
    %8338 = vmatmul.mubr.bf16.gmra.mrb[0].mxu0 %v5855
    %v8339 = vpop.f32.mrb[0].mxu0
    %v8340 = vadd.f32 %v8299, %v8339
    %v8341 = vpop.f32.mrb[0].mxu0
    %v8342 = vadd.f32 %v8301, %v8341
    %v8343 = vpop.f32.mrb[0].mxu0
    %v8344 = vpop.f32.mrb[0].mxu0
    %8345 = vdwg.mxu0
    %8346 = vmatprep.subr.bf16.mxu0 %v7624
    %8347 = vmatpush1.bf16.msra.mxu0 %v7623
    %8348 = vmatprep.subr.bf16.mxu0 %v7631
    %8349 = vmatpush1.bf16.msra.mxu0 %v7630
    %8350 = vmatprep.subr.bf16.mxu0 %v7638
    %8351 = vmatpush1.bf16.msra.mxu0 %v7637
    %8352 = vmatprep.subr.bf16.mxu0 %v7645
    %8353 = vmatpush1.bf16.msra.mxu0 %v7644
    %8354 = vmatprep.subr.bf16.mxu0 %v7652
    %8355 = vmatpush1.bf16.msra.mxu0 %v7651
    %8356 = vmatprep.subr.bf16.mxu0 %v7659
    %8357 = vmatpush1.bf16.msra.mxu0 %v7658
    %8358 = vmatprep.subr.bf16.mxu0 %v7666
    %8359 = vmatpush1.bf16.msra.mxu0 %v7665
    %8360 = vmatprep.subr.bf16.mxu0 %v7673
    %8361 = vmatpush1.bf16.msra.mxu0 %v7672
    %8362 = vmatprep.subr.bf16.mxu0 %v7680
    %8363 = vmatpush1.bf16.msra.mxu0 %v7679
    %8364 = vmatprep.subr.bf16.mxu0 %v7687
    %8365 = vmatpush1.bf16.msra.mxu0 %v7686
    %8366 = vmatprep.subr.bf16.mxu0 %v7694
    %8367 = vmatpush1.bf16.msra.mxu0 %v7693
    %8368 = vmatprep.subr.bf16.mxu0 %v7701
    %8369 = vmatpush1.bf16.msra.mxu0 %v7700
    %8370 = vmatprep.subr.bf16.mxu0 %v7708
    %8371 = vmatpush1.bf16.msra.mxu0 %v7707
    %8372 = vmatprep.subr.bf16.mxu0 %v7715
    %8373 = vmatpush1.bf16.msra.mxu0 %v7714
    %8374 = vmatprep.subr.bf16.mxu0 %v7722
    %8375 = vmatpush1.bf16.msra.mxu0 %v7721
    %8376 = vmatprep.subr.bf16.mxu0 %v7729
    %8377 = vmatpush1.bf16.msra.mxu0 %v7728
    %8378 = vmatprep.mubr.bf16.mxu0 %v5858
    %8379 = vmatmul.mubr.bf16.gmra.mrb[0].mxu0 %v5857
    %v8380 = vpop.f32.mrb[0].mxu0
    %v8381 = vadd.f32 %v8340, %v8380
    %v8382 = vpop.f32.mrb[0].mxu0
    %v8383 = vadd.f32 %v8342, %v8382
    %v8384 = vpop.f32.mrb[0].mxu0
    %v8385 = vpop.f32.mrb[0].mxu0
    %8386 = vdwg.mxu0
    %8387 = vmatprep.subr.bf16.mxu0 %v7736
    %8388 = vmatpush1.bf16.msra.mxu0 %v7735
    %8389 = vmatprep.subr.bf16.mxu0 %v7743
    %8390 = vmatpush1.bf16.msra.mxu0 %v7742
    %8391 = vmatprep.subr.bf16.mxu0 0
    %8392 = vmatpush1.bf16.msra.mxu0 0
    %8393 = vmatprep.subr.bf16.mxu0 0
    %8394 = vmatpush1.bf16.msra.mxu0 0
    %8395 = vmatprep.subr.bf16.mxu0 0
    %8396 = vmatpush1.bf16.msra.mxu0 0
    %8397 = vmatprep.subr.bf16.mxu0 0
    %8398 = vmatpush1.bf16.msra.mxu0 0
    %8399 = vmatprep.subr.bf16.mxu0 0
    %8400 = vmatpush1.bf16.msra.mxu0 0
    %8401 = vmatprep.subr.bf16.mxu0 0
    %8402 = vmatpush1.bf16.msra.mxu0 0
    %8403 = vmatprep.subr.bf16.mxu0 0
    %8404 = vmatpush1.bf16.msra.mxu0 0
    %8405 = vmatprep.subr.bf16.mxu0 0
    %8406 = vmatpush1.bf16.msra.mxu0 0
    %8407 = vmatprep.subr.bf16.mxu0 0
    %8408 = vmatpush1.bf16.msra.mxu0 0
    %8409 = vmatprep.subr.bf16.mxu0 0
    %8410 = vmatpush1.bf16.msra.mxu0 0
    %8411 = vmatprep.subr.bf16.mxu0 0
    %8412 = vmatpush1.bf16.msra.mxu0 0
    %8413 = vmatprep.subr.bf16.mxu0 0
    %8414 = vmatpush1.bf16.msra.mxu0 0
    %8415 = vmatprep.subr.bf16.mxu0 0
    %8416 = vmatpush1.bf16.msra.mxu0 0
    %8417 = vmatprep.subr.bf16.mxu0 0
    %8418 = vmatpush1.bf16.msra.mxu0 0
    %8419 = vmatprep.mubr.bf16.mxu0 0
    %8420 = vmatmul.mubr.bf16.gmra.mrb[0].mxu0 %v8098
    %v8421 = vpop.f32.mrb[0].mxu0
    %v8422 = vadd.f32 %v8381, %v8421
    %v8423 = vpop.f32.mrb[0].mxu0
    %v8424 = vadd.f32 %v8383, %v8423
    %v8425 = vpop.f32.mrb[0].mxu0
    %v8426 = vpop.f32.mrb[0].mxu0
    %8427 = vdwg.mxu0
    %8428 = vmatprep.subr.bf16.mxu0 %v7402
    %8429 = vmatpush1.bf16.msra.mxu0 %v7401
    %8430 = vmatprep.subr.bf16.mxu0 %v7409
    %8431 = vmatpush1.bf16.msra.mxu0 %v7408
    %8432 = vmatprep.subr.bf16.mxu0 %v7416
    %8433 = vmatpush1.bf16.msra.mxu0 %v7415
    %8434 = vmatprep.subr.bf16.mxu0 %v7423
    %8435 = vmatpush1.bf16.msra.mxu0 %v7422
    %8436 = vmatprep.subr.bf16.mxu0 %v7430
    %8437 = vmatpush1.bf16.msra.mxu0 %v7429
    %8438 = vmatprep.subr.bf16.mxu0 %v7437
    %8439 = vmatpush1.bf16.msra.mxu0 %v7436
    %8440 = vmatprep.subr.bf16.mxu0 %v7444
    %8441 = vmatpush1.bf16.msra.mxu0 %v7443
    %8442 = vmatprep.subr.bf16.mxu0 %v7451
    %8443 = vmatpush1.bf16.msra.mxu0 %v7450
    %8444 = vmatprep.subr.bf16.mxu0 %v7458
    %8445 = vmatpush1.bf16.msra.mxu0 %v7457
    %8446 = vmatprep.subr.bf16.mxu0 %v7465
    %8447 = vmatpush1.bf16.msra.mxu0 %v7464
    %8448 = vmatprep.subr.bf16.mxu0 %v7472
    %8449 = vmatpush1.bf16.msra.mxu0 %v7471
    %8450 = vmatprep.subr.bf16.mxu0 %v7479
    %8451 = vmatpush1.bf16.msra.mxu0 %v7478
    %8452 = vmatprep.subr.bf16.mxu0 %v7486
    %8453 = vmatpush1.bf16.msra.mxu0 %v7485
    %8454 = vmatprep.subr.bf16.mxu0 %v7493
    %8455 = vmatpush1.bf16.msra.mxu0 %v7492
    %8456 = vmatprep.subr.bf16.mxu0 %v7500
    %8457 = vmatpush1.bf16.msra.mxu0 %v7499
    %8458 = vmatprep.subr.bf16.mxu0 %v7507
    %8459 = vmatpush1.bf16.msra.mxu0 %v7506
    %8460 = vmatprep.mubr.bf16.mxu0 %v5854
    %8461 = vmatmul.mubr.bf16.gmra.mrb[0].mxu0 %v5853
    %v8462 = vpop.f32.mrb[0].mxu0
    %v8463 = vadd.f32 %v6281, %v8462
    %v8464 = vpop.f32.mrb[0].mxu0
    %v8465 = vadd.f32 %v6285, %v8464
    %v8466 = vpop.f32.mrb[0].mxu0
    %v8467 = vpop.f32.mrb[0].mxu0
    %8468 = vdwg.mxu0
    %8469 = vmatprep.subr.bf16.mxu0 %v7514
    %8470 = vmatpush1.bf16.msra.mxu0 %v7513
    %8471 = vmatprep.subr.bf16.mxu0 %v7521
    %8472 = vmatpush1.bf16.msra.mxu0 %v7520
    %8473 = vmatprep.subr.bf16.mxu0 %v7528
    %8474 = vmatpush1.bf16.msra.mxu0 %v7527
    %8475 = vmatprep.subr.bf16.mxu0 %v7535
    %8476 = vmatpush1.bf16.msra.mxu0 %v7534
    %8477 = vmatprep.subr.bf16.mxu0 %v7542
    %8478 = vmatpush1.bf16.msra.mxu0 %v7541
    %8479 = vmatprep.subr.bf16.mxu0 %v7549
    %8480 = vmatpush1.bf16.msra.mxu0 %v7548
    %8481 = vmatprep.subr.bf16.mxu0 %v7556
    %8482 = vmatpush1.bf16.msra.mxu0 %v7555
    %8483 = vmatprep.subr.bf16.mxu0 %v7563
    %8484 = vmatpush1.bf16.msra.mxu0 %v7562
    %8485 = vmatprep.subr.bf16.mxu0 %v7570
    %8486 = vmatpush1.bf16.msra.mxu0 %v7569
    %8487 = vmatprep.subr.bf16.mxu0 %v7577
    %8488 = vmatpush1.bf16.msra.mxu0 %v7576
    %8489 = vmatprep.subr.bf16.mxu0 %v7584
    %8490 = vmatpush1.bf16.msra.mxu0 %v7583
    %8491 = vmatprep.subr.bf16.mxu0 %v7591
    %8492 = vmatpush1.bf16.msra.mxu0 %v7590
    %8493 = vmatprep.subr.bf16.mxu0 %v7598
    %8494 = vmatpush1.bf16.msra.mxu0 %v7597
    %8495 = vmatprep.subr.bf16.mxu0 %v7605
    %8496 = vmatpush1.bf16.msra.mxu0 %v7604
    %8497 = vmatprep.subr.bf16.mxu0 %v7612
    %8498 = vmatpush1.bf16.msra.mxu0 %v7611
    %8499 = vmatprep.subr.bf16.mxu0 %v7619
    %8500 = vmatpush1.bf16.msra.mxu0 %v7618
    %8501 = vmatprep.mubr.bf16.mxu0 %v5856
    %8502 = vmatmul.mubr.bf16.gmra.mrb[0].mxu0 %v5855
    %v8503 = vpop.f32.mrb[0].mxu0
    %v8504 = vadd.f32 %v8463, %v8503
    %v8505 = vpop.f32.mrb[0].mxu0
    %v8506 = vadd.f32 %v8465, %v8505
    %v8507 = vpop.f32.mrb[0].mxu0
    %v8508 = vpop.f32.mrb[0].mxu0
    %8509 = vdwg.mxu0
    %8510 = vmatprep.subr.bf16.mxu0 %v7626
    %8511 = vmatpush1.bf16.msra.mxu0 %v7625
    %8512 = vmatprep.subr.bf16.mxu0 %v7633
    %8513 = vmatpush1.bf16.msra.mxu0 %v7632
    %8514 = vmatprep.subr.bf16.mxu0 %v7640
    %8515 = vmatpush1.bf16.msra.mxu0 %v7639
    %8516 = vmatprep.subr.bf16.mxu0 %v7647
    %8517 = vmatpush1.bf16.msra.mxu0 %v7646
    %8518 = vmatprep.subr.bf16.mxu0 %v7654
    %8519 = vmatpush1.bf16.msra.mxu0 %v7653
    %8520 = vmatprep.subr.bf16.mxu0 %v7661
    %8521 = vmatpush1.bf16.msra.mxu0 %v7660
    %8522 = vmatprep.subr.bf16.mxu0 %v7668
    %8523 = vmatpush1.bf16.msra.mxu0 %v7667
    %8524 = vmatprep.subr.bf16.mxu0 %v7675
    %8525 = vmatpush1.bf16.msra.mxu0 %v7674
    %8526 = vmatprep.subr.bf16.mxu0 %v7682
    %8527 = vmatpush1.bf16.msra.mxu0 %v7681
    %8528 = vmatprep.subr.bf16.mxu0 %v7689
    %8529 = vmatpush1.bf16.msra.mxu0 %v7688
    %8530 = vmatprep.subr.bf16.mxu0 %v7696
    %8531 = vmatpush1.bf16.msra.mxu0 %v7695
    %8532 = vmatprep.subr.bf16.mxu0 %v7703
    %8533 = vmatpush1.bf16.msra.mxu0 %v7702
    %8534 = vmatprep.subr.bf16.mxu0 %v7710
    %8535 = vmatpush1.bf16.msra.mxu0 %v7709
    %8536 = vmatprep.subr.bf16.mxu0 %v7717
    %8537 = vmatpush1.bf16.msra.mxu0 %v7716
    %8538 = vmatprep.subr.bf16.mxu0 %v7724
    %8539 = vmatpush1.bf16.msra.mxu0 %v7723
    %8540 = vmatprep.subr.bf16.mxu0 %v7731
    %8541 = vmatpush1.bf16.msra.mxu0 %v7730
    %8542 = vmatprep.mubr.bf16.mxu0 %v5858
    %8543 = vmatmul.mubr.bf16.gmra.mrb[0].mxu0 %v5857
    %v8544 = vpop.f32.mrb[0].mxu0
    %v8545 = vadd.f32 %v8504, %v8544
    %v8546 = vpop.f32.mrb[0].mxu0
    %v8547 = vadd.f32 %v8506, %v8546
    %v8548 = vpop.f32.mrb[0].mxu0
    %v8549 = vpop.f32.mrb[0].mxu0
    %8550 = vdwg.mxu0
    %8551 = vmatprep.subr.bf16.mxu0 %v7738
    %8552 = vmatpush1.bf16.msra.mxu0 %v7737
    %8553 = vmatprep.subr.bf16.mxu0 %v7745
    %8554 = vmatpush1.bf16.msra.mxu0 %v7744
    %8555 = vmatprep.subr.bf16.mxu0 0
    %8556 = vmatpush1.bf16.msra.mxu0 0
    %8557 = vmatprep.subr.bf16.mxu0 0
    %8558 = vmatpush1.bf16.msra.mxu0 0
    %8559 = vmatprep.subr.bf16.mxu0 0
    %8560 = vmatpush1.bf16.msra.mxu0 0
    %8561 = vmatprep.subr.bf16.mxu0 0
    %8562 = vmatpush1.bf16.msra.mxu0 0
    %8563 = vmatprep.subr.bf16.mxu0 0
    %8564 = vmatpush1.bf16.msra.mxu0 0
    %8565 = vmatprep.subr.bf16.mxu0 0
    %8566 = vmatpush1.bf16.msra.mxu0 0
    %8567 = vmatprep.subr.bf16.mxu0 0
    %8568 = vmatpush1.bf16.msra.mxu0 0
    %8569 = vmatprep.subr.bf16.mxu0 0
    %8570 = vmatpush1.bf16.msra.mxu0 0
    %8571 = vmatprep.subr.bf16.mxu0 0
    %8572 = vmatpush1.bf16.msra.mxu0 0
    %8573 = vmatprep.subr.bf16.mxu0 0
    %8574 = vmatpush1.bf16.msra.mxu0 0
    %8575 = vmatprep.subr.bf16.mxu0 0
    %8576 = vmatpush1.bf16.msra.mxu0 0
    %8577 = vmatprep.subr.bf16.mxu0 0
    %8578 = vmatpush1.bf16.msra.mxu0 0
    %8579 = vmatprep.subr.bf16.mxu0 0
    %8580 = vmatpush1.bf16.msra.mxu0 0
    %8581 = vmatprep.subr.bf16.mxu0 0
    %8582 = vmatpush1.bf16.msra.mxu0 0
    %8583 = vmatprep.mubr.bf16.mxu0 0
    %8584 = vmatmul.mubr.bf16.gmra.mrb[0].mxu0 %v8098
    %v8585 = vpop.f32.mrb[0].mxu0
    %v8586 = vadd.f32 %v8545, %v8585
    %v8587 = vpop.f32.mrb[0].mxu0
    %v8588 = vadd.f32 %v8547, %v8587
    %v8589 = vpop.f32.mrb[0].mxu0
    %v8590 = vpop.f32.mrb[0].mxu0
    %8591 = vdwg.mxu0
    %8592 = vmatprep.subr.bf16.mxu0 0
    %8593 = vmatpush1.bf16.msra.mxu0 %v7403
    %8594 = vmatprep.subr.bf16.mxu0 0
    %8595 = vmatpush1.bf16.msra.mxu0 %v7410
    %8596 = vmatprep.subr.bf16.mxu0 0
    %8597 = vmatpush1.bf16.msra.mxu0 %v7417
    %8598 = vmatprep.subr.bf16.mxu0 0
    %8599 = vmatpush1.bf16.msra.mxu0 %v7424
    %8600 = vmatprep.subr.bf16.mxu0 0
    %8601 = vmatpush1.bf16.msra.mxu0 %v7431
    %8602 = vmatprep.subr.bf16.mxu0 0
    %8603 = vmatpush1.bf16.msra.mxu0 %v7438
    %8604 = vmatprep.subr.bf16.mxu0 0
    %8605 = vmatpush1.bf16.msra.mxu0 %v7445
    %8606 = vmatprep.subr.bf16.mxu0 0
    %8607 = vmatpush1.bf16.msra.mxu0 %v7452
    %8608 = vmatprep.subr.bf16.mxu0 0
    %8609 = vmatpush1.bf16.msra.mxu0 %v7459
    %8610 = vmatprep.subr.bf16.mxu0 0
    %8611 = vmatpush1.bf16.msra.mxu0 %v7466
    %8612 = vmatprep.subr.bf16.mxu0 0
    %8613 = vmatpush1.bf16.msra.mxu0 %v7473
    %8614 = vmatprep.subr.bf16.mxu0 0
    %8615 = vmatpush1.bf16.msra.mxu0 %v7480
    %8616 = vmatprep.subr.bf16.mxu0 0
    %8617 = vmatpush1.bf16.msra.mxu0 %v7487
    %8618 = vmatprep.subr.bf16.mxu0 0
    %8619 = vmatpush1.bf16.msra.mxu0 %v7494
    %8620 = vmatprep.subr.bf16.mxu0 0
    %8621 = vmatpush1.bf16.msra.mxu0 %v7501
    %8622 = vmatprep.subr.bf16.mxu0 0
    %8623 = vmatpush1.bf16.msra.mxu0 %v7508
    %8624 = vmatprep.mubr.bf16.mxu0 %v5854
    %8625 = vmatmul.mubr.bf16.gmra.mrb[0].mxu0 %v5853
    %v8626 = vpop.f32.mrb[0].mxu0
    %v8627 = vadd.f32 %v6289, %v8626
    %v8628 = vpop.f32.mrb[0].mxu0
    %v8629 = vpop.f32.mrb[0].mxu0
    %v8630 = vpop.f32.mrb[0].mxu0
    %8631 = vdwg.mxu0
    %8632 = vmatprep.subr.bf16.mxu0 0
    %8633 = vmatpush1.bf16.msra.mxu0 %v7515
    %8634 = vmatprep.subr.bf16.mxu0 0
    %8635 = vmatpush1.bf16.msra.mxu0 %v7522
    %8636 = vmatprep.subr.bf16.mxu0 0
    %8637 = vmatpush1.bf16.msra.mxu0 %v7529
    %8638 = vmatprep.subr.bf16.mxu0 0
    %8639 = vmatpush1.bf16.msra.mxu0 %v7536
    %8640 = vmatprep.subr.bf16.mxu0 0
    %8641 = vmatpush1.bf16.msra.mxu0 %v7543
    %8642 = vmatprep.subr.bf16.mxu0 0
    %8643 = vmatpush1.bf16.msra.mxu0 %v7550
    %8644 = vmatprep.subr.bf16.mxu0 0
    %8645 = vmatpush1.bf16.msra.mxu0 %v7557
    %8646 = vmatprep.subr.bf16.mxu0 0
    %8647 = vmatpush1.bf16.msra.mxu0 %v7564
    %8648 = vmatprep.subr.bf16.mxu0 0
    %8649 = vmatpush1.bf16.msra.mxu0 %v7571
    %8650 = vmatprep.subr.bf16.mxu0 0
    %8651 = vmatpush1.bf16.msra.mxu0 %v7578
    %8652 = vmatprep.subr.bf16.mxu0 0
    %8653 = vmatpush1.bf16.msra.mxu0 %v7585
    %8654 = vmatprep.subr.bf16.mxu0 0
    %8655 = vmatpush1.bf16.msra.mxu0 %v7592
    %8656 = vmatprep.subr.bf16.mxu0 0
    %8657 = vmatpush1.bf16.msra.mxu0 %v7599
    %8658 = vmatprep.subr.bf16.mxu0 0
    %8659 = vmatpush1.bf16.msra.mxu0 %v7606
    %8660 = vmatprep.subr.bf16.mxu0 0
    %8661 = vmatpush1.bf16.msra.mxu0 %v7613
    %8662 = vmatprep.subr.bf16.mxu0 0
    %8663 = vmatpush1.bf16.msra.mxu0 %v7620
    %8664 = vmatprep.mubr.bf16.mxu0 %v5856
    %8665 = vmatmul.mubr.bf16.gmra.mrb[0].mxu0 %v5855
    %v8666 = vpop.f32.mrb[0].mxu0
    %v8667 = vadd.f32 %v8627, %v8666
    %v8668 = vpop.f32.mrb[0].mxu0
    %v8669 = vpop.f32.mrb[0].mxu0
    %v8670 = vpop.f32.mrb[0].mxu0
    %8671 = vdwg.mxu0
    %8672 = vmatprep.subr.bf16.mxu0 0
    %8673 = vmatpush1.bf16.msra.mxu0 %v7627
    %8674 = vmatprep.subr.bf16.mxu0 0
    %8675 = vmatpush1.bf16.msra.mxu0 %v7634
    %8676 = vmatprep.subr.bf16.mxu0 0
    %8677 = vmatpush1.bf16.msra.mxu0 %v7641
    %8678 = vmatprep.subr.bf16.mxu0 0
    %8679 = vmatpush1.bf16.msra.mxu0 %v7648
    %8680 = vmatprep.subr.bf16.mxu0 0
    %8681 = vmatpush1.bf16.msra.mxu0 %v7655
    %8682 = vmatprep.subr.bf16.mxu0 0
    %8683 = vmatpush1.bf16.msra.mxu0 %v7662
    %8684 = vmatprep.subr.bf16.mxu0 0
    %8685 = vmatpush1.bf16.msra.mxu0 %v7669
    %8686 = vmatprep.subr.bf16.mxu0 0
    %8687 = vmatpush1.bf16.msra.mxu0 %v7676
    %8688 = vmatprep.subr.bf16.mxu0 0
    %8689 = vmatpush1.bf16.msra.mxu0 %v7683
    %8690 = vmatprep.subr.bf16.mxu0 0
    %8691 = vmatpush1.bf16.msra.mxu0 %v7690
    %8692 = vmatprep.subr.bf16.mxu0 0
    %8693 = vmatpush1.bf16.msra.mxu0 %v7697
    %8694 = vmatprep.subr.bf16.mxu0 0
    %8695 = vmatpush1.bf16.msra.mxu0 %v7704
    %8696 = vmatprep.subr.bf16.mxu0 0
    %8697 = vmatpush1.bf16.msra.mxu0 %v7711
    %8698 = vmatprep.subr.bf16.mxu0 0
    %8699 = vmatpush1.bf16.msra.mxu0 %v7718
    %8700 = vmatprep.subr.bf16.mxu0 0
    %8701 = vmatpush1.bf16.msra.mxu0 %v7725
    %8702 = vmatprep.subr.bf16.mxu0 0
    %8703 = vmatpush1.bf16.msra.mxu0 %v7732
    %8704 = vmatprep.mubr.bf16.mxu0 %v5858
    %8705 = vmatmul.mubr.bf16.gmra.mrb[0].mxu0 %v5857
    %v8706 = vpop.f32.mrb[0].mxu0
    %v8707 = vadd.f32 %v8667, %v8706
    %v8708 = vpop.f32.mrb[0].mxu0
    %v8709 = vpop.f32.mrb[0].mxu0
    %v8710 = vpop.f32.mrb[0].mxu0
    %8711 = vdwg.mxu0
    %8712 = vmatprep.subr.bf16.mxu0 0
    %8713 = vmatpush1.bf16.msra.mxu0 %v7739
    %8714 = vmatprep.subr.bf16.mxu0 0
    %8715 = vmatpush1.bf16.msra.mxu0 %v7746
    %8716 = vmatprep.subr.bf16.mxu0 0
    %8717 = vmatpush1.bf16.msra.mxu0 0
    %8718 = vmatprep.subr.bf16.mxu0 0
    %8719 = vmatpush1.bf16.msra.mxu0 0
    %8720 = vmatprep.subr.bf16.mxu0 0
    %8721 = vmatpush1.bf16.msra.mxu0 0
    %8722 = vmatprep.subr.bf16.mxu0 0
    %8723 = vmatpush1.bf16.msra.mxu0 0
    %8724 = vmatprep.subr.bf16.mxu0 0
    %8725 = vmatpush1.bf16.msra.mxu0 0
    %8726 = vmatprep.subr.bf16.mxu0 0
    %8727 = vmatpush1.bf16.msra.mxu0 0
    %8728 = vmatprep.subr.bf16.mxu0 0
    %8729 = vmatpush1.bf16.msra.mxu0 0
    %8730 = vmatprep.subr.bf16.mxu0 0
    %8731 = vmatpush1.bf16.msra.mxu0 0
    %8732 = vmatprep.subr.bf16.mxu0 0
    %8733 = vmatpush1.bf16.msra.mxu0 0
    %8734 = vmatprep.subr.bf16.mxu0 0
    %8735 = vmatpush1.bf16.msra.mxu0 0
    %8736 = vmatprep.subr.bf16.mxu0 0
    %8737 = vmatpush1.bf16.msra.mxu0 0
    %8738 = vmatprep.subr.bf16.mxu0 0
    %8739 = vmatpush1.bf16.msra.mxu0 0
    %8740 = vmatprep.subr.bf16.mxu0 0
    %8741 = vmatpush1.bf16.msra.mxu0 0
    %8742 = vmatprep.subr.bf16.mxu0 0
    %8743 = vmatpush1.bf16.msra.mxu0 0
    %8744 = vmatprep.mubr.bf16.mxu0 0
    %8745 = vmatmul.mubr.bf16.gmra.mrb[0].mxu0 %v8098
    %v8746 = vpop.f32.mrb[0].mxu0
    %v8747 = vadd.f32 %v8707, %v8746
    %v8748 = vpop.f32.mrb[0].mxu0
    %v8749 = vpop.f32.mrb[0].mxu0
    %v8750 = vpop.f32.mrb[0].mxu0
    %8751 = vdwg.mxu0
    %v8752 = vtanh.pop %v8258
    %v8753 = vtanh.pop %v8260
    %v8754 = vtanh.pop %v8422
    %v8755 = vtanh.pop %v8424
    %v8756 = vtanh.pop %v8586
    %v8757 = vtanh.pop %v8588
    %v8758 = vtanh.pop %v8747
    %v8759 = vld [vmem:[%s7] sm:$0xff]
    %v8760 = vld [vmem:[%s7 + $0x8] sm:$0xff]
    %v8761 = vld [vmem:[%s7 + $0x10] sm:$0xff]
    %v8762 = vld [vmem:[%s7 + $0x18] sm:$0xff]
    %v8763 = vld [vmem:[%s7 + $0x20] sm:$0xff]
    %v8764 = vld [vmem:[%s7 + $0x28] sm:$0xff]
    %v8765 = vld [vmem:[%s7 + $0x30] sm:$0xff]
    %v8766 = vld [vmem:[%s7 + $0x38] sm:$0xff]
    %v8767 = vld [vmem:[%s7 + $0x40] sm:$0xff]
    %v8768 = vld [vmem:[%s7 + $0x48] sm:$0xff]
    %v8769 = vld [vmem:[%s7 + $0x50] sm:$0xff]
    %v8770 = vld [vmem:[%s7 + $0x58] sm:$0xff]
    %v8771 = vld [vmem:[%s7 + $0x60] sm:$0xff]
    %v8772 = vld [vmem:[%s7 + $0x68] sm:$0xff]
    %v8773 = vld [vmem:[%s7 + $0x70] sm:$0xff]
    %v8774 = vld [vmem:[%s7 + $0x78] sm:$0xff]
    %v8775 = vld [vmem:[%s7 + $0x80] sm:$0xff]
    %v8776 = vld [vmem:[%s7 + $0x88] sm:$0xff]
    %v8777 = vld [vmem:[%s7 + $0x90] sm:$0xff]
    %v8778 = vld [vmem:[%s7 + $0x98] sm:$0xff]
    %v8779 = vld [vmem:[%s7 + $0xa0] sm:$0xff]
    %v8780 = vld [vmem:[%s7 + $0xa8] sm:$0xff]
    %v8781 = vld [vmem:[%s7 + $0xb0] sm:$0xff]
    %v8782 = vld [vmem:[%s7 + $0xb8] sm:$0xff]
    %v8783 = vld [vmem:[%s7 + $0xc0] sm:$0xff]
    %v8784 = vld [vmem:[%s7 + $0xc8] sm:$0xff]
    %v8785 = vld [vmem:[%s7 + $0xd0] sm:$0xff]
    %v8786 = vld [vmem:[%s7 + $0xd8] sm:$0xff]
    %v8787 = vld [vmem:[%s7 + $0xe0] sm:$0xff]
    %v8788 = vld [vmem:[%s7 + $0xe8] sm:$0xff]
    %v8789 = vld [vmem:[%s7 + $0xf0] sm:$0xff]
    %v8790 = vld [vmem:[%s7 + $0xf8] sm:$0xff]
    %v8791 = vld [vmem:[%s7 + $0x100] sm:$0xff]
    %v8792 = vld [vmem:[%s7 + $0x108] sm:$0xff]
    %v8793 = vld [vmem:[%s7 + $0x110] sm:$0xff]
    %v8794 = vld [vmem:[%s7 + $0x118] sm:$0xff]
    %v8795 = vld [vmem:[%s7 + $0x120] sm:$0xff]
    %v8796 = vld [vmem:[%s7 + $0x128] sm:$0xff]
    %v8797 = vld [vmem:[%s7 + $0x130] sm:$0xff]
    %v8798 = vld [vmem:[%s7 + $0x138] sm:$0xff]
    %v8799 = vld [vmem:[%s7 + $0x140] sm:$0xff]
    %v8800 = vld [vmem:[%s7 + $0x148] sm:$0xff]
    %v8801 = vld [vmem:[%s7 + $0x150] sm:$0xff]
    %v8802 = vld [vmem:[%s7 + $0x158] sm:$0xff]
    %v8803 = vld [vmem:[%s7 + $0x160] sm:$0xff]
    %v8804 = vld [vmem:[%s7 + $0x168] sm:$0xff]
    %v8805 = vld [vmem:[%s7 + $0x170] sm:$0xff]
    %v8806 = vld [vmem:[%s7 + $0x178] sm:$0xff]
    %v8807 = vld [vmem:[%s7 + $0x180] sm:$0xff]
    %v8808 = vld [vmem:[%s7 + $0x188] sm:$0xff]
    %v8809 = vld [vmem:[%s7 + $0x190] sm:$0xff]
    %v8810 = vld [vmem:[%s7 + $0x198] sm:$0xff]
    %v8811 = vld [vmem:[%s7 + $0x1a0] sm:$0xff]
    %v8812 = vld [vmem:[%s7 + $0x1a8] sm:$0xff]
    %v8813 = vld [vmem:[%s7 + $0x1b0] sm:$0xff]
    %v8814 = vld [vmem:[%s7 + $0x1b8] sm:$0xff]
    %v8815 = vld [vmem:[%s7 + $0x1c0] sm:$0xff]
    %v8816 = vld [vmem:[%s7 + $0x1c8] sm:$0xff]
    %v8817 = vld [vmem:[%s7 + $0x1d0] sm:$0xff]
    %v8818 = vld [vmem:[%s7 + $0x1d8] sm:$0xff]
    %v8819 = vld [vmem:[%s7 + $0x1e0] sm:$0xff]
    %v8820 = vld [vmem:[%s7 + $0x1e8] sm:$0xff]
    %v8821 = vld [vmem:[%s7 + $0x1f0] sm:$0xff]
    %v8822 = vld [vmem:[%s7 + $0x1f8] sm:$0xff]
    %v8823 = vld [vmem:[%s7 + $0x200] sm:$0xff]
    %v8824 = vld [vmem:[%s7 + $0x208] sm:$0xff]
    %v8825 = vld [vmem:[%s7 + $0x210] sm:$0xff]
    %v8826 = vld [vmem:[%s7 + $0x218] sm:$0xff]
    %v8827 = vld [vmem:[%s7 + $0x220] sm:$0xff]
    %v8828 = vld [vmem:[%s7 + $0x228] sm:$0xff]
    %v8829 = vld [vmem:[%s7 + $0x230] sm:$0xff]
    %v8830 = vld [vmem:[%s7 + $0x238] sm:$0xff]
    %v8831 = vld [vmem:[%s7 + $0x240] sm:$0xff]
    %v8832 = vld [vmem:[%s7 + $0x248] sm:$0xff]
    %v8833 = vld [vmem:[%s7 + $0x250] sm:$0xff]
    %v8834 = vld [vmem:[%s7 + $0x258] sm:$0xff]
    %v8835 = vld [vmem:[%s7 + $0x260] sm:$0xff]
    %v8836 = vld [vmem:[%s7 + $0x268] sm:$0xff]
    %v8837 = vld [vmem:[%s7 + $0x270] sm:$0xff]
    %v8838 = vld [vmem:[%s7 + $0x278] sm:$0xff]
    %v8839 = vld [vmem:[%s7 + $0x280] sm:$0xff]
    %v8840 = vld [vmem:[%s7 + $0x288] sm:$0xff]
    %v8841 = vld [vmem:[%s7 + $0x290] sm:$0xff]
    %v8842 = vld [vmem:[%s7 + $0x298] sm:$0xff]
    %v8843 = vld [vmem:[%s7 + $0x2a0] sm:$0xff]
    %v8844 = vld [vmem:[%s7 + $0x2a8] sm:$0xff]
    %v8845 = vld [vmem:[%s7 + $0x2b0] sm:$0xff]
    %v8846 = vld [vmem:[%s7 + $0x2b8] sm:$0xff]
    %v8847 = vld [vmem:[%s7 + $0x2c0] sm:$0xff]
    %v8848 = vld [vmem:[%s7 + $0x2c8] sm:$0xff]
    %v8849 = vld [vmem:[%s7 + $0x2d0] sm:$0xff]
    %v8850 = vld [vmem:[%s7 + $0x2d8] sm:$0xff]
    %v8851 = vld [vmem:[%s7 + $0x2e0] sm:$0xff]
    %v8852 = vld [vmem:[%s7 + $0x2e8] sm:$0xff]
    %v8853 = vld [vmem:[%s7 + $0x2f0] sm:$0xff]
    %v8854 = vld [vmem:[%s7 + $0x2f8] sm:$0xff]
    %v8855 = vld [vmem:[%s7 + $0x300] sm:$0xff]
    %v8856 = vld [vmem:[%s7 + $0x308] sm:$0xff]
    %v8857 = vld [vmem:[%s7 + $0x310] sm:$0xff]
    %v8858 = vld [vmem:[%s7 + $0x318] sm:$0xff]
    %v8859 = vld [vmem:[%s8] sm:$0x1]
    %v8861 = vlaneseq
    %v8862 = vshrl.u32 %v8861, 7
    %v8863 = vsub.s32 0, %v8862
    %v8864 = vrot.slane %v8859, %v8863
    %v8867 = vsel %vm2291, %v8758, 0
    %8869 = vmatprep.subr.mxu0 0.0
    %8870 = vmatpush1.msra.mxu0 %v8759
    %8871 = vmatprep.subr.mxu0 0.0
    %8872 = vmatpush1.msra.mxu0 %v8760
    %8873 = vmatprep.subr.mxu0 0.0
    %8874 = vmatpush1.msra.mxu0 %v8761
    %8875 = vmatprep.subr.mxu0 0.0
    %8876 = vmatpush1.msra.mxu0 %v8762
    %8877 = vmatprep.subr.mxu0 0.0
    %8878 = vmatpush1.msra.mxu0 %v8763
    %8879 = vmatprep.subr.mxu0 0.0
    %8880 = vmatpush1.msra.mxu0 %v8764
    %8881 = vmatprep.subr.mxu0 0.0
    %8882 = vmatpush1.msra.mxu0 %v8765
    %8883 = vmatprep.subr.mxu0 0.0
    %8884 = vmatpush1.msra.mxu0 %v8766
    %8885 = vmatprep.subr.mxu0 0.0
    %8886 = vmatpush1.msra.mxu0 %v8767
    %8887 = vmatprep.subr.mxu0 0.0
    %8888 = vmatpush1.msra.mxu0 %v8768
    %8889 = vmatprep.subr.mxu0 0.0
    %8890 = vmatpush1.msra.mxu0 %v8769
    %8891 = vmatprep.subr.mxu0 0.0
    %8892 = vmatpush1.msra.mxu0 %v8770
    %8893 = vmatprep.subr.mxu0 0.0
    %8894 = vmatpush1.msra.mxu0 %v8771
    %8895 = vmatprep.subr.mxu0 0.0
    %8896 = vmatpush1.msra.mxu0 %v8772
    %8897 = vmatprep.subr.mxu0 0.0
    %8898 = vmatpush1.msra.mxu0 %v8773
    %8899 = vmatprep.subr.mxu0 0.0
    %8900 = vmatpush1.msra.mxu0 %v8774
    %8901 = vmatprep.subr.mxu0 0.0
    %8902 = vmatpush1.msra.mxu0 %v8775
    %8903 = vmatprep.subr.mxu0 0.0
    %8904 = vmatpush1.msra.mxu0 %v8776
    %8905 = vmatprep.subr.mxu0 0.0
    %8906 = vmatpush1.msra.mxu0 %v8777
    %8907 = vmatprep.subr.mxu0 0.0
    %8908 = vmatpush1.msra.mxu0 %v8778
    %8909 = vmatprep.subr.mxu0 0.0
    %8910 = vmatpush1.msra.mxu0 %v8779
    %8911 = vmatprep.subr.mxu0 0.0
    %8912 = vmatpush1.msra.mxu0 %v8780
    %8913 = vmatprep.subr.mxu0 0.0
    %8914 = vmatpush1.msra.mxu0 %v8781
    %8915 = vmatprep.subr.mxu0 0.0
    %8916 = vmatpush1.msra.mxu0 %v8782
    %8917 = vmatprep.subr.mxu0 0.0
    %8918 = vmatpush1.msra.mxu0 %v8783
    %8919 = vmatprep.subr.mxu0 0.0
    %8920 = vmatpush1.msra.mxu0 %v8784
    %8921 = vmatprep.subr.mxu0 0.0
    %8922 = vmatpush1.msra.mxu0 %v8785
    %8923 = vmatprep.subr.mxu0 0.0
    %8924 = vmatpush1.msra.mxu0 %v8786
    %8925 = vmatprep.subr.mxu0 0.0
    %8926 = vmatpush1.msra.mxu0 %v8787
    %8927 = vmatprep.subr.mxu0 0.0
    %8928 = vmatpush1.msra.mxu0 %v8788
    %8929 = vmatprep.subr.mxu0 0.0
    %8930 = vmatpush1.msra.mxu0 %v8789
    %8931 = vmatprep.subr.mxu0 0.0
    %8932 = vmatpush1.msra.mxu0 %v8790
    %8933 = vmatprep.mubr.f32.mxu0 %v8753
    %8934 = vmatmul.mubr.f32.gmra.mrb[0].mxu0 %v8752
    %v8935 = vpop.f32.mrb[0].mxu0
    %v8936 = vadd.f32 %v8864, %v8935
    %v8937 = vpop.f32.mrb[0].mxu0
    %8938 = vdwg.mxu0
    %8939 = vmatprep.subr.mxu0 0.0
    %8940 = vmatpush1.msra.mxu0 %v8791
    %8941 = vmatprep.subr.mxu0 0.0
    %8942 = vmatpush1.msra.mxu0 %v8792
    %8943 = vmatprep.subr.mxu0 0.0
    %8944 = vmatpush1.msra.mxu0 %v8793
    %8945 = vmatprep.subr.mxu0 0.0
    %8946 = vmatpush1.msra.mxu0 %v8794
    %8947 = vmatprep.subr.mxu0 0.0
    %8948 = vmatpush1.msra.mxu0 %v8795
    %8949 = vmatprep.subr.mxu0 0.0
    %8950 = vmatpush1.msra.mxu0 %v8796
    %8951 = vmatprep.subr.mxu0 0.0
    %8952 = vmatpush1.msra.mxu0 %v8797
    %8953 = vmatprep.subr.mxu0 0.0
    %8954 = vmatpush1.msra.mxu0 %v8798
    %8955 = vmatprep.subr.mxu0 0.0
    %8956 = vmatpush1.msra.mxu0 %v8799
    %8957 = vmatprep.subr.mxu0 0.0
    %8958 = vmatpush1.msra.mxu0 %v8800
    %8959 = vmatprep.subr.mxu0 0.0
    %8960 = vmatpush1.msra.mxu0 %v8801
    %8961 = vmatprep.subr.mxu0 0.0
    %8962 = vmatpush1.msra.mxu0 %v8802
    %8963 = vmatprep.subr.mxu0 0.0
    %8964 = vmatpush1.msra.mxu0 %v8803
    %8965 = vmatprep.subr.mxu0 0.0
    %8966 = vmatpush1.msra.mxu0 %v8804
    %8967 = vmatprep.subr.mxu0 0.0
    %8968 = vmatpush1.msra.mxu0 %v8805
    %8969 = vmatprep.subr.mxu0 0.0
    %8970 = vmatpush1.msra.mxu0 %v8806
    %8971 = vmatprep.subr.mxu0 0.0
    %8972 = vmatpush1.msra.mxu0 %v8807
    %8973 = vmatprep.subr.mxu0 0.0
    %8974 = vmatpush1.msra.mxu0 %v8808
    %8975 = vmatprep.subr.mxu0 0.0
    %8976 = vmatpush1.msra.mxu0 %v8809
    %8977 = vmatprep.subr.mxu0 0.0
    %8978 = vmatpush1.msra.mxu0 %v8810
    %8979 = vmatprep.subr.mxu0 0.0
    %8980 = vmatpush1.msra.mxu0 %v8811
    %8981 = vmatprep.subr.mxu0 0.0
    %8982 = vmatpush1.msra.mxu0 %v8812
    %8983 = vmatprep.subr.mxu0 0.0
    %8984 = vmatpush1.msra.mxu0 %v8813
    %8985 = vmatprep.subr.mxu0 0.0
    %8986 = vmatpush1.msra.mxu0 %v8814
    %8987 = vmatprep.subr.mxu0 0.0
    %8988 = vmatpush1.msra.mxu0 %v8815
    %8989 = vmatprep.subr.mxu0 0.0
    %8990 = vmatpush1.msra.mxu0 %v8816
    %8991 = vmatprep.subr.mxu0 0.0
    %8992 = vmatpush1.msra.mxu0 %v8817
    %8993 = vmatprep.subr.mxu0 0.0
    %8994 = vmatpush1.msra.mxu0 %v8818
    %8995 = vmatprep.subr.mxu0 0.0
    %8996 = vmatpush1.msra.mxu0 %v8819
    %8997 = vmatprep.subr.mxu0 0.0
    %8998 = vmatpush1.msra.mxu0 %v8820
    %8999 = vmatprep.subr.mxu0 0.0
    %9000 = vmatpush1.msra.mxu0 %v8821
    %9001 = vmatprep.subr.mxu0 0.0
    %9002 = vmatpush1.msra.mxu0 %v8822
    %9003 = vmatprep.mubr.f32.mxu0 %v8755
    %9004 = vmatmul.mubr.f32.gmra.mrb[0].mxu0 %v8754
    %v9005 = vpop.f32.mrb[0].mxu0
    %v9006 = vadd.f32 %v8936, %v9005
    %v9007 = vpop.f32.mrb[0].mxu0
    %9008 = vdwg.mxu0
    %9009 = vmatprep.subr.mxu0 0.0
    %9010 = vmatpush1.msra.mxu0 %v8823
    %9011 = vmatprep.subr.mxu0 0.0
    %9012 = vmatpush1.msra.mxu0 %v8824
    %9013 = vmatprep.subr.mxu0 0.0
    %9014 = vmatpush1.msra.mxu0 %v8825
    %9015 = vmatprep.subr.mxu0 0.0
    %9016 = vmatpush1.msra.mxu0 %v8826
    %9017 = vmatprep.subr.mxu0 0.0
    %9018 = vmatpush1.msra.mxu0 %v8827
    %9019 = vmatprep.subr.mxu0 0.0
    %9020 = vmatpush1.msra.mxu0 %v8828
    %9021 = vmatprep.subr.mxu0 0.0
    %9022 = vmatpush1.msra.mxu0 %v8829
    %9023 = vmatprep.subr.mxu0 0.0
    %9024 = vmatpush1.msra.mxu0 %v8830
    %9025 = vmatprep.subr.mxu0 0.0
    %9026 = vmatpush1.msra.mxu0 %v8831
    %9027 = vmatprep.subr.mxu0 0.0
    %9028 = vmatpush1.msra.mxu0 %v8832
    %9029 = vmatprep.subr.mxu0 0.0
    %9030 = vmatpush1.msra.mxu0 %v8833
    %9031 = vmatprep.subr.mxu0 0.0
    %9032 = vmatpush1.msra.mxu0 %v8834
    %9033 = vmatprep.subr.mxu0 0.0
    %9034 = vmatpush1.msra.mxu0 %v8835
    %9035 = vmatprep.subr.mxu0 0.0
    %9036 = vmatpush1.msra.mxu0 %v8836
    %9037 = vmatprep.subr.mxu0 0.0
    %9038 = vmatpush1.msra.mxu0 %v8837
    %9039 = vmatprep.subr.mxu0 0.0
    %9040 = vmatpush1.msra.mxu0 %v8838
    %9041 = vmatprep.subr.mxu0 0.0
    %9042 = vmatpush1.msra.mxu0 %v8839
    %9043 = vmatprep.subr.mxu0 0.0
    %9044 = vmatpush1.msra.mxu0 %v8840
    %9045 = vmatprep.subr.mxu0 0.0
    %9046 = vmatpush1.msra.mxu0 %v8841
    %9047 = vmatprep.subr.mxu0 0.0
    %9048 = vmatpush1.msra.mxu0 %v8842
    %9049 = vmatprep.subr.mxu0 0.0
    %9050 = vmatpush1.msra.mxu0 %v8843
    %9051 = vmatprep.subr.mxu0 0.0
    %9052 = vmatpush1.msra.mxu0 %v8844
    %9053 = vmatprep.subr.mxu0 0.0
    %9054 = vmatpush1.msra.mxu0 %v8845
    %9055 = vmatprep.subr.mxu0 0.0
    %9056 = vmatpush1.msra.mxu0 %v8846
    %9057 = vmatprep.subr.mxu0 0.0
    %9058 = vmatpush1.msra.mxu0 %v8847
    %9059 = vmatprep.subr.mxu0 0.0
    %9060 = vmatpush1.msra.mxu0 %v8848
    %9061 = vmatprep.subr.mxu0 0.0
    %9062 = vmatpush1.msra.mxu0 %v8849
    %9063 = vmatprep.subr.mxu0 0.0
    %9064 = vmatpush1.msra.mxu0 %v8850
    %9065 = vmatprep.subr.mxu0 0.0
    %9066 = vmatpush1.msra.mxu0 %v8851
    %9067 = vmatprep.subr.mxu0 0.0
    %9068 = vmatpush1.msra.mxu0 %v8852
    %9069 = vmatprep.subr.mxu0 0.0
    %9070 = vmatpush1.msra.mxu0 %v8853
    %9071 = vmatprep.subr.mxu0 0.0
    %9072 = vmatpush1.msra.mxu0 %v8854
    %9073 = vmatprep.mubr.f32.mxu0 %v8757
    %9074 = vmatmul.mubr.f32.gmra.mrb[0].mxu0 %v8756
    %v9075 = vpop.f32.mrb[0].mxu0
    %v9076 = vadd.f32 %v9006, %v9075
    %v9077 = vpop.f32.mrb[0].mxu0
    %9078 = vdwg.mxu0
    %9079 = vmatprep.subr.mxu0 0.0
    %9080 = vmatpush1.msra.mxu0 %v8855
    %9081 = vmatprep.subr.mxu0 0.0
    %9082 = vmatpush1.msra.mxu0 %v8856
    %9083 = vmatprep.subr.mxu0 0.0
    %9084 = vmatpush1.msra.mxu0 %v8857
    %9085 = vmatprep.subr.mxu0 0.0
    %9086 = vmatpush1.msra.mxu0 %v8858
    %9087 = vmatprep.subr.mxu0 0.0
    %9088 = vmatpush1.msra.mxu0 0.0
    %9089 = vmatprep.subr.mxu0 0.0
    %9090 = vmatpush1.msra.mxu0 0.0
    %9091 = vmatprep.subr.mxu0 0.0
    %9092 = vmatpush1.msra.mxu0 0.0
    %9093 = vmatprep.subr.mxu0 0.0
    %9094 = vmatpush1.msra.mxu0 0.0
    %9095 = vmatprep.subr.mxu0 0.0
    %9096 = vmatpush1.msra.mxu0 0.0
    %9097 = vmatprep.subr.mxu0 0.0
    %9098 = vmatpush1.msra.mxu0 0.0
    %9099 = vmatprep.subr.mxu0 0.0
    %9100 = vmatpush1.msra.mxu0 0.0
    %9101 = vmatprep.subr.mxu0 0.0
    %9102 = vmatpush1.msra.mxu0 0.0
    %9103 = vmatprep.subr.mxu0 0.0
    %9104 = vmatpush1.msra.mxu0 0.0
    %9105 = vmatprep.subr.mxu0 0.0
    %9106 = vmatpush1.msra.mxu0 0.0
    %9107 = vmatprep.subr.mxu0 0.0
    %9108 = vmatpush1.msra.mxu0 0.0
    %9109 = vmatprep.subr.mxu0 0.0
    %9110 = vmatpush1.msra.mxu0 0.0
    %9111 = vmatprep.subr.mxu0 0.0
    %9112 = vmatpush1.msra.mxu0 0.0
    %9113 = vmatprep.subr.mxu0 0.0
    %9114 = vmatpush1.msra.mxu0 0.0
    %9115 = vmatprep.subr.mxu0 0.0
    %9116 = vmatpush1.msra.mxu0 0.0
    %9117 = vmatprep.subr.mxu0 0.0
    %9118 = vmatpush1.msra.mxu0 0.0
    %9119 = vmatprep.subr.mxu0 0.0
    %9120 = vmatpush1.msra.mxu0 0.0
    %9121 = vmatprep.subr.mxu0 0.0
    %9122 = vmatpush1.msra.mxu0 0.0
    %9123 = vmatprep.subr.mxu0 0.0
    %9124 = vmatpush1.msra.mxu0 0.0
    %9125 = vmatprep.subr.mxu0 0.0
    %9126 = vmatpush1.msra.mxu0 0.0
    %9127 = vmatprep.subr.mxu0 0.0
    %9128 = vmatpush1.msra.mxu0 0.0
    %9129 = vmatprep.subr.mxu0 0.0
    %9130 = vmatpush1.msra.mxu0 0.0
    %9131 = vmatprep.subr.mxu0 0.0
    %9132 = vmatpush1.msra.mxu0 0.0
    %9133 = vmatprep.subr.mxu0 0.0
    %9134 = vmatpush1.msra.mxu0 0.0
    %9135 = vmatprep.subr.mxu0 0.0
    %9136 = vmatpush1.msra.mxu0 0.0
    %9137 = vmatprep.subr.mxu0 0.0
    %9138 = vmatpush1.msra.mxu0 0.0
    %9139 = vmatprep.subr.mxu0 0.0
    %9140 = vmatpush1.msra.mxu0 0.0
    %9141 = vmatprep.subr.mxu0 0.0
    %9142 = vmatpush1.msra.mxu0 0.0
    %9143 = vmatprep.mubr.f32.mxu0 0.0
    %9144 = vmatmul.mubr.f32.gmra.mrb[0].mxu0 %v8867
    %v9145 = vpop.f32.mrb[0].mxu0
    %v9146 = vadd.f32 %v9076, %v9145
    %v9147 = vpop.f32.mrb[0].mxu0
    %9148 = vdwg.mxu0
    %9149 = vst [vmem:[#allocation2] sm:$0xf] %v9146
    // Predicated region
    $region38: #{baseline_forward.1} parent=1 // pred_check
      _
    $region39: #{baseline_forward.1} parent=1 // pred_check_branch
      %9151 = sbr.rel (0) target = $region41
    $region40: #{baseline_forward.1} parent=1 // pred_region
      %s9153 = ssub.s32 64, 64
      %9154 = vsyncadd [#allocation3], %s9153
      %s9156 = sshll.u32 [#allocation2], 4
      %s9157 = int_to_ptr.vmem [resolvable:$true] %s9156
      %9159 = dma.vmem_to_hbm [thread:$0]  %s9157, 64, %s9, [#allocation3]
    $region41: #{baseline_forward.1} parent=1 // pred_fallthru
      _
    // Predicated region
    $region42: #{baseline_forward.1} parent=1 // pred_check
      _
    $region43: #{baseline_forward.1} parent=1 // pred_check_branch
      %9161 = sbr.rel (0) target = $region45
    $region44: #{baseline_forward.1} parent=1 // pred_region
      %9162 = dma.done [#allocation3], 64
    $region45: #{baseline_forward.1} parent=1 // pred_fallthru
      _
    %9163 = vsyncpa [#allocation3], 1

</llo_original>
